<compile_context>
chip_gen: v6e
topology: v6e:2x2x1
jax: 0.10.0
libtpu: 0.0.40
codegen_flags: <defaults>
</compile_context>

<pallas_src>
import jax
import jax.numpy as jnp
from jax.experimental import pallas as pl
from jax.experimental.pallas import tpu as pltpu


# ---------------------------------------------------------------------------
# Pallas kernel: per-mode complex channel mix via 3 MXU contractions
# ---------------------------------------------------------------------------
def _spectral_mix_kernel(xr_ref, xi_ref, wr_ref, wd_ref, ws_ref, or_ref, oi_ref):
    # xr_ref/xi_ref : (mt, B,   Cin )   real / imag Fourier modes
    # wr_ref        : (mt, Cin, Cout)   Re(w)
    # wd_ref        : (mt, Cin, Cout)   Im(w) - Re(w)
    # ws_ref        : (mt, Cin, Cout)   Re(w) + Im(w)
    # or_ref/oi_ref : (mt, B,   Cout)
    xr = xr_ref[...]
    xi = xi_ref[...]
    xs = xr + xi
    # Karatsuba: (xr + i*xi)(wr + i*wi) with 3 real batched matmuls (MXU).
    k1 = jnp.einsum('gbi,gio->gbo', xs, wr_ref[...],
                    preferred_element_type=jnp.float32)
    k2 = jnp.einsum('gbi,gio->gbo', xr, wd_ref[...],
                    preferred_element_type=jnp.float32)
    k3 = jnp.einsum('gbi,gio->gbo', xi, ws_ref[...],
                    preferred_element_type=jnp.float32)
    or_ref[...] = k1 - k3          # xr*wr - xi*wi
    oi_ref[...] = k1 + k2          # xr*wi + xi*wr


def _pick_mode_tile(n_modes, B, Cin, Cout, budget_bytes=12 * 1024 * 1024):
    """Largest divisor of n_modes whose double-buffered, (8,128)-padded VMEM
    footprint fits the budget (keeps v7x's smaller VMEM comfortable)."""
    def rup(v, m):
        return ((v + m - 1) // m) * m
    per_mode = 4 * 2 * (2 * rup(B, 8) * rup(Cin, 128)        # xr, xi
                        + 3 * rup(Cin, 8) * rup(Cout, 128)   # wr, wd, ws
                        + 2 * rup(B, 8) * rup(Cout, 128))    # or, oi
    cap = max(1, budget_bytes // per_mode)
    mt = 1
    for d in range(1, n_modes + 1):
        if n_modes % d == 0 and d <= cap:
            mt = d
    return mt


def spectral_conv2d(x, w1, w2, modes1, modes2):
    """Pallas-accelerated SpectralConv2d.forward. x: float32 NCHW."""
    B, Cin, H, W = x.shape
    Cout = w1.shape[1]
    Wr = W // 2 + 1
    m1, m2 = modes1, modes2
    Mm = m1 * m2

    # ---- FFT + mode truncation (XLA) --------------------------------------
    x_ft = jnp.fft.rfft2(x)                                   # (B, Cin, H, Wr) c64
    top = x_ft[:, :, :m1, :m2]
    bot = x_ft[:, :, H - m1:, :m2]
    xm = jnp.stack([top, bot], axis=0)                        # (2, B, Cin, m1, m2)
    # channels-minor, modes-flattened layout for the batched matmul
    xm = jnp.transpose(xm, (0, 3, 4, 1, 2)).reshape(2, Mm, B, Cin)
    xr = jnp.real(xm).astype(jnp.float32)
    xi = jnp.imag(xm).astype(jnp.float32)

    w = jnp.stack([w1, w2], axis=0)                           # (2, Cin, Cout, m1, m2)
    w = jnp.transpose(w, (0, 3, 4, 1, 2)).reshape(2, Mm, Cin, Cout)
    wr = jnp.real(w).astype(jnp.float32)
    wi = jnp.imag(w).astype(jnp.float32)
    wd = wi - wr                                              # Karatsuba combos
    ws = wr + wi

    mt = _pick_mode_tile(Mm, B, Cin, Cout)
    n_mt = Mm // mt

    x_spec = pl.BlockSpec((None, mt, B, Cin), lambda r, m: (r, m, 0, 0))
    w_spec = pl.BlockSpec((None, mt, Cin, Cout), lambda r, m: (r, m, 0, 0))
    o_spec = pl.BlockSpec((None, mt, B, Cout), lambda r, m: (r, m, 0, 0))

    or_, oi_ = pl.pallas_call(
        _spectral_mix_kernel,
        out_shape=(
            jax.ShapeDtypeStruct((2, Mm, B, Cout), jnp.float32),
            jax.ShapeDtypeStruct((2, Mm, B, Cout), jnp.float32),
        ),
        grid=(2, n_mt),
        in_specs=[x_spec, x_spec, w_spec, w_spec, w_spec],
        out_specs=(o_spec, o_spec),
        compiler_params=pltpu.CompilerParams(
            dimension_semantics=("parallel", "parallel"),
            vmem_limit_bytes=32 * 1024 * 1024),
    )(xr, xi, wr, wd, ws)

    out_m = jax.lax.complex(or_, oi_)                         # (2, Mm, B, Cout)
    out_m = out_m.reshape(2, m1, m2, B, Cout)
    out_m = jnp.transpose(out_m, (0, 3, 4, 1, 2))             # (2, B, Cout, m1, m2)

    out_ft = jnp.zeros((B, Cout, H, Wr), dtype=jnp.complex64)
    out_ft = out_ft.at[:, :, :m1, :m2].set(out_m[0])
    out_ft = out_ft.at[:, :, H - m1:, :m2].set(out_m[1])
    return jnp.fft.irfft2(out_ft, s=(H, W))                   # (B, Cout, H, W) f32


# ---------------------------------------------------------------------------
# Pure-jnp reference SpectralConv2d (matches the PyTorch einsum path exactly)
# ---------------------------------------------------------------------------
def _spectral_conv2d_ref(x, w1, w2, modes1, modes2):
    B, Cin, H, W = x.shape
    Cout = w1.shape[1]
    x_ft = jnp.fft.rfft2(x)
    out_ft = jnp.zeros((B, Cout, H, W // 2 + 1), dtype=jnp.complex64)
    out_ft = out_ft.at[:, :, :modes1, :modes2].set(
        jnp.einsum('bixy,ioxy->boxy', x_ft[:, :, :modes1, :modes2], w1))
    out_ft = out_ft.at[:, :, H - modes1:, :modes2].set(
        jnp.einsum('bixy,ioxy->boxy', x_ft[:, :, H - modes1:, :modes2], w2))
    return jnp.fft.irfft2(out_ft, s=(H, W))


# ---------------------------------------------------------------------------
# Full FNO2d forward (fc0 -> 4x [SpectralConv + 1x1 conv + GELU] -> fc1/fc2)
# ---------------------------------------------------------------------------
def fno2d_forward(params, x, modes1, modes2, padding=13, spectral_fn=spectral_conv2d):
    # x: (B, s, s, n_features)
    x = x @ params['fc0_w'] + params['fc0_b']                 # (B, s, s, width)
    x = jnp.transpose(x, (0, 3, 1, 2))                        # (B, width, s, s)
    x = jnp.pad(x, ((0, 0), (0, 0), (0, padding), (0, padding)))
    for l in range(4):
        x1 = spectral_fn(x, params[f'conv{l}_w1'], params[f'conv{l}_w2'],
                         modes1, modes2)
        x2 = jnp.einsum('bchw,oc->bohw', x, params[f'w{l}_w']) \
            + params[f'w{l}_b'][None, :, None, None]
        x = x1 + x2
        if l < 3:
            x = jax.nn.gelu(x, approximate=False)
    x = x[..., :-padding, :-padding]
    x = jnp.transpose(x, (0, 2, 3, 1))                        # (B, s, s, width)
    x = jax.nn.gelu(x @ params['fc1_w'] + params['fc1_b'], approximate=False)
    x = x @ params['fc2_w'] + params['fc2_b']                 # (B, s, s, 1)
    return x


def init_fno2d_params(key, modes1, modes2, width, n_features):
    keys = jax.random.split(key, 24)
    it = iter(keys)
    scale = 1.0 / (width * width)

    def spec_w(k):
        kr, ki = jax.random.split(k)
        shp = (width, width, modes1, modes2)
        return jax.lax.complex(
            scale * jax.random.uniform(kr, shp, jnp.float32),
            scale * jax.random.uniform(ki, shp, jnp.float32))

    p = {}
    p['fc0_w'] = jax.random.normal(next(it), (n_features, width), jnp.float32) \
        / jnp.sqrt(float(n_features))
    p['fc0_b'] = 0.1 * jax.random.normal(next(it), (width,), jnp.float32)
    for l in range(4):
        p[f'conv{l}_w1'] = spec_w(next(it))
        p[f'conv{l}_w2'] = spec_w(next(it))
        p[f'w{l}_w'] = jax.random.normal(next(it), (width, width), jnp.float32) / width
        p[f'w{l}_b'] = 0.05 * jax.random.normal(next(it), (width,), jnp.float32)
    p['fc1_w'] = jax.random.normal(next(it), (width, 128), jnp.float32) \
        / jnp.sqrt(float(width))
    p['fc1_b'] = 0.05 * jax.random.normal(next(it), (128,), jnp.float32)
    p['fc2_w'] = jax.random.normal(next(it), (128, 1), jnp.float32) / jnp.sqrt(128.0)
    p['fc2_b'] = jnp.zeros((1,), jnp.float32)
    return p


if __name__ == "__main__":
    # Small shapes consistent with the module: (batch, s, s, n_features)
    B, s, n_features = 2, 16, 3
    width, modes1, modes2 = 8, 6, 6

    key = jax.random.PRNGKey(0)
    kp, kx = jax.random.split(key)
    params = init_fno2d_params(kp, modes1, modes2, width, n_features)
    x = jax.random.normal(kx, (B, s, s, n_features), dtype=jnp.float32)

    fwd = jax.jit(lambda p, a: fno2d_forward(p, a, modes1, modes2,
                                             spectral_fn=spectral_conv2d))
    ref_fwd = jax.jit(lambda p, a: fno2d_forward(p, a, modes1, modes2,
                                                 spectral_fn=_spectral_conv2d_ref))

    out = jax.block_until_ready(fwd(params, x))
    ref = jax.block_until_ready(ref_fwd(params, x))

    assert out.shape == (B, s, s, 1)
    max_err = float(jnp.max(jnp.abs(out - ref)))
    assert jnp.allclose(out, ref, atol=5e-4, rtol=5e-4), f"max err {max_err}"

    print("KERNEL_OK")
</pallas_src>

<mosaic_0001>
module attributes {stable_mosaic.version = 11 : i64} {
  func.func @_spectral_mix_kernel(%arg0: i32, %arg1: i32, %arg2: memref<1x36x2x8xf32, #tpu.memory_space<vmem>>, %arg3: memref<1x36x2x8xf32, #tpu.memory_space<vmem>>, %arg4: memref<1x36x8x8xf32, #tpu.memory_space<vmem>>, %arg5: memref<1x36x8x8xf32, #tpu.memory_space<vmem>>, %arg6: memref<1x36x8x8xf32, #tpu.memory_space<vmem>>, %arg7: memref<1x36x2x8xf32, #tpu.memory_space<vmem>>, %arg8: memref<1x36x2x8xf32, #tpu.memory_space<vmem>>) attributes {dimension_semantics = [#tpu.dimension_semantics<parallel>, #tpu.dimension_semantics<parallel>], iteration_bounds = array<i64: 2, 1>, scalar_prefetch = 0 : i64, scratch_operands = 0 : i64, tpu.core_type = #tpu.core_type<tc>, window_params = [{transform_indices = @transform_0, window_bounds = array<i64: 1, 36, 2, 8>}, {transform_indices = @transform_1, window_bounds = array<i64: 1, 36, 2, 8>}, {transform_indices = @transform_2, window_bounds = array<i64: 1, 36, 8, 8>}, {transform_indices = @transform_3, window_bounds = array<i64: 1, 36, 8, 8>}, {transform_indices = @transform_4, window_bounds = array<i64: 1, 36, 8, 8>}, {transform_indices = @transform_5, window_bounds = array<i64: 1, 36, 2, 8>}, {transform_indices = @transform_6, window_bounds = array<i64: 1, 36, 2, 8>}]} {
    %c0 = arith.constant 0 : index
    %c0_0 = arith.constant 0 : index
    %c0_1 = arith.constant 0 : index
    %c0_2 = arith.constant 0 : index
    %0 = vector.load %arg2[%c0, %c0_0, %c0_1, %c0_2] : memref<1x36x2x8xf32, #tpu.memory_space<vmem>>, vector<1x36x2x8xf32>
    %1 = vector.shape_cast %0 : vector<1x36x2x8xf32> to vector<36x2x8xf32>
    %c0_3 = arith.constant 0 : index
    %c0_4 = arith.constant 0 : index
    %c0_5 = arith.constant 0 : index
    %c0_6 = arith.constant 0 : index
    %2 = vector.load %arg3[%c0_3, %c0_4, %c0_5, %c0_6] : memref<1x36x2x8xf32, #tpu.memory_space<vmem>>, vector<1x36x2x8xf32>
    %3 = vector.shape_cast %2 : vector<1x36x2x8xf32> to vector<36x2x8xf32>
    %4 = arith.addf %1, %3 : vector<36x2x8xf32>
    %c0_7 = arith.constant 0 : index
    %c0_8 = arith.constant 0 : index
    %c0_9 = arith.constant 0 : index
    %c0_10 = arith.constant 0 : index
    %5 = vector.load %arg4[%c0_7, %c0_8, %c0_9, %c0_10] : memref<1x36x8x8xf32, #tpu.memory_space<vmem>>, vector<1x36x8x8xf32>
    %6 = vector.shape_cast %5 : vector<1x36x8x8xf32> to vector<36x8x8xf32>
    "tpu.trace_start"() <{level = 10 : i32, message = "gbi,gio->gbo"}> : () -> ()
    %cst = arith.constant dense<0.000000e+00> : vector<36x2x8xf32>
    %7 = tpu.matmul %4, %6, %cst {dimension_numbers = #tpu.dot_dimension_numbers<[2], [1], [1], [2], [0, 0, 0, 1, 1, 2], [0], [0]>} : vector<36x2x8xf32>, vector<36x8x8xf32>, vector<36x2x8xf32> -> vector<36x2x8xf32>
    "tpu.trace_stop"() : () -> ()
    %c0_11 = arith.constant 0 : index
    %c0_12 = arith.constant 0 : index
    %c0_13 = arith.constant 0 : index
    %c0_14 = arith.constant 0 : index
    %8 = vector.load %arg5[%c0_11, %c0_12, %c0_13, %c0_14] : memref<1x36x8x8xf32, #tpu.memory_space<vmem>>, vector<1x36x8x8xf32>
    %9 = vector.shape_cast %8 : vector<1x36x8x8xf32> to vector<36x8x8xf32>
    "tpu.trace_start"() <{level = 10 : i32, message = "gbi,gio->gbo"}> : () -> ()
    %cst_15 = arith.constant dense<0.000000e+00> : vector<36x2x8xf32>
    %10 = tpu.matmul %1, %9, %cst_15 {dimension_numbers = #tpu.dot_dimension_numbers<[2], [1], [1], [2], [0, 0, 0, 1, 1, 2], [0], [0]>} : vector<36x2x8xf32>, vector<36x8x8xf32>, vector<36x2x8xf32> -> vector<36x2x8xf32>
    "tpu.trace_stop"() : () -> ()
    %c0_16 = arith.constant 0 : index
    %c0_17 = arith.constant 0 : index
    %c0_18 = arith.constant 0 : index
    %c0_19 = arith.constant 0 : index
    %11 = vector.load %arg6[%c0_16, %c0_17, %c0_18, %c0_19] : memref<1x36x8x8xf32, #tpu.memory_space<vmem>>, vector<1x36x8x8xf32>
    %12 = vector.shape_cast %11 : vector<1x36x8x8xf32> to vector<36x8x8xf32>
    "tpu.trace_start"() <{level = 10 : i32, message = "gbi,gio->gbo"}> : () -> ()
    %cst_20 = arith.constant dense<0.000000e+00> : vector<36x2x8xf32>
    %13 = tpu.matmul %3, %12, %cst_20 {dimension_numbers = #tpu.dot_dimension_numbers<[2], [1], [1], [2], [0, 0, 0, 1, 1, 2], [0], [0]>} : vector<36x2x8xf32>, vector<36x8x8xf32>, vector<36x2x8xf32> -> vector<36x2x8xf32>
    "tpu.trace_stop"() : () -> ()
    %14 = arith.subf %7, %13 : vector<36x2x8xf32>
    %c0_21 = arith.constant 0 : index
    %c0_22 = arith.constant 0 : index
    %c0_23 = arith.constant 0 : index
    %c0_24 = arith.constant 0 : index
    %15 = vector.load %arg7[%c0_21, %c0_22, %c0_23, %c0_24] : memref<1x36x2x8xf32, #tpu.memory_space<vmem>>, vector<1x36x2x8xf32>
    %16 = vector.shape_cast %15 : vector<1x36x2x8xf32> to vector<36x2x8xf32>
    %17 = vector.shape_cast %14 : vector<36x2x8xf32> to vector<1x36x2x8xf32>
    tpu.vector_store %arg7[%c0_21, %c0_22, %c0_23, %c0_24], %17 {strides = array<i32>} : memref<1x36x2x8xf32, #tpu.memory_space<vmem>>, vector<1x36x2x8xf32>,
    %18 = arith.addf %7, %10 : vector<36x2x8xf32>
    %c0_25 = arith.constant 0 : index
    %c0_26 = arith.constant 0 : index
    %c0_27 = arith.constant 0 : index
    %c0_28 = arith.constant 0 : index
    %19 = vector.load %arg8[%c0_25, %c0_26, %c0_27, %c0_28] : memref<1x36x2x8xf32, #tpu.memory_space<vmem>>, vector<1x36x2x8xf32>
    %20 = vector.shape_cast %19 : vector<1x36x2x8xf32> to vector<36x2x8xf32>
    %21 = vector.shape_cast %18 : vector<36x2x8xf32> to vector<1x36x2x8xf32>
    tpu.vector_store %arg8[%c0_25, %c0_26, %c0_27, %c0_28], %21 {strides = array<i32>} : memref<1x36x2x8xf32, #tpu.memory_space<vmem>>, vector<1x36x2x8xf32>,
    return
  }
  func.func @transform_0(%arg0: i32, %arg1: i32) -> (i32, i32, i32, i32) {
    %c0_i32 = arith.constant 0 : i32
    %c0_i32_0 = arith.constant 0 : i32
    %c0_i32_1 = arith.constant 0 : i32
    return %arg0, %arg1, %c0_i32, %c0_i32_0 : i32, i32, i32, i32
  }
  func.func @transform_1(%arg0: i32, %arg1: i32) -> (i32, i32, i32, i32) {
    %c0_i32 = arith.constant 0 : i32
    %c0_i32_0 = arith.constant 0 : i32
    %c0_i32_1 = arith.constant 0 : i32
    return %arg0, %arg1, %c0_i32, %c0_i32_0 : i32, i32, i32, i32
  }
  func.func @transform_2(%arg0: i32, %arg1: i32) -> (i32, i32, i32, i32) {
    %c0_i32 = arith.constant 0 : i32
    %c0_i32_0 = arith.constant 0 : i32
    %c0_i32_1 = arith.constant 0 : i32
    return %arg0, %arg1, %c0_i32, %c0_i32_0 : i32, i32, i32, i32
  }
  func.func @transform_3(%arg0: i32, %arg1: i32) -> (i32, i32, i32, i32) {
    %c0_i32 = arith.constant 0 : i32
    %c0_i32_0 = arith.constant 0 : i32
    %c0_i32_1 = arith.constant 0 : i32
    return %arg0, %arg1, %c0_i32, %c0_i32_0 : i32, i32, i32, i32
  }
  func.func @transform_4(%arg0: i32, %arg1: i32) -> (i32, i32, i32, i32) {
    %c0_i32 = arith.constant 0 : i32
    %c0_i32_0 = arith.constant 0 : i32
    %c0_i32_1 = arith.constant 0 : i32
    return %arg0, %arg1, %c0_i32, %c0_i32_0 : i32, i32, i32, i32
  }
  func.func @transform_5(%arg0: i32, %arg1: i32) -> (i32, i32, i32, i32) {
    %c0_i32 = arith.constant 0 : i32
    %c0_i32_0 = arith.constant 0 : i32
    %c0_i32_1 = arith.constant 0 : i32
    return %arg0, %arg1, %c0_i32, %c0_i32_0 : i32, i32, i32, i32
  }
  func.func @transform_6(%arg0: i32, %arg1: i32) -> (i32, i32, i32, i32) {
    %c0_i32 = arith.constant 0 : i32
    %c0_i32_0 = arith.constant 0 : i32
    %c0_i32_1 = arith.constant 0 : i32
    return %arg0, %arg1, %c0_i32, %c0_i32_0 : i32, i32, i32, i32
  }
}

</mosaic_0001>

<llo_original>
// kernel: custom-call
$region0: #{custom-call}
  %s0 = inlined_call_operand.hbm [shape: c64[8,8,6,6], index: 0, kind: input, shape index: {}]
  %s1 = inlined_call_operand.vmem [shape: f32[8,8,6,6], index: 1, kind: output, shape index: {}]
  $region1: #{custom-call} parent=0
    #allocation0 [shape = 's32[1]{0}', space=sflag, size = 0x4, scoped, tag = 'scoped memory for custom-call']
    %2 = vsyncpa [#allocation0], 0
    %s3 = sshll.u32 %s1, 4
    %s4 = int_to_ptr.vmem [resolvable:$true] %s3
    %6 = dma.hbm_to_vmem [thread:$0]  %s0, 4608, %s4, [#allocation0]
    %7 = dma.done [#allocation0], 4608
    %8 = vsyncpa [#allocation0], 1

// kernel: custom-call.1
$region0: #{custom-call.1}
  %s0 = inlined_call_operand.hbm [shape: c64[8,8,6,6], index: 0, kind: input, shape index: {}]
  %s1 = inlined_call_operand.vmem [shape: f32[8,8,6,6], index: 1, kind: output, shape index: {}]
  %s2 = scalar_lea.hbm %s0, 4608
  $region1: #{custom-call.1} parent=0
    #allocation0 [shape = 's32[1]{0}', space=sflag, size = 0x4, scoped, tag = 'scoped memory for custom-call.1']
    %3 = vsyncpa [#allocation0], 0
    %s4 = sshll.u32 %s1, 4
    %s5 = int_to_ptr.vmem [resolvable:$true] %s4
    %7 = dma.hbm_to_vmem [thread:$0]  %s2, 4608, %s5, [#allocation0]
    %8 = dma.done [#allocation0], 4608
    %9 = vsyncpa [#allocation0], 1

// kernel: reverse.9
$region0: #{reverse.9}
  %s0 = inlined_call_operand.vmem [shape: f32[2,8,29,14], index: 0, kind: input, shape index: {}]
  %s1 = inlined_call_operand.vmem [shape: f32[2,8,29,14], index: 1, kind: output, shape index: {}]
  $region1: #{reverse.9} parent=0
    #allocation0 [shape = 'u8[196608]{0}', space=vmem, size = 0x30000, scoped, tag = 'operand span for operand 0']
    #allocation1 [shape = 'u8[131072]{0}', space=vmem, size = 0x20000, scoped, tag = 'operand span for operand 1']
    %s2 = scalar_lea.vmem [#allocation0], 8
    // Predicated region
    $region2: #{reverse.9} parent=1 // pred_check
      _
    $region3: #{reverse.9} parent=1 // pred_check_branch
      %4 = sbr.rel (0) target = $region5
    $region4: #{reverse.9} parent=1 // pred_region
      // Predicated region
      $region6: #{reverse.9} parent=4 // pred_check
        _
      $region7: #{reverse.9} parent=4 // pred_check_branch
        %6 = sbr.rel (0) target = $region9
      $region8: #{reverse.9} parent=4 // pred_region
        // Predicated region
        $region21: #{reverse.9} parent=8 // pred_check
          _
        $region22: #{reverse.9} parent=8 // pred_check_branch
          %84 = sbr.rel (0) target = $region24
        $region23: #{reverse.9} parent=8 // pred_region
          loop: start=0, step=1, limit=1
          $region25: #{reverse.9} parent=23 // loop_pre_header
            _
          $region26: #{reverse.9} parent=23 // loop_header
            %s86 = sphi 0, %s90
            %p87 = scmp.ge.s32.totalorder %s86, 1
            %s91 = sphi %s0, %s0
            %s92 = sphi %s2, %s2
          $region27: #{reverse.9} parent=23 // loop_header_branch
            %89 = sbr.rel (%p87) target = $region31
          $region28: #{reverse.9} parent=23 // loop_body
            %v93 = vld [vmem:[%s91] sm:$0xff]
            %94 = vst [vmem:[%s92] sm:$0xff] %v93
            %v95 = vld [vmem:[%s91 + $0x8] sm:$0xff]
            %96 = vst [vmem:[%s92 + $0x8] sm:$0xff] %v95
            %v97 = vld [vmem:[%s91 + $0x10] sm:$0xff]
            %98 = vst [vmem:[%s92 + $0x18] sm:$0xff] %v97
            %v99 = vld [vmem:[%s91 + $0x18] sm:$0xff]
            %100 = vst [vmem:[%s92 + $0x20] sm:$0xff] %v99
            %v101 = vld [vmem:[%s91 + $0x20] sm:$0xff]
            %102 = vst [vmem:[%s92 + $0x30] sm:$0xff] %v101
            %v103 = vld [vmem:[%s91 + $0x28] sm:$0xff]
            %104 = vst [vmem:[%s92 + $0x38] sm:$0xff] %v103
            %v105 = vld [vmem:[%s91 + $0x30] sm:$0xff]
            %106 = vst [vmem:[%s92 + $0x48] sm:$0xff] %v105
            %v107 = vld [vmem:[%s91 + $0x38] sm:$0xff]
            %108 = vst [vmem:[%s92 + $0x50] sm:$0xff] %v107
            %v109 = vld [vmem:[%s91 + $0x40] sm:$0xff]
            %110 = vst [vmem:[%s92 + $0x60] sm:$0xff] %v109
            %v111 = vld [vmem:[%s91 + $0x48] sm:$0xff]
            %112 = vst [vmem:[%s92 + $0x68] sm:$0xff] %v111
            %v113 = vld [vmem:[%s91 + $0x50] sm:$0xff]
            %114 = vst [vmem:[%s92 + $0x78] sm:$0xff] %v113
            %v115 = vld [vmem:[%s91 + $0x58] sm:$0xff]
            %116 = vst [vmem:[%s92 + $0x80] sm:$0xff] %v115
            %v117 = vld [vmem:[%s91 + $0x60] sm:$0xff]
            %118 = vst [vmem:[%s92 + $0x90] sm:$0xff] %v117
            %v119 = vld [vmem:[%s91 + $0x68] sm:$0xff]
            %120 = vst [vmem:[%s92 + $0x98] sm:$0xff] %v119
            %v121 = vld [vmem:[%s91 + $0x70] sm:$0xff]
            %122 = vst [vmem:[%s92 + $0xa8] sm:$0xff] %v121
            %v123 = vld [vmem:[%s91 + $0x78] sm:$0xff]
            %124 = vst [vmem:[%s92 + $0xb0] sm:$0xff] %v123
            %v125 = vld [vmem:[%s91 + $0x80] sm:$0xff]
            %126 = vst [vmem:[%s92 + $0xc0] sm:$0xff] %v125
            %v127 = vld [vmem:[%s91 + $0x88] sm:$0xff]
            %128 = vst [vmem:[%s92 + $0xc8] sm:$0xff] %v127
            %v129 = vld [vmem:[%s91 + $0x90] sm:$0xff]
            %130 = vst [vmem:[%s92 + $0xd8] sm:$0xff] %v129
            %v131 = vld [vmem:[%s91 + $0x98] sm:$0xff]
            %132 = vst [vmem:[%s92 + $0xe0] sm:$0xff] %v131
            %v133 = vld [vmem:[%s91 + $0xa0] sm:$0xff]
            %134 = vst [vmem:[%s92 + $0xf0] sm:$0xff] %v133
            %v135 = vld [vmem:[%s91 + $0xa8] sm:$0xff]
            %136 = vst [vmem:[%s92 + $0xf8] sm:$0xff] %v135
            %v137 = vld [vmem:[%s91 + $0xb0] sm:$0xff]
            %138 = vst [vmem:[%s92 + $0x108] sm:$0xff] %v137
            %v139 = vld [vmem:[%s91 + $0xb8] sm:$0xff]
            %140 = vst [vmem:[%s92 + $0x110] sm:$0xff] %v139
            %v141 = vld [vmem:[%s91 + $0xc0] sm:$0xff]
            %142 = vst [vmem:[%s92 + $0x120] sm:$0xff] %v141
            %v143 = vld [vmem:[%s91 + $0xc8] sm:$0xff]
            %144 = vst [vmem:[%s92 + $0x128] sm:$0xff] %v143
            %v145 = vld [vmem:[%s91 + $0xd0] sm:$0xff]
            %146 = vst [vmem:[%s92 + $0x138] sm:$0xff] %v145
            %v147 = vld [vmem:[%s91 + $0xd8] sm:$0xff]
            %148 = vst [vmem:[%s92 + $0x140] sm:$0xff] %v147
            %v149 = vld [vmem:[%s91 + $0xe0] sm:$0xff]
            %150 = vst [vmem:[%s92 + $0x150] sm:$0xff] %v149
            %v151 = vld [vmem:[%s91 + $0xe8] sm:$0xff]
            %152 = vst [vmem:[%s92 + $0x158] sm:$0xff] %v151
            %v153 = vld [vmem:[%s91 + $0xf0] sm:$0xff]
            %154 = vst [vmem:[%s92 + $0x168] sm:$0xff] %v153
            %v155 = vld [vmem:[%s91 + $0xf8] sm:$0xff]
            %156 = vst [vmem:[%s92 + $0x170] sm:$0xff] %v155
          $region29: #{reverse.9} parent=23 // loop_footer
            %s90 = sadd.s32 1, %s86
          $region30: #{reverse.9} parent=23 // loop_footer_branch
            %85 = sbr.rel target = $region26
          $region31: #{reverse.9} parent=23 // loop_exit
            _
        $region24: #{reverse.9} parent=8 // pred_fallthru
          _
        // Predicated region
        $region32: #{reverse.9} parent=8 // pred_check
          _
        $region33: #{reverse.9} parent=8 // pred_check_branch
          %158 = sbr.rel target = $region35
        $region34: #{reverse.9} parent=8 // pred_region
          _
        $region35: #{reverse.9} parent=8 // pred_fallthru
          _
      $region9: #{reverse.9} parent=4 // pred_fallthru
        _
      // Predicated region
      $region10: #{reverse.9} parent=4 // pred_check
        _
      $region11: #{reverse.9} parent=4 // pred_check_branch
        %8 = sbr.rel target = $region13
      $region12: #{reverse.9} parent=4 // pred_region
        %s10 = ssub.s32 256, 1
        loop: start=0, step=1, limit=1
        $region14: #{reverse.9} parent=12 // loop_pre_header
          _
        $region15: #{reverse.9} parent=12 // loop_header
          %s12 = sphi 0, %s16
          %p13 = scmp.ge.s32.totalorder %s12, 1
          %s17 = sphi %s0, %s0
          %s18 = sphi %s2, %s2
        $region16: #{reverse.9} parent=12 // loop_header_branch
          %15 = sbr.rel (%p13) target = $region20
        $region17: #{reverse.9} parent=12 // loop_body
          %v19 = vld [vmem:[%s17] sm:%s10]
          %20 = vst [vmem:[%s18] sm:%s10] %v19
          %v21 = vld [vmem:[%s17 + $0x8] sm:%s10]
          %22 = vst [vmem:[%s18 + $0x8] sm:%s10] %v21
          %v23 = vld [vmem:[%s17 + $0x10] sm:%s10]
          %24 = vst [vmem:[%s18 + $0x18] sm:%s10] %v23
          %v25 = vld [vmem:[%s17 + $0x18] sm:%s10]
          %26 = vst [vmem:[%s18 + $0x20] sm:%s10] %v25
          %v27 = vld [vmem:[%s17 + $0x20] sm:%s10]
          %28 = vst [vmem:[%s18 + $0x30] sm:%s10] %v27
          %v29 = vld [vmem:[%s17 + $0x28] sm:%s10]
          %30 = vst [vmem:[%s18 + $0x38] sm:%s10] %v29
          %v31 = vld [vmem:[%s17 + $0x30] sm:%s10]
          %32 = vst [vmem:[%s18 + $0x48] sm:%s10] %v31
          %v33 = vld [vmem:[%s17 + $0x38] sm:%s10]
          %34 = vst [vmem:[%s18 + $0x50] sm:%s10] %v33
          %v35 = vld [vmem:[%s17 + $0x40] sm:%s10]
          %36 = vst [vmem:[%s18 + $0x60] sm:%s10] %v35
          %v37 = vld [vmem:[%s17 + $0x48] sm:%s10]
          %38 = vst [vmem:[%s18 + $0x68] sm:%s10] %v37
          %v39 = vld [vmem:[%s17 + $0x50] sm:%s10]
          %40 = vst [vmem:[%s18 + $0x78] sm:%s10] %v39
          %v41 = vld [vmem:[%s17 + $0x58] sm:%s10]
          %42 = vst [vmem:[%s18 + $0x80] sm:%s10] %v41
          %v43 = vld [vmem:[%s17 + $0x60] sm:%s10]
          %44 = vst [vmem:[%s18 + $0x90] sm:%s10] %v43
          %v45 = vld [vmem:[%s17 + $0x68] sm:%s10]
          %46 = vst [vmem:[%s18 + $0x98] sm:%s10] %v45
          %v47 = vld [vmem:[%s17 + $0x70] sm:%s10]
          %48 = vst [vmem:[%s18 + $0xa8] sm:%s10] %v47
          %v49 = vld [vmem:[%s17 + $0x78] sm:%s10]
          %50 = vst [vmem:[%s18 + $0xb0] sm:%s10] %v49
          %v51 = vld [vmem:[%s17 + $0x80] sm:%s10]
          %52 = vst [vmem:[%s18 + $0xc0] sm:%s10] %v51
          %v53 = vld [vmem:[%s17 + $0x88] sm:%s10]
          %54 = vst [vmem:[%s18 + $0xc8] sm:%s10] %v53
          %v55 = vld [vmem:[%s17 + $0x90] sm:%s10]
          %56 = vst [vmem:[%s18 + $0xd8] sm:%s10] %v55
          %v57 = vld [vmem:[%s17 + $0x98] sm:%s10]
          %58 = vst [vmem:[%s18 + $0xe0] sm:%s10] %v57
          %v59 = vld [vmem:[%s17 + $0xa0] sm:%s10]
          %60 = vst [vmem:[%s18 + $0xf0] sm:%s10] %v59
          %v61 = vld [vmem:[%s17 + $0xa8] sm:%s10]
          %62 = vst [vmem:[%s18 + $0xf8] sm:%s10] %v61
          %v63 = vld [vmem:[%s17 + $0xb0] sm:%s10]
          %64 = vst [vmem:[%s18 + $0x108] sm:%s10] %v63
          %v65 = vld [vmem:[%s17 + $0xb8] sm:%s10]
          %66 = vst [vmem:[%s18 + $0x110] sm:%s10] %v65
          %v67 = vld [vmem:[%s17 + $0xc0] sm:%s10]
          %68 = vst [vmem:[%s18 + $0x120] sm:%s10] %v67
          %v69 = vld [vmem:[%s17 + $0xc8] sm:%s10]
          %70 = vst [vmem:[%s18 + $0x128] sm:%s10] %v69
          %v71 = vld [vmem:[%s17 + $0xd0] sm:%s10]
          %72 = vst [vmem:[%s18 + $0x138] sm:%s10] %v71
          %v73 = vld [vmem:[%s17 + $0xd8] sm:%s10]
          %74 = vst [vmem:[%s18 + $0x140] sm:%s10] %v73
          %v75 = vld [vmem:[%s17 + $0xe0] sm:%s10]
          %76 = vst [vmem:[%s18 + $0x150] sm:%s10] %v75
          %v77 = vld [vmem:[%s17 + $0xe8] sm:%s10]
          %78 = vst [vmem:[%s18 + $0x158] sm:%s10] %v77
          %v79 = vld [vmem:[%s17 + $0xf0] sm:%s10]
          %80 = vst [vmem:[%s18 + $0x168] sm:%s10] %v79
          %v81 = vld [vmem:[%s17 + $0xf8] sm:%s10]
          %82 = vst [vmem:[%s18 + $0x170] sm:%s10] %v81
        $region18: #{reverse.9} parent=12 // loop_footer
          %s16 = sadd.s32 1, %s12
        $region19: #{reverse.9} parent=12 // loop_footer_branch
          %11 = sbr.rel target = $region15
        $region20: #{reverse.9} parent=12 // loop_exit
          _
      $region13: #{reverse.9} parent=4 // pred_fallthru
        _
    $region5: #{reverse.9} parent=1 // pred_fallthru
      _
    %159 = vnop
    %s160 = scalar_lea.vmem [#allocation0], 8
    %s161 = scalar_lea.vmem %s160, 7 [#allocation0]
    %v162 = vld [vmem:[%s161] ss:$-1 sm:$0xff]
    %v163 = vrot.slane %v162, 2
    %164 = vst [vmem:[#allocation1] sm:$0xff] %v163
    %s165 = scalar_lea.vmem [#allocation0], 16
    %s166 = scalar_lea.vmem %s165, 7 [#allocation0]
    %v167 = vld [vmem:[%s166] ss:$-1 sm:$0xff]
    %v168 = vrot.slane %v167, 2
    %v169 = vlaneseq
    %v170 = vshrl.u32 %v169, 7
    %vm171 = vcmp.lt.s32.totalorder %v170, 6
    %172 = vst.msk [vmem:[#allocation1] sm:$0xff] %vm171, %v168
    %s173 = scalar_lea.vmem [#allocation1], 8
    %s174 = scalar_lea.vmem [#allocation0], 7
    %v175 = vld [vmem:[%s174] ss:$-1 sm:$0xff]
    %v176 = vrot.slane %v175, 2
    %177 = vst [vmem:[%s173] sm:$0xff] %v176
    %s178 = scalar_lea.vmem [#allocation0], 8
    %s179 = scalar_lea.vmem %s178, 7 [#allocation0]
    %v180 = vld [vmem:[%s179] ss:$-1 sm:$0xff]
    %v181 = vrot.slane %v180, 2
    %v182 = vlaneseq
    %v183 = vshrl.u32 %v182, 7
    %vm184 = vcmp.lt.s32.totalorder %v183, 6
    %185 = vst.msk [vmem:[%s173] sm:$0xff] %vm184, %v181
    %s186 = scalar_lea.vmem [#allocation1], 16
    %s187 = scalar_lea.vmem [#allocation0], 24
    %s188 = scalar_lea.vmem %s187, 8 [#allocation0]
    %s189 = scalar_lea.vmem %s188, 7 [#allocation0]
    %v190 = vld [vmem:[%s189] ss:$-1 sm:$0xff]
    %v191 = vrot.slane %v190, 2
    %192 = vst [vmem:[%s186] sm:$0xff] %v191
    %s193 = scalar_lea.vmem %s187, 16 [#allocation0]
    %s194 = scalar_lea.vmem %s193, 7 [#allocation0]
    %v195 = vld [vmem:[%s194] ss:$-1 sm:$0xff]
    %v196 = vrot.slane %v195, 2
    %v197 = vlaneseq
    %v198 = vshrl.u32 %v197, 7
    %vm199 = vcmp.lt.s32.totalorder %v198, 6
    %200 = vst.msk [vmem:[%s186] sm:$0xff] %vm199, %v196
    %s201 = scalar_lea.vmem %s186, 8 [#allocation1]
    %s202 = scalar_lea.vmem %s187, 7 [#allocation0]
    %v203 = vld [vmem:[%s202] ss:$-1 sm:$0xff]
    %v204 = vrot.slane %v203, 2
    %205 = vst [vmem:[%s201] sm:$0xff] %v204
    %s206 = scalar_lea.vmem %s187, 8 [#allocation0]
    %s207 = scalar_lea.vmem %s206, 7 [#allocation0]
    %v208 = vld [vmem:[%s207] ss:$-1 sm:$0xff]
    %v209 = vrot.slane %v208, 2
    %v210 = vlaneseq
    %v211 = vshrl.u32 %v210, 7
    %vm212 = vcmp.lt.s32.totalorder %v211, 6
    %213 = vst.msk [vmem:[%s201] sm:$0xff] %vm212, %v209
    %s214 = scalar_lea.vmem [#allocation1], 32
    %s215 = scalar_lea.vmem [#allocation0], 48
    %s216 = scalar_lea.vmem %s215, 8 [#allocation0]
    %s217 = scalar_lea.vmem %s216, 7 [#allocation0]
    %v218 = vld [vmem:[%s217] ss:$-1 sm:$0xff]
    %v219 = vrot.slane %v218, 2
    %220 = vst [vmem:[%s214] sm:$0xff] %v219
    %s221 = scalar_lea.vmem %s215, 16 [#allocation0]
    %s222 = scalar_lea.vmem %s221, 7 [#allocation0]
    %v223 = vld [vmem:[%s222] ss:$-1 sm:$0xff]
    %v224 = vrot.slane %v223, 2
    %v225 = vlaneseq
    %v226 = vshrl.u32 %v225, 7
    %vm227 = vcmp.lt.s32.totalorder %v226, 6
    %228 = vst.msk [vmem:[%s214] sm:$0xff] %vm227, %v224
    %s229 = scalar_lea.vmem %s214, 8 [#allocation1]
    %s230 = scalar_lea.vmem %s215, 7 [#allocation0]
    %v231 = vld [vmem:[%s230] ss:$-1 sm:$0xff]
    %v232 = vrot.slane %v231, 2
    %233 = vst [vmem:[%s229] sm:$0xff] %v232
    %s234 = scalar_lea.vmem %s215, 8 [#allocation0]
    %s235 = scalar_lea.vmem %s234, 7 [#allocation0]
    %v236 = vld [vmem:[%s235] ss:$-1 sm:$0xff]
    %v237 = vrot.slane %v236, 2
    %v238 = vlaneseq
    %v239 = vshrl.u32 %v238, 7
    %vm240 = vcmp.lt.s32.totalorder %v239, 6
    %241 = vst.msk [vmem:[%s229] sm:$0xff] %vm240, %v237
    %s242 = scalar_lea.vmem [#allocation1], 48
    %s243 = scalar_lea.vmem [#allocation0], 72
    %s244 = scalar_lea.vmem %s243, 8 [#allocation0]
    %s245 = scalar_lea.vmem %s244, 7 [#allocation0]
    %v246 = vld [vmem:[%s245] ss:$-1 sm:$0xff]
    %v247 = vrot.slane %v246, 2
    %248 = vst [vmem:[%s242] sm:$0xff] %v247
    %s249 = scalar_lea.vmem %s243, 16 [#allocation0]
    %s250 = scalar_lea.vmem %s249, 7 [#allocation0]
    %v251 = vld [vmem:[%s250] ss:$-1 sm:$0xff]
    %v252 = vrot.slane %v251, 2
    %v253 = vlaneseq
    %v254 = vshrl.u32 %v253, 7
    %vm255 = vcmp.lt.s32.totalorder %v254, 6
    %256 = vst.msk [vmem:[%s242] sm:$0xff] %vm255, %v252
    %s257 = scalar_lea.vmem %s242, 8 [#allocation1]
    %s258 = scalar_lea.vmem %s243, 7 [#allocation0]
    %v259 = vld [vmem:[%s258] ss:$-1 sm:$0xff]
    %v260 = vrot.slane %v259, 2
    %261 = vst [vmem:[%s257] sm:$0xff] %v260
    %s262 = scalar_lea.vmem %s243, 8 [#allocation0]
    %s263 = scalar_lea.vmem %s262, 7 [#allocation0]
    %v264 = vld [vmem:[%s263] ss:$-1 sm:$0xff]
    %v265 = vrot.slane %v264, 2
    %v266 = vlaneseq
    %v267 = vshrl.u32 %v266, 7
    %vm268 = vcmp.lt.s32.totalorder %v267, 6
    %269 = vst.msk [vmem:[%s257] sm:$0xff] %vm268, %v265
    %s270 = scalar_lea.vmem [#allocation1], 64
    %s271 = scalar_lea.vmem [#allocation0], 96
    %s272 = scalar_lea.vmem %s271, 8 [#allocation0]
    %s273 = scalar_lea.vmem %s272, 7 [#allocation0]
    %v274 = vld [vmem:[%s273] ss:$-1 sm:$0xff]
    %v275 = vrot.slane %v274, 2
    %276 = vst [vmem:[%s270] sm:$0xff] %v275
    %s277 = scalar_lea.vmem %s271, 16 [#allocation0]
    %s278 = scalar_lea.vmem %s277, 7 [#allocation0]
    %v279 = vld [vmem:[%s278] ss:$-1 sm:$0xff]
    %v280 = vrot.slane %v279, 2
    %v281 = vlaneseq
    %v282 = vshrl.u32 %v281, 7
    %vm283 = vcmp.lt.s32.totalorder %v282, 6
    %284 = vst.msk [vmem:[%s270] sm:$0xff] %vm283, %v280
    %s285 = scalar_lea.vmem %s270, 8 [#allocation1]
    %s286 = scalar_lea.vmem %s271, 7 [#allocation0]
    %v287 = vld [vmem:[%s286] ss:$-1 sm:$0xff]
    %v288 = vrot.slane %v287, 2
    %289 = vst [vmem:[%s285] sm:$0xff] %v288
    %s290 = scalar_lea.vmem %s271, 8 [#allocation0]
    %s291 = scalar_lea.vmem %s290, 7 [#allocation0]
    %v292 = vld [vmem:[%s291] ss:$-1 sm:$0xff]
    %v293 = vrot.slane %v292, 2
    %v294 = vlaneseq
    %v295 = vshrl.u32 %v294, 7
    %vm296 = vcmp.lt.s32.totalorder %v295, 6
    %297 = vst.msk [vmem:[%s285] sm:$0xff] %vm296, %v293
    %s298 = scalar_lea.vmem [#allocation1], 80
    %s299 = scalar_lea.vmem [#allocation0], 120
    %s300 = scalar_lea.vmem %s299, 8 [#allocation0]
    %s301 = scalar_lea.vmem %s300, 7 [#allocation0]
    %v302 = vld [vmem:[%s301] ss:$-1 sm:$0xff]
    %v303 = vrot.slane %v302, 2
    %304 = vst [vmem:[%s298] sm:$0xff] %v303
    %s305 = scalar_lea.vmem %s299, 16 [#allocation0]
    %s306 = scalar_lea.vmem %s305, 7 [#allocation0]
    %v307 = vld [vmem:[%s306] ss:$-1 sm:$0xff]
    %v308 = vrot.slane %v307, 2
    %v309 = vlaneseq
    %v310 = vshrl.u32 %v309, 7
    %vm311 = vcmp.lt.s32.totalorder %v310, 6
    %312 = vst.msk [vmem:[%s298] sm:$0xff] %vm311, %v308
    %s313 = scalar_lea.vmem %s298, 8 [#allocation1]
    %s314 = scalar_lea.vmem %s299, 7 [#allocation0]
    %v315 = vld [vmem:[%s314] ss:$-1 sm:$0xff]
    %v316 = vrot.slane %v315, 2
    %317 = vst [vmem:[%s313] sm:$0xff] %v316
    %s318 = scalar_lea.vmem %s299, 8 [#allocation0]
    %s319 = scalar_lea.vmem %s318, 7 [#allocation0]
    %v320 = vld [vmem:[%s319] ss:$-1 sm:$0xff]
    %v321 = vrot.slane %v320, 2
    %v322 = vlaneseq
    %v323 = vshrl.u32 %v322, 7
    %vm324 = vcmp.lt.s32.totalorder %v323, 6
    %325 = vst.msk [vmem:[%s313] sm:$0xff] %vm324, %v321
    %s326 = scalar_lea.vmem [#allocation1], 96
    %s327 = scalar_lea.vmem [#allocation0], 144
    %s328 = scalar_lea.vmem %s327, 8 [#allocation0]
    %s329 = scalar_lea.vmem %s328, 7 [#allocation0]
    %v330 = vld [vmem:[%s329] ss:$-1 sm:$0xff]
    %v331 = vrot.slane %v330, 2
    %332 = vst [vmem:[%s326] sm:$0xff] %v331
    %s333 = scalar_lea.vmem %s327, 16 [#allocation0]
    %s334 = scalar_lea.vmem %s333, 7 [#allocation0]
    %v335 = vld [vmem:[%s334] ss:$-1 sm:$0xff]
    %v336 = vrot.slane %v335, 2
    %v337 = vlaneseq
    %v338 = vshrl.u32 %v337, 7
    %vm339 = vcmp.lt.s32.totalorder %v338, 6
    %340 = vst.msk [vmem:[%s326] sm:$0xff] %vm339, %v336
    %s341 = scalar_lea.vmem %s326, 8 [#allocation1]
    %s342 = scalar_lea.vmem %s327, 7 [#allocation0]
    %v343 = vld [vmem:[%s342] ss:$-1 sm:$0xff]
    %v344 = vrot.slane %v343, 2
    %345 = vst [vmem:[%s341] sm:$0xff] %v344
    %s346 = scalar_lea.vmem %s327, 8 [#allocation0]
    %s347 = scalar_lea.vmem %s346, 7 [#allocation0]
    %v348 = vld [vmem:[%s347] ss:$-1 sm:$0xff]
    %v349 = vrot.slane %v348, 2
    %v350 = vlaneseq
    %v351 = vshrl.u32 %v350, 7
    %vm352 = vcmp.lt.s32.totalorder %v351, 6
    %353 = vst.msk [vmem:[%s341] sm:$0xff] %vm352, %v349
    %s354 = scalar_lea.vmem [#allocation1], 112
    %s355 = scalar_lea.vmem [#allocation0], 168
    %s356 = scalar_lea.vmem %s355, 8 [#allocation0]
    %s357 = scalar_lea.vmem %s356, 7 [#allocation0]
    %v358 = vld [vmem:[%s357] ss:$-1 sm:$0xff]
    %v359 = vrot.slane %v358, 2
    %360 = vst [vmem:[%s354] sm:$0xff] %v359
    %s361 = scalar_lea.vmem %s355, 16 [#allocation0]
    %s362 = scalar_lea.vmem %s361, 7 [#allocation0]
    %v363 = vld [vmem:[%s362] ss:$-1 sm:$0xff]
    %v364 = vrot.slane %v363, 2
    %v365 = vlaneseq
    %v366 = vshrl.u32 %v365, 7
    %vm367 = vcmp.lt.s32.totalorder %v366, 6
    %368 = vst.msk [vmem:[%s354] sm:$0xff] %vm367, %v364
    %s369 = scalar_lea.vmem %s354, 8 [#allocation1]
    %s370 = scalar_lea.vmem %s355, 7 [#allocation0]
    %v371 = vld [vmem:[%s370] ss:$-1 sm:$0xff]
    %v372 = vrot.slane %v371, 2
    %373 = vst [vmem:[%s369] sm:$0xff] %v372
    %s374 = scalar_lea.vmem %s355, 8 [#allocation0]
    %s375 = scalar_lea.vmem %s374, 7 [#allocation0]
    %v376 = vld [vmem:[%s375] ss:$-1 sm:$0xff]
    %v377 = vrot.slane %v376, 2
    %v378 = vlaneseq
    %v379 = vshrl.u32 %v378, 7
    %vm380 = vcmp.lt.s32.totalorder %v379, 6
    %381 = vst.msk [vmem:[%s369] sm:$0xff] %vm380, %v377
    %s382 = scalar_lea.vmem [#allocation1], 128
    %s383 = scalar_lea.vmem [#allocation0], 192
    %s384 = scalar_lea.vmem %s383, 8 [#allocation0]
    %s385 = scalar_lea.vmem %s384, 7 [#allocation0]
    %v386 = vld [vmem:[%s385] ss:$-1 sm:$0xff]
    %v387 = vrot.slane %v386, 2
    %388 = vst [vmem:[%s382] sm:$0xff] %v387
    %s389 = scalar_lea.vmem %s383, 16 [#allocation0]
    %s390 = scalar_lea.vmem %s389, 7 [#allocation0]
    %v391 = vld [vmem:[%s390] ss:$-1 sm:$0xff]
    %v392 = vrot.slane %v391, 2
    %v393 = vlaneseq
    %v394 = vshrl.u32 %v393, 7
    %vm395 = vcmp.lt.s32.totalorder %v394, 6
    %396 = vst.msk [vmem:[%s382] sm:$0xff] %vm395, %v392
    %s397 = scalar_lea.vmem %s382, 8 [#allocation1]
    %s398 = scalar_lea.vmem %s383, 7 [#allocation0]
    %v399 = vld [vmem:[%s398] ss:$-1 sm:$0xff]
    %v400 = vrot.slane %v399, 2
    %401 = vst [vmem:[%s397] sm:$0xff] %v400
    %s402 = scalar_lea.vmem %s383, 8 [#allocation0]
    %s403 = scalar_lea.vmem %s402, 7 [#allocation0]
    %v404 = vld [vmem:[%s403] ss:$-1 sm:$0xff]
    %v405 = vrot.slane %v404, 2
    %v406 = vlaneseq
    %v407 = vshrl.u32 %v406, 7
    %vm408 = vcmp.lt.s32.totalorder %v407, 6
    %409 = vst.msk [vmem:[%s397] sm:$0xff] %vm408, %v405
    %s410 = scalar_lea.vmem [#allocation1], 144
    %s411 = scalar_lea.vmem [#allocation0], 216
    %s412 = scalar_lea.vmem %s411, 8 [#allocation0]
    %s413 = scalar_lea.vmem %s412, 7 [#allocation0]
    %v414 = vld [vmem:[%s413] ss:$-1 sm:$0xff]
    %v415 = vrot.slane %v414, 2
    %416 = vst [vmem:[%s410] sm:$0xff] %v415
    %s417 = scalar_lea.vmem %s411, 16 [#allocation0]
    %s418 = scalar_lea.vmem %s417, 7 [#allocation0]
    %v419 = vld [vmem:[%s418] ss:$-1 sm:$0xff]
    %v420 = vrot.slane %v419, 2
    %v421 = vlaneseq
    %v422 = vshrl.u32 %v421, 7
    %vm423 = vcmp.lt.s32.totalorder %v422, 6
    %424 = vst.msk [vmem:[%s410] sm:$0xff] %vm423, %v420
    %s425 = scalar_lea.vmem %s410, 8 [#allocation1]
    %s426 = scalar_lea.vmem %s411, 7 [#allocation0]
    %v427 = vld [vmem:[%s426] ss:$-1 sm:$0xff]
    %v428 = vrot.slane %v427, 2
    %429 = vst [vmem:[%s425] sm:$0xff] %v428
    %s430 = scalar_lea.vmem %s411, 8 [#allocation0]
    %s431 = scalar_lea.vmem %s430, 7 [#allocation0]
    %v432 = vld [vmem:[%s431] ss:$-1 sm:$0xff]
    %v433 = vrot.slane %v432, 2
    %v434 = vlaneseq
    %v435 = vshrl.u32 %v434, 7
    %vm436 = vcmp.lt.s32.totalorder %v435, 6
    %437 = vst.msk [vmem:[%s425] sm:$0xff] %vm436, %v433
    %s438 = scalar_lea.vmem [#allocation1], 160
    %s439 = scalar_lea.vmem [#allocation0], 240
    %s440 = scalar_lea.vmem %s439, 8 [#allocation0]
    %s441 = scalar_lea.vmem %s440, 7 [#allocation0]
    %v442 = vld [vmem:[%s441] ss:$-1 sm:$0xff]
    %v443 = vrot.slane %v442, 2
    %444 = vst [vmem:[%s438] sm:$0xff] %v443
    %s445 = scalar_lea.vmem %s439, 16 [#allocation0]
    %s446 = scalar_lea.vmem %s445, 7 [#allocation0]
    %v447 = vld [vmem:[%s446] ss:$-1 sm:$0xff]
    %v448 = vrot.slane %v447, 2
    %v449 = vlaneseq
    %v450 = vshrl.u32 %v449, 7
    %vm451 = vcmp.lt.s32.totalorder %v450, 6
    %452 = vst.msk [vmem:[%s438] sm:$0xff] %vm451, %v448
    %s453 = scalar_lea.vmem %s438, 8 [#allocation1]
    %s454 = scalar_lea.vmem %s439, 7 [#allocation0]
    %v455 = vld [vmem:[%s454] ss:$-1 sm:$0xff]
    %v456 = vrot.slane %v455, 2
    %457 = vst [vmem:[%s453] sm:$0xff] %v456
    %s458 = scalar_lea.vmem %s439, 8 [#allocation0]
    %s459 = scalar_lea.vmem %s458, 7 [#allocation0]
    %v460 = vld [vmem:[%s459] ss:$-1 sm:$0xff]
    %v461 = vrot.slane %v460, 2
    %v462 = vlaneseq
    %v463 = vshrl.u32 %v462, 7
    %vm464 = vcmp.lt.s32.totalorder %v463, 6
    %465 = vst.msk [vmem:[%s453] sm:$0xff] %vm464, %v461
    %s466 = scalar_lea.vmem [#allocation1], 176
    %s467 = scalar_lea.vmem [#allocation0], 264
    %s468 = scalar_lea.vmem %s467, 8 [#allocation0]
    %s469 = scalar_lea.vmem %s468, 7 [#allocation0]
    %v470 = vld [vmem:[%s469] ss:$-1 sm:$0xff]
    %v471 = vrot.slane %v470, 2
    %472 = vst [vmem:[%s466] sm:$0xff] %v471
    %s473 = scalar_lea.vmem %s467, 16 [#allocation0]
    %s474 = scalar_lea.vmem %s473, 7 [#allocation0]
    %v475 = vld [vmem:[%s474] ss:$-1 sm:$0xff]
    %v476 = vrot.slane %v475, 2
    %v477 = vlaneseq
    %v478 = vshrl.u32 %v477, 7
    %vm479 = vcmp.lt.s32.totalorder %v478, 6
    %480 = vst.msk [vmem:[%s466] sm:$0xff] %vm479, %v476
    %s481 = scalar_lea.vmem %s466, 8 [#allocation1]
    %s482 = scalar_lea.vmem %s467, 7 [#allocation0]
    %v483 = vld [vmem:[%s482] ss:$-1 sm:$0xff]
    %v484 = vrot.slane %v483, 2
    %485 = vst [vmem:[%s481] sm:$0xff] %v484
    %s486 = scalar_lea.vmem %s467, 8 [#allocation0]
    %s487 = scalar_lea.vmem %s486, 7 [#allocation0]
    %v488 = vld [vmem:[%s487] ss:$-1 sm:$0xff]
    %v489 = vrot.slane %v488, 2
    %v490 = vlaneseq
    %v491 = vshrl.u32 %v490, 7
    %vm492 = vcmp.lt.s32.totalorder %v491, 6
    %493 = vst.msk [vmem:[%s481] sm:$0xff] %vm492, %v489
    %s494 = scalar_lea.vmem [#allocation1], 192
    %s495 = scalar_lea.vmem [#allocation0], 288
    %s496 = scalar_lea.vmem %s495, 8 [#allocation0]
    %s497 = scalar_lea.vmem %s496, 7 [#allocation0]
    %v498 = vld [vmem:[%s497] ss:$-1 sm:$0xff]
    %v499 = vrot.slane %v498, 2
    %500 = vst [vmem:[%s494] sm:$0xff] %v499
    %s501 = scalar_lea.vmem %s495, 16 [#allocation0]
    %s502 = scalar_lea.vmem %s501, 7 [#allocation0]
    %v503 = vld [vmem:[%s502] ss:$-1 sm:$0xff]
    %v504 = vrot.slane %v503, 2
    %v505 = vlaneseq
    %v506 = vshrl.u32 %v505, 7
    %vm507 = vcmp.lt.s32.totalorder %v506, 6
    %508 = vst.msk [vmem:[%s494] sm:$0xff] %vm507, %v504
    %s509 = scalar_lea.vmem %s494, 8 [#allocation1]
    %s510 = scalar_lea.vmem %s495, 7 [#allocation0]
    %v511 = vld [vmem:[%s510] ss:$-1 sm:$0xff]
    %v512 = vrot.slane %v511, 2
    %513 = vst [vmem:[%s509] sm:$0xff] %v512
    %s514 = scalar_lea.vmem %s495, 8 [#allocation0]
    %s515 = scalar_lea.vmem %s514, 7 [#allocation0]
    %v516 = vld [vmem:[%s515] ss:$-1 sm:$0xff]
    %v517 = vrot.slane %v516, 2
    %v518 = vlaneseq
    %v519 = vshrl.u32 %v518, 7
    %vm520 = vcmp.lt.s32.totalorder %v519, 6
    %521 = vst.msk [vmem:[%s509] sm:$0xff] %vm520, %v517
    %s522 = scalar_lea.vmem [#allocation1], 208
    %s523 = scalar_lea.vmem [#allocation0], 312
    %s524 = scalar_lea.vmem %s523, 8 [#allocation0]
    %s525 = scalar_lea.vmem %s524, 7 [#allocation0]
    %v526 = vld [vmem:[%s525] ss:$-1 sm:$0xff]
    %v527 = vrot.slane %v526, 2
    %528 = vst [vmem:[%s522] sm:$0xff] %v527
    %s529 = scalar_lea.vmem %s523, 16 [#allocation0]
    %s530 = scalar_lea.vmem %s529, 7 [#allocation0]
    %v531 = vld [vmem:[%s530] ss:$-1 sm:$0xff]
    %v532 = vrot.slane %v531, 2
    %v533 = vlaneseq
    %v534 = vshrl.u32 %v533, 7
    %vm535 = vcmp.lt.s32.totalorder %v534, 6
    %536 = vst.msk [vmem:[%s522] sm:$0xff] %vm535, %v532
    %s537 = scalar_lea.vmem %s522, 8 [#allocation1]
    %s538 = scalar_lea.vmem %s523, 7 [#allocation0]
    %v539 = vld [vmem:[%s538] ss:$-1 sm:$0xff]
    %v540 = vrot.slane %v539, 2
    %541 = vst [vmem:[%s537] sm:$0xff] %v540
    %s542 = scalar_lea.vmem %s523, 8 [#allocation0]
    %s543 = scalar_lea.vmem %s542, 7 [#allocation0]
    %v544 = vld [vmem:[%s543] ss:$-1 sm:$0xff]
    %v545 = vrot.slane %v544, 2
    %v546 = vlaneseq
    %v547 = vshrl.u32 %v546, 7
    %vm548 = vcmp.lt.s32.totalorder %v547, 6
    %549 = vst.msk [vmem:[%s537] sm:$0xff] %vm548, %v545
    %s550 = scalar_lea.vmem [#allocation1], 224
    %s551 = scalar_lea.vmem [#allocation0], 336
    %s552 = scalar_lea.vmem %s551, 8 [#allocation0]
    %s553 = scalar_lea.vmem %s552, 7 [#allocation0]
    %v554 = vld [vmem:[%s553] ss:$-1 sm:$0xff]
    %v555 = vrot.slane %v554, 2
    %556 = vst [vmem:[%s550] sm:$0xff] %v555
    %s557 = scalar_lea.vmem %s551, 16 [#allocation0]
    %s558 = scalar_lea.vmem %s557, 7 [#allocation0]
    %v559 = vld [vmem:[%s558] ss:$-1 sm:$0xff]
    %v560 = vrot.slane %v559, 2
    %v561 = vlaneseq
    %v562 = vshrl.u32 %v561, 7
    %vm563 = vcmp.lt.s32.totalorder %v562, 6
    %564 = vst.msk [vmem:[%s550] sm:$0xff] %vm563, %v560
    %s565 = scalar_lea.vmem %s550, 8 [#allocation1]
    %s566 = scalar_lea.vmem %s551, 7 [#allocation0]
    %v567 = vld [vmem:[%s566] ss:$-1 sm:$0xff]
    %v568 = vrot.slane %v567, 2
    %569 = vst [vmem:[%s565] sm:$0xff] %v568
    %s570 = scalar_lea.vmem %s551, 8 [#allocation0]
    %s571 = scalar_lea.vmem %s570, 7 [#allocation0]
    %v572 = vld [vmem:[%s571] ss:$-1 sm:$0xff]
    %v573 = vrot.slane %v572, 2
    %v574 = vlaneseq
    %v575 = vshrl.u32 %v574, 7
    %vm576 = vcmp.lt.s32.totalorder %v575, 6
    %577 = vst.msk [vmem:[%s565] sm:$0xff] %vm576, %v573
    %s578 = scalar_lea.vmem [#allocation1], 240
    %s579 = scalar_lea.vmem [#allocation0], 360
    %s580 = scalar_lea.vmem %s579, 8 [#allocation0]
    %s581 = scalar_lea.vmem %s580, 7 [#allocation0]
    %v582 = vld [vmem:[%s581] ss:$-1 sm:$0xff]
    %v583 = vrot.slane %v582, 2
    %584 = vst [vmem:[%s578] sm:$0xff] %v583
    %s585 = scalar_lea.vmem %s579, 16 [#allocation0]
    %s586 = scalar_lea.vmem %s585, 7 [#allocation0]
    %v587 = vld [vmem:[%s586] ss:$-1 sm:$0xff]
    %v588 = vrot.slane %v587, 2
    %v589 = vlaneseq
    %v590 = vshrl.u32 %v589, 7
    %vm591 = vcmp.lt.s32.totalorder %v590, 6
    %592 = vst.msk [vmem:[%s578] sm:$0xff] %vm591, %v588
    %s593 = scalar_lea.vmem %s578, 8 [#allocation1]
    %s594 = scalar_lea.vmem %s579, 7 [#allocation0]
    %v595 = vld [vmem:[%s594] ss:$-1 sm:$0xff]
    %v596 = vrot.slane %v595, 2
    %597 = vst [vmem:[%s593] sm:$0xff] %v596
    %s598 = scalar_lea.vmem %s579, 8 [#allocation0]
    %s599 = scalar_lea.vmem %s598, 7 [#allocation0]
    %v600 = vld [vmem:[%s599] ss:$-1 sm:$0xff]
    %v601 = vrot.slane %v600, 2
    %v602 = vlaneseq
    %v603 = vshrl.u32 %v602, 7
    %vm604 = vcmp.lt.s32.totalorder %v603, 6
    %605 = vst.msk [vmem:[%s593] sm:$0xff] %vm604, %v601
    // Predicated region
    $region36: #{reverse.9} parent=1 // pred_check
      _
    $region37: #{reverse.9} parent=1 // pred_check_branch
      %607 = sbr.rel (0) target = $region39
    $region38: #{reverse.9} parent=1 // pred_region
      // Predicated region
      $region40: #{reverse.9} parent=38 // pred_check
        _
      $region41: #{reverse.9} parent=38 // pred_check_branch
        %609 = sbr.rel (0) target = $region43
      $region42: #{reverse.9} parent=38 // pred_region
        // Predicated region
        $region55: #{reverse.9} parent=42 // pred_check
          _
        $region56: #{reverse.9} parent=42 // pred_check_branch
          %687 = sbr.rel (0) target = $region58
        $region57: #{reverse.9} parent=42 // pred_region
          loop: start=0, step=1, limit=1
          $region59: #{reverse.9} parent=57 // loop_pre_header
            _
          $region60: #{reverse.9} parent=57 // loop_header
            %s689 = sphi 0, %s693
            %p690 = scmp.ge.s32.totalorder %s689, 1
            %s694 = sphi [#allocation1], [#allocation1]
            %s695 = sphi %s1, %s1
          $region61: #{reverse.9} parent=57 // loop_header_branch
            %692 = sbr.rel (%p690) target = $region65
          $region62: #{reverse.9} parent=57 // loop_body
            %v696 = vld [vmem:[%s694] sm:$0xff]
            %697 = vst [vmem:[%s695] sm:$0xff] %v696
            %v698 = vld [vmem:[%s694 + $0x8] sm:$0xff]
            %699 = vst [vmem:[%s695 + $0x8] sm:$0xff] %v698
            %v700 = vld [vmem:[%s694 + $0x10] sm:$0xff]
            %701 = vst [vmem:[%s695 + $0x10] sm:$0xff] %v700
            %v702 = vld [vmem:[%s694 + $0x18] sm:$0xff]
            %703 = vst [vmem:[%s695 + $0x18] sm:$0xff] %v702
            %v704 = vld [vmem:[%s694 + $0x20] sm:$0xff]
            %705 = vst [vmem:[%s695 + $0x20] sm:$0xff] %v704
            %v706 = vld [vmem:[%s694 + $0x28] sm:$0xff]
            %707 = vst [vmem:[%s695 + $0x28] sm:$0xff] %v706
            %v708 = vld [vmem:[%s694 + $0x30] sm:$0xff]
            %709 = vst [vmem:[%s695 + $0x30] sm:$0xff] %v708
            %v710 = vld [vmem:[%s694 + $0x38] sm:$0xff]
            %711 = vst [vmem:[%s695 + $0x38] sm:$0xff] %v710
            %v712 = vld [vmem:[%s694 + $0x40] sm:$0xff]
            %713 = vst [vmem:[%s695 + $0x40] sm:$0xff] %v712
            %v714 = vld [vmem:[%s694 + $0x48] sm:$0xff]
            %715 = vst [vmem:[%s695 + $0x48] sm:$0xff] %v714
            %v716 = vld [vmem:[%s694 + $0x50] sm:$0xff]
            %717 = vst [vmem:[%s695 + $0x50] sm:$0xff] %v716
            %v718 = vld [vmem:[%s694 + $0x58] sm:$0xff]
            %719 = vst [vmem:[%s695 + $0x58] sm:$0xff] %v718
            %v720 = vld [vmem:[%s694 + $0x60] sm:$0xff]
            %721 = vst [vmem:[%s695 + $0x60] sm:$0xff] %v720
            %v722 = vld [vmem:[%s694 + $0x68] sm:$0xff]
            %723 = vst [vmem:[%s695 + $0x68] sm:$0xff] %v722
            %v724 = vld [vmem:[%s694 + $0x70] sm:$0xff]
            %725 = vst [vmem:[%s695 + $0x70] sm:$0xff] %v724
            %v726 = vld [vmem:[%s694 + $0x78] sm:$0xff]
            %727 = vst [vmem:[%s695 + $0x78] sm:$0xff] %v726
            %v728 = vld [vmem:[%s694 + $0x80] sm:$0xff]
            %729 = vst [vmem:[%s695 + $0x80] sm:$0xff] %v728
            %v730 = vld [vmem:[%s694 + $0x88] sm:$0xff]
            %731 = vst [vmem:[%s695 + $0x88] sm:$0xff] %v730
            %v732 = vld [vmem:[%s694 + $0x90] sm:$0xff]
            %733 = vst [vmem:[%s695 + $0x90] sm:$0xff] %v732
            %v734 = vld [vmem:[%s694 + $0x98] sm:$0xff]
            %735 = vst [vmem:[%s695 + $0x98] sm:$0xff] %v734
            %v736 = vld [vmem:[%s694 + $0xa0] sm:$0xff]
            %737 = vst [vmem:[%s695 + $0xa0] sm:$0xff] %v736
            %v738 = vld [vmem:[%s694 + $0xa8] sm:$0xff]
            %739 = vst [vmem:[%s695 + $0xa8] sm:$0xff] %v738
            %v740 = vld [vmem:[%s694 + $0xb0] sm:$0xff]
            %741 = vst [vmem:[%s695 + $0xb0] sm:$0xff] %v740
            %v742 = vld [vmem:[%s694 + $0xb8] sm:$0xff]
            %743 = vst [vmem:[%s695 + $0xb8] sm:$0xff] %v742
            %v744 = vld [vmem:[%s694 + $0xc0] sm:$0xff]
            %745 = vst [vmem:[%s695 + $0xc0] sm:$0xff] %v744
            %v746 = vld [vmem:[%s694 + $0xc8] sm:$0xff]
            %747 = vst [vmem:[%s695 + $0xc8] sm:$0xff] %v746
            %v748 = vld [vmem:[%s694 + $0xd0] sm:$0xff]
            %749 = vst [vmem:[%s695 + $0xd0] sm:$0xff] %v748
            %v750 = vld [vmem:[%s694 + $0xd8] sm:$0xff]
            %751 = vst [vmem:[%s695 + $0xd8] sm:$0xff] %v750
            %v752 = vld [vmem:[%s694 + $0xe0] sm:$0xff]
            %753 = vst [vmem:[%s695 + $0xe0] sm:$0xff] %v752
            %v754 = vld [vmem:[%s694 + $0xe8] sm:$0xff]
            %755 = vst [vmem:[%s695 + $0xe8] sm:$0xff] %v754
            %v756 = vld [vmem:[%s694 + $0xf0] sm:$0xff]
            %757 = vst [vmem:[%s695 + $0xf0] sm:$0xff] %v756
            %v758 = vld [vmem:[%s694 + $0xf8] sm:$0xff]
            %759 = vst [vmem:[%s695 + $0xf8] sm:$0xff] %v758
          $region63: #{reverse.9} parent=57 // loop_footer
            %s693 = sadd.s32 1, %s689
          $region64: #{reverse.9} parent=57 // loop_footer_branch
            %688 = sbr.rel target = $region60
          $region65: #{reverse.9} parent=57 // loop_exit
            _
        $region58: #{reverse.9} parent=42 // pred_fallthru
          _
        // Predicated region
        $region66: #{reverse.9} parent=42 // pred_check
          _
        $region67: #{reverse.9} parent=42 // pred_check_branch
          %761 = sbr.rel target = $region69
        $region68: #{reverse.9} parent=42 // pred_region
          _
        $region69: #{reverse.9} parent=42 // pred_fallthru
          _
      $region43: #{reverse.9} parent=38 // pred_fallthru
        _
      // Predicated region
      $region44: #{reverse.9} parent=38 // pred_check
        _
      $region45: #{reverse.9} parent=38 // pred_check_branch
        %611 = sbr.rel target = $region47
      $region46: #{reverse.9} parent=38 // pred_region
        %s613 = ssub.s32 256, 1
        loop: start=0, step=1, limit=1
        $region48: #{reverse.9} parent=46 // loop_pre_header
          _
        $region49: #{reverse.9} parent=46 // loop_header
          %s615 = sphi 0, %s619
          %p616 = scmp.ge.s32.totalorder %s615, 1
          %s620 = sphi [#allocation1], [#allocation1]
          %s621 = sphi %s1, %s1
        $region50: #{reverse.9} parent=46 // loop_header_branch
          %618 = sbr.rel (%p616) target = $region54
        $region51: #{reverse.9} parent=46 // loop_body
          %v622 = vld [vmem:[%s620] sm:%s613]
          %623 = vst [vmem:[%s621] sm:%s613] %v622
          %v624 = vld [vmem:[%s620 + $0x8] sm:%s613]
          %625 = vst [vmem:[%s621 + $0x8] sm:%s613] %v624
          %v626 = vld [vmem:[%s620 + $0x10] sm:%s613]
          %627 = vst [vmem:[%s621 + $0x10] sm:%s613] %v626
          %v628 = vld [vmem:[%s620 + $0x18] sm:%s613]
          %629 = vst [vmem:[%s621 + $0x18] sm:%s613] %v628
          %v630 = vld [vmem:[%s620 + $0x20] sm:%s613]
          %631 = vst [vmem:[%s621 + $0x20] sm:%s613] %v630
          %v632 = vld [vmem:[%s620 + $0x28] sm:%s613]
          %633 = vst [vmem:[%s621 + $0x28] sm:%s613] %v632
          %v634 = vld [vmem:[%s620 + $0x30] sm:%s613]
          %635 = vst [vmem:[%s621 + $0x30] sm:%s613] %v634
          %v636 = vld [vmem:[%s620 + $0x38] sm:%s613]
          %637 = vst [vmem:[%s621 + $0x38] sm:%s613] %v636
          %v638 = vld [vmem:[%s620 + $0x40] sm:%s613]
          %639 = vst [vmem:[%s621 + $0x40] sm:%s613] %v638
          %v640 = vld [vmem:[%s620 + $0x48] sm:%s613]
          %641 = vst [vmem:[%s621 + $0x48] sm:%s613] %v640
          %v642 = vld [vmem:[%s620 + $0x50] sm:%s613]
          %643 = vst [vmem:[%s621 + $0x50] sm:%s613] %v642
          %v644 = vld [vmem:[%s620 + $0x58] sm:%s613]
          %645 = vst [vmem:[%s621 + $0x58] sm:%s613] %v644
          %v646 = vld [vmem:[%s620 + $0x60] sm:%s613]
          %647 = vst [vmem:[%s621 + $0x60] sm:%s613] %v646
          %v648 = vld [vmem:[%s620 + $0x68] sm:%s613]
          %649 = vst [vmem:[%s621 + $0x68] sm:%s613] %v648
          %v650 = vld [vmem:[%s620 + $0x70] sm:%s613]
          %651 = vst [vmem:[%s621 + $0x70] sm:%s613] %v650
          %v652 = vld [vmem:[%s620 + $0x78] sm:%s613]
          %653 = vst [vmem:[%s621 + $0x78] sm:%s613] %v652
          %v654 = vld [vmem:[%s620 + $0x80] sm:%s613]
          %655 = vst [vmem:[%s621 + $0x80] sm:%s613] %v654
          %v656 = vld [vmem:[%s620 + $0x88] sm:%s613]
          %657 = vst [vmem:[%s621 + $0x88] sm:%s613] %v656
          %v658 = vld [vmem:[%s620 + $0x90] sm:%s613]
          %659 = vst [vmem:[%s621 + $0x90] sm:%s613] %v658
          %v660 = vld [vmem:[%s620 + $0x98] sm:%s613]
          %661 = vst [vmem:[%s621 + $0x98] sm:%s613] %v660
          %v662 = vld [vmem:[%s620 + $0xa0] sm:%s613]
          %663 = vst [vmem:[%s621 + $0xa0] sm:%s613] %v662
          %v664 = vld [vmem:[%s620 + $0xa8] sm:%s613]
          %665 = vst [vmem:[%s621 + $0xa8] sm:%s613] %v664
          %v666 = vld [vmem:[%s620 + $0xb0] sm:%s613]
          %667 = vst [vmem:[%s621 + $0xb0] sm:%s613] %v666
          %v668 = vld [vmem:[%s620 + $0xb8] sm:%s613]
          %669 = vst [vmem:[%s621 + $0xb8] sm:%s613] %v668
          %v670 = vld [vmem:[%s620 + $0xc0] sm:%s613]
          %671 = vst [vmem:[%s621 + $0xc0] sm:%s613] %v670
          %v672 = vld [vmem:[%s620 + $0xc8] sm:%s613]
          %673 = vst [vmem:[%s621 + $0xc8] sm:%s613] %v672
          %v674 = vld [vmem:[%s620 + $0xd0] sm:%s613]
          %675 = vst [vmem:[%s621 + $0xd0] sm:%s613] %v674
          %v676 = vld [vmem:[%s620 + $0xd8] sm:%s613]
          %677 = vst [vmem:[%s621 + $0xd8] sm:%s613] %v676
          %v678 = vld [vmem:[%s620 + $0xe0] sm:%s613]
          %679 = vst [vmem:[%s621 + $0xe0] sm:%s613] %v678
          %v680 = vld [vmem:[%s620 + $0xe8] sm:%s613]
          %681 = vst [vmem:[%s621 + $0xe8] sm:%s613] %v680
          %v682 = vld [vmem:[%s620 + $0xf0] sm:%s613]
          %683 = vst [vmem:[%s621 + $0xf0] sm:%s613] %v682
          %v684 = vld [vmem:[%s620 + $0xf8] sm:%s613]
          %685 = vst [vmem:[%s621 + $0xf8] sm:%s613] %v684
        $region52: #{reverse.9} parent=46 // loop_footer
          %s619 = sadd.s32 1, %s615
        $region53: #{reverse.9} parent=46 // loop_footer_branch
          %614 = sbr.rel target = $region49
        $region54: #{reverse.9} parent=46 // loop_exit
          _
      $region47: #{reverse.9} parent=38 // pred_fallthru
        _
    $region39: #{reverse.9} parent=1 // pred_fallthru
      _
    %762 = vnop

// kernel: _lambda_.4
$region0: #{_lambda_.4}
  #allocation0 [shape = 'u32[]', space=smem, size = 0x4, offset = 0x4, fixed_abs, tag = 'smem constant byte address 0x4 - core index']
  #allocation1 [shape = 'u32[144,128]{1,0:T(1,128)}', space=vmem, size = 0x12000, scoped, tag = 'internal scratch']
  %s0 = inlined_call_operand.vmem [shape: f32[2,36,2,8], index: 0, kind: input, shape index: {}]
  %s1 = inlined_call_operand.vmem [shape: f32[2,36,2,8], index: 1, kind: input, shape index: {}]
  %s2 = inlined_call_operand.vmem [shape: f32[2,36,8,8], index: 2, kind: input, shape index: {}]
  %s3 = inlined_call_operand.vmem [shape: f32[2,36,8,8], index: 3, kind: input, shape index: {}]
  %s4 = inlined_call_operand.vmem [shape: f32[2,36,8,8], index: 4, kind: input, shape index: {}]
  %s5 = inlined_call_operand.vmem [shape: f32[2,36,2,8], index: 5, kind: output, shape index: {0}]
  %s6 = inlined_call_operand.vmem [shape: f32[2,36,2,8], index: 6, kind: output, shape index: {1}]
  %7 = xla_tuple %s5, %s6
  %s8 = sld [smem:[#allocation0]]
  $region61: #{_lambda_.4} parent=0
    _
  %s10 = ssub.s32 1, %s8
  %s11 = scalar_select 0, %s10, %s8
  loop: start=0, step=1, limit=4
  $region2: #{_lambda_.4} parent=0 // loop_pre_header
    _
  $region3: #{_lambda_.4} parent=0 // loop_header
    %s13 = sphi 0, %s17
    %p14 = scmp.ge.s32.totalorder %s13, 4
    %s20 = sphi 0, %s32
    %s21 = sphi 0, %s28
    %s22 = sphi 0, %s20
    %s23 = sphi 0, %s21
    %s24 = sphi 0, %s22
    %s25 = sphi 0, %s23
    %s37 = sphi 0, %s39
    %s40 = sphi 0, %s37
    %s41 = sphi 0, %s40
    %s57 = sphi 0, %s41
    %s65 = sphi 0, %s67
    %s68 = sphi 0, %s65
    %s69 = sphi 0, %s68
    %s85 = sphi 0, %s69
    %s93 = sphi 0, %s95
    %s96 = sphi 0, %s93
    %s97 = sphi 0, %s96
    %s113 = sphi 0, %s97
    %s121 = sphi 0, %s123
    %s124 = sphi 0, %s121
    %s125 = sphi 0, %s124
    %s141 = sphi 0, %s125
    %s149 = sphi 0, %s151
    %s152 = sphi 0, %s149
    %s153 = sphi 0, %s152
    %s169 = sphi 0, %s153
    %s177 = sphi 0, %s179
    %s180 = sphi 0, %s177
    %s181 = sphi 0, %s180
    %s197 = sphi 0, %s181
    %s205 = sphi 0, %s207
    %s208 = sphi 0, %s205
    %s209 = sphi 0, %s208
    %s225 = sphi 0, %s209
  $region4: #{_lambda_.4} parent=0 // loop_header_branch
    %16 = sbr.rel (%p14) target = $region8
  $region5: #{_lambda_.4} parent=0 // loop_body
    %s18 = ssub.s32 %s13, 1
    %s19 = ssub.s32 %s13, 2
    %s26 = sadd.s32 1, %s21
    %p27 = scmp.ge.s32.totalorder %s26, 1
    %s28 = scalar_select %p27, 0, %s26
    %s29 = sadd.s32 1, %s20
    %s30 = scalar_select %p27, %s29, %s20
    %p31 = scmp.ge.s32.totalorder %s30, 2
    %s32 = scalar_select %p31, 0, %s30
    %s33 = ssub.s32 %s20, %s32
    %s34 = ssub.s32 %s21, %s28
    %s35 = sor.u32 %s33, %s34
    %p36 = scmp.eq.s32.totalorder %s35, 0
    %s38 = sadd.s32 %s37, 1
    %s39 = scalar_select %p36, %s37, %s38
    %p42 = pneg %p36
    %p43 = scmp.eq.s32.totalorder %s13, 1
    %p44 = por %p42, %p43
    %p45 = scmp.ne.s32.totalorder %s37, %s40
    %p46 = scmp.eq.s32.totalorder %s13, 0
    %p47 = por %p45, %p46
    %p48 = scmp.ne.s32.totalorder %s37, %s40
    %p49 = scmp.eq.s32.totalorder %s18, 1
    %p50 = por %p48, %p49
    %p51 = scmp.ne.s32.totalorder %s40, %s41
    %p52 = scmp.eq.s32.totalorder %s18, 0
    %p53 = por %p51, %p52
    %p54 = scmp.ne.s32.totalorder %s40, %s41
    %p55 = scmp.eq.s32.totalorder %s19, 1
    %p56 = por %p54, %p55
    %p58 = scmp.ne.s32.totalorder %s41, %s57
    %p59 = scmp.eq.s32.totalorder %s19, 0
    %p60 = por %p58, %p59
    %s61 = ssub.s32 %s20, %s32
    %s62 = ssub.s32 %s21, %s28
    %s63 = sor.u32 %s61, %s62
    %p64 = scmp.eq.s32.totalorder %s63, 0
    %s66 = sadd.s32 %s65, 1
    %s67 = scalar_select %p64, %s65, %s66
    %p70 = pneg %p64
    %p71 = scmp.eq.s32.totalorder %s13, 1
    %p72 = por %p70, %p71
    %p73 = scmp.ne.s32.totalorder %s65, %s68
    %p74 = scmp.eq.s32.totalorder %s13, 0
    %p75 = por %p73, %p74
    %p76 = scmp.ne.s32.totalorder %s65, %s68
    %p77 = scmp.eq.s32.totalorder %s18, 1
    %p78 = por %p76, %p77
    %p79 = scmp.ne.s32.totalorder %s68, %s69
    %p80 = scmp.eq.s32.totalorder %s18, 0
    %p81 = por %p79, %p80
    %p82 = scmp.ne.s32.totalorder %s68, %s69
    %p83 = scmp.eq.s32.totalorder %s19, 1
    %p84 = por %p82, %p83
    %p86 = scmp.ne.s32.totalorder %s69, %s85
    %p87 = scmp.eq.s32.totalorder %s19, 0
    %p88 = por %p86, %p87
    %s89 = ssub.s32 %s20, %s32
    %s90 = ssub.s32 %s21, %s28
    %s91 = sor.u32 %s89, %s90
    %p92 = scmp.eq.s32.totalorder %s91, 0
    %s94 = sadd.s32 %s93, 1
    %s95 = scalar_select %p92, %s93, %s94
    %p98 = pneg %p92
    %p99 = scmp.eq.s32.totalorder %s13, 1
    %p100 = por %p98, %p99
    %p101 = scmp.ne.s32.totalorder %s93, %s96
    %p102 = scmp.eq.s32.totalorder %s13, 0
    %p103 = por %p101, %p102
    %p104 = scmp.ne.s32.totalorder %s93, %s96
    %p105 = scmp.eq.s32.totalorder %s18, 1
    %p106 = por %p104, %p105
    %p107 = scmp.ne.s32.totalorder %s96, %s97
    %p108 = scmp.eq.s32.totalorder %s18, 0
    %p109 = por %p107, %p108
    %p110 = scmp.ne.s32.totalorder %s96, %s97
    %p111 = scmp.eq.s32.totalorder %s19, 1
    %p112 = por %p110, %p111
    %p114 = scmp.ne.s32.totalorder %s97, %s113
    %p115 = scmp.eq.s32.totalorder %s19, 0
    %p116 = por %p114, %p115
    %s117 = ssub.s32 %s20, %s32
    %s118 = ssub.s32 %s21, %s28
    %s119 = sor.u32 %s117, %s118
    %p120 = scmp.eq.s32.totalorder %s119, 0
    %s122 = sadd.s32 %s121, 1
    %s123 = scalar_select %p120, %s121, %s122
    %p126 = pneg %p120
    %p127 = scmp.eq.s32.totalorder %s13, 1
    %p128 = por %p126, %p127
    %p129 = scmp.ne.s32.totalorder %s121, %s124
    %p130 = scmp.eq.s32.totalorder %s13, 0
    %p131 = por %p129, %p130
    %p132 = scmp.ne.s32.totalorder %s121, %s124
    %p133 = scmp.eq.s32.totalorder %s18, 1
    %p134 = por %p132, %p133
    %p135 = scmp.ne.s32.totalorder %s124, %s125
    %p136 = scmp.eq.s32.totalorder %s18, 0
    %p137 = por %p135, %p136
    %p138 = scmp.ne.s32.totalorder %s124, %s125
    %p139 = scmp.eq.s32.totalorder %s19, 1
    %p140 = por %p138, %p139
    %p142 = scmp.ne.s32.totalorder %s125, %s141
    %p143 = scmp.eq.s32.totalorder %s19, 0
    %p144 = por %p142, %p143
    %s145 = ssub.s32 %s20, %s32
    %s146 = ssub.s32 %s21, %s28
    %s147 = sor.u32 %s145, %s146
    %p148 = scmp.eq.s32.totalorder %s147, 0
    %s150 = sadd.s32 %s149, 1
    %s151 = scalar_select %p148, %s149, %s150
    %p154 = pneg %p148
    %p155 = scmp.eq.s32.totalorder %s13, 1
    %p156 = por %p154, %p155
    %p157 = scmp.ne.s32.totalorder %s149, %s152
    %p158 = scmp.eq.s32.totalorder %s13, 0
    %p159 = por %p157, %p158
    %p160 = scmp.ne.s32.totalorder %s149, %s152
    %p161 = scmp.eq.s32.totalorder %s18, 1
    %p162 = por %p160, %p161
    %p163 = scmp.ne.s32.totalorder %s152, %s153
    %p164 = scmp.eq.s32.totalorder %s18, 0
    %p165 = por %p163, %p164
    %p166 = scmp.ne.s32.totalorder %s152, %s153
    %p167 = scmp.eq.s32.totalorder %s19, 1
    %p168 = por %p166, %p167
    %p170 = scmp.ne.s32.totalorder %s153, %s169
    %p171 = scmp.eq.s32.totalorder %s19, 0
    %p172 = por %p170, %p171
    %s173 = ssub.s32 %s20, %s32
    %s174 = ssub.s32 %s21, %s28
    %s175 = sor.u32 %s173, %s174
    %p176 = scmp.eq.s32.totalorder %s175, 0
    %s178 = sadd.s32 %s177, 1
    %s179 = scalar_select %p176, %s177, %s178
    %p182 = pneg %p176
    %p183 = scmp.eq.s32.totalorder %s13, 1
    %p184 = por %p182, %p183
    %p185 = scmp.ne.s32.totalorder %s177, %s180
    %p186 = scmp.eq.s32.totalorder %s13, 0
    %p187 = por %p185, %p186
    %p188 = scmp.ne.s32.totalorder %s177, %s180
    %p189 = scmp.eq.s32.totalorder %s18, 1
    %p190 = por %p188, %p189
    %p191 = scmp.ne.s32.totalorder %s180, %s181
    %p192 = scmp.eq.s32.totalorder %s18, 0
    %p193 = por %p191, %p192
    %p194 = scmp.ne.s32.totalorder %s180, %s181
    %p195 = scmp.eq.s32.totalorder %s19, 1
    %p196 = por %p194, %p195
    %p198 = scmp.ne.s32.totalorder %s181, %s197
    %p199 = scmp.eq.s32.totalorder %s19, 0
    %p200 = por %p198, %p199
    %s201 = ssub.s32 %s20, %s32
    %s202 = ssub.s32 %s21, %s28
    %s203 = sor.u32 %s201, %s202
    %p204 = scmp.eq.s32.totalorder %s203, 0
    %s206 = sadd.s32 %s205, 1
    %s207 = scalar_select %p204, %s205, %s206
    %p210 = pneg %p204
    %p211 = scmp.eq.s32.totalorder %s13, 1
    %p212 = por %p210, %p211
    %p213 = scmp.ne.s32.totalorder %s205, %s208
    %p214 = scmp.eq.s32.totalorder %s13, 0
    %p215 = por %p213, %p214
    %p216 = scmp.ne.s32.totalorder %s205, %s208
    %p217 = scmp.eq.s32.totalorder %s18, 1
    %p218 = por %p216, %p217
    %p219 = scmp.ne.s32.totalorder %s208, %s209
    %p220 = scmp.eq.s32.totalorder %s18, 0
    %p221 = por %p219, %p220
    %p222 = scmp.ne.s32.totalorder %s208, %s209
    %p223 = scmp.eq.s32.totalorder %s19, 1
    %p224 = por %p222, %p223
    %p226 = scmp.ne.s32.totalorder %s209, %s225
    %p227 = scmp.eq.s32.totalorder %s19, 0
    %p228 = por %p226, %p227
    %p229 = scmp.le.s32.totalorder 1, %s13
    %p230 = scmp.lt.s32.totalorder %s13, 3
    %p231 = pnand %p229, %p230
    %p232 = pneg %p231
    // Predicated region
    $region9: #{_lambda_.4} parent=5 // pred_check
      _
    $region10: #{_lambda_.4} parent=5 // pred_check_branch
      %234 = sbr.rel (%p231) target = $region12
    $region11: #{_lambda_.4} parent=5 // pred_region
      %s235 = ssub.s32 %s13, 1
    $region12: #{_lambda_.4} parent=5 // pred_fallthru
      _
    %p236 = scmp.lt.s32.totalorder %s13, 2
    // Predicated region
    $region13: #{_lambda_.4} parent=5 // pred_check
      %p237 = pneg %p236
    $region14: #{_lambda_.4} parent=5 // pred_check_branch
      %239 = sbr.rel (%p237) target = $region16
    $region15: #{_lambda_.4} parent=5 // pred_region
      // Predicated region
      $region17: #{_lambda_.4} parent=15 // pred_check
        %p240 = pneg %p47
      $region18: #{_lambda_.4} parent=15 // pred_check_branch
        %242 = sbr.rel (%p240) target = $region20
      $region19: #{_lambda_.4} parent=15 // pred_region
        %s243 = smul.u32 36, %s21
        %p244 = scmp.lt.s32.totalorder %s20, 1
        %s245 = scalar_select %p244, %s20, 1
        %p246 = scmp.lt.s32.totalorder %s243, 35
        %s247 = scalar_select %p246, %s243, 35
        %s248 = smul.addr %s245, 36
        %s249 = sadd.s32 %s247, %s248
        %s250 = smul.addr %s249, 2
        %s251 = scalar_lea.vmem %s0, %s250
        %s252 = smul.u32 36, %s21
      $region20: #{_lambda_.4} parent=15 // pred_fallthru
        _
      // Predicated region
      $region21: #{_lambda_.4} parent=15 // pred_check
        %p253 = pneg %p75
      $region22: #{_lambda_.4} parent=15 // pred_check_branch
        %255 = sbr.rel (%p253) target = $region24
      $region23: #{_lambda_.4} parent=15 // pred_region
        %s256 = smul.u32 36, %s21
        %p257 = scmp.lt.s32.totalorder %s20, 1
        %s258 = scalar_select %p257, %s20, 1
        %p259 = scmp.lt.s32.totalorder %s256, 35
        %s260 = scalar_select %p259, %s256, 35
        %s261 = smul.addr %s258, 36
        %s262 = sadd.s32 %s260, %s261
        %s263 = smul.addr %s262, 2
        %s264 = scalar_lea.vmem %s1, %s263
        %s265 = smul.u32 36, %s21
      $region24: #{_lambda_.4} parent=15 // pred_fallthru
        _
      // Predicated region
      $region25: #{_lambda_.4} parent=15 // pred_check
        %p266 = pneg %p103
      $region26: #{_lambda_.4} parent=15 // pred_check_branch
        %268 = sbr.rel (%p266) target = $region28
      $region27: #{_lambda_.4} parent=15 // pred_region
        %s269 = smul.u32 36, %s21
        %p270 = scmp.lt.s32.totalorder %s20, 1
        %s271 = scalar_select %p270, %s20, 1
        %p272 = scmp.lt.s32.totalorder %s269, 35
        %s273 = scalar_select %p272, %s269, 35
        %s274 = smul.addr %s271, 36
        %s275 = sadd.s32 %s273, %s274
        %s276 = smul.addr %s275, 8
        %s277 = scalar_lea.vmem %s2, %s276
        %s278 = smul.u32 36, %s21
      $region28: #{_lambda_.4} parent=15 // pred_fallthru
        _
      // Predicated region
      $region29: #{_lambda_.4} parent=15 // pred_check
        %p279 = pneg %p131
      $region30: #{_lambda_.4} parent=15 // pred_check_branch
        %281 = sbr.rel (%p279) target = $region32
      $region31: #{_lambda_.4} parent=15 // pred_region
        %s282 = smul.u32 36, %s21
        %p283 = scmp.lt.s32.totalorder %s20, 1
        %s284 = scalar_select %p283, %s20, 1
        %p285 = scmp.lt.s32.totalorder %s282, 35
        %s286 = scalar_select %p285, %s282, 35
        %s287 = smul.addr %s284, 36
        %s288 = sadd.s32 %s286, %s287
        %s289 = smul.addr %s288, 8
        %s290 = scalar_lea.vmem %s3, %s289
        %s291 = smul.u32 36, %s21
      $region32: #{_lambda_.4} parent=15 // pred_fallthru
        _
      // Predicated region
      $region33: #{_lambda_.4} parent=15 // pred_check
        %p292 = pneg %p159
      $region34: #{_lambda_.4} parent=15 // pred_check_branch
        %294 = sbr.rel (%p292) target = $region36
      $region35: #{_lambda_.4} parent=15 // pred_region
        %s295 = smul.u32 36, %s21
        %p296 = scmp.lt.s32.totalorder %s20, 1
        %s297 = scalar_select %p296, %s20, 1
        %p298 = scmp.lt.s32.totalorder %s295, 35
        %s299 = scalar_select %p298, %s295, 35
        %s300 = smul.addr %s297, 36
        %s301 = sadd.s32 %s299, %s300
        %s302 = smul.addr %s301, 8
        %s303 = scalar_lea.vmem %s4, %s302
        %s304 = smul.u32 36, %s21
      $region36: #{_lambda_.4} parent=15 // pred_fallthru
        _
    $region16: #{_lambda_.4} parent=5 // pred_fallthru
      _
    %p305 = scmp.le.s32.totalorder 1, %s13
    %p306 = scmp.lt.s32.totalorder %s13, 3
    %p307 = pnand %p305, %p306
    %p308 = pneg %p307
    // Predicated region
    $region37: #{_lambda_.4} parent=5 // pred_check
      _
    $region38: #{_lambda_.4} parent=5 // pred_check_branch
      %310 = sbr.rel (%p307) target = $region40
    $region39: #{_lambda_.4} parent=5 // pred_region
      %s311 = ssub.s32 %s13, 1
      %s312 = smul.u32 36, %s23
      %p313 = scmp.lt.s32.totalorder %s22, 1
      %s314 = scalar_select %p313, %s22, 1
      %p315 = scmp.lt.s32.totalorder %s312, 35
      %s316 = scalar_select %p315, %s312, 35
      %s317 = smul.addr %s314, 36
      %s318 = sadd.s32 %s316, %s317
      %s319 = smul.addr %s318, 2
      %s320 = scalar_lea.vmem %s0, %s319
      %p321 = pneg %p53
      %p322 = pneg %p50
      %s323 = smul.u32 36, %s23
      %p324 = scmp.lt.s32.totalorder %s22, 1
      %s325 = scalar_select %p324, %s22, 1
      %p326 = scmp.lt.s32.totalorder %s323, 35
      %s327 = scalar_select %p326, %s323, 35
      %s328 = smul.addr %s325, 36
      %s329 = sadd.s32 %s327, %s328
      %s330 = smul.addr %s329, 2
      %s331 = scalar_lea.vmem %s1, %s330
      %p332 = pneg %p81
      %p333 = pneg %p78
      %s334 = smul.u32 36, %s23
      %p335 = scmp.lt.s32.totalorder %s22, 1
      %s336 = scalar_select %p335, %s22, 1
      %p337 = scmp.lt.s32.totalorder %s334, 35
      %s338 = scalar_select %p337, %s334, 35
      %s339 = smul.addr %s336, 36
      %s340 = sadd.s32 %s338, %s339
      %s341 = smul.addr %s340, 8
      %s342 = scalar_lea.vmem %s2, %s341
      %p343 = pneg %p109
      %p344 = pneg %p106
      %s345 = smul.u32 36, %s23
      %p346 = scmp.lt.s32.totalorder %s22, 1
      %s347 = scalar_select %p346, %s22, 1
      %p348 = scmp.lt.s32.totalorder %s345, 35
      %s349 = scalar_select %p348, %s345, 35
      %s350 = smul.addr %s347, 36
      %s351 = sadd.s32 %s349, %s350
      %s352 = smul.addr %s351, 8
      %s353 = scalar_lea.vmem %s3, %s352
      %p354 = pneg %p137
      %p355 = pneg %p134
      %s356 = smul.u32 36, %s23
      %p357 = scmp.lt.s32.totalorder %s22, 1
      %s358 = scalar_select %p357, %s22, 1
      %p359 = scmp.lt.s32.totalorder %s356, 35
      %s360 = scalar_select %p359, %s356, 35
      %s361 = smul.addr %s358, 36
      %s362 = sadd.s32 %s360, %s361
      %s363 = smul.addr %s362, 8
      %s364 = scalar_lea.vmem %s4, %s363
      %p365 = pneg %p165
      %p366 = pneg %p162
      %p367 = pneg %p193
      %p368 = pneg %p190
      %s369 = smul.u32 36, %s23
      %p370 = scmp.lt.s32.totalorder %s22, 1
      %s371 = scalar_select %p370, %s22, 1
      %p372 = scmp.lt.s32.totalorder %s369, 35
      %s373 = scalar_select %p372, %s369, 35
      %s374 = smul.addr %s371, 36
      %s375 = sadd.s32 %s373, %s374
      %s376 = smul.addr %s375, 2
      %s377 = scalar_lea.vmem %s5, %s376
      %p378 = pneg %p221
      %p379 = pneg %p218
      %s380 = smul.u32 36, %s23
      %p381 = scmp.lt.s32.totalorder %s22, 1
      %s382 = scalar_select %p381, %s22, 1
      %p383 = scmp.lt.s32.totalorder %s380, 35
      %s384 = scalar_select %p383, %s380, 35
      %s385 = smul.addr %s382, 36
      %s386 = sadd.s32 %s384, %s385
      %s387 = smul.addr %s386, 2
      %s388 = scalar_lea.vmem %s6, %s387
      %s389 = smul.u32 36, %s23
      %p390 = scmp.lt.s32.totalorder %s22, 1
      %s391 = scalar_select %p390, %s22, 1
      %p392 = scmp.lt.s32.totalorder %s389, 35
      %s393 = scalar_select %p392, %s389, 35
      %s394 = smul.addr %s391, 36
      %s395 = sadd.s32 %s393, %s394
      %s396 = smul.addr %s395, 2
      %s397 = scalar_lea.vmem %s0, %s396
      %s398 = smul.u32 36, %s23
      %s399 = smul.u32 36, %s23
      %p400 = scmp.lt.s32.totalorder %s22, 1
      %s401 = scalar_select %p400, %s22, 1
      %p402 = scmp.lt.s32.totalorder %s399, 35
      %s403 = scalar_select %p402, %s399, 35
      %s404 = smul.addr %s401, 36
      %s405 = sadd.s32 %s403, %s404
      %s406 = smul.addr %s405, 2
      %s407 = scalar_lea.vmem %s1, %s406
      %s408 = smul.u32 36, %s23
      %s409 = smul.u32 36, %s23
      %p410 = scmp.lt.s32.totalorder %s22, 1
      %s411 = scalar_select %p410, %s22, 1
      %p412 = scmp.lt.s32.totalorder %s409, 35
      %s413 = scalar_select %p412, %s409, 35
      %s414 = smul.addr %s411, 36
      %s415 = sadd.s32 %s413, %s414
      %s416 = smul.addr %s415, 8
      %s417 = scalar_lea.vmem %s2, %s416
      %s418 = smul.u32 36, %s23
      %s419 = smul.u32 36, %s23
      %p420 = scmp.lt.s32.totalorder %s22, 1
      %s421 = scalar_select %p420, %s22, 1
      %p422 = scmp.lt.s32.totalorder %s419, 35
      %s423 = scalar_select %p422, %s419, 35
      %s424 = smul.addr %s421, 36
      %s425 = sadd.s32 %s423, %s424
      %s426 = smul.addr %s425, 8
      %s427 = scalar_lea.vmem %s3, %s426
      %s428 = smul.u32 36, %s23
      %s429 = smul.u32 36, %s23
      %p430 = scmp.lt.s32.totalorder %s22, 1
      %s431 = scalar_select %p430, %s22, 1
      %p432 = scmp.lt.s32.totalorder %s429, 35
      %s433 = scalar_select %p432, %s429, 35
      %s434 = smul.addr %s431, 36
      %s435 = sadd.s32 %s433, %s434
      %s436 = smul.addr %s435, 8
      %s437 = scalar_lea.vmem %s4, %s436
      %s438 = smul.u32 36, %s23
      %s439 = smul.u32 36, %s23
      %p440 = scmp.lt.s32.totalorder %s22, 1
      %s441 = scalar_select %p440, %s22, 1
      %p442 = scmp.lt.s32.totalorder %s439, 35
      %s443 = scalar_select %p442, %s439, 35
      %s444 = smul.addr %s441, 36
      %s445 = sadd.s32 %s443, %s444
      %s446 = smul.addr %s445, 2
      %s447 = scalar_lea.vmem %s5, %s446
      %s448 = smul.u32 36, %s23
      %s449 = smul.u32 36, %s23
      %p450 = scmp.lt.s32.totalorder %s22, 1
      %s451 = scalar_select %p450, %s22, 1
      %p452 = scmp.lt.s32.totalorder %s449, 35
      %s453 = scalar_select %p452, %s449, 35
      %s454 = smul.addr %s451, 36
      %s455 = sadd.s32 %s453, %s454
      %s456 = smul.addr %s455, 2
      %s457 = scalar_lea.vmem %s6, %s456
      %s458 = smul.u32 36, %s23
      %v459 = vld [vmem:[%s397] sm:$0x3]
      %v460 = vld [vmem:[%s397 + $0x2] sm:$0x3]
      %v461 = vld [vmem:[%s397 + $0x4] sm:$0x3]
      %v462 = vld [vmem:[%s397 + $0x6] sm:$0x3]
      %v463 = vld [vmem:[%s397 + $0x8] sm:$0x3]
      %v464 = vld [vmem:[%s397 + $0xa] sm:$0x3]
      %v465 = vld [vmem:[%s397 + $0xc] sm:$0x3]
      %v466 = vld [vmem:[%s397 + $0xe] sm:$0x3]
      %v467 = vld [vmem:[%s397 + $0x10] sm:$0x3]
      %v468 = vld [vmem:[%s397 + $0x12] sm:$0x3]
      %v469 = vld [vmem:[%s397 + $0x14] sm:$0x3]
      %v470 = vld [vmem:[%s397 + $0x16] sm:$0x3]
      %v471 = vld [vmem:[%s397 + $0x18] sm:$0x3]
      %v472 = vld [vmem:[%s397 + $0x1a] sm:$0x3]
      %v473 = vld [vmem:[%s397 + $0x1c] sm:$0x3]
      %v474 = vld [vmem:[%s397 + $0x1e] sm:$0x3]
      %v475 = vld [vmem:[%s397 + $0x20] sm:$0x3]
      %v476 = vld [vmem:[%s397 + $0x22] sm:$0x3]
      %v477 = vld [vmem:[%s397 + $0x24] sm:$0x3]
      %v478 = vld [vmem:[%s397 + $0x26] sm:$0x3]
      %v479 = vld [vmem:[%s397 + $0x28] sm:$0x3]
      %v480 = vld [vmem:[%s397 + $0x2a] sm:$0x3]
      %v481 = vld [vmem:[%s397 + $0x2c] sm:$0x3]
      %v482 = vld [vmem:[%s397 + $0x2e] sm:$0x3]
      %v483 = vld [vmem:[%s397 + $0x30] sm:$0x3]
      %v484 = vld [vmem:[%s397 + $0x32] sm:$0x3]
      %v485 = vld [vmem:[%s397 + $0x34] sm:$0x3]
      %v486 = vld [vmem:[%s397 + $0x36] sm:$0x3]
      %v487 = vld [vmem:[%s397 + $0x38] sm:$0x3]
      %v488 = vld [vmem:[%s397 + $0x3a] sm:$0x3]
      %v489 = vld [vmem:[%s397 + $0x3c] sm:$0x3]
      %v490 = vld [vmem:[%s397 + $0x3e] sm:$0x3]
      %v491 = vld [vmem:[%s397 + $0x40] sm:$0x3]
      %v492 = vld [vmem:[%s397 + $0x42] sm:$0x3]
      %v493 = vld [vmem:[%s397 + $0x44] sm:$0x3]
      %v494 = vld [vmem:[%s397 + $0x46] sm:$0x3]
      %v495 = vld [vmem:[%s407] sm:$0x3]
      %v496 = vld [vmem:[%s407 + $0x2] sm:$0x3]
      %v497 = vld [vmem:[%s407 + $0x4] sm:$0x3]
      %v498 = vld [vmem:[%s407 + $0x6] sm:$0x3]
      %v499 = vld [vmem:[%s407 + $0x8] sm:$0x3]
      %v500 = vld [vmem:[%s407 + $0xa] sm:$0x3]
      %v501 = vld [vmem:[%s407 + $0xc] sm:$0x3]
      %v502 = vld [vmem:[%s407 + $0xe] sm:$0x3]
      %v503 = vld [vmem:[%s407 + $0x10] sm:$0x3]
      %v504 = vld [vmem:[%s407 + $0x12] sm:$0x3]
      %v505 = vld [vmem:[%s407 + $0x14] sm:$0x3]
      %v506 = vld [vmem:[%s407 + $0x16] sm:$0x3]
      %v507 = vld [vmem:[%s407 + $0x18] sm:$0x3]
      %v508 = vld [vmem:[%s407 + $0x1a] sm:$0x3]
      %v509 = vld [vmem:[%s407 + $0x1c] sm:$0x3]
      %v510 = vld [vmem:[%s407 + $0x1e] sm:$0x3]
      %v511 = vld [vmem:[%s407 + $0x20] sm:$0x3]
      %v512 = vld [vmem:[%s407 + $0x22] sm:$0x3]
      %v513 = vld [vmem:[%s407 + $0x24] sm:$0x3]
      %v514 = vld [vmem:[%s407 + $0x26] sm:$0x3]
      %v515 = vld [vmem:[%s407 + $0x28] sm:$0x3]
      %v516 = vld [vmem:[%s407 + $0x2a] sm:$0x3]
      %v517 = vld [vmem:[%s407 + $0x2c] sm:$0x3]
      %v518 = vld [vmem:[%s407 + $0x2e] sm:$0x3]
      %v519 = vld [vmem:[%s407 + $0x30] sm:$0x3]
      %v520 = vld [vmem:[%s407 + $0x32] sm:$0x3]
      %v521 = vld [vmem:[%s407 + $0x34] sm:$0x3]
      %v522 = vld [vmem:[%s407 + $0x36] sm:$0x3]
      %v523 = vld [vmem:[%s407 + $0x38] sm:$0x3]
      %v524 = vld [vmem:[%s407 + $0x3a] sm:$0x3]
      %v525 = vld [vmem:[%s407 + $0x3c] sm:$0x3]
      %v526 = vld [vmem:[%s407 + $0x3e] sm:$0x3]
      %v527 = vld [vmem:[%s407 + $0x40] sm:$0x3]
      %v528 = vld [vmem:[%s407 + $0x42] sm:$0x3]
      %v529 = vld [vmem:[%s407 + $0x44] sm:$0x3]
      %v530 = vld [vmem:[%s407 + $0x46] sm:$0x3]
      %v531 = vadd.f32 %v459, %v495
      %v532 = vadd.f32 %v460, %v496
      %v533 = vadd.f32 %v461, %v497
      %v534 = vadd.f32 %v462, %v498
      %v535 = vadd.f32 %v463, %v499
      %v536 = vadd.f32 %v464, %v500
      %v537 = vadd.f32 %v465, %v501
      %v538 = vadd.f32 %v466, %v502
      %v539 = vadd.f32 %v467, %v503
      %v540 = vadd.f32 %v468, %v504
      %v541 = vadd.f32 %v469, %v505
      %v542 = vadd.f32 %v470, %v506
      %v543 = vadd.f32 %v471, %v507
      %v544 = vadd.f32 %v472, %v508
      %v545 = vadd.f32 %v473, %v509
      %v546 = vadd.f32 %v474, %v510
      %v547 = vadd.f32 %v475, %v511
      %v548 = vadd.f32 %v476, %v512
      %v549 = vadd.f32 %v477, %v513
      %v550 = vadd.f32 %v478, %v514
      %v551 = vadd.f32 %v479, %v515
      %v552 = vadd.f32 %v480, %v516
      %v553 = vadd.f32 %v481, %v517
      %v554 = vadd.f32 %v482, %v518
      %v555 = vadd.f32 %v483, %v519
      %v556 = vadd.f32 %v484, %v520
      %v557 = vadd.f32 %v485, %v521
      %v558 = vadd.f32 %v486, %v522
      %v559 = vadd.f32 %v487, %v523
      %v560 = vadd.f32 %v488, %v524
      %v561 = vadd.f32 %v489, %v525
      %v562 = vadd.f32 %v490, %v526
      %v563 = vadd.f32 %v491, %v527
      %v564 = vadd.f32 %v492, %v528
      %v565 = vadd.f32 %v493, %v529
      %v566 = vadd.f32 %v494, %v530
      %v567 = vld [vmem:[%s417] sm:$0xff]
      %v568 = vld [vmem:[%s417 + $0x8] sm:$0xff]
      %v569 = vld [vmem:[%s417 + $0x10] sm:$0xff]
      %v570 = vld [vmem:[%s417 + $0x18] sm:$0xff]
      %v571 = vld [vmem:[%s417 + $0x20] sm:$0xff]
      %v572 = vld [vmem:[%s417 + $0x28] sm:$0xff]
      %v573 = vld [vmem:[%s417 + $0x30] sm:$0xff]
      %v574 = vld [vmem:[%s417 + $0x38] sm:$0xff]
      %v575 = vld [vmem:[%s417 + $0x40] sm:$0xff]
      %v576 = vld [vmem:[%s417 + $0x48] sm:$0xff]
      %v577 = vld [vmem:[%s417 + $0x50] sm:$0xff]
      %v578 = vld [vmem:[%s417 + $0x58] sm:$0xff]
      %v579 = vld [vmem:[%s417 + $0x60] sm:$0xff]
      %v580 = vld [vmem:[%s417 + $0x68] sm:$0xff]
      %v581 = vld [vmem:[%s417 + $0x70] sm:$0xff]
      %v582 = vld [vmem:[%s417 + $0x78] sm:$0xff]
      %v583 = vld [vmem:[%s417 + $0x80] sm:$0xff]
      %v584 = vld [vmem:[%s417 + $0x88] sm:$0xff]
      %v585 = vld [vmem:[%s417 + $0x90] sm:$0xff]
      %v586 = vld [vmem:[%s417 + $0x98] sm:$0xff]
      %v587 = vld [vmem:[%s417 + $0xa0] sm:$0xff]
      %v588 = vld [vmem:[%s417 + $0xa8] sm:$0xff]
      %v589 = vld [vmem:[%s417 + $0xb0] sm:$0xff]
      %v590 = vld [vmem:[%s417 + $0xb8] sm:$0xff]
      %v591 = vld [vmem:[%s417 + $0xc0] sm:$0xff]
      %v592 = vld [vmem:[%s417 + $0xc8] sm:$0xff]
      %v593 = vld [vmem:[%s417 + $0xd0] sm:$0xff]
      %v594 = vld [vmem:[%s417 + $0xd8] sm:$0xff]
      %v595 = vld [vmem:[%s417 + $0xe0] sm:$0xff]
      %v596 = vld [vmem:[%s417 + $0xe8] sm:$0xff]
      %v597 = vld [vmem:[%s417 + $0xf0] sm:$0xff]
      %v598 = vld [vmem:[%s417 + $0xf8] sm:$0xff]
      %v599 = vld [vmem:[%s417 + $0x100] sm:$0xff]
      %v600 = vld [vmem:[%s417 + $0x108] sm:$0xff]
      %v601 = vld [vmem:[%s417 + $0x110] sm:$0xff]
      %v602 = vld [vmem:[%s417 + $0x118] sm:$0xff]
      %vm603 = vcmask 64512
      %v605 = vsel %vm603, %v531, 0
      %607 = vmatprep.subr.mxu0 0.0
      %608 = vmatpush1.msra.mxu0 0.0
      %609 = vmatprep.subr.mxu0 0.0
      %610 = vmatpush1.msra.mxu0 0.0
      %611 = vmatprep.subr.mxu0 0.0
      %612 = vmatpush1.msra.mxu0 0.0
      %613 = vmatprep.subr.mxu0 0.0
      %614 = vmatpush1.msra.mxu0 0.0
      %615 = vmatprep.subr.mxu0 0.0
      %616 = vmatpush1.msra.mxu0 0.0
      %617 = vmatprep.subr.mxu0 0.0
      %618 = vmatpush1.msra.mxu0 0.0
      %619 = vmatprep.subr.mxu0 0.0
      %620 = vmatpush1.msra.mxu0 0.0
      %621 = vmatprep.subr.mxu0 0.0
      %622 = vmatpush1.msra.mxu0 0.0
      %623 = vmatprep.subr.mxu0 0.0
      %624 = vmatpush1.msra.mxu0 0.0
      %625 = vmatprep.subr.mxu0 0.0
      %626 = vmatpush1.msra.mxu0 0.0
      %627 = vmatprep.subr.mxu0 0.0
      %628 = vmatpush1.msra.mxu0 0.0
      %629 = vmatprep.subr.mxu0 0.0
      %630 = vmatpush1.msra.mxu0 0.0
      %631 = vmatprep.subr.mxu0 0.0
      %632 = vmatpush1.msra.mxu0 0.0
      %633 = vmatprep.subr.mxu0 0.0
      %634 = vmatpush1.msra.mxu0 0.0
      %635 = vmatprep.subr.mxu0 0.0
      %636 = vmatpush1.msra.mxu0 0.0
      %637 = vmatprep.subr.mxu0 0.0
      %638 = vmatpush1.msra.mxu0 %v567
      %639 = vmatprep.subr.mxu0 0.0
      %640 = vmatpush2.msra.mxu0 0.0
      %641 = vmatprep.subr.mxu0 0.0
      %642 = vmatpush2.msra.mxu0 0.0
      %643 = vmatprep.subr.mxu0 0.0
      %644 = vmatpush2.msra.mxu0 0.0
      %645 = vmatprep.subr.mxu0 0.0
      %646 = vmatpush2.msra.mxu0 0.0
      %647 = vmatprep.subr.mxu0 0.0
      %648 = vmatpush2.msra.mxu0 0.0
      %649 = vmatprep.subr.mxu0 0.0
      %650 = vmatpush2.msra.mxu0 0.0
      %651 = vmatprep.subr.mxu0 0.0
      %652 = vmatpush2.msra.mxu0 0.0
      %653 = vmatprep.subr.mxu0 0.0
      %654 = vmatpush2.msra.mxu0 0.0
      %655 = vmatprep.subr.mxu0 0.0
      %656 = vmatpush2.msra.mxu0 0.0
      %657 = vmatprep.subr.mxu0 0.0
      %658 = vmatpush2.msra.mxu0 0.0
      %659 = vmatprep.subr.mxu0 0.0
      %660 = vmatpush2.msra.mxu0 0.0
      %661 = vmatprep.subr.mxu0 0.0
      %662 = vmatpush2.msra.mxu0 0.0
      %663 = vmatprep.subr.mxu0 0.0
      %664 = vmatpush2.msra.mxu0 0.0
      %665 = vmatprep.subr.mxu0 0.0
      %666 = vmatpush2.msra.mxu0 0.0
      %667 = vmatprep.subr.mxu0 0.0
      %668 = vmatpush2.msra.mxu0 0.0
      %669 = vmatprep.subr.mxu0 0.0
      %670 = vmatpush2.msra.mxu0 0.0
      %671 = vmatprep.mubr.f32.mxu0 0.0
      %672 = vmatmul.mubr.f32.gmra.mxu0 %v605
      %v673 = vpop.f32.mrf.mxu0
      %v674 = vadd.f32 0.0, %v673
      %v675 = vpop.f32.mrf.mxu0
      %676 = vdwg.mxu0
      %v678 = vsel %vm603, %v532, 0
      %680 = vmatprep.subr.mxu0 0.0
      %681 = vmatpush1.msra.mxu0 0.0
      %682 = vmatprep.subr.mxu0 0.0
      %683 = vmatpush1.msra.mxu0 0.0
      %684 = vmatprep.subr.mxu0 0.0
      %685 = vmatpush1.msra.mxu0 0.0
      %686 = vmatprep.subr.mxu0 0.0
      %687 = vmatpush1.msra.mxu0 0.0
      %688 = vmatprep.subr.mxu0 0.0
      %689 = vmatpush1.msra.mxu0 0.0
      %690 = vmatprep.subr.mxu0 0.0
      %691 = vmatpush1.msra.mxu0 0.0
      %692 = vmatprep.subr.mxu0 0.0
      %693 = vmatpush1.msra.mxu0 0.0
      %694 = vmatprep.subr.mxu0 0.0
      %695 = vmatpush1.msra.mxu0 0.0
      %696 = vmatprep.subr.mxu0 0.0
      %697 = vmatpush1.msra.mxu0 0.0
      %698 = vmatprep.subr.mxu0 0.0
      %699 = vmatpush1.msra.mxu0 0.0
      %700 = vmatprep.subr.mxu0 0.0
      %701 = vmatpush1.msra.mxu0 0.0
      %702 = vmatprep.subr.mxu0 0.0
      %703 = vmatpush1.msra.mxu0 0.0
      %704 = vmatprep.subr.mxu0 0.0
      %705 = vmatpush1.msra.mxu0 0.0
      %706 = vmatprep.subr.mxu0 0.0
      %707 = vmatpush1.msra.mxu0 0.0
      %708 = vmatprep.subr.mxu0 0.0
      %709 = vmatpush1.msra.mxu0 0.0
      %710 = vmatprep.subr.mxu0 0.0
      %711 = vmatpush1.msra.mxu0 %v568
      %712 = vmatprep.subr.mxu0 0.0
      %713 = vmatpush2.msra.mxu0 0.0
      %714 = vmatprep.subr.mxu0 0.0
      %715 = vmatpush2.msra.mxu0 0.0
      %716 = vmatprep.subr.mxu0 0.0
      %717 = vmatpush2.msra.mxu0 0.0
      %718 = vmatprep.subr.mxu0 0.0
      %719 = vmatpush2.msra.mxu0 0.0
      %720 = vmatprep.subr.mxu0 0.0
      %721 = vmatpush2.msra.mxu0 0.0
      %722 = vmatprep.subr.mxu0 0.0
      %723 = vmatpush2.msra.mxu0 0.0
      %724 = vmatprep.subr.mxu0 0.0
      %725 = vmatpush2.msra.mxu0 0.0
      %726 = vmatprep.subr.mxu0 0.0
      %727 = vmatpush2.msra.mxu0 0.0
      %728 = vmatprep.subr.mxu0 0.0
      %729 = vmatpush2.msra.mxu0 0.0
      %730 = vmatprep.subr.mxu0 0.0
      %731 = vmatpush2.msra.mxu0 0.0
      %732 = vmatprep.subr.mxu0 0.0
      %733 = vmatpush2.msra.mxu0 0.0
      %734 = vmatprep.subr.mxu0 0.0
      %735 = vmatpush2.msra.mxu0 0.0
      %736 = vmatprep.subr.mxu0 0.0
      %737 = vmatpush2.msra.mxu0 0.0
      %738 = vmatprep.subr.mxu0 0.0
      %739 = vmatpush2.msra.mxu0 0.0
      %740 = vmatprep.subr.mxu0 0.0
      %741 = vmatpush2.msra.mxu0 0.0
      %742 = vmatprep.subr.mxu0 0.0
      %743 = vmatpush2.msra.mxu0 0.0
      %744 = vmatprep.mubr.f32.mxu0 0.0
      %745 = vmatmul.mubr.f32.gmra.mxu0 %v678
      %v746 = vpop.f32.mrf.mxu0
      %v747 = vadd.f32 0.0, %v746
      %v748 = vpop.f32.mrf.mxu0
      %749 = vdwg.mxu0
      %v751 = vsel %vm603, %v533, 0
      %753 = vmatprep.subr.mxu0 0.0
      %754 = vmatpush1.msra.mxu0 0.0
      %755 = vmatprep.subr.mxu0 0.0
      %756 = vmatpush1.msra.mxu0 0.0
      %757 = vmatprep.subr.mxu0 0.0
      %758 = vmatpush1.msra.mxu0 0.0
      %759 = vmatprep.subr.mxu0 0.0
      %760 = vmatpush1.msra.mxu0 0.0
      %761 = vmatprep.subr.mxu0 0.0
      %762 = vmatpush1.msra.mxu0 0.0
      %763 = vmatprep.subr.mxu0 0.0
      %764 = vmatpush1.msra.mxu0 0.0
      %765 = vmatprep.subr.mxu0 0.0
      %766 = vmatpush1.msra.mxu0 0.0
      %767 = vmatprep.subr.mxu0 0.0
      %768 = vmatpush1.msra.mxu0 0.0
      %769 = vmatprep.subr.mxu0 0.0
      %770 = vmatpush1.msra.mxu0 0.0
      %771 = vmatprep.subr.mxu0 0.0
      %772 = vmatpush1.msra.mxu0 0.0
      %773 = vmatprep.subr.mxu0 0.0
      %774 = vmatpush1.msra.mxu0 0.0
      %775 = vmatprep.subr.mxu0 0.0
      %776 = vmatpush1.msra.mxu0 0.0
      %777 = vmatprep.subr.mxu0 0.0
      %778 = vmatpush1.msra.mxu0 0.0
      %779 = vmatprep.subr.mxu0 0.0
      %780 = vmatpush1.msra.mxu0 0.0
      %781 = vmatprep.subr.mxu0 0.0
      %782 = vmatpush1.msra.mxu0 0.0
      %783 = vmatprep.subr.mxu0 0.0
      %784 = vmatpush1.msra.mxu0 %v569
      %785 = vmatprep.subr.mxu0 0.0
      %786 = vmatpush2.msra.mxu0 0.0
      %787 = vmatprep.subr.mxu0 0.0
      %788 = vmatpush2.msra.mxu0 0.0
      %789 = vmatprep.subr.mxu0 0.0
      %790 = vmatpush2.msra.mxu0 0.0
      %791 = vmatprep.subr.mxu0 0.0
      %792 = vmatpush2.msra.mxu0 0.0
      %793 = vmatprep.subr.mxu0 0.0
      %794 = vmatpush2.msra.mxu0 0.0
      %795 = vmatprep.subr.mxu0 0.0
      %796 = vmatpush2.msra.mxu0 0.0
      %797 = vmatprep.subr.mxu0 0.0
      %798 = vmatpush2.msra.mxu0 0.0
      %799 = vmatprep.subr.mxu0 0.0
      %800 = vmatpush2.msra.mxu0 0.0
      %801 = vmatprep.subr.mxu0 0.0
      %802 = vmatpush2.msra.mxu0 0.0
      %803 = vmatprep.subr.mxu0 0.0
      %804 = vmatpush2.msra.mxu0 0.0
      %805 = vmatprep.subr.mxu0 0.0
      %806 = vmatpush2.msra.mxu0 0.0
      %807 = vmatprep.subr.mxu0 0.0
      %808 = vmatpush2.msra.mxu0 0.0
      %809 = vmatprep.subr.mxu0 0.0
      %810 = vmatpush2.msra.mxu0 0.0
      %811 = vmatprep.subr.mxu0 0.0
      %812 = vmatpush2.msra.mxu0 0.0
      %813 = vmatprep.subr.mxu0 0.0
      %814 = vmatpush2.msra.mxu0 0.0
      %815 = vmatprep.subr.mxu0 0.0
      %816 = vmatpush2.msra.mxu0 0.0
      %817 = vmatprep.mubr.f32.mxu0 0.0
      %818 = vmatmul.mubr.f32.gmra.mxu0 %v751
      %v819 = vpop.f32.mrf.mxu0
      %v820 = vadd.f32 0.0, %v819
      %v821 = vpop.f32.mrf.mxu0
      %822 = vdwg.mxu0
      %v824 = vsel %vm603, %v534, 0
      %826 = vmatprep.subr.mxu0 0.0
      %827 = vmatpush1.msra.mxu0 0.0
      %828 = vmatprep.subr.mxu0 0.0
      %829 = vmatpush1.msra.mxu0 0.0
      %830 = vmatprep.subr.mxu0 0.0
      %831 = vmatpush1.msra.mxu0 0.0
      %832 = vmatprep.subr.mxu0 0.0
      %833 = vmatpush1.msra.mxu0 0.0
      %834 = vmatprep.subr.mxu0 0.0
      %835 = vmatpush1.msra.mxu0 0.0
      %836 = vmatprep.subr.mxu0 0.0
      %837 = vmatpush1.msra.mxu0 0.0
      %838 = vmatprep.subr.mxu0 0.0
      %839 = vmatpush1.msra.mxu0 0.0
      %840 = vmatprep.subr.mxu0 0.0
      %841 = vmatpush1.msra.mxu0 0.0
      %842 = vmatprep.subr.mxu0 0.0
      %843 = vmatpush1.msra.mxu0 0.0
      %844 = vmatprep.subr.mxu0 0.0
      %845 = vmatpush1.msra.mxu0 0.0
      %846 = vmatprep.subr.mxu0 0.0
      %847 = vmatpush1.msra.mxu0 0.0
      %848 = vmatprep.subr.mxu0 0.0
      %849 = vmatpush1.msra.mxu0 0.0
      %850 = vmatprep.subr.mxu0 0.0
      %851 = vmatpush1.msra.mxu0 0.0
      %852 = vmatprep.subr.mxu0 0.0
      %853 = vmatpush1.msra.mxu0 0.0
      %854 = vmatprep.subr.mxu0 0.0
      %855 = vmatpush1.msra.mxu0 0.0
      %856 = vmatprep.subr.mxu0 0.0
      %857 = vmatpush1.msra.mxu0 %v570
      %858 = vmatprep.subr.mxu0 0.0
      %859 = vmatpush2.msra.mxu0 0.0
      %860 = vmatprep.subr.mxu0 0.0
      %861 = vmatpush2.msra.mxu0 0.0
      %862 = vmatprep.subr.mxu0 0.0
      %863 = vmatpush2.msra.mxu0 0.0
      %864 = vmatprep.subr.mxu0 0.0
      %865 = vmatpush2.msra.mxu0 0.0
      %866 = vmatprep.subr.mxu0 0.0
      %867 = vmatpush2.msra.mxu0 0.0
      %868 = vmatprep.subr.mxu0 0.0
      %869 = vmatpush2.msra.mxu0 0.0
      %870 = vmatprep.subr.mxu0 0.0
      %871 = vmatpush2.msra.mxu0 0.0
      %872 = vmatprep.subr.mxu0 0.0
      %873 = vmatpush2.msra.mxu0 0.0
      %874 = vmatprep.subr.mxu0 0.0
      %875 = vmatpush2.msra.mxu0 0.0
      %876 = vmatprep.subr.mxu0 0.0
      %877 = vmatpush2.msra.mxu0 0.0
      %878 = vmatprep.subr.mxu0 0.0
      %879 = vmatpush2.msra.mxu0 0.0
      %880 = vmatprep.subr.mxu0 0.0
      %881 = vmatpush2.msra.mxu0 0.0
      %882 = vmatprep.subr.mxu0 0.0
      %883 = vmatpush2.msra.mxu0 0.0
      %884 = vmatprep.subr.mxu0 0.0
      %885 = vmatpush2.msra.mxu0 0.0
      %886 = vmatprep.subr.mxu0 0.0
      %887 = vmatpush2.msra.mxu0 0.0
      %888 = vmatprep.subr.mxu0 0.0
      %889 = vmatpush2.msra.mxu0 0.0
      %890 = vmatprep.mubr.f32.mxu0 0.0
      %891 = vmatmul.mubr.f32.gmra.mxu0 %v824
      %v892 = vpop.f32.mrf.mxu0
      %v893 = vadd.f32 0.0, %v892
      %v894 = vpop.f32.mrf.mxu0
      %895 = vdwg.mxu0
      %v897 = vsel %vm603, %v535, 0
      %899 = vmatprep.subr.mxu0 0.0
      %900 = vmatpush1.msra.mxu0 0.0
      %901 = vmatprep.subr.mxu0 0.0
      %902 = vmatpush1.msra.mxu0 0.0
      %903 = vmatprep.subr.mxu0 0.0
      %904 = vmatpush1.msra.mxu0 0.0
      %905 = vmatprep.subr.mxu0 0.0
      %906 = vmatpush1.msra.mxu0 0.0
      %907 = vmatprep.subr.mxu0 0.0
      %908 = vmatpush1.msra.mxu0 0.0
      %909 = vmatprep.subr.mxu0 0.0
      %910 = vmatpush1.msra.mxu0 0.0
      %911 = vmatprep.subr.mxu0 0.0
      %912 = vmatpush1.msra.mxu0 0.0
      %913 = vmatprep.subr.mxu0 0.0
      %914 = vmatpush1.msra.mxu0 0.0
      %915 = vmatprep.subr.mxu0 0.0
      %916 = vmatpush1.msra.mxu0 0.0
      %917 = vmatprep.subr.mxu0 0.0
      %918 = vmatpush1.msra.mxu0 0.0
      %919 = vmatprep.subr.mxu0 0.0
      %920 = vmatpush1.msra.mxu0 0.0
      %921 = vmatprep.subr.mxu0 0.0
      %922 = vmatpush1.msra.mxu0 0.0
      %923 = vmatprep.subr.mxu0 0.0
      %924 = vmatpush1.msra.mxu0 0.0
      %925 = vmatprep.subr.mxu0 0.0
      %926 = vmatpush1.msra.mxu0 0.0
      %927 = vmatprep.subr.mxu0 0.0
      %928 = vmatpush1.msra.mxu0 0.0
      %929 = vmatprep.subr.mxu0 0.0
      %930 = vmatpush1.msra.mxu0 %v571
      %931 = vmatprep.subr.mxu0 0.0
      %932 = vmatpush2.msra.mxu0 0.0
      %933 = vmatprep.subr.mxu0 0.0
      %934 = vmatpush2.msra.mxu0 0.0
      %935 = vmatprep.subr.mxu0 0.0
      %936 = vmatpush2.msra.mxu0 0.0
      %937 = vmatprep.subr.mxu0 0.0
      %938 = vmatpush2.msra.mxu0 0.0
      %939 = vmatprep.subr.mxu0 0.0
      %940 = vmatpush2.msra.mxu0 0.0
      %941 = vmatprep.subr.mxu0 0.0
      %942 = vmatpush2.msra.mxu0 0.0
      %943 = vmatprep.subr.mxu0 0.0
      %944 = vmatpush2.msra.mxu0 0.0
      %945 = vmatprep.subr.mxu0 0.0
      %946 = vmatpush2.msra.mxu0 0.0
      %947 = vmatprep.subr.mxu0 0.0
      %948 = vmatpush2.msra.mxu0 0.0
      %949 = vmatprep.subr.mxu0 0.0
      %950 = vmatpush2.msra.mxu0 0.0
      %951 = vmatprep.subr.mxu0 0.0
      %952 = vmatpush2.msra.mxu0 0.0
      %953 = vmatprep.subr.mxu0 0.0
      %954 = vmatpush2.msra.mxu0 0.0
      %955 = vmatprep.subr.mxu0 0.0
      %956 = vmatpush2.msra.mxu0 0.0
      %957 = vmatprep.subr.mxu0 0.0
      %958 = vmatpush2.msra.mxu0 0.0
      %959 = vmatprep.subr.mxu0 0.0
      %960 = vmatpush2.msra.mxu0 0.0
      %961 = vmatprep.subr.mxu0 0.0
      %962 = vmatpush2.msra.mxu0 0.0
      %963 = vmatprep.mubr.f32.mxu0 0.0
      %964 = vmatmul.mubr.f32.gmra.mxu0 %v897
      %v965 = vpop.f32.mrf.mxu0
      %v966 = vadd.f32 0.0, %v965
      %v967 = vpop.f32.mrf.mxu0
      %968 = vdwg.mxu0
      %v970 = vsel %vm603, %v536, 0
      %972 = vmatprep.subr.mxu0 0.0
      %973 = vmatpush1.msra.mxu0 0.0
      %974 = vmatprep.subr.mxu0 0.0
      %975 = vmatpush1.msra.mxu0 0.0
      %976 = vmatprep.subr.mxu0 0.0
      %977 = vmatpush1.msra.mxu0 0.0
      %978 = vmatprep.subr.mxu0 0.0
      %979 = vmatpush1.msra.mxu0 0.0
      %980 = vmatprep.subr.mxu0 0.0
      %981 = vmatpush1.msra.mxu0 0.0
      %982 = vmatprep.subr.mxu0 0.0
      %983 = vmatpush1.msra.mxu0 0.0
      %984 = vmatprep.subr.mxu0 0.0
      %985 = vmatpush1.msra.mxu0 0.0
      %986 = vmatprep.subr.mxu0 0.0
      %987 = vmatpush1.msra.mxu0 0.0
      %988 = vmatprep.subr.mxu0 0.0
      %989 = vmatpush1.msra.mxu0 0.0
      %990 = vmatprep.subr.mxu0 0.0
      %991 = vmatpush1.msra.mxu0 0.0
      %992 = vmatprep.subr.mxu0 0.0
      %993 = vmatpush1.msra.mxu0 0.0
      %994 = vmatprep.subr.mxu0 0.0
      %995 = vmatpush1.msra.mxu0 0.0
      %996 = vmatprep.subr.mxu0 0.0
      %997 = vmatpush1.msra.mxu0 0.0
      %998 = vmatprep.subr.mxu0 0.0
      %999 = vmatpush1.msra.mxu0 0.0
      %1000 = vmatprep.subr.mxu0 0.0
      %1001 = vmatpush1.msra.mxu0 0.0
      %1002 = vmatprep.subr.mxu0 0.0
      %1003 = vmatpush1.msra.mxu0 %v572
      %1004 = vmatprep.subr.mxu0 0.0
      %1005 = vmatpush2.msra.mxu0 0.0
      %1006 = vmatprep.subr.mxu0 0.0
      %1007 = vmatpush2.msra.mxu0 0.0
      %1008 = vmatprep.subr.mxu0 0.0
      %1009 = vmatpush2.msra.mxu0 0.0
      %1010 = vmatprep.subr.mxu0 0.0
      %1011 = vmatpush2.msra.mxu0 0.0
      %1012 = vmatprep.subr.mxu0 0.0
      %1013 = vmatpush2.msra.mxu0 0.0
      %1014 = vmatprep.subr.mxu0 0.0
      %1015 = vmatpush2.msra.mxu0 0.0
      %1016 = vmatprep.subr.mxu0 0.0
      %1017 = vmatpush2.msra.mxu0 0.0
      %1018 = vmatprep.subr.mxu0 0.0
      %1019 = vmatpush2.msra.mxu0 0.0
      %1020 = vmatprep.subr.mxu0 0.0
      %1021 = vmatpush2.msra.mxu0 0.0
      %1022 = vmatprep.subr.mxu0 0.0
      %1023 = vmatpush2.msra.mxu0 0.0
      %1024 = vmatprep.subr.mxu0 0.0
      %1025 = vmatpush2.msra.mxu0 0.0
      %1026 = vmatprep.subr.mxu0 0.0
      %1027 = vmatpush2.msra.mxu0 0.0
      %1028 = vmatprep.subr.mxu0 0.0
      %1029 = vmatpush2.msra.mxu0 0.0
      %1030 = vmatprep.subr.mxu0 0.0
      %1031 = vmatpush2.msra.mxu0 0.0
      %1032 = vmatprep.subr.mxu0 0.0
      %1033 = vmatpush2.msra.mxu0 0.0
      %1034 = vmatprep.subr.mxu0 0.0
      %1035 = vmatpush2.msra.mxu0 0.0
      %1036 = vmatprep.mubr.f32.mxu0 0.0
      %1037 = vmatmul.mubr.f32.gmra.mxu0 %v970
      %v1038 = vpop.f32.mrf.mxu0
      %v1039 = vadd.f32 0.0, %v1038
      %v1040 = vpop.f32.mrf.mxu0
      %1041 = vdwg.mxu0
      %v1043 = vsel %vm603, %v537, 0
      %1045 = vmatprep.subr.mxu0 0.0
      %1046 = vmatpush1.msra.mxu0 0.0
      %1047 = vmatprep.subr.mxu0 0.0
      %1048 = vmatpush1.msra.mxu0 0.0
      %1049 = vmatprep.subr.mxu0 0.0
      %1050 = vmatpush1.msra.mxu0 0.0
      %1051 = vmatprep.subr.mxu0 0.0
      %1052 = vmatpush1.msra.mxu0 0.0
      %1053 = vmatprep.subr.mxu0 0.0
      %1054 = vmatpush1.msra.mxu0 0.0
      %1055 = vmatprep.subr.mxu0 0.0
      %1056 = vmatpush1.msra.mxu0 0.0
      %1057 = vmatprep.subr.mxu0 0.0
      %1058 = vmatpush1.msra.mxu0 0.0
      %1059 = vmatprep.subr.mxu0 0.0
      %1060 = vmatpush1.msra.mxu0 0.0
      %1061 = vmatprep.subr.mxu0 0.0
      %1062 = vmatpush1.msra.mxu0 0.0
      %1063 = vmatprep.subr.mxu0 0.0
      %1064 = vmatpush1.msra.mxu0 0.0
      %1065 = vmatprep.subr.mxu0 0.0
      %1066 = vmatpush1.msra.mxu0 0.0
      %1067 = vmatprep.subr.mxu0 0.0
      %1068 = vmatpush1.msra.mxu0 0.0
      %1069 = vmatprep.subr.mxu0 0.0
      %1070 = vmatpush1.msra.mxu0 0.0
      %1071 = vmatprep.subr.mxu0 0.0
      %1072 = vmatpush1.msra.mxu0 0.0
      %1073 = vmatprep.subr.mxu0 0.0
      %1074 = vmatpush1.msra.mxu0 0.0
      %1075 = vmatprep.subr.mxu0 0.0
      %1076 = vmatpush1.msra.mxu0 %v573
      %1077 = vmatprep.subr.mxu0 0.0
      %1078 = vmatpush2.msra.mxu0 0.0
      %1079 = vmatprep.subr.mxu0 0.0
      %1080 = vmatpush2.msra.mxu0 0.0
      %1081 = vmatprep.subr.mxu0 0.0
      %1082 = vmatpush2.msra.mxu0 0.0
      %1083 = vmatprep.subr.mxu0 0.0
      %1084 = vmatpush2.msra.mxu0 0.0
      %1085 = vmatprep.subr.mxu0 0.0
      %1086 = vmatpush2.msra.mxu0 0.0
      %1087 = vmatprep.subr.mxu0 0.0
      %1088 = vmatpush2.msra.mxu0 0.0
      %1089 = vmatprep.subr.mxu0 0.0
      %1090 = vmatpush2.msra.mxu0 0.0
      %1091 = vmatprep.subr.mxu0 0.0
      %1092 = vmatpush2.msra.mxu0 0.0
      %1093 = vmatprep.subr.mxu0 0.0
      %1094 = vmatpush2.msra.mxu0 0.0
      %1095 = vmatprep.subr.mxu0 0.0
      %1096 = vmatpush2.msra.mxu0 0.0
      %1097 = vmatprep.subr.mxu0 0.0
      %1098 = vmatpush2.msra.mxu0 0.0
      %1099 = vmatprep.subr.mxu0 0.0
      %1100 = vmatpush2.msra.mxu0 0.0
      %1101 = vmatprep.subr.mxu0 0.0
      %1102 = vmatpush2.msra.mxu0 0.0
      %1103 = vmatprep.subr.mxu0 0.0
      %1104 = vmatpush2.msra.mxu0 0.0
      %1105 = vmatprep.subr.mxu0 0.0
      %1106 = vmatpush2.msra.mxu0 0.0
      %1107 = vmatprep.subr.mxu0 0.0
      %1108 = vmatpush2.msra.mxu0 0.0
      %1109 = vmatprep.mubr.f32.mxu0 0.0
      %1110 = vmatmul.mubr.f32.gmra.mxu0 %v1043
      %v1111 = vpop.f32.mrf.mxu0
      %v1112 = vadd.f32 0.0, %v1111
      %v1113 = vpop.f32.mrf.mxu0
      %1114 = vdwg.mxu0
      %v1116 = vsel %vm603, %v538, 0
      %1118 = vmatprep.subr.mxu0 0.0
      %1119 = vmatpush1.msra.mxu0 0.0
      %1120 = vmatprep.subr.mxu0 0.0
      %1121 = vmatpush1.msra.mxu0 0.0
      %1122 = vmatprep.subr.mxu0 0.0
      %1123 = vmatpush1.msra.mxu0 0.0
      %1124 = vmatprep.subr.mxu0 0.0
      %1125 = vmatpush1.msra.mxu0 0.0
      %1126 = vmatprep.subr.mxu0 0.0
      %1127 = vmatpush1.msra.mxu0 0.0
      %1128 = vmatprep.subr.mxu0 0.0
      %1129 = vmatpush1.msra.mxu0 0.0
      %1130 = vmatprep.subr.mxu0 0.0
      %1131 = vmatpush1.msra.mxu0 0.0
      %1132 = vmatprep.subr.mxu0 0.0
      %1133 = vmatpush1.msra.mxu0 0.0
      %1134 = vmatprep.subr.mxu0 0.0
      %1135 = vmatpush1.msra.mxu0 0.0
      %1136 = vmatprep.subr.mxu0 0.0
      %1137 = vmatpush1.msra.mxu0 0.0
      %1138 = vmatprep.subr.mxu0 0.0
      %1139 = vmatpush1.msra.mxu0 0.0
      %1140 = vmatprep.subr.mxu0 0.0
      %1141 = vmatpush1.msra.mxu0 0.0
      %1142 = vmatprep.subr.mxu0 0.0
      %1143 = vmatpush1.msra.mxu0 0.0
      %1144 = vmatprep.subr.mxu0 0.0
      %1145 = vmatpush1.msra.mxu0 0.0
      %1146 = vmatprep.subr.mxu0 0.0
      %1147 = vmatpush1.msra.mxu0 0.0
      %1148 = vmatprep.subr.mxu0 0.0
      %1149 = vmatpush1.msra.mxu0 %v574
      %1150 = vmatprep.subr.mxu0 0.0
      %1151 = vmatpush2.msra.mxu0 0.0
      %1152 = vmatprep.subr.mxu0 0.0
      %1153 = vmatpush2.msra.mxu0 0.0
      %1154 = vmatprep.subr.mxu0 0.0
      %1155 = vmatpush2.msra.mxu0 0.0
      %1156 = vmatprep.subr.mxu0 0.0
      %1157 = vmatpush2.msra.mxu0 0.0
      %1158 = vmatprep.subr.mxu0 0.0
      %1159 = vmatpush2.msra.mxu0 0.0
      %1160 = vmatprep.subr.mxu0 0.0
      %1161 = vmatpush2.msra.mxu0 0.0
      %1162 = vmatprep.subr.mxu0 0.0
      %1163 = vmatpush2.msra.mxu0 0.0
      %1164 = vmatprep.subr.mxu0 0.0
      %1165 = vmatpush2.msra.mxu0 0.0
      %1166 = vmatprep.subr.mxu0 0.0
      %1167 = vmatpush2.msra.mxu0 0.0
      %1168 = vmatprep.subr.mxu0 0.0
      %1169 = vmatpush2.msra.mxu0 0.0
      %1170 = vmatprep.subr.mxu0 0.0
      %1171 = vmatpush2.msra.mxu0 0.0
      %1172 = vmatprep.subr.mxu0 0.0
      %1173 = vmatpush2.msra.mxu0 0.0
      %1174 = vmatprep.subr.mxu0 0.0
      %1175 = vmatpush2.msra.mxu0 0.0
      %1176 = vmatprep.subr.mxu0 0.0
      %1177 = vmatpush2.msra.mxu0 0.0
      %1178 = vmatprep.subr.mxu0 0.0
      %1179 = vmatpush2.msra.mxu0 0.0
      %1180 = vmatprep.subr.mxu0 0.0
      %1181 = vmatpush2.msra.mxu0 0.0
      %1182 = vmatprep.mubr.f32.mxu0 0.0
      %1183 = vmatmul.mubr.f32.gmra.mxu0 %v1116
      %v1184 = vpop.f32.mrf.mxu0
      %v1185 = vadd.f32 0.0, %v1184
      %v1186 = vpop.f32.mrf.mxu0
      %1187 = vdwg.mxu0
      %v1189 = vsel %vm603, %v539, 0
      %1191 = vmatprep.subr.mxu0 0.0
      %1192 = vmatpush1.msra.mxu0 0.0
      %1193 = vmatprep.subr.mxu0 0.0
      %1194 = vmatpush1.msra.mxu0 0.0
      %1195 = vmatprep.subr.mxu0 0.0
      %1196 = vmatpush1.msra.mxu0 0.0
      %1197 = vmatprep.subr.mxu0 0.0
      %1198 = vmatpush1.msra.mxu0 0.0
      %1199 = vmatprep.subr.mxu0 0.0
      %1200 = vmatpush1.msra.mxu0 0.0
      %1201 = vmatprep.subr.mxu0 0.0
      %1202 = vmatpush1.msra.mxu0 0.0
      %1203 = vmatprep.subr.mxu0 0.0
      %1204 = vmatpush1.msra.mxu0 0.0
      %1205 = vmatprep.subr.mxu0 0.0
      %1206 = vmatpush1.msra.mxu0 0.0
      %1207 = vmatprep.subr.mxu0 0.0
      %1208 = vmatpush1.msra.mxu0 0.0
      %1209 = vmatprep.subr.mxu0 0.0
      %1210 = vmatpush1.msra.mxu0 0.0
      %1211 = vmatprep.subr.mxu0 0.0
      %1212 = vmatpush1.msra.mxu0 0.0
      %1213 = vmatprep.subr.mxu0 0.0
      %1214 = vmatpush1.msra.mxu0 0.0
      %1215 = vmatprep.subr.mxu0 0.0
      %1216 = vmatpush1.msra.mxu0 0.0
      %1217 = vmatprep.subr.mxu0 0.0
      %1218 = vmatpush1.msra.mxu0 0.0
      %1219 = vmatprep.subr.mxu0 0.0
      %1220 = vmatpush1.msra.mxu0 0.0
      %1221 = vmatprep.subr.mxu0 0.0
      %1222 = vmatpush1.msra.mxu0 %v575
      %1223 = vmatprep.subr.mxu0 0.0
      %1224 = vmatpush2.msra.mxu0 0.0
      %1225 = vmatprep.subr.mxu0 0.0
      %1226 = vmatpush2.msra.mxu0 0.0
      %1227 = vmatprep.subr.mxu0 0.0
      %1228 = vmatpush2.msra.mxu0 0.0
      %1229 = vmatprep.subr.mxu0 0.0
      %1230 = vmatpush2.msra.mxu0 0.0
      %1231 = vmatprep.subr.mxu0 0.0
      %1232 = vmatpush2.msra.mxu0 0.0
      %1233 = vmatprep.subr.mxu0 0.0
      %1234 = vmatpush2.msra.mxu0 0.0
      %1235 = vmatprep.subr.mxu0 0.0
      %1236 = vmatpush2.msra.mxu0 0.0
      %1237 = vmatprep.subr.mxu0 0.0
      %1238 = vmatpush2.msra.mxu0 0.0
      %1239 = vmatprep.subr.mxu0 0.0
      %1240 = vmatpush2.msra.mxu0 0.0
      %1241 = vmatprep.subr.mxu0 0.0
      %1242 = vmatpush2.msra.mxu0 0.0
      %1243 = vmatprep.subr.mxu0 0.0
      %1244 = vmatpush2.msra.mxu0 0.0
      %1245 = vmatprep.subr.mxu0 0.0
      %1246 = vmatpush2.msra.mxu0 0.0
      %1247 = vmatprep.subr.mxu0 0.0
      %1248 = vmatpush2.msra.mxu0 0.0
      %1249 = vmatprep.subr.mxu0 0.0
      %1250 = vmatpush2.msra.mxu0 0.0
      %1251 = vmatprep.subr.mxu0 0.0
      %1252 = vmatpush2.msra.mxu0 0.0
      %1253 = vmatprep.subr.mxu0 0.0
      %1254 = vmatpush2.msra.mxu0 0.0
      %1255 = vmatprep.mubr.f32.mxu0 0.0
      %1256 = vmatmul.mubr.f32.gmra.mxu0 %v1189
      %v1257 = vpop.f32.mrf.mxu0
      %v1258 = vadd.f32 0.0, %v1257
      %v1259 = vpop.f32.mrf.mxu0
      %1260 = vdwg.mxu0
      %v1262 = vsel %vm603, %v540, 0
      %1264 = vmatprep.subr.mxu0 0.0
      %1265 = vmatpush1.msra.mxu0 0.0
      %1266 = vmatprep.subr.mxu0 0.0
      %1267 = vmatpush1.msra.mxu0 0.0
      %1268 = vmatprep.subr.mxu0 0.0
      %1269 = vmatpush1.msra.mxu0 0.0
      %1270 = vmatprep.subr.mxu0 0.0
      %1271 = vmatpush1.msra.mxu0 0.0
      %1272 = vmatprep.subr.mxu0 0.0
      %1273 = vmatpush1.msra.mxu0 0.0
      %1274 = vmatprep.subr.mxu0 0.0
      %1275 = vmatpush1.msra.mxu0 0.0
      %1276 = vmatprep.subr.mxu0 0.0
      %1277 = vmatpush1.msra.mxu0 0.0
      %1278 = vmatprep.subr.mxu0 0.0
      %1279 = vmatpush1.msra.mxu0 0.0
      %1280 = vmatprep.subr.mxu0 0.0
      %1281 = vmatpush1.msra.mxu0 0.0
      %1282 = vmatprep.subr.mxu0 0.0
      %1283 = vmatpush1.msra.mxu0 0.0
      %1284 = vmatprep.subr.mxu0 0.0
      %1285 = vmatpush1.msra.mxu0 0.0
      %1286 = vmatprep.subr.mxu0 0.0
      %1287 = vmatpush1.msra.mxu0 0.0
      %1288 = vmatprep.subr.mxu0 0.0
      %1289 = vmatpush1.msra.mxu0 0.0
      %1290 = vmatprep.subr.mxu0 0.0
      %1291 = vmatpush1.msra.mxu0 0.0
      %1292 = vmatprep.subr.mxu0 0.0
      %1293 = vmatpush1.msra.mxu0 0.0
      %1294 = vmatprep.subr.mxu0 0.0
      %1295 = vmatpush1.msra.mxu0 %v576
      %1296 = vmatprep.subr.mxu0 0.0
      %1297 = vmatpush2.msra.mxu0 0.0
      %1298 = vmatprep.subr.mxu0 0.0
      %1299 = vmatpush2.msra.mxu0 0.0
      %1300 = vmatprep.subr.mxu0 0.0
      %1301 = vmatpush2.msra.mxu0 0.0
      %1302 = vmatprep.subr.mxu0 0.0
      %1303 = vmatpush2.msra.mxu0 0.0
      %1304 = vmatprep.subr.mxu0 0.0
      %1305 = vmatpush2.msra.mxu0 0.0
      %1306 = vmatprep.subr.mxu0 0.0
      %1307 = vmatpush2.msra.mxu0 0.0
      %1308 = vmatprep.subr.mxu0 0.0
      %1309 = vmatpush2.msra.mxu0 0.0
      %1310 = vmatprep.subr.mxu0 0.0
      %1311 = vmatpush2.msra.mxu0 0.0
      %1312 = vmatprep.subr.mxu0 0.0
      %1313 = vmatpush2.msra.mxu0 0.0
      %1314 = vmatprep.subr.mxu0 0.0
      %1315 = vmatpush2.msra.mxu0 0.0
      %1316 = vmatprep.subr.mxu0 0.0
      %1317 = vmatpush2.msra.mxu0 0.0
      %1318 = vmatprep.subr.mxu0 0.0
      %1319 = vmatpush2.msra.mxu0 0.0
      %1320 = vmatprep.subr.mxu0 0.0
      %1321 = vmatpush2.msra.mxu0 0.0
      %1322 = vmatprep.subr.mxu0 0.0
      %1323 = vmatpush2.msra.mxu0 0.0
      %1324 = vmatprep.subr.mxu0 0.0
      %1325 = vmatpush2.msra.mxu0 0.0
      %1326 = vmatprep.subr.mxu0 0.0
      %1327 = vmatpush2.msra.mxu0 0.0
      %1328 = vmatprep.mubr.f32.mxu0 0.0
      %1329 = vmatmul.mubr.f32.gmra.mxu0 %v1262
      %v1330 = vpop.f32.mrf.mxu0
      %v1331 = vadd.f32 0.0, %v1330
      %v1332 = vpop.f32.mrf.mxu0
      %1333 = vdwg.mxu0
      %v1335 = vsel %vm603, %v541, 0
      %1337 = vmatprep.subr.mxu0 0.0
      %1338 = vmatpush1.msra.mxu0 0.0
      %1339 = vmatprep.subr.mxu0 0.0
      %1340 = vmatpush1.msra.mxu0 0.0
      %1341 = vmatprep.subr.mxu0 0.0
      %1342 = vmatpush1.msra.mxu0 0.0
      %1343 = vmatprep.subr.mxu0 0.0
      %1344 = vmatpush1.msra.mxu0 0.0
      %1345 = vmatprep.subr.mxu0 0.0
      %1346 = vmatpush1.msra.mxu0 0.0
      %1347 = vmatprep.subr.mxu0 0.0
      %1348 = vmatpush1.msra.mxu0 0.0
      %1349 = vmatprep.subr.mxu0 0.0
      %1350 = vmatpush1.msra.mxu0 0.0
      %1351 = vmatprep.subr.mxu0 0.0
      %1352 = vmatpush1.msra.mxu0 0.0
      %1353 = vmatprep.subr.mxu0 0.0
      %1354 = vmatpush1.msra.mxu0 0.0
      %1355 = vmatprep.subr.mxu0 0.0
      %1356 = vmatpush1.msra.mxu0 0.0
      %1357 = vmatprep.subr.mxu0 0.0
      %1358 = vmatpush1.msra.mxu0 0.0
      %1359 = vmatprep.subr.mxu0 0.0
      %1360 = vmatpush1.msra.mxu0 0.0
      %1361 = vmatprep.subr.mxu0 0.0
      %1362 = vmatpush1.msra.mxu0 0.0
      %1363 = vmatprep.subr.mxu0 0.0
      %1364 = vmatpush1.msra.mxu0 0.0
      %1365 = vmatprep.subr.mxu0 0.0
      %1366 = vmatpush1.msra.mxu0 0.0
      %1367 = vmatprep.subr.mxu0 0.0
      %1368 = vmatpush1.msra.mxu0 %v577
      %1369 = vmatprep.subr.mxu0 0.0
      %1370 = vmatpush2.msra.mxu0 0.0
      %1371 = vmatprep.subr.mxu0 0.0
      %1372 = vmatpush2.msra.mxu0 0.0
      %1373 = vmatprep.subr.mxu0 0.0
      %1374 = vmatpush2.msra.mxu0 0.0
      %1375 = vmatprep.subr.mxu0 0.0
      %1376 = vmatpush2.msra.mxu0 0.0
      %1377 = vmatprep.subr.mxu0 0.0
      %1378 = vmatpush2.msra.mxu0 0.0
      %1379 = vmatprep.subr.mxu0 0.0
      %1380 = vmatpush2.msra.mxu0 0.0
      %1381 = vmatprep.subr.mxu0 0.0
      %1382 = vmatpush2.msra.mxu0 0.0
      %1383 = vmatprep.subr.mxu0 0.0
      %1384 = vmatpush2.msra.mxu0 0.0
      %1385 = vmatprep.subr.mxu0 0.0
      %1386 = vmatpush2.msra.mxu0 0.0
      %1387 = vmatprep.subr.mxu0 0.0
      %1388 = vmatpush2.msra.mxu0 0.0
      %1389 = vmatprep.subr.mxu0 0.0
      %1390 = vmatpush2.msra.mxu0 0.0
      %1391 = vmatprep.subr.mxu0 0.0
      %1392 = vmatpush2.msra.mxu0 0.0
      %1393 = vmatprep.subr.mxu0 0.0
      %1394 = vmatpush2.msra.mxu0 0.0
      %1395 = vmatprep.subr.mxu0 0.0
      %1396 = vmatpush2.msra.mxu0 0.0
      %1397 = vmatprep.subr.mxu0 0.0
      %1398 = vmatpush2.msra.mxu0 0.0
      %1399 = vmatprep.subr.mxu0 0.0
      %1400 = vmatpush2.msra.mxu0 0.0
      %1401 = vmatprep.mubr.f32.mxu0 0.0
      %1402 = vmatmul.mubr.f32.gmra.mxu0 %v1335
      %v1403 = vpop.f32.mrf.mxu0
      %v1404 = vadd.f32 0.0, %v1403
      %v1405 = vpop.f32.mrf.mxu0
      %1406 = vdwg.mxu0
      %v1408 = vsel %vm603, %v542, 0
      %1410 = vmatprep.subr.mxu0 0.0
      %1411 = vmatpush1.msra.mxu0 0.0
      %1412 = vmatprep.subr.mxu0 0.0
      %1413 = vmatpush1.msra.mxu0 0.0
      %1414 = vmatprep.subr.mxu0 0.0
      %1415 = vmatpush1.msra.mxu0 0.0
      %1416 = vmatprep.subr.mxu0 0.0
      %1417 = vmatpush1.msra.mxu0 0.0
      %1418 = vmatprep.subr.mxu0 0.0
      %1419 = vmatpush1.msra.mxu0 0.0
      %1420 = vmatprep.subr.mxu0 0.0
      %1421 = vmatpush1.msra.mxu0 0.0
      %1422 = vmatprep.subr.mxu0 0.0
      %1423 = vmatpush1.msra.mxu0 0.0
      %1424 = vmatprep.subr.mxu0 0.0
      %1425 = vmatpush1.msra.mxu0 0.0
      %1426 = vmatprep.subr.mxu0 0.0
      %1427 = vmatpush1.msra.mxu0 0.0
      %1428 = vmatprep.subr.mxu0 0.0
      %1429 = vmatpush1.msra.mxu0 0.0
      %1430 = vmatprep.subr.mxu0 0.0
      %1431 = vmatpush1.msra.mxu0 0.0
      %1432 = vmatprep.subr.mxu0 0.0
      %1433 = vmatpush1.msra.mxu0 0.0
      %1434 = vmatprep.subr.mxu0 0.0
      %1435 = vmatpush1.msra.mxu0 0.0
      %1436 = vmatprep.subr.mxu0 0.0
      %1437 = vmatpush1.msra.mxu0 0.0
      %1438 = vmatprep.subr.mxu0 0.0
      %1439 = vmatpush1.msra.mxu0 0.0
      %1440 = vmatprep.subr.mxu0 0.0
      %1441 = vmatpush1.msra.mxu0 %v578
      %1442 = vmatprep.subr.mxu0 0.0
      %1443 = vmatpush2.msra.mxu0 0.0
      %1444 = vmatprep.subr.mxu0 0.0
      %1445 = vmatpush2.msra.mxu0 0.0
      %1446 = vmatprep.subr.mxu0 0.0
      %1447 = vmatpush2.msra.mxu0 0.0
      %1448 = vmatprep.subr.mxu0 0.0
      %1449 = vmatpush2.msra.mxu0 0.0
      %1450 = vmatprep.subr.mxu0 0.0
      %1451 = vmatpush2.msra.mxu0 0.0
      %1452 = vmatprep.subr.mxu0 0.0
      %1453 = vmatpush2.msra.mxu0 0.0
      %1454 = vmatprep.subr.mxu0 0.0
      %1455 = vmatpush2.msra.mxu0 0.0
      %1456 = vmatprep.subr.mxu0 0.0
      %1457 = vmatpush2.msra.mxu0 0.0
      %1458 = vmatprep.subr.mxu0 0.0
      %1459 = vmatpush2.msra.mxu0 0.0
      %1460 = vmatprep.subr.mxu0 0.0
      %1461 = vmatpush2.msra.mxu0 0.0
      %1462 = vmatprep.subr.mxu0 0.0
      %1463 = vmatpush2.msra.mxu0 0.0
      %1464 = vmatprep.subr.mxu0 0.0
      %1465 = vmatpush2.msra.mxu0 0.0
      %1466 = vmatprep.subr.mxu0 0.0
      %1467 = vmatpush2.msra.mxu0 0.0
      %1468 = vmatprep.subr.mxu0 0.0
      %1469 = vmatpush2.msra.mxu0 0.0
      %1470 = vmatprep.subr.mxu0 0.0
      %1471 = vmatpush2.msra.mxu0 0.0
      %1472 = vmatprep.subr.mxu0 0.0
      %1473 = vmatpush2.msra.mxu0 0.0
      %1474 = vmatprep.mubr.f32.mxu0 0.0
      %1475 = vmatmul.mubr.f32.gmra.mxu0 %v1408
      %v1476 = vpop.f32.mrf.mxu0
      %v1477 = vadd.f32 0.0, %v1476
      %v1478 = vpop.f32.mrf.mxu0
      %1479 = vdwg.mxu0
      %v1481 = vsel %vm603, %v543, 0
      %1483 = vmatprep.subr.mxu0 0.0
      %1484 = vmatpush1.msra.mxu0 0.0
      %1485 = vmatprep.subr.mxu0 0.0
      %1486 = vmatpush1.msra.mxu0 0.0
      %1487 = vmatprep.subr.mxu0 0.0
      %1488 = vmatpush1.msra.mxu0 0.0
      %1489 = vmatprep.subr.mxu0 0.0
      %1490 = vmatpush1.msra.mxu0 0.0
      %1491 = vmatprep.subr.mxu0 0.0
      %1492 = vmatpush1.msra.mxu0 0.0
      %1493 = vmatprep.subr.mxu0 0.0
      %1494 = vmatpush1.msra.mxu0 0.0
      %1495 = vmatprep.subr.mxu0 0.0
      %1496 = vmatpush1.msra.mxu0 0.0
      %1497 = vmatprep.subr.mxu0 0.0
      %1498 = vmatpush1.msra.mxu0 0.0
      %1499 = vmatprep.subr.mxu0 0.0
      %1500 = vmatpush1.msra.mxu0 0.0
      %1501 = vmatprep.subr.mxu0 0.0
      %1502 = vmatpush1.msra.mxu0 0.0
      %1503 = vmatprep.subr.mxu0 0.0
      %1504 = vmatpush1.msra.mxu0 0.0
      %1505 = vmatprep.subr.mxu0 0.0
      %1506 = vmatpush1.msra.mxu0 0.0
      %1507 = vmatprep.subr.mxu0 0.0
      %1508 = vmatpush1.msra.mxu0 0.0
      %1509 = vmatprep.subr.mxu0 0.0
      %1510 = vmatpush1.msra.mxu0 0.0
      %1511 = vmatprep.subr.mxu0 0.0
      %1512 = vmatpush1.msra.mxu0 0.0
      %1513 = vmatprep.subr.mxu0 0.0
      %1514 = vmatpush1.msra.mxu0 %v579
      %1515 = vmatprep.subr.mxu0 0.0
      %1516 = vmatpush2.msra.mxu0 0.0
      %1517 = vmatprep.subr.mxu0 0.0
      %1518 = vmatpush2.msra.mxu0 0.0
      %1519 = vmatprep.subr.mxu0 0.0
      %1520 = vmatpush2.msra.mxu0 0.0
      %1521 = vmatprep.subr.mxu0 0.0
      %1522 = vmatpush2.msra.mxu0 0.0
      %1523 = vmatprep.subr.mxu0 0.0
      %1524 = vmatpush2.msra.mxu0 0.0
      %1525 = vmatprep.subr.mxu0 0.0
      %1526 = vmatpush2.msra.mxu0 0.0
      %1527 = vmatprep.subr.mxu0 0.0
      %1528 = vmatpush2.msra.mxu0 0.0
      %1529 = vmatprep.subr.mxu0 0.0
      %1530 = vmatpush2.msra.mxu0 0.0
      %1531 = vmatprep.subr.mxu0 0.0
      %1532 = vmatpush2.msra.mxu0 0.0
      %1533 = vmatprep.subr.mxu0 0.0
      %1534 = vmatpush2.msra.mxu0 0.0
      %1535 = vmatprep.subr.mxu0 0.0
      %1536 = vmatpush2.msra.mxu0 0.0
      %1537 = vmatprep.subr.mxu0 0.0
      %1538 = vmatpush2.msra.mxu0 0.0
      %1539 = vmatprep.subr.mxu0 0.0
      %1540 = vmatpush2.msra.mxu0 0.0
      %1541 = vmatprep.subr.mxu0 0.0
      %1542 = vmatpush2.msra.mxu0 0.0
      %1543 = vmatprep.subr.mxu0 0.0
      %1544 = vmatpush2.msra.mxu0 0.0
      %1545 = vmatprep.subr.mxu0 0.0
      %1546 = vmatpush2.msra.mxu0 0.0
      %1547 = vmatprep.mubr.f32.mxu0 0.0
      %1548 = vmatmul.mubr.f32.gmra.mxu0 %v1481
      %v1549 = vpop.f32.mrf.mxu0
      %v1550 = vadd.f32 0.0, %v1549
      %v1551 = vpop.f32.mrf.mxu0
      %1552 = vdwg.mxu0
      %v1554 = vsel %vm603, %v544, 0
      %1556 = vmatprep.subr.mxu0 0.0
      %1557 = vmatpush1.msra.mxu0 0.0
      %1558 = vmatprep.subr.mxu0 0.0
      %1559 = vmatpush1.msra.mxu0 0.0
      %1560 = vmatprep.subr.mxu0 0.0
      %1561 = vmatpush1.msra.mxu0 0.0
      %1562 = vmatprep.subr.mxu0 0.0
      %1563 = vmatpush1.msra.mxu0 0.0
      %1564 = vmatprep.subr.mxu0 0.0
      %1565 = vmatpush1.msra.mxu0 0.0
      %1566 = vmatprep.subr.mxu0 0.0
      %1567 = vmatpush1.msra.mxu0 0.0
      %1568 = vmatprep.subr.mxu0 0.0
      %1569 = vmatpush1.msra.mxu0 0.0
      %1570 = vmatprep.subr.mxu0 0.0
      %1571 = vmatpush1.msra.mxu0 0.0
      %1572 = vmatprep.subr.mxu0 0.0
      %1573 = vmatpush1.msra.mxu0 0.0
      %1574 = vmatprep.subr.mxu0 0.0
      %1575 = vmatpush1.msra.mxu0 0.0
      %1576 = vmatprep.subr.mxu0 0.0
      %1577 = vmatpush1.msra.mxu0 0.0
      %1578 = vmatprep.subr.mxu0 0.0
      %1579 = vmatpush1.msra.mxu0 0.0
      %1580 = vmatprep.subr.mxu0 0.0
      %1581 = vmatpush1.msra.mxu0 0.0
      %1582 = vmatprep.subr.mxu0 0.0
      %1583 = vmatpush1.msra.mxu0 0.0
      %1584 = vmatprep.subr.mxu0 0.0
      %1585 = vmatpush1.msra.mxu0 0.0
      %1586 = vmatprep.subr.mxu0 0.0
      %1587 = vmatpush1.msra.mxu0 %v580
      %1588 = vmatprep.subr.mxu0 0.0
      %1589 = vmatpush2.msra.mxu0 0.0
      %1590 = vmatprep.subr.mxu0 0.0
      %1591 = vmatpush2.msra.mxu0 0.0
      %1592 = vmatprep.subr.mxu0 0.0
      %1593 = vmatpush2.msra.mxu0 0.0
      %1594 = vmatprep.subr.mxu0 0.0
      %1595 = vmatpush2.msra.mxu0 0.0
      %1596 = vmatprep.subr.mxu0 0.0
      %1597 = vmatpush2.msra.mxu0 0.0
      %1598 = vmatprep.subr.mxu0 0.0
      %1599 = vmatpush2.msra.mxu0 0.0
      %1600 = vmatprep.subr.mxu0 0.0
      %1601 = vmatpush2.msra.mxu0 0.0
      %1602 = vmatprep.subr.mxu0 0.0
      %1603 = vmatpush2.msra.mxu0 0.0
      %1604 = vmatprep.subr.mxu0 0.0
      %1605 = vmatpush2.msra.mxu0 0.0
      %1606 = vmatprep.subr.mxu0 0.0
      %1607 = vmatpush2.msra.mxu0 0.0
      %1608 = vmatprep.subr.mxu0 0.0
      %1609 = vmatpush2.msra.mxu0 0.0
      %1610 = vmatprep.subr.mxu0 0.0
      %1611 = vmatpush2.msra.mxu0 0.0
      %1612 = vmatprep.subr.mxu0 0.0
      %1613 = vmatpush2.msra.mxu0 0.0
      %1614 = vmatprep.subr.mxu0 0.0
      %1615 = vmatpush2.msra.mxu0 0.0
      %1616 = vmatprep.subr.mxu0 0.0
      %1617 = vmatpush2.msra.mxu0 0.0
      %1618 = vmatprep.subr.mxu0 0.0
      %1619 = vmatpush2.msra.mxu0 0.0
      %1620 = vmatprep.mubr.f32.mxu0 0.0
      %1621 = vmatmul.mubr.f32.gmra.mxu0 %v1554
      %v1622 = vpop.f32.mrf.mxu0
      %v1623 = vadd.f32 0.0, %v1622
      %v1624 = vpop.f32.mrf.mxu0
      %1625 = vdwg.mxu0
      %v1627 = vsel %vm603, %v545, 0
      %1629 = vmatprep.subr.mxu0 0.0
      %1630 = vmatpush1.msra.mxu0 0.0
      %1631 = vmatprep.subr.mxu0 0.0
      %1632 = vmatpush1.msra.mxu0 0.0
      %1633 = vmatprep.subr.mxu0 0.0
      %1634 = vmatpush1.msra.mxu0 0.0
      %1635 = vmatprep.subr.mxu0 0.0
      %1636 = vmatpush1.msra.mxu0 0.0
      %1637 = vmatprep.subr.mxu0 0.0
      %1638 = vmatpush1.msra.mxu0 0.0
      %1639 = vmatprep.subr.mxu0 0.0
      %1640 = vmatpush1.msra.mxu0 0.0
      %1641 = vmatprep.subr.mxu0 0.0
      %1642 = vmatpush1.msra.mxu0 0.0
      %1643 = vmatprep.subr.mxu0 0.0
      %1644 = vmatpush1.msra.mxu0 0.0
      %1645 = vmatprep.subr.mxu0 0.0
      %1646 = vmatpush1.msra.mxu0 0.0
      %1647 = vmatprep.subr.mxu0 0.0
      %1648 = vmatpush1.msra.mxu0 0.0
      %1649 = vmatprep.subr.mxu0 0.0
      %1650 = vmatpush1.msra.mxu0 0.0
      %1651 = vmatprep.subr.mxu0 0.0
      %1652 = vmatpush1.msra.mxu0 0.0
      %1653 = vmatprep.subr.mxu0 0.0
      %1654 = vmatpush1.msra.mxu0 0.0
      %1655 = vmatprep.subr.mxu0 0.0
      %1656 = vmatpush1.msra.mxu0 0.0
      %1657 = vmatprep.subr.mxu0 0.0
      %1658 = vmatpush1.msra.mxu0 0.0
      %1659 = vmatprep.subr.mxu0 0.0
      %1660 = vmatpush1.msra.mxu0 %v581
      %1661 = vmatprep.subr.mxu0 0.0
      %1662 = vmatpush2.msra.mxu0 0.0
      %1663 = vmatprep.subr.mxu0 0.0
      %1664 = vmatpush2.msra.mxu0 0.0
      %1665 = vmatprep.subr.mxu0 0.0
      %1666 = vmatpush2.msra.mxu0 0.0
      %1667 = vmatprep.subr.mxu0 0.0
      %1668 = vmatpush2.msra.mxu0 0.0
      %1669 = vmatprep.subr.mxu0 0.0
      %1670 = vmatpush2.msra.mxu0 0.0
      %1671 = vmatprep.subr.mxu0 0.0
      %1672 = vmatpush2.msra.mxu0 0.0
      %1673 = vmatprep.subr.mxu0 0.0
      %1674 = vmatpush2.msra.mxu0 0.0
      %1675 = vmatprep.subr.mxu0 0.0
      %1676 = vmatpush2.msra.mxu0 0.0
      %1677 = vmatprep.subr.mxu0 0.0
      %1678 = vmatpush2.msra.mxu0 0.0
      %1679 = vmatprep.subr.mxu0 0.0
      %1680 = vmatpush2.msra.mxu0 0.0
      %1681 = vmatprep.subr.mxu0 0.0
      %1682 = vmatpush2.msra.mxu0 0.0
      %1683 = vmatprep.subr.mxu0 0.0
      %1684 = vmatpush2.msra.mxu0 0.0
      %1685 = vmatprep.subr.mxu0 0.0
      %1686 = vmatpush2.msra.mxu0 0.0
      %1687 = vmatprep.subr.mxu0 0.0
      %1688 = vmatpush2.msra.mxu0 0.0
      %1689 = vmatprep.subr.mxu0 0.0
      %1690 = vmatpush2.msra.mxu0 0.0
      %1691 = vmatprep.subr.mxu0 0.0
      %1692 = vmatpush2.msra.mxu0 0.0
      %1693 = vmatprep.mubr.f32.mxu0 0.0
      %1694 = vmatmul.mubr.f32.gmra.mxu0 %v1627
      %v1695 = vpop.f32.mrf.mxu0
      %v1696 = vadd.f32 0.0, %v1695
      %v1697 = vpop.f32.mrf.mxu0
      %1698 = vdwg.mxu0
      %v1700 = vsel %vm603, %v546, 0
      %1702 = vmatprep.subr.mxu0 0.0
      %1703 = vmatpush1.msra.mxu0 0.0
      %1704 = vmatprep.subr.mxu0 0.0
      %1705 = vmatpush1.msra.mxu0 0.0
      %1706 = vmatprep.subr.mxu0 0.0
      %1707 = vmatpush1.msra.mxu0 0.0
      %1708 = vmatprep.subr.mxu0 0.0
      %1709 = vmatpush1.msra.mxu0 0.0
      %1710 = vmatprep.subr.mxu0 0.0
      %1711 = vmatpush1.msra.mxu0 0.0
      %1712 = vmatprep.subr.mxu0 0.0
      %1713 = vmatpush1.msra.mxu0 0.0
      %1714 = vmatprep.subr.mxu0 0.0
      %1715 = vmatpush1.msra.mxu0 0.0
      %1716 = vmatprep.subr.mxu0 0.0
      %1717 = vmatpush1.msra.mxu0 0.0
      %1718 = vmatprep.subr.mxu0 0.0
      %1719 = vmatpush1.msra.mxu0 0.0
      %1720 = vmatprep.subr.mxu0 0.0
      %1721 = vmatpush1.msra.mxu0 0.0
      %1722 = vmatprep.subr.mxu0 0.0
      %1723 = vmatpush1.msra.mxu0 0.0
      %1724 = vmatprep.subr.mxu0 0.0
      %1725 = vmatpush1.msra.mxu0 0.0
      %1726 = vmatprep.subr.mxu0 0.0
      %1727 = vmatpush1.msra.mxu0 0.0
      %1728 = vmatprep.subr.mxu0 0.0
      %1729 = vmatpush1.msra.mxu0 0.0
      %1730 = vmatprep.subr.mxu0 0.0
      %1731 = vmatpush1.msra.mxu0 0.0
      %1732 = vmatprep.subr.mxu0 0.0
      %1733 = vmatpush1.msra.mxu0 %v582
      %1734 = vmatprep.subr.mxu0 0.0
      %1735 = vmatpush2.msra.mxu0 0.0
      %1736 = vmatprep.subr.mxu0 0.0
      %1737 = vmatpush2.msra.mxu0 0.0
      %1738 = vmatprep.subr.mxu0 0.0
      %1739 = vmatpush2.msra.mxu0 0.0
      %1740 = vmatprep.subr.mxu0 0.0
      %1741 = vmatpush2.msra.mxu0 0.0
      %1742 = vmatprep.subr.mxu0 0.0
      %1743 = vmatpush2.msra.mxu0 0.0
      %1744 = vmatprep.subr.mxu0 0.0
      %1745 = vmatpush2.msra.mxu0 0.0
      %1746 = vmatprep.subr.mxu0 0.0
      %1747 = vmatpush2.msra.mxu0 0.0
      %1748 = vmatprep.subr.mxu0 0.0
      %1749 = vmatpush2.msra.mxu0 0.0
      %1750 = vmatprep.subr.mxu0 0.0
      %1751 = vmatpush2.msra.mxu0 0.0
      %1752 = vmatprep.subr.mxu0 0.0
      %1753 = vmatpush2.msra.mxu0 0.0
      %1754 = vmatprep.subr.mxu0 0.0
      %1755 = vmatpush2.msra.mxu0 0.0
      %1756 = vmatprep.subr.mxu0 0.0
      %1757 = vmatpush2.msra.mxu0 0.0
      %1758 = vmatprep.subr.mxu0 0.0
      %1759 = vmatpush2.msra.mxu0 0.0
      %1760 = vmatprep.subr.mxu0 0.0
      %1761 = vmatpush2.msra.mxu0 0.0
      %1762 = vmatprep.subr.mxu0 0.0
      %1763 = vmatpush2.msra.mxu0 0.0
      %1764 = vmatprep.subr.mxu0 0.0
      %1765 = vmatpush2.msra.mxu0 0.0
      %1766 = vmatprep.mubr.f32.mxu0 0.0
      %1767 = vmatmul.mubr.f32.gmra.mxu0 %v1700
      %v1768 = vpop.f32.mrf.mxu0
      %v1769 = vadd.f32 0.0, %v1768
      %v1770 = vpop.f32.mrf.mxu0
      %1771 = vdwg.mxu0
      %v1773 = vsel %vm603, %v547, 0
      %1775 = vmatprep.subr.mxu0 0.0
      %1776 = vmatpush1.msra.mxu0 0.0
      %1777 = vmatprep.subr.mxu0 0.0
      %1778 = vmatpush1.msra.mxu0 0.0
      %1779 = vmatprep.subr.mxu0 0.0
      %1780 = vmatpush1.msra.mxu0 0.0
      %1781 = vmatprep.subr.mxu0 0.0
      %1782 = vmatpush1.msra.mxu0 0.0
      %1783 = vmatprep.subr.mxu0 0.0
      %1784 = vmatpush1.msra.mxu0 0.0
      %1785 = vmatprep.subr.mxu0 0.0
      %1786 = vmatpush1.msra.mxu0 0.0
      %1787 = vmatprep.subr.mxu0 0.0
      %1788 = vmatpush1.msra.mxu0 0.0
      %1789 = vmatprep.subr.mxu0 0.0
      %1790 = vmatpush1.msra.mxu0 0.0
      %1791 = vmatprep.subr.mxu0 0.0
      %1792 = vmatpush1.msra.mxu0 0.0
      %1793 = vmatprep.subr.mxu0 0.0
      %1794 = vmatpush1.msra.mxu0 0.0
      %1795 = vmatprep.subr.mxu0 0.0
      %1796 = vmatpush1.msra.mxu0 0.0
      %1797 = vmatprep.subr.mxu0 0.0
      %1798 = vmatpush1.msra.mxu0 0.0
      %1799 = vmatprep.subr.mxu0 0.0
      %1800 = vmatpush1.msra.mxu0 0.0
      %1801 = vmatprep.subr.mxu0 0.0
      %1802 = vmatpush1.msra.mxu0 0.0
      %1803 = vmatprep.subr.mxu0 0.0
      %1804 = vmatpush1.msra.mxu0 0.0
      %1805 = vmatprep.subr.mxu0 0.0
      %1806 = vmatpush1.msra.mxu0 %v583
      %1807 = vmatprep.subr.mxu0 0.0
      %1808 = vmatpush2.msra.mxu0 0.0
      %1809 = vmatprep.subr.mxu0 0.0
      %1810 = vmatpush2.msra.mxu0 0.0
      %1811 = vmatprep.subr.mxu0 0.0
      %1812 = vmatpush2.msra.mxu0 0.0
      %1813 = vmatprep.subr.mxu0 0.0
      %1814 = vmatpush2.msra.mxu0 0.0
      %1815 = vmatprep.subr.mxu0 0.0
      %1816 = vmatpush2.msra.mxu0 0.0
      %1817 = vmatprep.subr.mxu0 0.0
      %1818 = vmatpush2.msra.mxu0 0.0
      %1819 = vmatprep.subr.mxu0 0.0
      %1820 = vmatpush2.msra.mxu0 0.0
      %1821 = vmatprep.subr.mxu0 0.0
      %1822 = vmatpush2.msra.mxu0 0.0
      %1823 = vmatprep.subr.mxu0 0.0
      %1824 = vmatpush2.msra.mxu0 0.0
      %1825 = vmatprep.subr.mxu0 0.0
      %1826 = vmatpush2.msra.mxu0 0.0
      %1827 = vmatprep.subr.mxu0 0.0
      %1828 = vmatpush2.msra.mxu0 0.0
      %1829 = vmatprep.subr.mxu0 0.0
      %1830 = vmatpush2.msra.mxu0 0.0
      %1831 = vmatprep.subr.mxu0 0.0
      %1832 = vmatpush2.msra.mxu0 0.0
      %1833 = vmatprep.subr.mxu0 0.0
      %1834 = vmatpush2.msra.mxu0 0.0
      %1835 = vmatprep.subr.mxu0 0.0
      %1836 = vmatpush2.msra.mxu0 0.0
      %1837 = vmatprep.subr.mxu0 0.0
      %1838 = vmatpush2.msra.mxu0 0.0
      %1839 = vmatprep.mubr.f32.mxu0 0.0
      %1840 = vmatmul.mubr.f32.gmra.mxu0 %v1773
      %v1841 = vpop.f32.mrf.mxu0
      %v1842 = vadd.f32 0.0, %v1841
      %v1843 = vpop.f32.mrf.mxu0
      %1844 = vdwg.mxu0
      %v1846 = vsel %vm603, %v548, 0
      %1848 = vmatprep.subr.mxu0 0.0
      %1849 = vmatpush1.msra.mxu0 0.0
      %1850 = vmatprep.subr.mxu0 0.0
      %1851 = vmatpush1.msra.mxu0 0.0
      %1852 = vmatprep.subr.mxu0 0.0
      %1853 = vmatpush1.msra.mxu0 0.0
      %1854 = vmatprep.subr.mxu0 0.0
      %1855 = vmatpush1.msra.mxu0 0.0
      %1856 = vmatprep.subr.mxu0 0.0
      %1857 = vmatpush1.msra.mxu0 0.0
      %1858 = vmatprep.subr.mxu0 0.0
      %1859 = vmatpush1.msra.mxu0 0.0
      %1860 = vmatprep.subr.mxu0 0.0
      %1861 = vmatpush1.msra.mxu0 0.0
      %1862 = vmatprep.subr.mxu0 0.0
      %1863 = vmatpush1.msra.mxu0 0.0
      %1864 = vmatprep.subr.mxu0 0.0
      %1865 = vmatpush1.msra.mxu0 0.0
      %1866 = vmatprep.subr.mxu0 0.0
      %1867 = vmatpush1.msra.mxu0 0.0
      %1868 = vmatprep.subr.mxu0 0.0
      %1869 = vmatpush1.msra.mxu0 0.0
      %1870 = vmatprep.subr.mxu0 0.0
      %1871 = vmatpush1.msra.mxu0 0.0
      %1872 = vmatprep.subr.mxu0 0.0
      %1873 = vmatpush1.msra.mxu0 0.0
      %1874 = vmatprep.subr.mxu0 0.0
      %1875 = vmatpush1.msra.mxu0 0.0
      %1876 = vmatprep.subr.mxu0 0.0
      %1877 = vmatpush1.msra.mxu0 0.0
      %1878 = vmatprep.subr.mxu0 0.0
      %1879 = vmatpush1.msra.mxu0 %v584
      %1880 = vmatprep.subr.mxu0 0.0
      %1881 = vmatpush2.msra.mxu0 0.0
      %1882 = vmatprep.subr.mxu0 0.0
      %1883 = vmatpush2.msra.mxu0 0.0
      %1884 = vmatprep.subr.mxu0 0.0
      %1885 = vmatpush2.msra.mxu0 0.0
      %1886 = vmatprep.subr.mxu0 0.0
      %1887 = vmatpush2.msra.mxu0 0.0
      %1888 = vmatprep.subr.mxu0 0.0
      %1889 = vmatpush2.msra.mxu0 0.0
      %1890 = vmatprep.subr.mxu0 0.0
      %1891 = vmatpush2.msra.mxu0 0.0
      %1892 = vmatprep.subr.mxu0 0.0
      %1893 = vmatpush2.msra.mxu0 0.0
      %1894 = vmatprep.subr.mxu0 0.0
      %1895 = vmatpush2.msra.mxu0 0.0
      %1896 = vmatprep.subr.mxu0 0.0
      %1897 = vmatpush2.msra.mxu0 0.0
      %1898 = vmatprep.subr.mxu0 0.0
      %1899 = vmatpush2.msra.mxu0 0.0
      %1900 = vmatprep.subr.mxu0 0.0
      %1901 = vmatpush2.msra.mxu0 0.0
      %1902 = vmatprep.subr.mxu0 0.0
      %1903 = vmatpush2.msra.mxu0 0.0
      %1904 = vmatprep.subr.mxu0 0.0
      %1905 = vmatpush2.msra.mxu0 0.0
      %1906 = vmatprep.subr.mxu0 0.0
      %1907 = vmatpush2.msra.mxu0 0.0
      %1908 = vmatprep.subr.mxu0 0.0
      %1909 = vmatpush2.msra.mxu0 0.0
      %1910 = vmatprep.subr.mxu0 0.0
      %1911 = vmatpush2.msra.mxu0 0.0
      %1912 = vmatprep.mubr.f32.mxu0 0.0
      %1913 = vmatmul.mubr.f32.gmra.mxu0 %v1846
      %v1914 = vpop.f32.mrf.mxu0
      %v1915 = vadd.f32 0.0, %v1914
      %v1916 = vpop.f32.mrf.mxu0
      %1917 = vdwg.mxu0
      %v1919 = vsel %vm603, %v549, 0
      %1921 = vmatprep.subr.mxu0 0.0
      %1922 = vmatpush1.msra.mxu0 0.0
      %1923 = vmatprep.subr.mxu0 0.0
      %1924 = vmatpush1.msra.mxu0 0.0
      %1925 = vmatprep.subr.mxu0 0.0
      %1926 = vmatpush1.msra.mxu0 0.0
      %1927 = vmatprep.subr.mxu0 0.0
      %1928 = vmatpush1.msra.mxu0 0.0
      %1929 = vmatprep.subr.mxu0 0.0
      %1930 = vmatpush1.msra.mxu0 0.0
      %1931 = vmatprep.subr.mxu0 0.0
      %1932 = vmatpush1.msra.mxu0 0.0
      %1933 = vmatprep.subr.mxu0 0.0
      %1934 = vmatpush1.msra.mxu0 0.0
      %1935 = vmatprep.subr.mxu0 0.0
      %1936 = vmatpush1.msra.mxu0 0.0
      %1937 = vmatprep.subr.mxu0 0.0
      %1938 = vmatpush1.msra.mxu0 0.0
      %1939 = vmatprep.subr.mxu0 0.0
      %1940 = vmatpush1.msra.mxu0 0.0
      %1941 = vmatprep.subr.mxu0 0.0
      %1942 = vmatpush1.msra.mxu0 0.0
      %1943 = vmatprep.subr.mxu0 0.0
      %1944 = vmatpush1.msra.mxu0 0.0
      %1945 = vmatprep.subr.mxu0 0.0
      %1946 = vmatpush1.msra.mxu0 0.0
      %1947 = vmatprep.subr.mxu0 0.0
      %1948 = vmatpush1.msra.mxu0 0.0
      %1949 = vmatprep.subr.mxu0 0.0
      %1950 = vmatpush1.msra.mxu0 0.0
      %1951 = vmatprep.subr.mxu0 0.0
      %1952 = vmatpush1.msra.mxu0 %v585
      %1953 = vmatprep.subr.mxu0 0.0
      %1954 = vmatpush2.msra.mxu0 0.0
      %1955 = vmatprep.subr.mxu0 0.0
      %1956 = vmatpush2.msra.mxu0 0.0
      %1957 = vmatprep.subr.mxu0 0.0
      %1958 = vmatpush2.msra.mxu0 0.0
      %1959 = vmatprep.subr.mxu0 0.0
      %1960 = vmatpush2.msra.mxu0 0.0
      %1961 = vmatprep.subr.mxu0 0.0
      %1962 = vmatpush2.msra.mxu0 0.0
      %1963 = vmatprep.subr.mxu0 0.0
      %1964 = vmatpush2.msra.mxu0 0.0
      %1965 = vmatprep.subr.mxu0 0.0
      %1966 = vmatpush2.msra.mxu0 0.0
      %1967 = vmatprep.subr.mxu0 0.0
      %1968 = vmatpush2.msra.mxu0 0.0
      %1969 = vmatprep.subr.mxu0 0.0
      %1970 = vmatpush2.msra.mxu0 0.0
      %1971 = vmatprep.subr.mxu0 0.0
      %1972 = vmatpush2.msra.mxu0 0.0
      %1973 = vmatprep.subr.mxu0 0.0
      %1974 = vmatpush2.msra.mxu0 0.0
      %1975 = vmatprep.subr.mxu0 0.0
      %1976 = vmatpush2.msra.mxu0 0.0
      %1977 = vmatprep.subr.mxu0 0.0
      %1978 = vmatpush2.msra.mxu0 0.0
      %1979 = vmatprep.subr.mxu0 0.0
      %1980 = vmatpush2.msra.mxu0 0.0
      %1981 = vmatprep.subr.mxu0 0.0
      %1982 = vmatpush2.msra.mxu0 0.0
      %1983 = vmatprep.subr.mxu0 0.0
      %1984 = vmatpush2.msra.mxu0 0.0
      %1985 = vmatprep.mubr.f32.mxu0 0.0
      %1986 = vmatmul.mubr.f32.gmra.mxu0 %v1919
      %v1987 = vpop.f32.mrf.mxu0
      %v1988 = vadd.f32 0.0, %v1987
      %v1989 = vpop.f32.mrf.mxu0
      %1990 = vdwg.mxu0
      %v1992 = vsel %vm603, %v550, 0
      %1994 = vmatprep.subr.mxu0 0.0
      %1995 = vmatpush1.msra.mxu0 0.0
      %1996 = vmatprep.subr.mxu0 0.0
      %1997 = vmatpush1.msra.mxu0 0.0
      %1998 = vmatprep.subr.mxu0 0.0
      %1999 = vmatpush1.msra.mxu0 0.0
      %2000 = vmatprep.subr.mxu0 0.0
      %2001 = vmatpush1.msra.mxu0 0.0
      %2002 = vmatprep.subr.mxu0 0.0
      %2003 = vmatpush1.msra.mxu0 0.0
      %2004 = vmatprep.subr.mxu0 0.0
      %2005 = vmatpush1.msra.mxu0 0.0
      %2006 = vmatprep.subr.mxu0 0.0
      %2007 = vmatpush1.msra.mxu0 0.0
      %2008 = vmatprep.subr.mxu0 0.0
      %2009 = vmatpush1.msra.mxu0 0.0
      %2010 = vmatprep.subr.mxu0 0.0
      %2011 = vmatpush1.msra.mxu0 0.0
      %2012 = vmatprep.subr.mxu0 0.0
      %2013 = vmatpush1.msra.mxu0 0.0
      %2014 = vmatprep.subr.mxu0 0.0
      %2015 = vmatpush1.msra.mxu0 0.0
      %2016 = vmatprep.subr.mxu0 0.0
      %2017 = vmatpush1.msra.mxu0 0.0
      %2018 = vmatprep.subr.mxu0 0.0
      %2019 = vmatpush1.msra.mxu0 0.0
      %2020 = vmatprep.subr.mxu0 0.0
      %2021 = vmatpush1.msra.mxu0 0.0
      %2022 = vmatprep.subr.mxu0 0.0
      %2023 = vmatpush1.msra.mxu0 0.0
      %2024 = vmatprep.subr.mxu0 0.0
      %2025 = vmatpush1.msra.mxu0 %v586
      %2026 = vmatprep.subr.mxu0 0.0
      %2027 = vmatpush2.msra.mxu0 0.0
      %2028 = vmatprep.subr.mxu0 0.0
      %2029 = vmatpush2.msra.mxu0 0.0
      %2030 = vmatprep.subr.mxu0 0.0
      %2031 = vmatpush2.msra.mxu0 0.0
      %2032 = vmatprep.subr.mxu0 0.0
      %2033 = vmatpush2.msra.mxu0 0.0
      %2034 = vmatprep.subr.mxu0 0.0
      %2035 = vmatpush2.msra.mxu0 0.0
      %2036 = vmatprep.subr.mxu0 0.0
      %2037 = vmatpush2.msra.mxu0 0.0
      %2038 = vmatprep.subr.mxu0 0.0
      %2039 = vmatpush2.msra.mxu0 0.0
      %2040 = vmatprep.subr.mxu0 0.0
      %2041 = vmatpush2.msra.mxu0 0.0
      %2042 = vmatprep.subr.mxu0 0.0
      %2043 = vmatpush2.msra.mxu0 0.0
      %2044 = vmatprep.subr.mxu0 0.0
      %2045 = vmatpush2.msra.mxu0 0.0
      %2046 = vmatprep.subr.mxu0 0.0
      %2047 = vmatpush2.msra.mxu0 0.0
      %2048 = vmatprep.subr.mxu0 0.0
      %2049 = vmatpush2.msra.mxu0 0.0
      %2050 = vmatprep.subr.mxu0 0.0
      %2051 = vmatpush2.msra.mxu0 0.0
      %2052 = vmatprep.subr.mxu0 0.0
      %2053 = vmatpush2.msra.mxu0 0.0
      %2054 = vmatprep.subr.mxu0 0.0
      %2055 = vmatpush2.msra.mxu0 0.0
      %2056 = vmatprep.subr.mxu0 0.0
      %2057 = vmatpush2.msra.mxu0 0.0
      %2058 = vmatprep.mubr.f32.mxu0 0.0
      %2059 = vmatmul.mubr.f32.gmra.mxu0 %v1992
      %v2060 = vpop.f32.mrf.mxu0
      %v2061 = vadd.f32 0.0, %v2060
      %v2062 = vpop.f32.mrf.mxu0
      %2063 = vdwg.mxu0
      %v2065 = vsel %vm603, %v551, 0
      %2067 = vmatprep.subr.mxu0 0.0
      %2068 = vmatpush1.msra.mxu0 0.0
      %2069 = vmatprep.subr.mxu0 0.0
      %2070 = vmatpush1.msra.mxu0 0.0
      %2071 = vmatprep.subr.mxu0 0.0
      %2072 = vmatpush1.msra.mxu0 0.0
      %2073 = vmatprep.subr.mxu0 0.0
      %2074 = vmatpush1.msra.mxu0 0.0
      %2075 = vmatprep.subr.mxu0 0.0
      %2076 = vmatpush1.msra.mxu0 0.0
      %2077 = vmatprep.subr.mxu0 0.0
      %2078 = vmatpush1.msra.mxu0 0.0
      %2079 = vmatprep.subr.mxu0 0.0
      %2080 = vmatpush1.msra.mxu0 0.0
      %2081 = vmatprep.subr.mxu0 0.0
      %2082 = vmatpush1.msra.mxu0 0.0
      %2083 = vmatprep.subr.mxu0 0.0
      %2084 = vmatpush1.msra.mxu0 0.0
      %2085 = vmatprep.subr.mxu0 0.0
      %2086 = vmatpush1.msra.mxu0 0.0
      %2087 = vmatprep.subr.mxu0 0.0
      %2088 = vmatpush1.msra.mxu0 0.0
      %2089 = vmatprep.subr.mxu0 0.0
      %2090 = vmatpush1.msra.mxu0 0.0
      %2091 = vmatprep.subr.mxu0 0.0
      %2092 = vmatpush1.msra.mxu0 0.0
      %2093 = vmatprep.subr.mxu0 0.0
      %2094 = vmatpush1.msra.mxu0 0.0
      %2095 = vmatprep.subr.mxu0 0.0
      %2096 = vmatpush1.msra.mxu0 0.0
      %2097 = vmatprep.subr.mxu0 0.0
      %2098 = vmatpush1.msra.mxu0 %v587
      %2099 = vmatprep.subr.mxu0 0.0
      %2100 = vmatpush2.msra.mxu0 0.0
      %2101 = vmatprep.subr.mxu0 0.0
      %2102 = vmatpush2.msra.mxu0 0.0
      %2103 = vmatprep.subr.mxu0 0.0
      %2104 = vmatpush2.msra.mxu0 0.0
      %2105 = vmatprep.subr.mxu0 0.0
      %2106 = vmatpush2.msra.mxu0 0.0
      %2107 = vmatprep.subr.mxu0 0.0
      %2108 = vmatpush2.msra.mxu0 0.0
      %2109 = vmatprep.subr.mxu0 0.0
      %2110 = vmatpush2.msra.mxu0 0.0
      %2111 = vmatprep.subr.mxu0 0.0
      %2112 = vmatpush2.msra.mxu0 0.0
      %2113 = vmatprep.subr.mxu0 0.0
      %2114 = vmatpush2.msra.mxu0 0.0
      %2115 = vmatprep.subr.mxu0 0.0
      %2116 = vmatpush2.msra.mxu0 0.0
      %2117 = vmatprep.subr.mxu0 0.0
      %2118 = vmatpush2.msra.mxu0 0.0
      %2119 = vmatprep.subr.mxu0 0.0
      %2120 = vmatpush2.msra.mxu0 0.0
      %2121 = vmatprep.subr.mxu0 0.0
      %2122 = vmatpush2.msra.mxu0 0.0
      %2123 = vmatprep.subr.mxu0 0.0
      %2124 = vmatpush2.msra.mxu0 0.0
      %2125 = vmatprep.subr.mxu0 0.0
      %2126 = vmatpush2.msra.mxu0 0.0
      %2127 = vmatprep.subr.mxu0 0.0
      %2128 = vmatpush2.msra.mxu0 0.0
      %2129 = vmatprep.subr.mxu0 0.0
      %2130 = vmatpush2.msra.mxu0 0.0
      %2131 = vmatprep.mubr.f32.mxu0 0.0
      %2132 = vmatmul.mubr.f32.gmra.mxu0 %v2065
      %v2133 = vpop.f32.mrf.mxu0
      %v2134 = vadd.f32 0.0, %v2133
      %v2135 = vpop.f32.mrf.mxu0
      %2136 = vdwg.mxu0
      %v2138 = vsel %vm603, %v552, 0
      %2140 = vmatprep.subr.mxu0 0.0
      %2141 = vmatpush1.msra.mxu0 0.0
      %2142 = vmatprep.subr.mxu0 0.0
      %2143 = vmatpush1.msra.mxu0 0.0
      %2144 = vmatprep.subr.mxu0 0.0
      %2145 = vmatpush1.msra.mxu0 0.0
      %2146 = vmatprep.subr.mxu0 0.0
      %2147 = vmatpush1.msra.mxu0 0.0
      %2148 = vmatprep.subr.mxu0 0.0
      %2149 = vmatpush1.msra.mxu0 0.0
      %2150 = vmatprep.subr.mxu0 0.0
      %2151 = vmatpush1.msra.mxu0 0.0
      %2152 = vmatprep.subr.mxu0 0.0
      %2153 = vmatpush1.msra.mxu0 0.0
      %2154 = vmatprep.subr.mxu0 0.0
      %2155 = vmatpush1.msra.mxu0 0.0
      %2156 = vmatprep.subr.mxu0 0.0
      %2157 = vmatpush1.msra.mxu0 0.0
      %2158 = vmatprep.subr.mxu0 0.0
      %2159 = vmatpush1.msra.mxu0 0.0
      %2160 = vmatprep.subr.mxu0 0.0
      %2161 = vmatpush1.msra.mxu0 0.0
      %2162 = vmatprep.subr.mxu0 0.0
      %2163 = vmatpush1.msra.mxu0 0.0
      %2164 = vmatprep.subr.mxu0 0.0
      %2165 = vmatpush1.msra.mxu0 0.0
      %2166 = vmatprep.subr.mxu0 0.0
      %2167 = vmatpush1.msra.mxu0 0.0
      %2168 = vmatprep.subr.mxu0 0.0
      %2169 = vmatpush1.msra.mxu0 0.0
      %2170 = vmatprep.subr.mxu0 0.0
      %2171 = vmatpush1.msra.mxu0 %v588
      %2172 = vmatprep.subr.mxu0 0.0
      %2173 = vmatpush2.msra.mxu0 0.0
      %2174 = vmatprep.subr.mxu0 0.0
      %2175 = vmatpush2.msra.mxu0 0.0
      %2176 = vmatprep.subr.mxu0 0.0
      %2177 = vmatpush2.msra.mxu0 0.0
      %2178 = vmatprep.subr.mxu0 0.0
      %2179 = vmatpush2.msra.mxu0 0.0
      %2180 = vmatprep.subr.mxu0 0.0
      %2181 = vmatpush2.msra.mxu0 0.0
      %2182 = vmatprep.subr.mxu0 0.0
      %2183 = vmatpush2.msra.mxu0 0.0
      %2184 = vmatprep.subr.mxu0 0.0
      %2185 = vmatpush2.msra.mxu0 0.0
      %2186 = vmatprep.subr.mxu0 0.0
      %2187 = vmatpush2.msra.mxu0 0.0
      %2188 = vmatprep.subr.mxu0 0.0
      %2189 = vmatpush2.msra.mxu0 0.0
      %2190 = vmatprep.subr.mxu0 0.0
      %2191 = vmatpush2.msra.mxu0 0.0
      %2192 = vmatprep.subr.mxu0 0.0
      %2193 = vmatpush2.msra.mxu0 0.0
      %2194 = vmatprep.subr.mxu0 0.0
      %2195 = vmatpush2.msra.mxu0 0.0
      %2196 = vmatprep.subr.mxu0 0.0
      %2197 = vmatpush2.msra.mxu0 0.0
      %2198 = vmatprep.subr.mxu0 0.0
      %2199 = vmatpush2.msra.mxu0 0.0
      %2200 = vmatprep.subr.mxu0 0.0
      %2201 = vmatpush2.msra.mxu0 0.0
      %2202 = vmatprep.subr.mxu0 0.0
      %2203 = vmatpush2.msra.mxu0 0.0
      %2204 = vmatprep.mubr.f32.mxu0 0.0
      %2205 = vmatmul.mubr.f32.gmra.mxu0 %v2138
      %v2206 = vpop.f32.mrf.mxu0
      %v2207 = vadd.f32 0.0, %v2206
      %v2208 = vpop.f32.mrf.mxu0
      %2209 = vdwg.mxu0
      %v2211 = vsel %vm603, %v553, 0
      %2213 = vmatprep.subr.mxu0 0.0
      %2214 = vmatpush1.msra.mxu0 0.0
      %2215 = vmatprep.subr.mxu0 0.0
      %2216 = vmatpush1.msra.mxu0 0.0
      %2217 = vmatprep.subr.mxu0 0.0
      %2218 = vmatpush1.msra.mxu0 0.0
      %2219 = vmatprep.subr.mxu0 0.0
      %2220 = vmatpush1.msra.mxu0 0.0
      %2221 = vmatprep.subr.mxu0 0.0
      %2222 = vmatpush1.msra.mxu0 0.0
      %2223 = vmatprep.subr.mxu0 0.0
      %2224 = vmatpush1.msra.mxu0 0.0
      %2225 = vmatprep.subr.mxu0 0.0
      %2226 = vmatpush1.msra.mxu0 0.0
      %2227 = vmatprep.subr.mxu0 0.0
      %2228 = vmatpush1.msra.mxu0 0.0
      %2229 = vmatprep.subr.mxu0 0.0
      %2230 = vmatpush1.msra.mxu0 0.0
      %2231 = vmatprep.subr.mxu0 0.0
      %2232 = vmatpush1.msra.mxu0 0.0
      %2233 = vmatprep.subr.mxu0 0.0
      %2234 = vmatpush1.msra.mxu0 0.0
      %2235 = vmatprep.subr.mxu0 0.0
      %2236 = vmatpush1.msra.mxu0 0.0
      %2237 = vmatprep.subr.mxu0 0.0
      %2238 = vmatpush1.msra.mxu0 0.0
      %2239 = vmatprep.subr.mxu0 0.0
      %2240 = vmatpush1.msra.mxu0 0.0
      %2241 = vmatprep.subr.mxu0 0.0
      %2242 = vmatpush1.msra.mxu0 0.0
      %2243 = vmatprep.subr.mxu0 0.0
      %2244 = vmatpush1.msra.mxu0 %v589
      %2245 = vmatprep.subr.mxu0 0.0
      %2246 = vmatpush2.msra.mxu0 0.0
      %2247 = vmatprep.subr.mxu0 0.0
      %2248 = vmatpush2.msra.mxu0 0.0
      %2249 = vmatprep.subr.mxu0 0.0
      %2250 = vmatpush2.msra.mxu0 0.0
      %2251 = vmatprep.subr.mxu0 0.0
      %2252 = vmatpush2.msra.mxu0 0.0
      %2253 = vmatprep.subr.mxu0 0.0
      %2254 = vmatpush2.msra.mxu0 0.0
      %2255 = vmatprep.subr.mxu0 0.0
      %2256 = vmatpush2.msra.mxu0 0.0
      %2257 = vmatprep.subr.mxu0 0.0
      %2258 = vmatpush2.msra.mxu0 0.0
      %2259 = vmatprep.subr.mxu0 0.0
      %2260 = vmatpush2.msra.mxu0 0.0
      %2261 = vmatprep.subr.mxu0 0.0
      %2262 = vmatpush2.msra.mxu0 0.0
      %2263 = vmatprep.subr.mxu0 0.0
      %2264 = vmatpush2.msra.mxu0 0.0
      %2265 = vmatprep.subr.mxu0 0.0
      %2266 = vmatpush2.msra.mxu0 0.0
      %2267 = vmatprep.subr.mxu0 0.0
      %2268 = vmatpush2.msra.mxu0 0.0
      %2269 = vmatprep.subr.mxu0 0.0
      %2270 = vmatpush2.msra.mxu0 0.0
      %2271 = vmatprep.subr.mxu0 0.0
      %2272 = vmatpush2.msra.mxu0 0.0
      %2273 = vmatprep.subr.mxu0 0.0
      %2274 = vmatpush2.msra.mxu0 0.0
      %2275 = vmatprep.subr.mxu0 0.0
      %2276 = vmatpush2.msra.mxu0 0.0
      %2277 = vmatprep.mubr.f32.mxu0 0.0
      %2278 = vmatmul.mubr.f32.gmra.mxu0 %v2211
      %v2279 = vpop.f32.mrf.mxu0
      %v2280 = vadd.f32 0.0, %v2279
      %v2281 = vpop.f32.mrf.mxu0
      %2282 = vdwg.mxu0
      %v2284 = vsel %vm603, %v554, 0
      %2286 = vmatprep.subr.mxu0 0.0
      %2287 = vmatpush1.msra.mxu0 0.0
      %2288 = vmatprep.subr.mxu0 0.0
      %2289 = vmatpush1.msra.mxu0 0.0
      %2290 = vmatprep.subr.mxu0 0.0
      %2291 = vmatpush1.msra.mxu0 0.0
      %2292 = vmatprep.subr.mxu0 0.0
      %2293 = vmatpush1.msra.mxu0 0.0
      %2294 = vmatprep.subr.mxu0 0.0
      %2295 = vmatpush1.msra.mxu0 0.0
      %2296 = vmatprep.subr.mxu0 0.0
      %2297 = vmatpush1.msra.mxu0 0.0
      %2298 = vmatprep.subr.mxu0 0.0
      %2299 = vmatpush1.msra.mxu0 0.0
      %2300 = vmatprep.subr.mxu0 0.0
      %2301 = vmatpush1.msra.mxu0 0.0
      %2302 = vmatprep.subr.mxu0 0.0
      %2303 = vmatpush1.msra.mxu0 0.0
      %2304 = vmatprep.subr.mxu0 0.0
      %2305 = vmatpush1.msra.mxu0 0.0
      %2306 = vmatprep.subr.mxu0 0.0
      %2307 = vmatpush1.msra.mxu0 0.0
      %2308 = vmatprep.subr.mxu0 0.0
      %2309 = vmatpush1.msra.mxu0 0.0
      %2310 = vmatprep.subr.mxu0 0.0
      %2311 = vmatpush1.msra.mxu0 0.0
      %2312 = vmatprep.subr.mxu0 0.0
      %2313 = vmatpush1.msra.mxu0 0.0
      %2314 = vmatprep.subr.mxu0 0.0
      %2315 = vmatpush1.msra.mxu0 0.0
      %2316 = vmatprep.subr.mxu0 0.0
      %2317 = vmatpush1.msra.mxu0 %v590
      %2318 = vmatprep.subr.mxu0 0.0
      %2319 = vmatpush2.msra.mxu0 0.0
      %2320 = vmatprep.subr.mxu0 0.0
      %2321 = vmatpush2.msra.mxu0 0.0
      %2322 = vmatprep.subr.mxu0 0.0
      %2323 = vmatpush2.msra.mxu0 0.0
      %2324 = vmatprep.subr.mxu0 0.0
      %2325 = vmatpush2.msra.mxu0 0.0
      %2326 = vmatprep.subr.mxu0 0.0
      %2327 = vmatpush2.msra.mxu0 0.0
      %2328 = vmatprep.subr.mxu0 0.0
      %2329 = vmatpush2.msra.mxu0 0.0
      %2330 = vmatprep.subr.mxu0 0.0
      %2331 = vmatpush2.msra.mxu0 0.0
      %2332 = vmatprep.subr.mxu0 0.0
      %2333 = vmatpush2.msra.mxu0 0.0
      %2334 = vmatprep.subr.mxu0 0.0
      %2335 = vmatpush2.msra.mxu0 0.0
      %2336 = vmatprep.subr.mxu0 0.0
      %2337 = vmatpush2.msra.mxu0 0.0
      %2338 = vmatprep.subr.mxu0 0.0
      %2339 = vmatpush2.msra.mxu0 0.0
      %2340 = vmatprep.subr.mxu0 0.0
      %2341 = vmatpush2.msra.mxu0 0.0
      %2342 = vmatprep.subr.mxu0 0.0
      %2343 = vmatpush2.msra.mxu0 0.0
      %2344 = vmatprep.subr.mxu0 0.0
      %2345 = vmatpush2.msra.mxu0 0.0
      %2346 = vmatprep.subr.mxu0 0.0
      %2347 = vmatpush2.msra.mxu0 0.0
      %2348 = vmatprep.subr.mxu0 0.0
      %2349 = vmatpush2.msra.mxu0 0.0
      %2350 = vmatprep.mubr.f32.mxu0 0.0
      %2351 = vmatmul.mubr.f32.gmra.mxu0 %v2284
      %v2352 = vpop.f32.mrf.mxu0
      %v2353 = vadd.f32 0.0, %v2352
      %v2354 = vpop.f32.mrf.mxu0
      %2355 = vdwg.mxu0
      %v2357 = vsel %vm603, %v555, 0
      %2359 = vmatprep.subr.mxu0 0.0
      %2360 = vmatpush1.msra.mxu0 0.0
      %2361 = vmatprep.subr.mxu0 0.0
      %2362 = vmatpush1.msra.mxu0 0.0
      %2363 = vmatprep.subr.mxu0 0.0
      %2364 = vmatpush1.msra.mxu0 0.0
      %2365 = vmatprep.subr.mxu0 0.0
      %2366 = vmatpush1.msra.mxu0 0.0
      %2367 = vmatprep.subr.mxu0 0.0
      %2368 = vmatpush1.msra.mxu0 0.0
      %2369 = vmatprep.subr.mxu0 0.0
      %2370 = vmatpush1.msra.mxu0 0.0
      %2371 = vmatprep.subr.mxu0 0.0
      %2372 = vmatpush1.msra.mxu0 0.0
      %2373 = vmatprep.subr.mxu0 0.0
      %2374 = vmatpush1.msra.mxu0 0.0
      %2375 = vmatprep.subr.mxu0 0.0
      %2376 = vmatpush1.msra.mxu0 0.0
      %2377 = vmatprep.subr.mxu0 0.0
      %2378 = vmatpush1.msra.mxu0 0.0
      %2379 = vmatprep.subr.mxu0 0.0
      %2380 = vmatpush1.msra.mxu0 0.0
      %2381 = vmatprep.subr.mxu0 0.0
      %2382 = vmatpush1.msra.mxu0 0.0
      %2383 = vmatprep.subr.mxu0 0.0
      %2384 = vmatpush1.msra.mxu0 0.0
      %2385 = vmatprep.subr.mxu0 0.0
      %2386 = vmatpush1.msra.mxu0 0.0
      %2387 = vmatprep.subr.mxu0 0.0
      %2388 = vmatpush1.msra.mxu0 0.0
      %2389 = vmatprep.subr.mxu0 0.0
      %2390 = vmatpush1.msra.mxu0 %v591
      %2391 = vmatprep.subr.mxu0 0.0
      %2392 = vmatpush2.msra.mxu0 0.0
      %2393 = vmatprep.subr.mxu0 0.0
      %2394 = vmatpush2.msra.mxu0 0.0
      %2395 = vmatprep.subr.mxu0 0.0
      %2396 = vmatpush2.msra.mxu0 0.0
      %2397 = vmatprep.subr.mxu0 0.0
      %2398 = vmatpush2.msra.mxu0 0.0
      %2399 = vmatprep.subr.mxu0 0.0
      %2400 = vmatpush2.msra.mxu0 0.0
      %2401 = vmatprep.subr.mxu0 0.0
      %2402 = vmatpush2.msra.mxu0 0.0
      %2403 = vmatprep.subr.mxu0 0.0
      %2404 = vmatpush2.msra.mxu0 0.0
      %2405 = vmatprep.subr.mxu0 0.0
      %2406 = vmatpush2.msra.mxu0 0.0
      %2407 = vmatprep.subr.mxu0 0.0
      %2408 = vmatpush2.msra.mxu0 0.0
      %2409 = vmatprep.subr.mxu0 0.0
      %2410 = vmatpush2.msra.mxu0 0.0
      %2411 = vmatprep.subr.mxu0 0.0
      %2412 = vmatpush2.msra.mxu0 0.0
      %2413 = vmatprep.subr.mxu0 0.0
      %2414 = vmatpush2.msra.mxu0 0.0
      %2415 = vmatprep.subr.mxu0 0.0
      %2416 = vmatpush2.msra.mxu0 0.0
      %2417 = vmatprep.subr.mxu0 0.0
      %2418 = vmatpush2.msra.mxu0 0.0
      %2419 = vmatprep.subr.mxu0 0.0
      %2420 = vmatpush2.msra.mxu0 0.0
      %2421 = vmatprep.subr.mxu0 0.0
      %2422 = vmatpush2.msra.mxu0 0.0
      %2423 = vmatprep.mubr.f32.mxu0 0.0
      %2424 = vmatmul.mubr.f32.gmra.mxu0 %v2357
      %v2425 = vpop.f32.mrf.mxu0
      %v2426 = vadd.f32 0.0, %v2425
      %v2427 = vpop.f32.mrf.mxu0
      %2428 = vdwg.mxu0
      %v2430 = vsel %vm603, %v556, 0
      %2432 = vmatprep.subr.mxu0 0.0
      %2433 = vmatpush1.msra.mxu0 0.0
      %2434 = vmatprep.subr.mxu0 0.0
      %2435 = vmatpush1.msra.mxu0 0.0
      %2436 = vmatprep.subr.mxu0 0.0
      %2437 = vmatpush1.msra.mxu0 0.0
      %2438 = vmatprep.subr.mxu0 0.0
      %2439 = vmatpush1.msra.mxu0 0.0
      %2440 = vmatprep.subr.mxu0 0.0
      %2441 = vmatpush1.msra.mxu0 0.0
      %2442 = vmatprep.subr.mxu0 0.0
      %2443 = vmatpush1.msra.mxu0 0.0
      %2444 = vmatprep.subr.mxu0 0.0
      %2445 = vmatpush1.msra.mxu0 0.0
      %2446 = vmatprep.subr.mxu0 0.0
      %2447 = vmatpush1.msra.mxu0 0.0
      %2448 = vmatprep.subr.mxu0 0.0
      %2449 = vmatpush1.msra.mxu0 0.0
      %2450 = vmatprep.subr.mxu0 0.0
      %2451 = vmatpush1.msra.mxu0 0.0
      %2452 = vmatprep.subr.mxu0 0.0
      %2453 = vmatpush1.msra.mxu0 0.0
      %2454 = vmatprep.subr.mxu0 0.0
      %2455 = vmatpush1.msra.mxu0 0.0
      %2456 = vmatprep.subr.mxu0 0.0
      %2457 = vmatpush1.msra.mxu0 0.0
      %2458 = vmatprep.subr.mxu0 0.0
      %2459 = vmatpush1.msra.mxu0 0.0
      %2460 = vmatprep.subr.mxu0 0.0
      %2461 = vmatpush1.msra.mxu0 0.0
      %2462 = vmatprep.subr.mxu0 0.0
      %2463 = vmatpush1.msra.mxu0 %v592
      %2464 = vmatprep.subr.mxu0 0.0
      %2465 = vmatpush2.msra.mxu0 0.0
      %2466 = vmatprep.subr.mxu0 0.0
      %2467 = vmatpush2.msra.mxu0 0.0
      %2468 = vmatprep.subr.mxu0 0.0
      %2469 = vmatpush2.msra.mxu0 0.0
      %2470 = vmatprep.subr.mxu0 0.0
      %2471 = vmatpush2.msra.mxu0 0.0
      %2472 = vmatprep.subr.mxu0 0.0
      %2473 = vmatpush2.msra.mxu0 0.0
      %2474 = vmatprep.subr.mxu0 0.0
      %2475 = vmatpush2.msra.mxu0 0.0
      %2476 = vmatprep.subr.mxu0 0.0
      %2477 = vmatpush2.msra.mxu0 0.0
      %2478 = vmatprep.subr.mxu0 0.0
      %2479 = vmatpush2.msra.mxu0 0.0
      %2480 = vmatprep.subr.mxu0 0.0
      %2481 = vmatpush2.msra.mxu0 0.0
      %2482 = vmatprep.subr.mxu0 0.0
      %2483 = vmatpush2.msra.mxu0 0.0
      %2484 = vmatprep.subr.mxu0 0.0
      %2485 = vmatpush2.msra.mxu0 0.0
      %2486 = vmatprep.subr.mxu0 0.0
      %2487 = vmatpush2.msra.mxu0 0.0
      %2488 = vmatprep.subr.mxu0 0.0
      %2489 = vmatpush2.msra.mxu0 0.0
      %2490 = vmatprep.subr.mxu0 0.0
      %2491 = vmatpush2.msra.mxu0 0.0
      %2492 = vmatprep.subr.mxu0 0.0
      %2493 = vmatpush2.msra.mxu0 0.0
      %2494 = vmatprep.subr.mxu0 0.0
      %2495 = vmatpush2.msra.mxu0 0.0
      %2496 = vmatprep.mubr.f32.mxu0 0.0
      %2497 = vmatmul.mubr.f32.gmra.mxu0 %v2430
      %v2498 = vpop.f32.mrf.mxu0
      %v2499 = vadd.f32 0.0, %v2498
      %v2500 = vpop.f32.mrf.mxu0
      %2501 = vdwg.mxu0
      %v2503 = vsel %vm603, %v557, 0
      %2505 = vmatprep.subr.mxu0 0.0
      %2506 = vmatpush1.msra.mxu0 0.0
      %2507 = vmatprep.subr.mxu0 0.0
      %2508 = vmatpush1.msra.mxu0 0.0
      %2509 = vmatprep.subr.mxu0 0.0
      %2510 = vmatpush1.msra.mxu0 0.0
      %2511 = vmatprep.subr.mxu0 0.0
      %2512 = vmatpush1.msra.mxu0 0.0
      %2513 = vmatprep.subr.mxu0 0.0
      %2514 = vmatpush1.msra.mxu0 0.0
      %2515 = vmatprep.subr.mxu0 0.0
      %2516 = vmatpush1.msra.mxu0 0.0
      %2517 = vmatprep.subr.mxu0 0.0
      %2518 = vmatpush1.msra.mxu0 0.0
      %2519 = vmatprep.subr.mxu0 0.0
      %2520 = vmatpush1.msra.mxu0 0.0
      %2521 = vmatprep.subr.mxu0 0.0
      %2522 = vmatpush1.msra.mxu0 0.0
      %2523 = vmatprep.subr.mxu0 0.0
      %2524 = vmatpush1.msra.mxu0 0.0
      %2525 = vmatprep.subr.mxu0 0.0
      %2526 = vmatpush1.msra.mxu0 0.0
      %2527 = vmatprep.subr.mxu0 0.0
      %2528 = vmatpush1.msra.mxu0 0.0
      %2529 = vmatprep.subr.mxu0 0.0
      %2530 = vmatpush1.msra.mxu0 0.0
      %2531 = vmatprep.subr.mxu0 0.0
      %2532 = vmatpush1.msra.mxu0 0.0
      %2533 = vmatprep.subr.mxu0 0.0
      %2534 = vmatpush1.msra.mxu0 0.0
      %2535 = vmatprep.subr.mxu0 0.0
      %2536 = vmatpush1.msra.mxu0 %v593
      %2537 = vmatprep.subr.mxu0 0.0
      %2538 = vmatpush2.msra.mxu0 0.0
      %2539 = vmatprep.subr.mxu0 0.0
      %2540 = vmatpush2.msra.mxu0 0.0
      %2541 = vmatprep.subr.mxu0 0.0
      %2542 = vmatpush2.msra.mxu0 0.0
      %2543 = vmatprep.subr.mxu0 0.0
      %2544 = vmatpush2.msra.mxu0 0.0
      %2545 = vmatprep.subr.mxu0 0.0
      %2546 = vmatpush2.msra.mxu0 0.0
      %2547 = vmatprep.subr.mxu0 0.0
      %2548 = vmatpush2.msra.mxu0 0.0
      %2549 = vmatprep.subr.mxu0 0.0
      %2550 = vmatpush2.msra.mxu0 0.0
      %2551 = vmatprep.subr.mxu0 0.0
      %2552 = vmatpush2.msra.mxu0 0.0
      %2553 = vmatprep.subr.mxu0 0.0
      %2554 = vmatpush2.msra.mxu0 0.0
      %2555 = vmatprep.subr.mxu0 0.0
      %2556 = vmatpush2.msra.mxu0 0.0
      %2557 = vmatprep.subr.mxu0 0.0
      %2558 = vmatpush2.msra.mxu0 0.0
      %2559 = vmatprep.subr.mxu0 0.0
      %2560 = vmatpush2.msra.mxu0 0.0
      %2561 = vmatprep.subr.mxu0 0.0
      %2562 = vmatpush2.msra.mxu0 0.0
      %2563 = vmatprep.subr.mxu0 0.0
      %2564 = vmatpush2.msra.mxu0 0.0
      %2565 = vmatprep.subr.mxu0 0.0
      %2566 = vmatpush2.msra.mxu0 0.0
      %2567 = vmatprep.subr.mxu0 0.0
      %2568 = vmatpush2.msra.mxu0 0.0
      %2569 = vmatprep.mubr.f32.mxu0 0.0
      %2570 = vmatmul.mubr.f32.gmra.mxu0 %v2503
      %v2571 = vpop.f32.mrf.mxu0
      %v2572 = vadd.f32 0.0, %v2571
      %v2573 = vpop.f32.mrf.mxu0
      %2574 = vdwg.mxu0
      %v2576 = vsel %vm603, %v558, 0
      %2578 = vmatprep.subr.mxu0 0.0
      %2579 = vmatpush1.msra.mxu0 0.0
      %2580 = vmatprep.subr.mxu0 0.0
      %2581 = vmatpush1.msra.mxu0 0.0
      %2582 = vmatprep.subr.mxu0 0.0
      %2583 = vmatpush1.msra.mxu0 0.0
      %2584 = vmatprep.subr.mxu0 0.0
      %2585 = vmatpush1.msra.mxu0 0.0
      %2586 = vmatprep.subr.mxu0 0.0
      %2587 = vmatpush1.msra.mxu0 0.0
      %2588 = vmatprep.subr.mxu0 0.0
      %2589 = vmatpush1.msra.mxu0 0.0
      %2590 = vmatprep.subr.mxu0 0.0
      %2591 = vmatpush1.msra.mxu0 0.0
      %2592 = vmatprep.subr.mxu0 0.0
      %2593 = vmatpush1.msra.mxu0 0.0
      %2594 = vmatprep.subr.mxu0 0.0
      %2595 = vmatpush1.msra.mxu0 0.0
      %2596 = vmatprep.subr.mxu0 0.0
      %2597 = vmatpush1.msra.mxu0 0.0
      %2598 = vmatprep.subr.mxu0 0.0
      %2599 = vmatpush1.msra.mxu0 0.0
      %2600 = vmatprep.subr.mxu0 0.0
      %2601 = vmatpush1.msra.mxu0 0.0
      %2602 = vmatprep.subr.mxu0 0.0
      %2603 = vmatpush1.msra.mxu0 0.0
      %2604 = vmatprep.subr.mxu0 0.0
      %2605 = vmatpush1.msra.mxu0 0.0
      %2606 = vmatprep.subr.mxu0 0.0
      %2607 = vmatpush1.msra.mxu0 0.0
      %2608 = vmatprep.subr.mxu0 0.0
      %2609 = vmatpush1.msra.mxu0 %v594
      %2610 = vmatprep.subr.mxu0 0.0
      %2611 = vmatpush2.msra.mxu0 0.0
      %2612 = vmatprep.subr.mxu0 0.0
      %2613 = vmatpush2.msra.mxu0 0.0
      %2614 = vmatprep.subr.mxu0 0.0
      %2615 = vmatpush2.msra.mxu0 0.0
      %2616 = vmatprep.subr.mxu0 0.0
      %2617 = vmatpush2.msra.mxu0 0.0
      %2618 = vmatprep.subr.mxu0 0.0
      %2619 = vmatpush2.msra.mxu0 0.0
      %2620 = vmatprep.subr.mxu0 0.0
      %2621 = vmatpush2.msra.mxu0 0.0
      %2622 = vmatprep.subr.mxu0 0.0
      %2623 = vmatpush2.msra.mxu0 0.0
      %2624 = vmatprep.subr.mxu0 0.0
      %2625 = vmatpush2.msra.mxu0 0.0
      %2626 = vmatprep.subr.mxu0 0.0
      %2627 = vmatpush2.msra.mxu0 0.0
      %2628 = vmatprep.subr.mxu0 0.0
      %2629 = vmatpush2.msra.mxu0 0.0
      %2630 = vmatprep.subr.mxu0 0.0
      %2631 = vmatpush2.msra.mxu0 0.0
      %2632 = vmatprep.subr.mxu0 0.0
      %2633 = vmatpush2.msra.mxu0 0.0
      %2634 = vmatprep.subr.mxu0 0.0
      %2635 = vmatpush2.msra.mxu0 0.0
      %2636 = vmatprep.subr.mxu0 0.0
      %2637 = vmatpush2.msra.mxu0 0.0
      %2638 = vmatprep.subr.mxu0 0.0
      %2639 = vmatpush2.msra.mxu0 0.0
      %2640 = vmatprep.subr.mxu0 0.0
      %2641 = vmatpush2.msra.mxu0 0.0
      %2642 = vmatprep.mubr.f32.mxu0 0.0
      %2643 = vmatmul.mubr.f32.gmra.mxu0 %v2576
      %v2644 = vpop.f32.mrf.mxu0
      %v2645 = vadd.f32 0.0, %v2644
      %v2646 = vpop.f32.mrf.mxu0
      %2647 = vdwg.mxu0
      %v2649 = vsel %vm603, %v559, 0
      %2651 = vmatprep.subr.mxu0 0.0
      %2652 = vmatpush1.msra.mxu0 0.0
      %2653 = vmatprep.subr.mxu0 0.0
      %2654 = vmatpush1.msra.mxu0 0.0
      %2655 = vmatprep.subr.mxu0 0.0
      %2656 = vmatpush1.msra.mxu0 0.0
      %2657 = vmatprep.subr.mxu0 0.0
      %2658 = vmatpush1.msra.mxu0 0.0
      %2659 = vmatprep.subr.mxu0 0.0
      %2660 = vmatpush1.msra.mxu0 0.0
      %2661 = vmatprep.subr.mxu0 0.0
      %2662 = vmatpush1.msra.mxu0 0.0
      %2663 = vmatprep.subr.mxu0 0.0
      %2664 = vmatpush1.msra.mxu0 0.0
      %2665 = vmatprep.subr.mxu0 0.0
      %2666 = vmatpush1.msra.mxu0 0.0
      %2667 = vmatprep.subr.mxu0 0.0
      %2668 = vmatpush1.msra.mxu0 0.0
      %2669 = vmatprep.subr.mxu0 0.0
      %2670 = vmatpush1.msra.mxu0 0.0
      %2671 = vmatprep.subr.mxu0 0.0
      %2672 = vmatpush1.msra.mxu0 0.0
      %2673 = vmatprep.subr.mxu0 0.0
      %2674 = vmatpush1.msra.mxu0 0.0
      %2675 = vmatprep.subr.mxu0 0.0
      %2676 = vmatpush1.msra.mxu0 0.0
      %2677 = vmatprep.subr.mxu0 0.0
      %2678 = vmatpush1.msra.mxu0 0.0
      %2679 = vmatprep.subr.mxu0 0.0
      %2680 = vmatpush1.msra.mxu0 0.0
      %2681 = vmatprep.subr.mxu0 0.0
      %2682 = vmatpush1.msra.mxu0 %v595
      %2683 = vmatprep.subr.mxu0 0.0
      %2684 = vmatpush2.msra.mxu0 0.0
      %2685 = vmatprep.subr.mxu0 0.0
      %2686 = vmatpush2.msra.mxu0 0.0
      %2687 = vmatprep.subr.mxu0 0.0
      %2688 = vmatpush2.msra.mxu0 0.0
      %2689 = vmatprep.subr.mxu0 0.0
      %2690 = vmatpush2.msra.mxu0 0.0
      %2691 = vmatprep.subr.mxu0 0.0
      %2692 = vmatpush2.msra.mxu0 0.0
      %2693 = vmatprep.subr.mxu0 0.0
      %2694 = vmatpush2.msra.mxu0 0.0
      %2695 = vmatprep.subr.mxu0 0.0
      %2696 = vmatpush2.msra.mxu0 0.0
      %2697 = vmatprep.subr.mxu0 0.0
      %2698 = vmatpush2.msra.mxu0 0.0
      %2699 = vmatprep.subr.mxu0 0.0
      %2700 = vmatpush2.msra.mxu0 0.0
      %2701 = vmatprep.subr.mxu0 0.0
      %2702 = vmatpush2.msra.mxu0 0.0
      %2703 = vmatprep.subr.mxu0 0.0
      %2704 = vmatpush2.msra.mxu0 0.0
      %2705 = vmatprep.subr.mxu0 0.0
      %2706 = vmatpush2.msra.mxu0 0.0
      %2707 = vmatprep.subr.mxu0 0.0
      %2708 = vmatpush2.msra.mxu0 0.0
      %2709 = vmatprep.subr.mxu0 0.0
      %2710 = vmatpush2.msra.mxu0 0.0
      %2711 = vmatprep.subr.mxu0 0.0
      %2712 = vmatpush2.msra.mxu0 0.0
      %2713 = vmatprep.subr.mxu0 0.0
      %2714 = vmatpush2.msra.mxu0 0.0
      %2715 = vmatprep.mubr.f32.mxu0 0.0
      %2716 = vmatmul.mubr.f32.gmra.mxu0 %v2649
      %v2717 = vpop.f32.mrf.mxu0
      %v2718 = vadd.f32 0.0, %v2717
      %v2719 = vpop.f32.mrf.mxu0
      %2720 = vdwg.mxu0
      %v2722 = vsel %vm603, %v560, 0
      %2724 = vmatprep.subr.mxu0 0.0
      %2725 = vmatpush1.msra.mxu0 0.0
      %2726 = vmatprep.subr.mxu0 0.0
      %2727 = vmatpush1.msra.mxu0 0.0
      %2728 = vmatprep.subr.mxu0 0.0
      %2729 = vmatpush1.msra.mxu0 0.0
      %2730 = vmatprep.subr.mxu0 0.0
      %2731 = vmatpush1.msra.mxu0 0.0
      %2732 = vmatprep.subr.mxu0 0.0
      %2733 = vmatpush1.msra.mxu0 0.0
      %2734 = vmatprep.subr.mxu0 0.0
      %2735 = vmatpush1.msra.mxu0 0.0
      %2736 = vmatprep.subr.mxu0 0.0
      %2737 = vmatpush1.msra.mxu0 0.0
      %2738 = vmatprep.subr.mxu0 0.0
      %2739 = vmatpush1.msra.mxu0 0.0
      %2740 = vmatprep.subr.mxu0 0.0
      %2741 = vmatpush1.msra.mxu0 0.0
      %2742 = vmatprep.subr.mxu0 0.0
      %2743 = vmatpush1.msra.mxu0 0.0
      %2744 = vmatprep.subr.mxu0 0.0
      %2745 = vmatpush1.msra.mxu0 0.0
      %2746 = vmatprep.subr.mxu0 0.0
      %2747 = vmatpush1.msra.mxu0 0.0
      %2748 = vmatprep.subr.mxu0 0.0
      %2749 = vmatpush1.msra.mxu0 0.0
      %2750 = vmatprep.subr.mxu0 0.0
      %2751 = vmatpush1.msra.mxu0 0.0
      %2752 = vmatprep.subr.mxu0 0.0
      %2753 = vmatpush1.msra.mxu0 0.0
      %2754 = vmatprep.subr.mxu0 0.0
      %2755 = vmatpush1.msra.mxu0 %v596
      %2756 = vmatprep.subr.mxu0 0.0
      %2757 = vmatpush2.msra.mxu0 0.0
      %2758 = vmatprep.subr.mxu0 0.0
      %2759 = vmatpush2.msra.mxu0 0.0
      %2760 = vmatprep.subr.mxu0 0.0
      %2761 = vmatpush2.msra.mxu0 0.0
      %2762 = vmatprep.subr.mxu0 0.0
      %2763 = vmatpush2.msra.mxu0 0.0
      %2764 = vmatprep.subr.mxu0 0.0
      %2765 = vmatpush2.msra.mxu0 0.0
      %2766 = vmatprep.subr.mxu0 0.0
      %2767 = vmatpush2.msra.mxu0 0.0
      %2768 = vmatprep.subr.mxu0 0.0
      %2769 = vmatpush2.msra.mxu0 0.0
      %2770 = vmatprep.subr.mxu0 0.0
      %2771 = vmatpush2.msra.mxu0 0.0
      %2772 = vmatprep.subr.mxu0 0.0
      %2773 = vmatpush2.msra.mxu0 0.0
      %2774 = vmatprep.subr.mxu0 0.0
      %2775 = vmatpush2.msra.mxu0 0.0
      %2776 = vmatprep.subr.mxu0 0.0
      %2777 = vmatpush2.msra.mxu0 0.0
      %2778 = vmatprep.subr.mxu0 0.0
      %2779 = vmatpush2.msra.mxu0 0.0
      %2780 = vmatprep.subr.mxu0 0.0
      %2781 = vmatpush2.msra.mxu0 0.0
      %2782 = vmatprep.subr.mxu0 0.0
      %2783 = vmatpush2.msra.mxu0 0.0
      %2784 = vmatprep.subr.mxu0 0.0
      %2785 = vmatpush2.msra.mxu0 0.0
      %2786 = vmatprep.subr.mxu0 0.0
      %2787 = vmatpush2.msra.mxu0 0.0
      %2788 = vmatprep.mubr.f32.mxu0 0.0
      %2789 = vmatmul.mubr.f32.gmra.mxu0 %v2722
      %v2790 = vpop.f32.mrf.mxu0
      %v2791 = vadd.f32 0.0, %v2790
      %v2792 = vpop.f32.mrf.mxu0
      %2793 = vdwg.mxu0
      %v2795 = vsel %vm603, %v561, 0
      %2797 = vmatprep.subr.mxu0 0.0
      %2798 = vmatpush1.msra.mxu0 0.0
      %2799 = vmatprep.subr.mxu0 0.0
      %2800 = vmatpush1.msra.mxu0 0.0
      %2801 = vmatprep.subr.mxu0 0.0
      %2802 = vmatpush1.msra.mxu0 0.0
      %2803 = vmatprep.subr.mxu0 0.0
      %2804 = vmatpush1.msra.mxu0 0.0
      %2805 = vmatprep.subr.mxu0 0.0
      %2806 = vmatpush1.msra.mxu0 0.0
      %2807 = vmatprep.subr.mxu0 0.0
      %2808 = vmatpush1.msra.mxu0 0.0
      %2809 = vmatprep.subr.mxu0 0.0
      %2810 = vmatpush1.msra.mxu0 0.0
      %2811 = vmatprep.subr.mxu0 0.0
      %2812 = vmatpush1.msra.mxu0 0.0
      %2813 = vmatprep.subr.mxu0 0.0
      %2814 = vmatpush1.msra.mxu0 0.0
      %2815 = vmatprep.subr.mxu0 0.0
      %2816 = vmatpush1.msra.mxu0 0.0
      %2817 = vmatprep.subr.mxu0 0.0
      %2818 = vmatpush1.msra.mxu0 0.0
      %2819 = vmatprep.subr.mxu0 0.0
      %2820 = vmatpush1.msra.mxu0 0.0
      %2821 = vmatprep.subr.mxu0 0.0
      %2822 = vmatpush1.msra.mxu0 0.0
      %2823 = vmatprep.subr.mxu0 0.0
      %2824 = vmatpush1.msra.mxu0 0.0
      %2825 = vmatprep.subr.mxu0 0.0
      %2826 = vmatpush1.msra.mxu0 0.0
      %2827 = vmatprep.subr.mxu0 0.0
      %2828 = vmatpush1.msra.mxu0 %v597
      %2829 = vmatprep.subr.mxu0 0.0
      %2830 = vmatpush2.msra.mxu0 0.0
      %2831 = vmatprep.subr.mxu0 0.0
      %2832 = vmatpush2.msra.mxu0 0.0
      %2833 = vmatprep.subr.mxu0 0.0
      %2834 = vmatpush2.msra.mxu0 0.0
      %2835 = vmatprep.subr.mxu0 0.0
      %2836 = vmatpush2.msra.mxu0 0.0
      %2837 = vmatprep.subr.mxu0 0.0
      %2838 = vmatpush2.msra.mxu0 0.0
      %2839 = vmatprep.subr.mxu0 0.0
      %2840 = vmatpush2.msra.mxu0 0.0
      %2841 = vmatprep.subr.mxu0 0.0
      %2842 = vmatpush2.msra.mxu0 0.0
      %2843 = vmatprep.subr.mxu0 0.0
      %2844 = vmatpush2.msra.mxu0 0.0
      %2845 = vmatprep.subr.mxu0 0.0
      %2846 = vmatpush2.msra.mxu0 0.0
      %2847 = vmatprep.subr.mxu0 0.0
      %2848 = vmatpush2.msra.mxu0 0.0
      %2849 = vmatprep.subr.mxu0 0.0
      %2850 = vmatpush2.msra.mxu0 0.0
      %2851 = vmatprep.subr.mxu0 0.0
      %2852 = vmatpush2.msra.mxu0 0.0
      %2853 = vmatprep.subr.mxu0 0.0
      %2854 = vmatpush2.msra.mxu0 0.0
      %2855 = vmatprep.subr.mxu0 0.0
      %2856 = vmatpush2.msra.mxu0 0.0
      %2857 = vmatprep.subr.mxu0 0.0
      %2858 = vmatpush2.msra.mxu0 0.0
      %2859 = vmatprep.subr.mxu0 0.0
      %2860 = vmatpush2.msra.mxu0 0.0
      %2861 = vmatprep.mubr.f32.mxu0 0.0
      %2862 = vmatmul.mubr.f32.gmra.mxu0 %v2795
      %v2863 = vpop.f32.mrf.mxu0
      %v2864 = vadd.f32 0.0, %v2863
      %v2865 = vpop.f32.mrf.mxu0
      %2866 = vdwg.mxu0
      %v2868 = vsel %vm603, %v562, 0
      %2870 = vmatprep.subr.mxu0 0.0
      %2871 = vmatpush1.msra.mxu0 0.0
      %2872 = vmatprep.subr.mxu0 0.0
      %2873 = vmatpush1.msra.mxu0 0.0
      %2874 = vmatprep.subr.mxu0 0.0
      %2875 = vmatpush1.msra.mxu0 0.0
      %2876 = vmatprep.subr.mxu0 0.0
      %2877 = vmatpush1.msra.mxu0 0.0
      %2878 = vmatprep.subr.mxu0 0.0
      %2879 = vmatpush1.msra.mxu0 0.0
      %2880 = vmatprep.subr.mxu0 0.0
      %2881 = vmatpush1.msra.mxu0 0.0
      %2882 = vmatprep.subr.mxu0 0.0
      %2883 = vmatpush1.msra.mxu0 0.0
      %2884 = vmatprep.subr.mxu0 0.0
      %2885 = vmatpush1.msra.mxu0 0.0
      %2886 = vmatprep.subr.mxu0 0.0
      %2887 = vmatpush1.msra.mxu0 0.0
      %2888 = vmatprep.subr.mxu0 0.0
      %2889 = vmatpush1.msra.mxu0 0.0
      %2890 = vmatprep.subr.mxu0 0.0
      %2891 = vmatpush1.msra.mxu0 0.0
      %2892 = vmatprep.subr.mxu0 0.0
      %2893 = vmatpush1.msra.mxu0 0.0
      %2894 = vmatprep.subr.mxu0 0.0
      %2895 = vmatpush1.msra.mxu0 0.0
      %2896 = vmatprep.subr.mxu0 0.0
      %2897 = vmatpush1.msra.mxu0 0.0
      %2898 = vmatprep.subr.mxu0 0.0
      %2899 = vmatpush1.msra.mxu0 0.0
      %2900 = vmatprep.subr.mxu0 0.0
      %2901 = vmatpush1.msra.mxu0 %v598
      %2902 = vmatprep.subr.mxu0 0.0
      %2903 = vmatpush2.msra.mxu0 0.0
      %2904 = vmatprep.subr.mxu0 0.0
      %2905 = vmatpush2.msra.mxu0 0.0
      %2906 = vmatprep.subr.mxu0 0.0
      %2907 = vmatpush2.msra.mxu0 0.0
      %2908 = vmatprep.subr.mxu0 0.0
      %2909 = vmatpush2.msra.mxu0 0.0
      %2910 = vmatprep.subr.mxu0 0.0
      %2911 = vmatpush2.msra.mxu0 0.0
      %2912 = vmatprep.subr.mxu0 0.0
      %2913 = vmatpush2.msra.mxu0 0.0
      %2914 = vmatprep.subr.mxu0 0.0
      %2915 = vmatpush2.msra.mxu0 0.0
      %2916 = vmatprep.subr.mxu0 0.0
      %2917 = vmatpush2.msra.mxu0 0.0
      %2918 = vmatprep.subr.mxu0 0.0
      %2919 = vmatpush2.msra.mxu0 0.0
      %2920 = vmatprep.subr.mxu0 0.0
      %2921 = vmatpush2.msra.mxu0 0.0
      %2922 = vmatprep.subr.mxu0 0.0
      %2923 = vmatpush2.msra.mxu0 0.0
      %2924 = vmatprep.subr.mxu0 0.0
      %2925 = vmatpush2.msra.mxu0 0.0
      %2926 = vmatprep.subr.mxu0 0.0
      %2927 = vmatpush2.msra.mxu0 0.0
      %2928 = vmatprep.subr.mxu0 0.0
      %2929 = vmatpush2.msra.mxu0 0.0
      %2930 = vmatprep.subr.mxu0 0.0
      %2931 = vmatpush2.msra.mxu0 0.0
      %2932 = vmatprep.subr.mxu0 0.0
      %2933 = vmatpush2.msra.mxu0 0.0
      %2934 = vmatprep.mubr.f32.mxu0 0.0
      %2935 = vmatmul.mubr.f32.gmra.mxu0 %v2868
      %v2936 = vpop.f32.mrf.mxu0
      %v2937 = vadd.f32 0.0, %v2936
      %v2938 = vpop.f32.mrf.mxu0
      %2939 = vdwg.mxu0
      %v2941 = vsel %vm603, %v563, 0
      %2943 = vmatprep.subr.mxu0 0.0
      %2944 = vmatpush1.msra.mxu0 0.0
      %2945 = vmatprep.subr.mxu0 0.0
      %2946 = vmatpush1.msra.mxu0 0.0
      %2947 = vmatprep.subr.mxu0 0.0
      %2948 = vmatpush1.msra.mxu0 0.0
      %2949 = vmatprep.subr.mxu0 0.0
      %2950 = vmatpush1.msra.mxu0 0.0
      %2951 = vmatprep.subr.mxu0 0.0
      %2952 = vmatpush1.msra.mxu0 0.0
      %2953 = vmatprep.subr.mxu0 0.0
      %2954 = vmatpush1.msra.mxu0 0.0
      %2955 = vmatprep.subr.mxu0 0.0
      %2956 = vmatpush1.msra.mxu0 0.0
      %2957 = vmatprep.subr.mxu0 0.0
      %2958 = vmatpush1.msra.mxu0 0.0
      %2959 = vmatprep.subr.mxu0 0.0
      %2960 = vmatpush1.msra.mxu0 0.0
      %2961 = vmatprep.subr.mxu0 0.0
      %2962 = vmatpush1.msra.mxu0 0.0
      %2963 = vmatprep.subr.mxu0 0.0
      %2964 = vmatpush1.msra.mxu0 0.0
      %2965 = vmatprep.subr.mxu0 0.0
      %2966 = vmatpush1.msra.mxu0 0.0
      %2967 = vmatprep.subr.mxu0 0.0
      %2968 = vmatpush1.msra.mxu0 0.0
      %2969 = vmatprep.subr.mxu0 0.0
      %2970 = vmatpush1.msra.mxu0 0.0
      %2971 = vmatprep.subr.mxu0 0.0
      %2972 = vmatpush1.msra.mxu0 0.0
      %2973 = vmatprep.subr.mxu0 0.0
      %2974 = vmatpush1.msra.mxu0 %v599
      %2975 = vmatprep.subr.mxu0 0.0
      %2976 = vmatpush2.msra.mxu0 0.0
      %2977 = vmatprep.subr.mxu0 0.0
      %2978 = vmatpush2.msra.mxu0 0.0
      %2979 = vmatprep.subr.mxu0 0.0
      %2980 = vmatpush2.msra.mxu0 0.0
      %2981 = vmatprep.subr.mxu0 0.0
      %2982 = vmatpush2.msra.mxu0 0.0
      %2983 = vmatprep.subr.mxu0 0.0
      %2984 = vmatpush2.msra.mxu0 0.0
      %2985 = vmatprep.subr.mxu0 0.0
      %2986 = vmatpush2.msra.mxu0 0.0
      %2987 = vmatprep.subr.mxu0 0.0
      %2988 = vmatpush2.msra.mxu0 0.0
      %2989 = vmatprep.subr.mxu0 0.0
      %2990 = vmatpush2.msra.mxu0 0.0
      %2991 = vmatprep.subr.mxu0 0.0
      %2992 = vmatpush2.msra.mxu0 0.0
      %2993 = vmatprep.subr.mxu0 0.0
      %2994 = vmatpush2.msra.mxu0 0.0
      %2995 = vmatprep.subr.mxu0 0.0
      %2996 = vmatpush2.msra.mxu0 0.0
      %2997 = vmatprep.subr.mxu0 0.0
      %2998 = vmatpush2.msra.mxu0 0.0
      %2999 = vmatprep.subr.mxu0 0.0
      %3000 = vmatpush2.msra.mxu0 0.0
      %3001 = vmatprep.subr.mxu0 0.0
      %3002 = vmatpush2.msra.mxu0 0.0
      %3003 = vmatprep.subr.mxu0 0.0
      %3004 = vmatpush2.msra.mxu0 0.0
      %3005 = vmatprep.subr.mxu0 0.0
      %3006 = vmatpush2.msra.mxu0 0.0
      %3007 = vmatprep.mubr.f32.mxu0 0.0
      %3008 = vmatmul.mubr.f32.gmra.mxu0 %v2941
      %v3009 = vpop.f32.mrf.mxu0
      %v3010 = vadd.f32 0.0, %v3009
      %v3011 = vpop.f32.mrf.mxu0
      %3012 = vdwg.mxu0
      %v3014 = vsel %vm603, %v564, 0
      %3016 = vmatprep.subr.mxu0 0.0
      %3017 = vmatpush1.msra.mxu0 0.0
      %3018 = vmatprep.subr.mxu0 0.0
      %3019 = vmatpush1.msra.mxu0 0.0
      %3020 = vmatprep.subr.mxu0 0.0
      %3021 = vmatpush1.msra.mxu0 0.0
      %3022 = vmatprep.subr.mxu0 0.0
      %3023 = vmatpush1.msra.mxu0 0.0
      %3024 = vmatprep.subr.mxu0 0.0
      %3025 = vmatpush1.msra.mxu0 0.0
      %3026 = vmatprep.subr.mxu0 0.0
      %3027 = vmatpush1.msra.mxu0 0.0
      %3028 = vmatprep.subr.mxu0 0.0
      %3029 = vmatpush1.msra.mxu0 0.0
      %3030 = vmatprep.subr.mxu0 0.0
      %3031 = vmatpush1.msra.mxu0 0.0
      %3032 = vmatprep.subr.mxu0 0.0
      %3033 = vmatpush1.msra.mxu0 0.0
      %3034 = vmatprep.subr.mxu0 0.0
      %3035 = vmatpush1.msra.mxu0 0.0
      %3036 = vmatprep.subr.mxu0 0.0
      %3037 = vmatpush1.msra.mxu0 0.0
      %3038 = vmatprep.subr.mxu0 0.0
      %3039 = vmatpush1.msra.mxu0 0.0
      %3040 = vmatprep.subr.mxu0 0.0
      %3041 = vmatpush1.msra.mxu0 0.0
      %3042 = vmatprep.subr.mxu0 0.0
      %3043 = vmatpush1.msra.mxu0 0.0
      %3044 = vmatprep.subr.mxu0 0.0
      %3045 = vmatpush1.msra.mxu0 0.0
      %3046 = vmatprep.subr.mxu0 0.0
      %3047 = vmatpush1.msra.mxu0 %v600
      %3048 = vmatprep.subr.mxu0 0.0
      %3049 = vmatpush2.msra.mxu0 0.0
      %3050 = vmatprep.subr.mxu0 0.0
      %3051 = vmatpush2.msra.mxu0 0.0
      %3052 = vmatprep.subr.mxu0 0.0
      %3053 = vmatpush2.msra.mxu0 0.0
      %3054 = vmatprep.subr.mxu0 0.0
      %3055 = vmatpush2.msra.mxu0 0.0
      %3056 = vmatprep.subr.mxu0 0.0
      %3057 = vmatpush2.msra.mxu0 0.0
      %3058 = vmatprep.subr.mxu0 0.0
      %3059 = vmatpush2.msra.mxu0 0.0
      %3060 = vmatprep.subr.mxu0 0.0
      %3061 = vmatpush2.msra.mxu0 0.0
      %3062 = vmatprep.subr.mxu0 0.0
      %3063 = vmatpush2.msra.mxu0 0.0
      %3064 = vmatprep.subr.mxu0 0.0
      %3065 = vmatpush2.msra.mxu0 0.0
      %3066 = vmatprep.subr.mxu0 0.0
      %3067 = vmatpush2.msra.mxu0 0.0
      %3068 = vmatprep.subr.mxu0 0.0
      %3069 = vmatpush2.msra.mxu0 0.0
      %3070 = vmatprep.subr.mxu0 0.0
      %3071 = vmatpush2.msra.mxu0 0.0
      %3072 = vmatprep.subr.mxu0 0.0
      %3073 = vmatpush2.msra.mxu0 0.0
      %3074 = vmatprep.subr.mxu0 0.0
      %3075 = vmatpush2.msra.mxu0 0.0
      %3076 = vmatprep.subr.mxu0 0.0
      %3077 = vmatpush2.msra.mxu0 0.0
      %3078 = vmatprep.subr.mxu0 0.0
      %3079 = vmatpush2.msra.mxu0 0.0
      %3080 = vmatprep.mubr.f32.mxu0 0.0
      %3081 = vmatmul.mubr.f32.gmra.mxu0 %v3014
      %v3082 = vpop.f32.mrf.mxu0
      %v3083 = vadd.f32 0.0, %v3082
      %v3084 = vpop.f32.mrf.mxu0
      %3085 = vdwg.mxu0
      %v3087 = vsel %vm603, %v565, 0
      %3089 = vmatprep.subr.mxu0 0.0
      %3090 = vmatpush1.msra.mxu0 0.0
      %3091 = vmatprep.subr.mxu0 0.0
      %3092 = vmatpush1.msra.mxu0 0.0
      %3093 = vmatprep.subr.mxu0 0.0
      %3094 = vmatpush1.msra.mxu0 0.0
      %3095 = vmatprep.subr.mxu0 0.0
      %3096 = vmatpush1.msra.mxu0 0.0
      %3097 = vmatprep.subr.mxu0 0.0
      %3098 = vmatpush1.msra.mxu0 0.0
      %3099 = vmatprep.subr.mxu0 0.0
      %3100 = vmatpush1.msra.mxu0 0.0
      %3101 = vmatprep.subr.mxu0 0.0
      %3102 = vmatpush1.msra.mxu0 0.0
      %3103 = vmatprep.subr.mxu0 0.0
      %3104 = vmatpush1.msra.mxu0 0.0
      %3105 = vmatprep.subr.mxu0 0.0
      %3106 = vmatpush1.msra.mxu0 0.0
      %3107 = vmatprep.subr.mxu0 0.0
      %3108 = vmatpush1.msra.mxu0 0.0
      %3109 = vmatprep.subr.mxu0 0.0
      %3110 = vmatpush1.msra.mxu0 0.0
      %3111 = vmatprep.subr.mxu0 0.0
      %3112 = vmatpush1.msra.mxu0 0.0
      %3113 = vmatprep.subr.mxu0 0.0
      %3114 = vmatpush1.msra.mxu0 0.0
      %3115 = vmatprep.subr.mxu0 0.0
      %3116 = vmatpush1.msra.mxu0 0.0
      %3117 = vmatprep.subr.mxu0 0.0
      %3118 = vmatpush1.msra.mxu0 0.0
      %3119 = vmatprep.subr.mxu0 0.0
      %3120 = vmatpush1.msra.mxu0 %v601
      %3121 = vmatprep.subr.mxu0 0.0
      %3122 = vmatpush2.msra.mxu0 0.0
      %3123 = vmatprep.subr.mxu0 0.0
      %3124 = vmatpush2.msra.mxu0 0.0
      %3125 = vmatprep.subr.mxu0 0.0
      %3126 = vmatpush2.msra.mxu0 0.0
      %3127 = vmatprep.subr.mxu0 0.0
      %3128 = vmatpush2.msra.mxu0 0.0
      %3129 = vmatprep.subr.mxu0 0.0
      %3130 = vmatpush2.msra.mxu0 0.0
      %3131 = vmatprep.subr.mxu0 0.0
      %3132 = vmatpush2.msra.mxu0 0.0
      %3133 = vmatprep.subr.mxu0 0.0
      %3134 = vmatpush2.msra.mxu0 0.0
      %3135 = vmatprep.subr.mxu0 0.0
      %3136 = vmatpush2.msra.mxu0 0.0
      %3137 = vmatprep.subr.mxu0 0.0
      %3138 = vmatpush2.msra.mxu0 0.0
      %3139 = vmatprep.subr.mxu0 0.0
      %3140 = vmatpush2.msra.mxu0 0.0
      %3141 = vmatprep.subr.mxu0 0.0
      %3142 = vmatpush2.msra.mxu0 0.0
      %3143 = vmatprep.subr.mxu0 0.0
      %3144 = vmatpush2.msra.mxu0 0.0
      %3145 = vmatprep.subr.mxu0 0.0
      %3146 = vmatpush2.msra.mxu0 0.0
      %3147 = vmatprep.subr.mxu0 0.0
      %3148 = vmatpush2.msra.mxu0 0.0
      %3149 = vmatprep.subr.mxu0 0.0
      %3150 = vmatpush2.msra.mxu0 0.0
      %3151 = vmatprep.subr.mxu0 0.0
      %3152 = vmatpush2.msra.mxu0 0.0
      %3153 = vmatprep.mubr.f32.mxu0 0.0
      %3154 = vmatmul.mubr.f32.gmra.mxu0 %v3087
      %v3155 = vpop.f32.mrf.mxu0
      %v3156 = vadd.f32 0.0, %v3155
      %v3157 = vpop.f32.mrf.mxu0
      %3158 = vdwg.mxu0
      %v3160 = vsel %vm603, %v566, 0
      %3162 = vmatprep.subr.mxu0 0.0
      %3163 = vmatpush1.msra.mxu0 0.0
      %3164 = vmatprep.subr.mxu0 0.0
      %3165 = vmatpush1.msra.mxu0 0.0
      %3166 = vmatprep.subr.mxu0 0.0
      %3167 = vmatpush1.msra.mxu0 0.0
      %3168 = vmatprep.subr.mxu0 0.0
      %3169 = vmatpush1.msra.mxu0 0.0
      %3170 = vmatprep.subr.mxu0 0.0
      %3171 = vmatpush1.msra.mxu0 0.0
      %3172 = vmatprep.subr.mxu0 0.0
      %3173 = vmatpush1.msra.mxu0 0.0
      %3174 = vmatprep.subr.mxu0 0.0
      %3175 = vmatpush1.msra.mxu0 0.0
      %3176 = vmatprep.subr.mxu0 0.0
      %3177 = vmatpush1.msra.mxu0 0.0
      %3178 = vmatprep.subr.mxu0 0.0
      %3179 = vmatpush1.msra.mxu0 0.0
      %3180 = vmatprep.subr.mxu0 0.0
      %3181 = vmatpush1.msra.mxu0 0.0
      %3182 = vmatprep.subr.mxu0 0.0
      %3183 = vmatpush1.msra.mxu0 0.0
      %3184 = vmatprep.subr.mxu0 0.0
      %3185 = vmatpush1.msra.mxu0 0.0
      %3186 = vmatprep.subr.mxu0 0.0
      %3187 = vmatpush1.msra.mxu0 0.0
      %3188 = vmatprep.subr.mxu0 0.0
      %3189 = vmatpush1.msra.mxu0 0.0
      %3190 = vmatprep.subr.mxu0 0.0
      %3191 = vmatpush1.msra.mxu0 0.0
      %3192 = vmatprep.subr.mxu0 0.0
      %3193 = vmatpush1.msra.mxu0 %v602
      %3194 = vmatprep.subr.mxu0 0.0
      %3195 = vmatpush2.msra.mxu0 0.0
      %3196 = vmatprep.subr.mxu0 0.0
      %3197 = vmatpush2.msra.mxu0 0.0
      %3198 = vmatprep.subr.mxu0 0.0
      %3199 = vmatpush2.msra.mxu0 0.0
      %3200 = vmatprep.subr.mxu0 0.0
      %3201 = vmatpush2.msra.mxu0 0.0
      %3202 = vmatprep.subr.mxu0 0.0
      %3203 = vmatpush2.msra.mxu0 0.0
      %3204 = vmatprep.subr.mxu0 0.0
      %3205 = vmatpush2.msra.mxu0 0.0
      %3206 = vmatprep.subr.mxu0 0.0
      %3207 = vmatpush2.msra.mxu0 0.0
      %3208 = vmatprep.subr.mxu0 0.0
      %3209 = vmatpush2.msra.mxu0 0.0
      %3210 = vmatprep.subr.mxu0 0.0
      %3211 = vmatpush2.msra.mxu0 0.0
      %3212 = vmatprep.subr.mxu0 0.0
      %3213 = vmatpush2.msra.mxu0 0.0
      %3214 = vmatprep.subr.mxu0 0.0
      %3215 = vmatpush2.msra.mxu0 0.0
      %3216 = vmatprep.subr.mxu0 0.0
      %3217 = vmatpush2.msra.mxu0 0.0
      %3218 = vmatprep.subr.mxu0 0.0
      %3219 = vmatpush2.msra.mxu0 0.0
      %3220 = vmatprep.subr.mxu0 0.0
      %3221 = vmatpush2.msra.mxu0 0.0
      %3222 = vmatprep.subr.mxu0 0.0
      %3223 = vmatpush2.msra.mxu0 0.0
      %3224 = vmatprep.subr.mxu0 0.0
      %3225 = vmatpush2.msra.mxu0 0.0
      %3226 = vmatprep.mubr.f32.mxu0 0.0
      %3227 = vmatmul.mubr.f32.gmra.mxu0 %v3160
      %v3228 = vpop.f32.mrf.mxu0
      %v3229 = vadd.f32 0.0, %v3228
      %v3230 = vpop.f32.mrf.mxu0
      %3231 = vdwg.mxu0
      %v3232 = vld [vmem:[%s427] sm:$0xff]
      %v3233 = vld [vmem:[%s427 + $0x8] sm:$0xff]
      %v3234 = vld [vmem:[%s427 + $0x10] sm:$0xff]
      %v3235 = vld [vmem:[%s427 + $0x18] sm:$0xff]
      %v3236 = vld [vmem:[%s427 + $0x20] sm:$0xff]
      %v3237 = vld [vmem:[%s427 + $0x28] sm:$0xff]
      %v3238 = vld [vmem:[%s427 + $0x30] sm:$0xff]
      %v3239 = vld [vmem:[%s427 + $0x38] sm:$0xff]
      %v3240 = vld [vmem:[%s427 + $0x40] sm:$0xff]
      %v3241 = vld [vmem:[%s427 + $0x48] sm:$0xff]
      %v3242 = vld [vmem:[%s427 + $0x50] sm:$0xff]
      %v3243 = vld [vmem:[%s427 + $0x58] sm:$0xff]
      %v3244 = vld [vmem:[%s427 + $0x60] sm:$0xff]
      %v3245 = vld [vmem:[%s427 + $0x68] sm:$0xff]
      %v3246 = vld [vmem:[%s427 + $0x70] sm:$0xff]
      %v3247 = vld [vmem:[%s427 + $0x78] sm:$0xff]
      %v3248 = vld [vmem:[%s427 + $0x80] sm:$0xff]
      %v3249 = vld [vmem:[%s427 + $0x88] sm:$0xff]
      %v3250 = vld [vmem:[%s427 + $0x90] sm:$0xff]
      %v3251 = vld [vmem:[%s427 + $0x98] sm:$0xff]
      %v3252 = vld [vmem:[%s427 + $0xa0] sm:$0xff]
      %v3253 = vld [vmem:[%s427 + $0xa8] sm:$0xff]
      %v3254 = vld [vmem:[%s427 + $0xb0] sm:$0xff]
      %v3255 = vld [vmem:[%s427 + $0xb8] sm:$0xff]
      %v3256 = vld [vmem:[%s427 + $0xc0] sm:$0xff]
      %v3257 = vld [vmem:[%s427 + $0xc8] sm:$0xff]
      %v3258 = vld [vmem:[%s427 + $0xd0] sm:$0xff]
      %v3259 = vld [vmem:[%s427 + $0xd8] sm:$0xff]
      %v3260 = vld [vmem:[%s427 + $0xe0] sm:$0xff]
      %v3261 = vld [vmem:[%s427 + $0xe8] sm:$0xff]
      %v3262 = vld [vmem:[%s427 + $0xf0] sm:$0xff]
      %v3263 = vld [vmem:[%s427 + $0xf8] sm:$0xff]
      %v3264 = vld [vmem:[%s427 + $0x100] sm:$0xff]
      %v3265 = vld [vmem:[%s427 + $0x108] sm:$0xff]
      %v3266 = vld [vmem:[%s427 + $0x110] sm:$0xff]
      %v3267 = vld [vmem:[%s427 + $0x118] sm:$0xff]
      %v3269 = vsel %vm603, %v459, 0
      %3271 = vmatprep.subr.mxu0 0.0
      %3272 = vmatpush1.msra.mxu0 0.0
      %3273 = vmatprep.subr.mxu0 0.0
      %3274 = vmatpush1.msra.mxu0 0.0
      %3275 = vmatprep.subr.mxu0 0.0
      %3276 = vmatpush1.msra.mxu0 0.0
      %3277 = vmatprep.subr.mxu0 0.0
      %3278 = vmatpush1.msra.mxu0 0.0
      %3279 = vmatprep.subr.mxu0 0.0
      %3280 = vmatpush1.msra.mxu0 0.0
      %3281 = vmatprep.subr.mxu0 0.0
      %3282 = vmatpush1.msra.mxu0 0.0
      %3283 = vmatprep.subr.mxu0 0.0
      %3284 = vmatpush1.msra.mxu0 0.0
      %3285 = vmatprep.subr.mxu0 0.0
      %3286 = vmatpush1.msra.mxu0 0.0
      %3287 = vmatprep.subr.mxu0 0.0
      %3288 = vmatpush1.msra.mxu0 0.0
      %3289 = vmatprep.subr.mxu0 0.0
      %3290 = vmatpush1.msra.mxu0 0.0
      %3291 = vmatprep.subr.mxu0 0.0
      %3292 = vmatpush1.msra.mxu0 0.0
      %3293 = vmatprep.subr.mxu0 0.0
      %3294 = vmatpush1.msra.mxu0 0.0
      %3295 = vmatprep.subr.mxu0 0.0
      %3296 = vmatpush1.msra.mxu0 0.0
      %3297 = vmatprep.subr.mxu0 0.0
      %3298 = vmatpush1.msra.mxu0 0.0
      %3299 = vmatprep.subr.mxu0 0.0
      %3300 = vmatpush1.msra.mxu0 0.0
      %3301 = vmatprep.subr.mxu0 0.0
      %3302 = vmatpush1.msra.mxu0 %v3232
      %3303 = vmatprep.subr.mxu0 0.0
      %3304 = vmatpush2.msra.mxu0 0.0
      %3305 = vmatprep.subr.mxu0 0.0
      %3306 = vmatpush2.msra.mxu0 0.0
      %3307 = vmatprep.subr.mxu0 0.0
      %3308 = vmatpush2.msra.mxu0 0.0
      %3309 = vmatprep.subr.mxu0 0.0
      %3310 = vmatpush2.msra.mxu0 0.0
      %3311 = vmatprep.subr.mxu0 0.0
      %3312 = vmatpush2.msra.mxu0 0.0
      %3313 = vmatprep.subr.mxu0 0.0
      %3314 = vmatpush2.msra.mxu0 0.0
      %3315 = vmatprep.subr.mxu0 0.0
      %3316 = vmatpush2.msra.mxu0 0.0
      %3317 = vmatprep.subr.mxu0 0.0
      %3318 = vmatpush2.msra.mxu0 0.0
      %3319 = vmatprep.subr.mxu0 0.0
      %3320 = vmatpush2.msra.mxu0 0.0
      %3321 = vmatprep.subr.mxu0 0.0
      %3322 = vmatpush2.msra.mxu0 0.0
      %3323 = vmatprep.subr.mxu0 0.0
      %3324 = vmatpush2.msra.mxu0 0.0
      %3325 = vmatprep.subr.mxu0 0.0
      %3326 = vmatpush2.msra.mxu0 0.0
      %3327 = vmatprep.subr.mxu0 0.0
      %3328 = vmatpush2.msra.mxu0 0.0
      %3329 = vmatprep.subr.mxu0 0.0
      %3330 = vmatpush2.msra.mxu0 0.0
      %3331 = vmatprep.subr.mxu0 0.0
      %3332 = vmatpush2.msra.mxu0 0.0
      %3333 = vmatprep.subr.mxu0 0.0
      %3334 = vmatpush2.msra.mxu0 0.0
      %3335 = vmatprep.mubr.f32.mxu0 0.0
      %3336 = vmatmul.mubr.f32.gmra.mxu0 %v3269
      %v3337 = vpop.f32.mrf.mxu0
      %v3338 = vadd.f32 0.0, %v3337
      %v3339 = vpop.f32.mrf.mxu0
      %3340 = vdwg.mxu0
      %v3342 = vsel %vm603, %v460, 0
      %3344 = vmatprep.subr.mxu0 0.0
      %3345 = vmatpush1.msra.mxu0 0.0
      %3346 = vmatprep.subr.mxu0 0.0
      %3347 = vmatpush1.msra.mxu0 0.0
      %3348 = vmatprep.subr.mxu0 0.0
      %3349 = vmatpush1.msra.mxu0 0.0
      %3350 = vmatprep.subr.mxu0 0.0
      %3351 = vmatpush1.msra.mxu0 0.0
      %3352 = vmatprep.subr.mxu0 0.0
      %3353 = vmatpush1.msra.mxu0 0.0
      %3354 = vmatprep.subr.mxu0 0.0
      %3355 = vmatpush1.msra.mxu0 0.0
      %3356 = vmatprep.subr.mxu0 0.0
      %3357 = vmatpush1.msra.mxu0 0.0
      %3358 = vmatprep.subr.mxu0 0.0
      %3359 = vmatpush1.msra.mxu0 0.0
      %3360 = vmatprep.subr.mxu0 0.0
      %3361 = vmatpush1.msra.mxu0 0.0
      %3362 = vmatprep.subr.mxu0 0.0
      %3363 = vmatpush1.msra.mxu0 0.0
      %3364 = vmatprep.subr.mxu0 0.0
      %3365 = vmatpush1.msra.mxu0 0.0
      %3366 = vmatprep.subr.mxu0 0.0
      %3367 = vmatpush1.msra.mxu0 0.0
      %3368 = vmatprep.subr.mxu0 0.0
      %3369 = vmatpush1.msra.mxu0 0.0
      %3370 = vmatprep.subr.mxu0 0.0
      %3371 = vmatpush1.msra.mxu0 0.0
      %3372 = vmatprep.subr.mxu0 0.0
      %3373 = vmatpush1.msra.mxu0 0.0
      %3374 = vmatprep.subr.mxu0 0.0
      %3375 = vmatpush1.msra.mxu0 %v3233
      %3376 = vmatprep.subr.mxu0 0.0
      %3377 = vmatpush2.msra.mxu0 0.0
      %3378 = vmatprep.subr.mxu0 0.0
      %3379 = vmatpush2.msra.mxu0 0.0
      %3380 = vmatprep.subr.mxu0 0.0
      %3381 = vmatpush2.msra.mxu0 0.0
      %3382 = vmatprep.subr.mxu0 0.0
      %3383 = vmatpush2.msra.mxu0 0.0
      %3384 = vmatprep.subr.mxu0 0.0
      %3385 = vmatpush2.msra.mxu0 0.0
      %3386 = vmatprep.subr.mxu0 0.0
      %3387 = vmatpush2.msra.mxu0 0.0
      %3388 = vmatprep.subr.mxu0 0.0
      %3389 = vmatpush2.msra.mxu0 0.0
      %3390 = vmatprep.subr.mxu0 0.0
      %3391 = vmatpush2.msra.mxu0 0.0
      %3392 = vmatprep.subr.mxu0 0.0
      %3393 = vmatpush2.msra.mxu0 0.0
      %3394 = vmatprep.subr.mxu0 0.0
      %3395 = vmatpush2.msra.mxu0 0.0
      %3396 = vmatprep.subr.mxu0 0.0
      %3397 = vmatpush2.msra.mxu0 0.0
      %3398 = vmatprep.subr.mxu0 0.0
      %3399 = vmatpush2.msra.mxu0 0.0
      %3400 = vmatprep.subr.mxu0 0.0
      %3401 = vmatpush2.msra.mxu0 0.0
      %3402 = vmatprep.subr.mxu0 0.0
      %3403 = vmatpush2.msra.mxu0 0.0
      %3404 = vmatprep.subr.mxu0 0.0
      %3405 = vmatpush2.msra.mxu0 0.0
      %3406 = vmatprep.subr.mxu0 0.0
      %3407 = vmatpush2.msra.mxu0 0.0
      %3408 = vmatprep.mubr.f32.mxu0 0.0
      %3409 = vmatmul.mubr.f32.gmra.mxu0 %v3342
      %v3410 = vpop.f32.mrf.mxu0
      %v3411 = vadd.f32 0.0, %v3410
      %v3412 = vpop.f32.mrf.mxu0
      %3413 = vdwg.mxu0
      %v3415 = vsel %vm603, %v461, 0
      %3417 = vmatprep.subr.mxu0 0.0
      %3418 = vmatpush1.msra.mxu0 0.0
      %3419 = vmatprep.subr.mxu0 0.0
      %3420 = vmatpush1.msra.mxu0 0.0
      %3421 = vmatprep.subr.mxu0 0.0
      %3422 = vmatpush1.msra.mxu0 0.0
      %3423 = vmatprep.subr.mxu0 0.0
      %3424 = vmatpush1.msra.mxu0 0.0
      %3425 = vmatprep.subr.mxu0 0.0
      %3426 = vmatpush1.msra.mxu0 0.0
      %3427 = vmatprep.subr.mxu0 0.0
      %3428 = vmatpush1.msra.mxu0 0.0
      %3429 = vmatprep.subr.mxu0 0.0
      %3430 = vmatpush1.msra.mxu0 0.0
      %3431 = vmatprep.subr.mxu0 0.0
      %3432 = vmatpush1.msra.mxu0 0.0
      %3433 = vmatprep.subr.mxu0 0.0
      %3434 = vmatpush1.msra.mxu0 0.0
      %3435 = vmatprep.subr.mxu0 0.0
      %3436 = vmatpush1.msra.mxu0 0.0
      %3437 = vmatprep.subr.mxu0 0.0
      %3438 = vmatpush1.msra.mxu0 0.0
      %3439 = vmatprep.subr.mxu0 0.0
      %3440 = vmatpush1.msra.mxu0 0.0
      %3441 = vmatprep.subr.mxu0 0.0
      %3442 = vmatpush1.msra.mxu0 0.0
      %3443 = vmatprep.subr.mxu0 0.0
      %3444 = vmatpush1.msra.mxu0 0.0
      %3445 = vmatprep.subr.mxu0 0.0
      %3446 = vmatpush1.msra.mxu0 0.0
      %3447 = vmatprep.subr.mxu0 0.0
      %3448 = vmatpush1.msra.mxu0 %v3234
      %3449 = vmatprep.subr.mxu0 0.0
      %3450 = vmatpush2.msra.mxu0 0.0
      %3451 = vmatprep.subr.mxu0 0.0
      %3452 = vmatpush2.msra.mxu0 0.0
      %3453 = vmatprep.subr.mxu0 0.0
      %3454 = vmatpush2.msra.mxu0 0.0
      %3455 = vmatprep.subr.mxu0 0.0
      %3456 = vmatpush2.msra.mxu0 0.0
      %3457 = vmatprep.subr.mxu0 0.0
      %3458 = vmatpush2.msra.mxu0 0.0
      %3459 = vmatprep.subr.mxu0 0.0
      %3460 = vmatpush2.msra.mxu0 0.0
      %3461 = vmatprep.subr.mxu0 0.0
      %3462 = vmatpush2.msra.mxu0 0.0
      %3463 = vmatprep.subr.mxu0 0.0
      %3464 = vmatpush2.msra.mxu0 0.0
      %3465 = vmatprep.subr.mxu0 0.0
      %3466 = vmatpush2.msra.mxu0 0.0
      %3467 = vmatprep.subr.mxu0 0.0
      %3468 = vmatpush2.msra.mxu0 0.0
      %3469 = vmatprep.subr.mxu0 0.0
      %3470 = vmatpush2.msra.mxu0 0.0
      %3471 = vmatprep.subr.mxu0 0.0
      %3472 = vmatpush2.msra.mxu0 0.0
      %3473 = vmatprep.subr.mxu0 0.0
      %3474 = vmatpush2.msra.mxu0 0.0
      %3475 = vmatprep.subr.mxu0 0.0
      %3476 = vmatpush2.msra.mxu0 0.0
      %3477 = vmatprep.subr.mxu0 0.0
      %3478 = vmatpush2.msra.mxu0 0.0
      %3479 = vmatprep.subr.mxu0 0.0
      %3480 = vmatpush2.msra.mxu0 0.0
      %3481 = vmatprep.mubr.f32.mxu0 0.0
      %3482 = vmatmul.mubr.f32.gmra.mxu0 %v3415
      %v3483 = vpop.f32.mrf.mxu0
      %v3484 = vadd.f32 0.0, %v3483
      %v3485 = vpop.f32.mrf.mxu0
      %3486 = vdwg.mxu0
      %v3488 = vsel %vm603, %v462, 0
      %3490 = vmatprep.subr.mxu0 0.0
      %3491 = vmatpush1.msra.mxu0 0.0
      %3492 = vmatprep.subr.mxu0 0.0
      %3493 = vmatpush1.msra.mxu0 0.0
      %3494 = vmatprep.subr.mxu0 0.0
      %3495 = vmatpush1.msra.mxu0 0.0
      %3496 = vmatprep.subr.mxu0 0.0
      %3497 = vmatpush1.msra.mxu0 0.0
      %3498 = vmatprep.subr.mxu0 0.0
      %3499 = vmatpush1.msra.mxu0 0.0
      %3500 = vmatprep.subr.mxu0 0.0
      %3501 = vmatpush1.msra.mxu0 0.0
      %3502 = vmatprep.subr.mxu0 0.0
      %3503 = vmatpush1.msra.mxu0 0.0
      %3504 = vmatprep.subr.mxu0 0.0
      %3505 = vmatpush1.msra.mxu0 0.0
      %3506 = vmatprep.subr.mxu0 0.0
      %3507 = vmatpush1.msra.mxu0 0.0
      %3508 = vmatprep.subr.mxu0 0.0
      %3509 = vmatpush1.msra.mxu0 0.0
      %3510 = vmatprep.subr.mxu0 0.0
      %3511 = vmatpush1.msra.mxu0 0.0
      %3512 = vmatprep.subr.mxu0 0.0
      %3513 = vmatpush1.msra.mxu0 0.0
      %3514 = vmatprep.subr.mxu0 0.0
      %3515 = vmatpush1.msra.mxu0 0.0
      %3516 = vmatprep.subr.mxu0 0.0
      %3517 = vmatpush1.msra.mxu0 0.0
      %3518 = vmatprep.subr.mxu0 0.0
      %3519 = vmatpush1.msra.mxu0 0.0
      %3520 = vmatprep.subr.mxu0 0.0
      %3521 = vmatpush1.msra.mxu0 %v3235
      %3522 = vmatprep.subr.mxu0 0.0
      %3523 = vmatpush2.msra.mxu0 0.0
      %3524 = vmatprep.subr.mxu0 0.0
      %3525 = vmatpush2.msra.mxu0 0.0
      %3526 = vmatprep.subr.mxu0 0.0
      %3527 = vmatpush2.msra.mxu0 0.0
      %3528 = vmatprep.subr.mxu0 0.0
      %3529 = vmatpush2.msra.mxu0 0.0
      %3530 = vmatprep.subr.mxu0 0.0
      %3531 = vmatpush2.msra.mxu0 0.0
      %3532 = vmatprep.subr.mxu0 0.0
      %3533 = vmatpush2.msra.mxu0 0.0
      %3534 = vmatprep.subr.mxu0 0.0
      %3535 = vmatpush2.msra.mxu0 0.0
      %3536 = vmatprep.subr.mxu0 0.0
      %3537 = vmatpush2.msra.mxu0 0.0
      %3538 = vmatprep.subr.mxu0 0.0
      %3539 = vmatpush2.msra.mxu0 0.0
      %3540 = vmatprep.subr.mxu0 0.0
      %3541 = vmatpush2.msra.mxu0 0.0
      %3542 = vmatprep.subr.mxu0 0.0
      %3543 = vmatpush2.msra.mxu0 0.0
      %3544 = vmatprep.subr.mxu0 0.0
      %3545 = vmatpush2.msra.mxu0 0.0
      %3546 = vmatprep.subr.mxu0 0.0
      %3547 = vmatpush2.msra.mxu0 0.0
      %3548 = vmatprep.subr.mxu0 0.0
      %3549 = vmatpush2.msra.mxu0 0.0
      %3550 = vmatprep.subr.mxu0 0.0
      %3551 = vmatpush2.msra.mxu0 0.0
      %3552 = vmatprep.subr.mxu0 0.0
      %3553 = vmatpush2.msra.mxu0 0.0
      %3554 = vmatprep.mubr.f32.mxu0 0.0
      %3555 = vmatmul.mubr.f32.gmra.mxu0 %v3488
      %v3556 = vpop.f32.mrf.mxu0
      %v3557 = vadd.f32 0.0, %v3556
      %v3558 = vpop.f32.mrf.mxu0
      %3559 = vdwg.mxu0
      %v3561 = vsel %vm603, %v463, 0
      %3563 = vmatprep.subr.mxu0 0.0
      %3564 = vmatpush1.msra.mxu0 0.0
      %3565 = vmatprep.subr.mxu0 0.0
      %3566 = vmatpush1.msra.mxu0 0.0
      %3567 = vmatprep.subr.mxu0 0.0
      %3568 = vmatpush1.msra.mxu0 0.0
      %3569 = vmatprep.subr.mxu0 0.0
      %3570 = vmatpush1.msra.mxu0 0.0
      %3571 = vmatprep.subr.mxu0 0.0
      %3572 = vmatpush1.msra.mxu0 0.0
      %3573 = vmatprep.subr.mxu0 0.0
      %3574 = vmatpush1.msra.mxu0 0.0
      %3575 = vmatprep.subr.mxu0 0.0
      %3576 = vmatpush1.msra.mxu0 0.0
      %3577 = vmatprep.subr.mxu0 0.0
      %3578 = vmatpush1.msra.mxu0 0.0
      %3579 = vmatprep.subr.mxu0 0.0
      %3580 = vmatpush1.msra.mxu0 0.0
      %3581 = vmatprep.subr.mxu0 0.0
      %3582 = vmatpush1.msra.mxu0 0.0
      %3583 = vmatprep.subr.mxu0 0.0
      %3584 = vmatpush1.msra.mxu0 0.0
      %3585 = vmatprep.subr.mxu0 0.0
      %3586 = vmatpush1.msra.mxu0 0.0
      %3587 = vmatprep.subr.mxu0 0.0
      %3588 = vmatpush1.msra.mxu0 0.0
      %3589 = vmatprep.subr.mxu0 0.0
      %3590 = vmatpush1.msra.mxu0 0.0
      %3591 = vmatprep.subr.mxu0 0.0
      %3592 = vmatpush1.msra.mxu0 0.0
      %3593 = vmatprep.subr.mxu0 0.0
      %3594 = vmatpush1.msra.mxu0 %v3236
      %3595 = vmatprep.subr.mxu0 0.0
      %3596 = vmatpush2.msra.mxu0 0.0
      %3597 = vmatprep.subr.mxu0 0.0
      %3598 = vmatpush2.msra.mxu0 0.0
      %3599 = vmatprep.subr.mxu0 0.0
      %3600 = vmatpush2.msra.mxu0 0.0
      %3601 = vmatprep.subr.mxu0 0.0
      %3602 = vmatpush2.msra.mxu0 0.0
      %3603 = vmatprep.subr.mxu0 0.0
      %3604 = vmatpush2.msra.mxu0 0.0
      %3605 = vmatprep.subr.mxu0 0.0
      %3606 = vmatpush2.msra.mxu0 0.0
      %3607 = vmatprep.subr.mxu0 0.0
      %3608 = vmatpush2.msra.mxu0 0.0
      %3609 = vmatprep.subr.mxu0 0.0
      %3610 = vmatpush2.msra.mxu0 0.0
      %3611 = vmatprep.subr.mxu0 0.0
      %3612 = vmatpush2.msra.mxu0 0.0
      %3613 = vmatprep.subr.mxu0 0.0
      %3614 = vmatpush2.msra.mxu0 0.0
      %3615 = vmatprep.subr.mxu0 0.0
      %3616 = vmatpush2.msra.mxu0 0.0
      %3617 = vmatprep.subr.mxu0 0.0
      %3618 = vmatpush2.msra.mxu0 0.0
      %3619 = vmatprep.subr.mxu0 0.0
      %3620 = vmatpush2.msra.mxu0 0.0
      %3621 = vmatprep.subr.mxu0 0.0
      %3622 = vmatpush2.msra.mxu0 0.0
      %3623 = vmatprep.subr.mxu0 0.0
      %3624 = vmatpush2.msra.mxu0 0.0
      %3625 = vmatprep.subr.mxu0 0.0
      %3626 = vmatpush2.msra.mxu0 0.0
      %3627 = vmatprep.mubr.f32.mxu0 0.0
      %3628 = vmatmul.mubr.f32.gmra.mxu0 %v3561
      %v3629 = vpop.f32.mrf.mxu0
      %v3630 = vadd.f32 0.0, %v3629
      %v3631 = vpop.f32.mrf.mxu0
      %3632 = vdwg.mxu0
      %v3634 = vsel %vm603, %v464, 0
      %3636 = vmatprep.subr.mxu0 0.0
      %3637 = vmatpush1.msra.mxu0 0.0
      %3638 = vmatprep.subr.mxu0 0.0
      %3639 = vmatpush1.msra.mxu0 0.0
      %3640 = vmatprep.subr.mxu0 0.0
      %3641 = vmatpush1.msra.mxu0 0.0
      %3642 = vmatprep.subr.mxu0 0.0
      %3643 = vmatpush1.msra.mxu0 0.0
      %3644 = vmatprep.subr.mxu0 0.0
      %3645 = vmatpush1.msra.mxu0 0.0
      %3646 = vmatprep.subr.mxu0 0.0
      %3647 = vmatpush1.msra.mxu0 0.0
      %3648 = vmatprep.subr.mxu0 0.0
      %3649 = vmatpush1.msra.mxu0 0.0
      %3650 = vmatprep.subr.mxu0 0.0
      %3651 = vmatpush1.msra.mxu0 0.0
      %3652 = vmatprep.subr.mxu0 0.0
      %3653 = vmatpush1.msra.mxu0 0.0
      %3654 = vmatprep.subr.mxu0 0.0
      %3655 = vmatpush1.msra.mxu0 0.0
      %3656 = vmatprep.subr.mxu0 0.0
      %3657 = vmatpush1.msra.mxu0 0.0
      %3658 = vmatprep.subr.mxu0 0.0
      %3659 = vmatpush1.msra.mxu0 0.0
      %3660 = vmatprep.subr.mxu0 0.0
      %3661 = vmatpush1.msra.mxu0 0.0
      %3662 = vmatprep.subr.mxu0 0.0
      %3663 = vmatpush1.msra.mxu0 0.0
      %3664 = vmatprep.subr.mxu0 0.0
      %3665 = vmatpush1.msra.mxu0 0.0
      %3666 = vmatprep.subr.mxu0 0.0
      %3667 = vmatpush1.msra.mxu0 %v3237
      %3668 = vmatprep.subr.mxu0 0.0
      %3669 = vmatpush2.msra.mxu0 0.0
      %3670 = vmatprep.subr.mxu0 0.0
      %3671 = vmatpush2.msra.mxu0 0.0
      %3672 = vmatprep.subr.mxu0 0.0
      %3673 = vmatpush2.msra.mxu0 0.0
      %3674 = vmatprep.subr.mxu0 0.0
      %3675 = vmatpush2.msra.mxu0 0.0
      %3676 = vmatprep.subr.mxu0 0.0
      %3677 = vmatpush2.msra.mxu0 0.0
      %3678 = vmatprep.subr.mxu0 0.0
      %3679 = vmatpush2.msra.mxu0 0.0
      %3680 = vmatprep.subr.mxu0 0.0
      %3681 = vmatpush2.msra.mxu0 0.0
      %3682 = vmatprep.subr.mxu0 0.0
      %3683 = vmatpush2.msra.mxu0 0.0
      %3684 = vmatprep.subr.mxu0 0.0
      %3685 = vmatpush2.msra.mxu0 0.0
      %3686 = vmatprep.subr.mxu0 0.0
      %3687 = vmatpush2.msra.mxu0 0.0
      %3688 = vmatprep.subr.mxu0 0.0
      %3689 = vmatpush2.msra.mxu0 0.0
      %3690 = vmatprep.subr.mxu0 0.0
      %3691 = vmatpush2.msra.mxu0 0.0
      %3692 = vmatprep.subr.mxu0 0.0
      %3693 = vmatpush2.msra.mxu0 0.0
      %3694 = vmatprep.subr.mxu0 0.0
      %3695 = vmatpush2.msra.mxu0 0.0
      %3696 = vmatprep.subr.mxu0 0.0
      %3697 = vmatpush2.msra.mxu0 0.0
      %3698 = vmatprep.subr.mxu0 0.0
      %3699 = vmatpush2.msra.mxu0 0.0
      %3700 = vmatprep.mubr.f32.mxu0 0.0
      %3701 = vmatmul.mubr.f32.gmra.mxu0 %v3634
      %v3702 = vpop.f32.mrf.mxu0
      %v3703 = vadd.f32 0.0, %v3702
      %v3704 = vpop.f32.mrf.mxu0
      %3705 = vdwg.mxu0
      %v3707 = vsel %vm603, %v465, 0
      %3709 = vmatprep.subr.mxu0 0.0
      %3710 = vmatpush1.msra.mxu0 0.0
      %3711 = vmatprep.subr.mxu0 0.0
      %3712 = vmatpush1.msra.mxu0 0.0
      %3713 = vmatprep.subr.mxu0 0.0
      %3714 = vmatpush1.msra.mxu0 0.0
      %3715 = vmatprep.subr.mxu0 0.0
      %3716 = vmatpush1.msra.mxu0 0.0
      %3717 = vmatprep.subr.mxu0 0.0
      %3718 = vmatpush1.msra.mxu0 0.0
      %3719 = vmatprep.subr.mxu0 0.0
      %3720 = vmatpush1.msra.mxu0 0.0
      %3721 = vmatprep.subr.mxu0 0.0
      %3722 = vmatpush1.msra.mxu0 0.0
      %3723 = vmatprep.subr.mxu0 0.0
      %3724 = vmatpush1.msra.mxu0 0.0
      %3725 = vmatprep.subr.mxu0 0.0
      %3726 = vmatpush1.msra.mxu0 0.0
      %3727 = vmatprep.subr.mxu0 0.0
      %3728 = vmatpush1.msra.mxu0 0.0
      %3729 = vmatprep.subr.mxu0 0.0
      %3730 = vmatpush1.msra.mxu0 0.0
      %3731 = vmatprep.subr.mxu0 0.0
      %3732 = vmatpush1.msra.mxu0 0.0
      %3733 = vmatprep.subr.mxu0 0.0
      %3734 = vmatpush1.msra.mxu0 0.0
      %3735 = vmatprep.subr.mxu0 0.0
      %3736 = vmatpush1.msra.mxu0 0.0
      %3737 = vmatprep.subr.mxu0 0.0
      %3738 = vmatpush1.msra.mxu0 0.0
      %3739 = vmatprep.subr.mxu0 0.0
      %3740 = vmatpush1.msra.mxu0 %v3238
      %3741 = vmatprep.subr.mxu0 0.0
      %3742 = vmatpush2.msra.mxu0 0.0
      %3743 = vmatprep.subr.mxu0 0.0
      %3744 = vmatpush2.msra.mxu0 0.0
      %3745 = vmatprep.subr.mxu0 0.0
      %3746 = vmatpush2.msra.mxu0 0.0
      %3747 = vmatprep.subr.mxu0 0.0
      %3748 = vmatpush2.msra.mxu0 0.0
      %3749 = vmatprep.subr.mxu0 0.0
      %3750 = vmatpush2.msra.mxu0 0.0
      %3751 = vmatprep.subr.mxu0 0.0
      %3752 = vmatpush2.msra.mxu0 0.0
      %3753 = vmatprep.subr.mxu0 0.0
      %3754 = vmatpush2.msra.mxu0 0.0
      %3755 = vmatprep.subr.mxu0 0.0
      %3756 = vmatpush2.msra.mxu0 0.0
      %3757 = vmatprep.subr.mxu0 0.0
      %3758 = vmatpush2.msra.mxu0 0.0
      %3759 = vmatprep.subr.mxu0 0.0
      %3760 = vmatpush2.msra.mxu0 0.0
      %3761 = vmatprep.subr.mxu0 0.0
      %3762 = vmatpush2.msra.mxu0 0.0
      %3763 = vmatprep.subr.mxu0 0.0
      %3764 = vmatpush2.msra.mxu0 0.0
      %3765 = vmatprep.subr.mxu0 0.0
      %3766 = vmatpush2.msra.mxu0 0.0
      %3767 = vmatprep.subr.mxu0 0.0
      %3768 = vmatpush2.msra.mxu0 0.0
      %3769 = vmatprep.subr.mxu0 0.0
      %3770 = vmatpush2.msra.mxu0 0.0
      %3771 = vmatprep.subr.mxu0 0.0
      %3772 = vmatpush2.msra.mxu0 0.0
      %3773 = vmatprep.mubr.f32.mxu0 0.0
      %3774 = vmatmul.mubr.f32.gmra.mxu0 %v3707
      %v3775 = vpop.f32.mrf.mxu0
      %v3776 = vadd.f32 0.0, %v3775
      %v3777 = vpop.f32.mrf.mxu0
      %3778 = vdwg.mxu0
      %v3780 = vsel %vm603, %v466, 0
      %3782 = vmatprep.subr.mxu0 0.0
      %3783 = vmatpush1.msra.mxu0 0.0
      %3784 = vmatprep.subr.mxu0 0.0
      %3785 = vmatpush1.msra.mxu0 0.0
      %3786 = vmatprep.subr.mxu0 0.0
      %3787 = vmatpush1.msra.mxu0 0.0
      %3788 = vmatprep.subr.mxu0 0.0
      %3789 = vmatpush1.msra.mxu0 0.0
      %3790 = vmatprep.subr.mxu0 0.0
      %3791 = vmatpush1.msra.mxu0 0.0
      %3792 = vmatprep.subr.mxu0 0.0
      %3793 = vmatpush1.msra.mxu0 0.0
      %3794 = vmatprep.subr.mxu0 0.0
      %3795 = vmatpush1.msra.mxu0 0.0
      %3796 = vmatprep.subr.mxu0 0.0
      %3797 = vmatpush1.msra.mxu0 0.0
      %3798 = vmatprep.subr.mxu0 0.0
      %3799 = vmatpush1.msra.mxu0 0.0
      %3800 = vmatprep.subr.mxu0 0.0
      %3801 = vmatpush1.msra.mxu0 0.0
      %3802 = vmatprep.subr.mxu0 0.0
      %3803 = vmatpush1.msra.mxu0 0.0
      %3804 = vmatprep.subr.mxu0 0.0
      %3805 = vmatpush1.msra.mxu0 0.0
      %3806 = vmatprep.subr.mxu0 0.0
      %3807 = vmatpush1.msra.mxu0 0.0
      %3808 = vmatprep.subr.mxu0 0.0
      %3809 = vmatpush1.msra.mxu0 0.0
      %3810 = vmatprep.subr.mxu0 0.0
      %3811 = vmatpush1.msra.mxu0 0.0
      %3812 = vmatprep.subr.mxu0 0.0
      %3813 = vmatpush1.msra.mxu0 %v3239
      %3814 = vmatprep.subr.mxu0 0.0
      %3815 = vmatpush2.msra.mxu0 0.0
      %3816 = vmatprep.subr.mxu0 0.0
      %3817 = vmatpush2.msra.mxu0 0.0
      %3818 = vmatprep.subr.mxu0 0.0
      %3819 = vmatpush2.msra.mxu0 0.0
      %3820 = vmatprep.subr.mxu0 0.0
      %3821 = vmatpush2.msra.mxu0 0.0
      %3822 = vmatprep.subr.mxu0 0.0
      %3823 = vmatpush2.msra.mxu0 0.0
      %3824 = vmatprep.subr.mxu0 0.0
      %3825 = vmatpush2.msra.mxu0 0.0
      %3826 = vmatprep.subr.mxu0 0.0
      %3827 = vmatpush2.msra.mxu0 0.0
      %3828 = vmatprep.subr.mxu0 0.0
      %3829 = vmatpush2.msra.mxu0 0.0
      %3830 = vmatprep.subr.mxu0 0.0
      %3831 = vmatpush2.msra.mxu0 0.0
      %3832 = vmatprep.subr.mxu0 0.0
      %3833 = vmatpush2.msra.mxu0 0.0
      %3834 = vmatprep.subr.mxu0 0.0
      %3835 = vmatpush2.msra.mxu0 0.0
      %3836 = vmatprep.subr.mxu0 0.0
      %3837 = vmatpush2.msra.mxu0 0.0
      %3838 = vmatprep.subr.mxu0 0.0
      %3839 = vmatpush2.msra.mxu0 0.0
      %3840 = vmatprep.subr.mxu0 0.0
      %3841 = vmatpush2.msra.mxu0 0.0
      %3842 = vmatprep.subr.mxu0 0.0
      %3843 = vmatpush2.msra.mxu0 0.0
      %3844 = vmatprep.subr.mxu0 0.0
      %3845 = vmatpush2.msra.mxu0 0.0
      %3846 = vmatprep.mubr.f32.mxu0 0.0
      %3847 = vmatmul.mubr.f32.gmra.mxu0 %v3780
      %v3848 = vpop.f32.mrf.mxu0
      %v3849 = vadd.f32 0.0, %v3848
      %v3850 = vpop.f32.mrf.mxu0
      %3851 = vdwg.mxu0
      %v3853 = vsel %vm603, %v467, 0
      %3855 = vmatprep.subr.mxu0 0.0
      %3856 = vmatpush1.msra.mxu0 0.0
      %3857 = vmatprep.subr.mxu0 0.0
      %3858 = vmatpush1.msra.mxu0 0.0
      %3859 = vmatprep.subr.mxu0 0.0
      %3860 = vmatpush1.msra.mxu0 0.0
      %3861 = vmatprep.subr.mxu0 0.0
      %3862 = vmatpush1.msra.mxu0 0.0
      %3863 = vmatprep.subr.mxu0 0.0
      %3864 = vmatpush1.msra.mxu0 0.0
      %3865 = vmatprep.subr.mxu0 0.0
      %3866 = vmatpush1.msra.mxu0 0.0
      %3867 = vmatprep.subr.mxu0 0.0
      %3868 = vmatpush1.msra.mxu0 0.0
      %3869 = vmatprep.subr.mxu0 0.0
      %3870 = vmatpush1.msra.mxu0 0.0
      %3871 = vmatprep.subr.mxu0 0.0
      %3872 = vmatpush1.msra.mxu0 0.0
      %3873 = vmatprep.subr.mxu0 0.0
      %3874 = vmatpush1.msra.mxu0 0.0
      %3875 = vmatprep.subr.mxu0 0.0
      %3876 = vmatpush1.msra.mxu0 0.0
      %3877 = vmatprep.subr.mxu0 0.0
      %3878 = vmatpush1.msra.mxu0 0.0
      %3879 = vmatprep.subr.mxu0 0.0
      %3880 = vmatpush1.msra.mxu0 0.0
      %3881 = vmatprep.subr.mxu0 0.0
      %3882 = vmatpush1.msra.mxu0 0.0
      %3883 = vmatprep.subr.mxu0 0.0
      %3884 = vmatpush1.msra.mxu0 0.0
      %3885 = vmatprep.subr.mxu0 0.0
      %3886 = vmatpush1.msra.mxu0 %v3240
      %3887 = vmatprep.subr.mxu0 0.0
      %3888 = vmatpush2.msra.mxu0 0.0
      %3889 = vmatprep.subr.mxu0 0.0
      %3890 = vmatpush2.msra.mxu0 0.0
      %3891 = vmatprep.subr.mxu0 0.0
      %3892 = vmatpush2.msra.mxu0 0.0
      %3893 = vmatprep.subr.mxu0 0.0
      %3894 = vmatpush2.msra.mxu0 0.0
      %3895 = vmatprep.subr.mxu0 0.0
      %3896 = vmatpush2.msra.mxu0 0.0
      %3897 = vmatprep.subr.mxu0 0.0
      %3898 = vmatpush2.msra.mxu0 0.0
      %3899 = vmatprep.subr.mxu0 0.0
      %3900 = vmatpush2.msra.mxu0 0.0
      %3901 = vmatprep.subr.mxu0 0.0
      %3902 = vmatpush2.msra.mxu0 0.0
      %3903 = vmatprep.subr.mxu0 0.0
      %3904 = vmatpush2.msra.mxu0 0.0
      %3905 = vmatprep.subr.mxu0 0.0
      %3906 = vmatpush2.msra.mxu0 0.0
      %3907 = vmatprep.subr.mxu0 0.0
      %3908 = vmatpush2.msra.mxu0 0.0
      %3909 = vmatprep.subr.mxu0 0.0
      %3910 = vmatpush2.msra.mxu0 0.0
      %3911 = vmatprep.subr.mxu0 0.0
      %3912 = vmatpush2.msra.mxu0 0.0
      %3913 = vmatprep.subr.mxu0 0.0
      %3914 = vmatpush2.msra.mxu0 0.0
      %3915 = vmatprep.subr.mxu0 0.0
      %3916 = vmatpush2.msra.mxu0 0.0
      %3917 = vmatprep.subr.mxu0 0.0
      %3918 = vmatpush2.msra.mxu0 0.0
      %3919 = vmatprep.mubr.f32.mxu0 0.0
      %3920 = vmatmul.mubr.f32.gmra.mxu0 %v3853
      %v3921 = vpop.f32.mrf.mxu0
      %v3922 = vadd.f32 0.0, %v3921
      %v3923 = vpop.f32.mrf.mxu0
      %3924 = vdwg.mxu0
      %v3926 = vsel %vm603, %v468, 0
      %3928 = vmatprep.subr.mxu0 0.0
      %3929 = vmatpush1.msra.mxu0 0.0
      %3930 = vmatprep.subr.mxu0 0.0
      %3931 = vmatpush1.msra.mxu0 0.0
      %3932 = vmatprep.subr.mxu0 0.0
      %3933 = vmatpush1.msra.mxu0 0.0
      %3934 = vmatprep.subr.mxu0 0.0
      %3935 = vmatpush1.msra.mxu0 0.0
      %3936 = vmatprep.subr.mxu0 0.0
      %3937 = vmatpush1.msra.mxu0 0.0
      %3938 = vmatprep.subr.mxu0 0.0
      %3939 = vmatpush1.msra.mxu0 0.0
      %3940 = vmatprep.subr.mxu0 0.0
      %3941 = vmatpush1.msra.mxu0 0.0
      %3942 = vmatprep.subr.mxu0 0.0
      %3943 = vmatpush1.msra.mxu0 0.0
      %3944 = vmatprep.subr.mxu0 0.0
      %3945 = vmatpush1.msra.mxu0 0.0
      %3946 = vmatprep.subr.mxu0 0.0
      %3947 = vmatpush1.msra.mxu0 0.0
      %3948 = vmatprep.subr.mxu0 0.0
      %3949 = vmatpush1.msra.mxu0 0.0
      %3950 = vmatprep.subr.mxu0 0.0
      %3951 = vmatpush1.msra.mxu0 0.0
      %3952 = vmatprep.subr.mxu0 0.0
      %3953 = vmatpush1.msra.mxu0 0.0
      %3954 = vmatprep.subr.mxu0 0.0
      %3955 = vmatpush1.msra.mxu0 0.0
      %3956 = vmatprep.subr.mxu0 0.0
      %3957 = vmatpush1.msra.mxu0 0.0
      %3958 = vmatprep.subr.mxu0 0.0
      %3959 = vmatpush1.msra.mxu0 %v3241
      %3960 = vmatprep.subr.mxu0 0.0
      %3961 = vmatpush2.msra.mxu0 0.0
      %3962 = vmatprep.subr.mxu0 0.0
      %3963 = vmatpush2.msra.mxu0 0.0
      %3964 = vmatprep.subr.mxu0 0.0
      %3965 = vmatpush2.msra.mxu0 0.0
      %3966 = vmatprep.subr.mxu0 0.0
      %3967 = vmatpush2.msra.mxu0 0.0
      %3968 = vmatprep.subr.mxu0 0.0
      %3969 = vmatpush2.msra.mxu0 0.0
      %3970 = vmatprep.subr.mxu0 0.0
      %3971 = vmatpush2.msra.mxu0 0.0
      %3972 = vmatprep.subr.mxu0 0.0
      %3973 = vmatpush2.msra.mxu0 0.0
      %3974 = vmatprep.subr.mxu0 0.0
      %3975 = vmatpush2.msra.mxu0 0.0
      %3976 = vmatprep.subr.mxu0 0.0
      %3977 = vmatpush2.msra.mxu0 0.0
      %3978 = vmatprep.subr.mxu0 0.0
      %3979 = vmatpush2.msra.mxu0 0.0
      %3980 = vmatprep.subr.mxu0 0.0
      %3981 = vmatpush2.msra.mxu0 0.0
      %3982 = vmatprep.subr.mxu0 0.0
      %3983 = vmatpush2.msra.mxu0 0.0
      %3984 = vmatprep.subr.mxu0 0.0
      %3985 = vmatpush2.msra.mxu0 0.0
      %3986 = vmatprep.subr.mxu0 0.0
      %3987 = vmatpush2.msra.mxu0 0.0
      %3988 = vmatprep.subr.mxu0 0.0
      %3989 = vmatpush2.msra.mxu0 0.0
      %3990 = vmatprep.subr.mxu0 0.0
      %3991 = vmatpush2.msra.mxu0 0.0
      %3992 = vmatprep.mubr.f32.mxu0 0.0
      %3993 = vmatmul.mubr.f32.gmra.mxu0 %v3926
      %v3994 = vpop.f32.mrf.mxu0
      %v3995 = vadd.f32 0.0, %v3994
      %v3996 = vpop.f32.mrf.mxu0
      %3997 = vdwg.mxu0
      %v3999 = vsel %vm603, %v469, 0
      %4001 = vmatprep.subr.mxu0 0.0
      %4002 = vmatpush1.msra.mxu0 0.0
      %4003 = vmatprep.subr.mxu0 0.0
      %4004 = vmatpush1.msra.mxu0 0.0
      %4005 = vmatprep.subr.mxu0 0.0
      %4006 = vmatpush1.msra.mxu0 0.0
      %4007 = vmatprep.subr.mxu0 0.0
      %4008 = vmatpush1.msra.mxu0 0.0
      %4009 = vmatprep.subr.mxu0 0.0
      %4010 = vmatpush1.msra.mxu0 0.0
      %4011 = vmatprep.subr.mxu0 0.0
      %4012 = vmatpush1.msra.mxu0 0.0
      %4013 = vmatprep.subr.mxu0 0.0
      %4014 = vmatpush1.msra.mxu0 0.0
      %4015 = vmatprep.subr.mxu0 0.0
      %4016 = vmatpush1.msra.mxu0 0.0
      %4017 = vmatprep.subr.mxu0 0.0
      %4018 = vmatpush1.msra.mxu0 0.0
      %4019 = vmatprep.subr.mxu0 0.0
      %4020 = vmatpush1.msra.mxu0 0.0
      %4021 = vmatprep.subr.mxu0 0.0
      %4022 = vmatpush1.msra.mxu0 0.0
      %4023 = vmatprep.subr.mxu0 0.0
      %4024 = vmatpush1.msra.mxu0 0.0
      %4025 = vmatprep.subr.mxu0 0.0
      %4026 = vmatpush1.msra.mxu0 0.0
      %4027 = vmatprep.subr.mxu0 0.0
      %4028 = vmatpush1.msra.mxu0 0.0
      %4029 = vmatprep.subr.mxu0 0.0
      %4030 = vmatpush1.msra.mxu0 0.0
      %4031 = vmatprep.subr.mxu0 0.0
      %4032 = vmatpush1.msra.mxu0 %v3242
      %4033 = vmatprep.subr.mxu0 0.0
      %4034 = vmatpush2.msra.mxu0 0.0
      %4035 = vmatprep.subr.mxu0 0.0
      %4036 = vmatpush2.msra.mxu0 0.0
      %4037 = vmatprep.subr.mxu0 0.0
      %4038 = vmatpush2.msra.mxu0 0.0
      %4039 = vmatprep.subr.mxu0 0.0
      %4040 = vmatpush2.msra.mxu0 0.0
      %4041 = vmatprep.subr.mxu0 0.0
      %4042 = vmatpush2.msra.mxu0 0.0
      %4043 = vmatprep.subr.mxu0 0.0
      %4044 = vmatpush2.msra.mxu0 0.0
      %4045 = vmatprep.subr.mxu0 0.0
      %4046 = vmatpush2.msra.mxu0 0.0
      %4047 = vmatprep.subr.mxu0 0.0
      %4048 = vmatpush2.msra.mxu0 0.0
      %4049 = vmatprep.subr.mxu0 0.0
      %4050 = vmatpush2.msra.mxu0 0.0
      %4051 = vmatprep.subr.mxu0 0.0
      %4052 = vmatpush2.msra.mxu0 0.0
      %4053 = vmatprep.subr.mxu0 0.0
      %4054 = vmatpush2.msra.mxu0 0.0
      %4055 = vmatprep.subr.mxu0 0.0
      %4056 = vmatpush2.msra.mxu0 0.0
      %4057 = vmatprep.subr.mxu0 0.0
      %4058 = vmatpush2.msra.mxu0 0.0
      %4059 = vmatprep.subr.mxu0 0.0
      %4060 = vmatpush2.msra.mxu0 0.0
      %4061 = vmatprep.subr.mxu0 0.0
      %4062 = vmatpush2.msra.mxu0 0.0
      %4063 = vmatprep.subr.mxu0 0.0
      %4064 = vmatpush2.msra.mxu0 0.0
      %4065 = vmatprep.mubr.f32.mxu0 0.0
      %4066 = vmatmul.mubr.f32.gmra.mxu0 %v3999
      %v4067 = vpop.f32.mrf.mxu0
      %v4068 = vadd.f32 0.0, %v4067
      %v4069 = vpop.f32.mrf.mxu0
      %4070 = vdwg.mxu0
      %v4072 = vsel %vm603, %v470, 0
      %4074 = vmatprep.subr.mxu0 0.0
      %4075 = vmatpush1.msra.mxu0 0.0
      %4076 = vmatprep.subr.mxu0 0.0
      %4077 = vmatpush1.msra.mxu0 0.0
      %4078 = vmatprep.subr.mxu0 0.0
      %4079 = vmatpush1.msra.mxu0 0.0
      %4080 = vmatprep.subr.mxu0 0.0
      %4081 = vmatpush1.msra.mxu0 0.0
      %4082 = vmatprep.subr.mxu0 0.0
      %4083 = vmatpush1.msra.mxu0 0.0
      %4084 = vmatprep.subr.mxu0 0.0
      %4085 = vmatpush1.msra.mxu0 0.0
      %4086 = vmatprep.subr.mxu0 0.0
      %4087 = vmatpush1.msra.mxu0 0.0
      %4088 = vmatprep.subr.mxu0 0.0
      %4089 = vmatpush1.msra.mxu0 0.0
      %4090 = vmatprep.subr.mxu0 0.0
      %4091 = vmatpush1.msra.mxu0 0.0
      %4092 = vmatprep.subr.mxu0 0.0
      %4093 = vmatpush1.msra.mxu0 0.0
      %4094 = vmatprep.subr.mxu0 0.0
      %4095 = vmatpush1.msra.mxu0 0.0
      %4096 = vmatprep.subr.mxu0 0.0
      %4097 = vmatpush1.msra.mxu0 0.0
      %4098 = vmatprep.subr.mxu0 0.0
      %4099 = vmatpush1.msra.mxu0 0.0
      %4100 = vmatprep.subr.mxu0 0.0
      %4101 = vmatpush1.msra.mxu0 0.0
      %4102 = vmatprep.subr.mxu0 0.0
      %4103 = vmatpush1.msra.mxu0 0.0
      %4104 = vmatprep.subr.mxu0 0.0
      %4105 = vmatpush1.msra.mxu0 %v3243
      %4106 = vmatprep.subr.mxu0 0.0
      %4107 = vmatpush2.msra.mxu0 0.0
      %4108 = vmatprep.subr.mxu0 0.0
      %4109 = vmatpush2.msra.mxu0 0.0
      %4110 = vmatprep.subr.mxu0 0.0
      %4111 = vmatpush2.msra.mxu0 0.0
      %4112 = vmatprep.subr.mxu0 0.0
      %4113 = vmatpush2.msra.mxu0 0.0
      %4114 = vmatprep.subr.mxu0 0.0
      %4115 = vmatpush2.msra.mxu0 0.0
      %4116 = vmatprep.subr.mxu0 0.0
      %4117 = vmatpush2.msra.mxu0 0.0
      %4118 = vmatprep.subr.mxu0 0.0
      %4119 = vmatpush2.msra.mxu0 0.0
      %4120 = vmatprep.subr.mxu0 0.0
      %4121 = vmatpush2.msra.mxu0 0.0
      %4122 = vmatprep.subr.mxu0 0.0
      %4123 = vmatpush2.msra.mxu0 0.0
      %4124 = vmatprep.subr.mxu0 0.0
      %4125 = vmatpush2.msra.mxu0 0.0
      %4126 = vmatprep.subr.mxu0 0.0
      %4127 = vmatpush2.msra.mxu0 0.0
      %4128 = vmatprep.subr.mxu0 0.0
      %4129 = vmatpush2.msra.mxu0 0.0
      %4130 = vmatprep.subr.mxu0 0.0
      %4131 = vmatpush2.msra.mxu0 0.0
      %4132 = vmatprep.subr.mxu0 0.0
      %4133 = vmatpush2.msra.mxu0 0.0
      %4134 = vmatprep.subr.mxu0 0.0
      %4135 = vmatpush2.msra.mxu0 0.0
      %4136 = vmatprep.subr.mxu0 0.0
      %4137 = vmatpush2.msra.mxu0 0.0
      %4138 = vmatprep.mubr.f32.mxu0 0.0
      %4139 = vmatmul.mubr.f32.gmra.mxu0 %v4072
      %v4140 = vpop.f32.mrf.mxu0
      %v4141 = vadd.f32 0.0, %v4140
      %v4142 = vpop.f32.mrf.mxu0
      %4143 = vdwg.mxu0
      %v4145 = vsel %vm603, %v471, 0
      %4147 = vmatprep.subr.mxu0 0.0
      %4148 = vmatpush1.msra.mxu0 0.0
      %4149 = vmatprep.subr.mxu0 0.0
      %4150 = vmatpush1.msra.mxu0 0.0
      %4151 = vmatprep.subr.mxu0 0.0
      %4152 = vmatpush1.msra.mxu0 0.0
      %4153 = vmatprep.subr.mxu0 0.0
      %4154 = vmatpush1.msra.mxu0 0.0
      %4155 = vmatprep.subr.mxu0 0.0
      %4156 = vmatpush1.msra.mxu0 0.0
      %4157 = vmatprep.subr.mxu0 0.0
      %4158 = vmatpush1.msra.mxu0 0.0
      %4159 = vmatprep.subr.mxu0 0.0
      %4160 = vmatpush1.msra.mxu0 0.0
      %4161 = vmatprep.subr.mxu0 0.0
      %4162 = vmatpush1.msra.mxu0 0.0
      %4163 = vmatprep.subr.mxu0 0.0
      %4164 = vmatpush1.msra.mxu0 0.0
      %4165 = vmatprep.subr.mxu0 0.0
      %4166 = vmatpush1.msra.mxu0 0.0
      %4167 = vmatprep.subr.mxu0 0.0
      %4168 = vmatpush1.msra.mxu0 0.0
      %4169 = vmatprep.subr.mxu0 0.0
      %4170 = vmatpush1.msra.mxu0 0.0
      %4171 = vmatprep.subr.mxu0 0.0
      %4172 = vmatpush1.msra.mxu0 0.0
      %4173 = vmatprep.subr.mxu0 0.0
      %4174 = vmatpush1.msra.mxu0 0.0
      %4175 = vmatprep.subr.mxu0 0.0
      %4176 = vmatpush1.msra.mxu0 0.0
      %4177 = vmatprep.subr.mxu0 0.0
      %4178 = vmatpush1.msra.mxu0 %v3244
      %4179 = vmatprep.subr.mxu0 0.0
      %4180 = vmatpush2.msra.mxu0 0.0
      %4181 = vmatprep.subr.mxu0 0.0
      %4182 = vmatpush2.msra.mxu0 0.0
      %4183 = vmatprep.subr.mxu0 0.0
      %4184 = vmatpush2.msra.mxu0 0.0
      %4185 = vmatprep.subr.mxu0 0.0
      %4186 = vmatpush2.msra.mxu0 0.0
      %4187 = vmatprep.subr.mxu0 0.0
      %4188 = vmatpush2.msra.mxu0 0.0
      %4189 = vmatprep.subr.mxu0 0.0
      %4190 = vmatpush2.msra.mxu0 0.0
      %4191 = vmatprep.subr.mxu0 0.0
      %4192 = vmatpush2.msra.mxu0 0.0
      %4193 = vmatprep.subr.mxu0 0.0
      %4194 = vmatpush2.msra.mxu0 0.0
      %4195 = vmatprep.subr.mxu0 0.0
      %4196 = vmatpush2.msra.mxu0 0.0
      %4197 = vmatprep.subr.mxu0 0.0
      %4198 = vmatpush2.msra.mxu0 0.0
      %4199 = vmatprep.subr.mxu0 0.0
      %4200 = vmatpush2.msra.mxu0 0.0
      %4201 = vmatprep.subr.mxu0 0.0
      %4202 = vmatpush2.msra.mxu0 0.0
      %4203 = vmatprep.subr.mxu0 0.0
      %4204 = vmatpush2.msra.mxu0 0.0
      %4205 = vmatprep.subr.mxu0 0.0
      %4206 = vmatpush2.msra.mxu0 0.0
      %4207 = vmatprep.subr.mxu0 0.0
      %4208 = vmatpush2.msra.mxu0 0.0
      %4209 = vmatprep.subr.mxu0 0.0
      %4210 = vmatpush2.msra.mxu0 0.0
      %4211 = vmatprep.mubr.f32.mxu0 0.0
      %4212 = vmatmul.mubr.f32.gmra.mxu0 %v4145
      %v4213 = vpop.f32.mrf.mxu0
      %v4214 = vadd.f32 0.0, %v4213
      %v4215 = vpop.f32.mrf.mxu0
      %4216 = vdwg.mxu0
      %v4218 = vsel %vm603, %v472, 0
      %4220 = vmatprep.subr.mxu0 0.0
      %4221 = vmatpush1.msra.mxu0 0.0
      %4222 = vmatprep.subr.mxu0 0.0
      %4223 = vmatpush1.msra.mxu0 0.0
      %4224 = vmatprep.subr.mxu0 0.0
      %4225 = vmatpush1.msra.mxu0 0.0
      %4226 = vmatprep.subr.mxu0 0.0
      %4227 = vmatpush1.msra.mxu0 0.0
      %4228 = vmatprep.subr.mxu0 0.0
      %4229 = vmatpush1.msra.mxu0 0.0
      %4230 = vmatprep.subr.mxu0 0.0
      %4231 = vmatpush1.msra.mxu0 0.0
      %4232 = vmatprep.subr.mxu0 0.0
      %4233 = vmatpush1.msra.mxu0 0.0
      %4234 = vmatprep.subr.mxu0 0.0
      %4235 = vmatpush1.msra.mxu0 0.0
      %4236 = vmatprep.subr.mxu0 0.0
      %4237 = vmatpush1.msra.mxu0 0.0
      %4238 = vmatprep.subr.mxu0 0.0
      %4239 = vmatpush1.msra.mxu0 0.0
      %4240 = vmatprep.subr.mxu0 0.0
      %4241 = vmatpush1.msra.mxu0 0.0
      %4242 = vmatprep.subr.mxu0 0.0
      %4243 = vmatpush1.msra.mxu0 0.0
      %4244 = vmatprep.subr.mxu0 0.0
      %4245 = vmatpush1.msra.mxu0 0.0
      %4246 = vmatprep.subr.mxu0 0.0
      %4247 = vmatpush1.msra.mxu0 0.0
      %4248 = vmatprep.subr.mxu0 0.0
      %4249 = vmatpush1.msra.mxu0 0.0
      %4250 = vmatprep.subr.mxu0 0.0
      %4251 = vmatpush1.msra.mxu0 %v3245
      %4252 = vmatprep.subr.mxu0 0.0
      %4253 = vmatpush2.msra.mxu0 0.0
      %4254 = vmatprep.subr.mxu0 0.0
      %4255 = vmatpush2.msra.mxu0 0.0
      %4256 = vmatprep.subr.mxu0 0.0
      %4257 = vmatpush2.msra.mxu0 0.0
      %4258 = vmatprep.subr.mxu0 0.0
      %4259 = vmatpush2.msra.mxu0 0.0
      %4260 = vmatprep.subr.mxu0 0.0
      %4261 = vmatpush2.msra.mxu0 0.0
      %4262 = vmatprep.subr.mxu0 0.0
      %4263 = vmatpush2.msra.mxu0 0.0
      %4264 = vmatprep.subr.mxu0 0.0
      %4265 = vmatpush2.msra.mxu0 0.0
      %4266 = vmatprep.subr.mxu0 0.0
      %4267 = vmatpush2.msra.mxu0 0.0
      %4268 = vmatprep.subr.mxu0 0.0
      %4269 = vmatpush2.msra.mxu0 0.0
      %4270 = vmatprep.subr.mxu0 0.0
      %4271 = vmatpush2.msra.mxu0 0.0
      %4272 = vmatprep.subr.mxu0 0.0
      %4273 = vmatpush2.msra.mxu0 0.0
      %4274 = vmatprep.subr.mxu0 0.0
      %4275 = vmatpush2.msra.mxu0 0.0
      %4276 = vmatprep.subr.mxu0 0.0
      %4277 = vmatpush2.msra.mxu0 0.0
      %4278 = vmatprep.subr.mxu0 0.0
      %4279 = vmatpush2.msra.mxu0 0.0
      %4280 = vmatprep.subr.mxu0 0.0
      %4281 = vmatpush2.msra.mxu0 0.0
      %4282 = vmatprep.subr.mxu0 0.0
      %4283 = vmatpush2.msra.mxu0 0.0
      %4284 = vmatprep.mubr.f32.mxu0 0.0
      %4285 = vmatmul.mubr.f32.gmra.mxu0 %v4218
      %v4286 = vpop.f32.mrf.mxu0
      %v4287 = vadd.f32 0.0, %v4286
      %v4288 = vpop.f32.mrf.mxu0
      %4289 = vdwg.mxu0
      %v4291 = vsel %vm603, %v473, 0
      %4293 = vmatprep.subr.mxu0 0.0
      %4294 = vmatpush1.msra.mxu0 0.0
      %4295 = vmatprep.subr.mxu0 0.0
      %4296 = vmatpush1.msra.mxu0 0.0
      %4297 = vmatprep.subr.mxu0 0.0
      %4298 = vmatpush1.msra.mxu0 0.0
      %4299 = vmatprep.subr.mxu0 0.0
      %4300 = vmatpush1.msra.mxu0 0.0
      %4301 = vmatprep.subr.mxu0 0.0
      %4302 = vmatpush1.msra.mxu0 0.0
      %4303 = vmatprep.subr.mxu0 0.0
      %4304 = vmatpush1.msra.mxu0 0.0
      %4305 = vmatprep.subr.mxu0 0.0
      %4306 = vmatpush1.msra.mxu0 0.0
      %4307 = vmatprep.subr.mxu0 0.0
      %4308 = vmatpush1.msra.mxu0 0.0
      %4309 = vmatprep.subr.mxu0 0.0
      %4310 = vmatpush1.msra.mxu0 0.0
      %4311 = vmatprep.subr.mxu0 0.0
      %4312 = vmatpush1.msra.mxu0 0.0
      %4313 = vmatprep.subr.mxu0 0.0
      %4314 = vmatpush1.msra.mxu0 0.0
      %4315 = vmatprep.subr.mxu0 0.0
      %4316 = vmatpush1.msra.mxu0 0.0
      %4317 = vmatprep.subr.mxu0 0.0
      %4318 = vmatpush1.msra.mxu0 0.0
      %4319 = vmatprep.subr.mxu0 0.0
      %4320 = vmatpush1.msra.mxu0 0.0
      %4321 = vmatprep.subr.mxu0 0.0
      %4322 = vmatpush1.msra.mxu0 0.0
      %4323 = vmatprep.subr.mxu0 0.0
      %4324 = vmatpush1.msra.mxu0 %v3246
      %4325 = vmatprep.subr.mxu0 0.0
      %4326 = vmatpush2.msra.mxu0 0.0
      %4327 = vmatprep.subr.mxu0 0.0
      %4328 = vmatpush2.msra.mxu0 0.0
      %4329 = vmatprep.subr.mxu0 0.0
      %4330 = vmatpush2.msra.mxu0 0.0
      %4331 = vmatprep.subr.mxu0 0.0
      %4332 = vmatpush2.msra.mxu0 0.0
      %4333 = vmatprep.subr.mxu0 0.0
      %4334 = vmatpush2.msra.mxu0 0.0
      %4335 = vmatprep.subr.mxu0 0.0
      %4336 = vmatpush2.msra.mxu0 0.0
      %4337 = vmatprep.subr.mxu0 0.0
      %4338 = vmatpush2.msra.mxu0 0.0
      %4339 = vmatprep.subr.mxu0 0.0
      %4340 = vmatpush2.msra.mxu0 0.0
      %4341 = vmatprep.subr.mxu0 0.0
      %4342 = vmatpush2.msra.mxu0 0.0
      %4343 = vmatprep.subr.mxu0 0.0
      %4344 = vmatpush2.msra.mxu0 0.0
      %4345 = vmatprep.subr.mxu0 0.0
      %4346 = vmatpush2.msra.mxu0 0.0
      %4347 = vmatprep.subr.mxu0 0.0
      %4348 = vmatpush2.msra.mxu0 0.0
      %4349 = vmatprep.subr.mxu0 0.0
      %4350 = vmatpush2.msra.mxu0 0.0
      %4351 = vmatprep.subr.mxu0 0.0
      %4352 = vmatpush2.msra.mxu0 0.0
      %4353 = vmatprep.subr.mxu0 0.0
      %4354 = vmatpush2.msra.mxu0 0.0
      %4355 = vmatprep.subr.mxu0 0.0
      %4356 = vmatpush2.msra.mxu0 0.0
      %4357 = vmatprep.mubr.f32.mxu0 0.0
      %4358 = vmatmul.mubr.f32.gmra.mxu0 %v4291
      %v4359 = vpop.f32.mrf.mxu0
      %v4360 = vadd.f32 0.0, %v4359
      %v4361 = vpop.f32.mrf.mxu0
      %4362 = vdwg.mxu0
      %v4364 = vsel %vm603, %v474, 0
      %4366 = vmatprep.subr.mxu0 0.0
      %4367 = vmatpush1.msra.mxu0 0.0
      %4368 = vmatprep.subr.mxu0 0.0
      %4369 = vmatpush1.msra.mxu0 0.0
      %4370 = vmatprep.subr.mxu0 0.0
      %4371 = vmatpush1.msra.mxu0 0.0
      %4372 = vmatprep.subr.mxu0 0.0
      %4373 = vmatpush1.msra.mxu0 0.0
      %4374 = vmatprep.subr.mxu0 0.0
      %4375 = vmatpush1.msra.mxu0 0.0
      %4376 = vmatprep.subr.mxu0 0.0
      %4377 = vmatpush1.msra.mxu0 0.0
      %4378 = vmatprep.subr.mxu0 0.0
      %4379 = vmatpush1.msra.mxu0 0.0
      %4380 = vmatprep.subr.mxu0 0.0
      %4381 = vmatpush1.msra.mxu0 0.0
      %4382 = vmatprep.subr.mxu0 0.0
      %4383 = vmatpush1.msra.mxu0 0.0
      %4384 = vmatprep.subr.mxu0 0.0
      %4385 = vmatpush1.msra.mxu0 0.0
      %4386 = vmatprep.subr.mxu0 0.0
      %4387 = vmatpush1.msra.mxu0 0.0
      %4388 = vmatprep.subr.mxu0 0.0
      %4389 = vmatpush1.msra.mxu0 0.0
      %4390 = vmatprep.subr.mxu0 0.0
      %4391 = vmatpush1.msra.mxu0 0.0
      %4392 = vmatprep.subr.mxu0 0.0
      %4393 = vmatpush1.msra.mxu0 0.0
      %4394 = vmatprep.subr.mxu0 0.0
      %4395 = vmatpush1.msra.mxu0 0.0
      %4396 = vmatprep.subr.mxu0 0.0
      %4397 = vmatpush1.msra.mxu0 %v3247
      %4398 = vmatprep.subr.mxu0 0.0
      %4399 = vmatpush2.msra.mxu0 0.0
      %4400 = vmatprep.subr.mxu0 0.0
      %4401 = vmatpush2.msra.mxu0 0.0
      %4402 = vmatprep.subr.mxu0 0.0
      %4403 = vmatpush2.msra.mxu0 0.0
      %4404 = vmatprep.subr.mxu0 0.0
      %4405 = vmatpush2.msra.mxu0 0.0
      %4406 = vmatprep.subr.mxu0 0.0
      %4407 = vmatpush2.msra.mxu0 0.0
      %4408 = vmatprep.subr.mxu0 0.0
      %4409 = vmatpush2.msra.mxu0 0.0
      %4410 = vmatprep.subr.mxu0 0.0
      %4411 = vmatpush2.msra.mxu0 0.0
      %4412 = vmatprep.subr.mxu0 0.0
      %4413 = vmatpush2.msra.mxu0 0.0
      %4414 = vmatprep.subr.mxu0 0.0
      %4415 = vmatpush2.msra.mxu0 0.0
      %4416 = vmatprep.subr.mxu0 0.0
      %4417 = vmatpush2.msra.mxu0 0.0
      %4418 = vmatprep.subr.mxu0 0.0
      %4419 = vmatpush2.msra.mxu0 0.0
      %4420 = vmatprep.subr.mxu0 0.0
      %4421 = vmatpush2.msra.mxu0 0.0
      %4422 = vmatprep.subr.mxu0 0.0
      %4423 = vmatpush2.msra.mxu0 0.0
      %4424 = vmatprep.subr.mxu0 0.0
      %4425 = vmatpush2.msra.mxu0 0.0
      %4426 = vmatprep.subr.mxu0 0.0
      %4427 = vmatpush2.msra.mxu0 0.0
      %4428 = vmatprep.subr.mxu0 0.0
      %4429 = vmatpush2.msra.mxu0 0.0
      %4430 = vmatprep.mubr.f32.mxu0 0.0
      %4431 = vmatmul.mubr.f32.gmra.mxu0 %v4364
      %v4432 = vpop.f32.mrf.mxu0
      %v4433 = vadd.f32 0.0, %v4432
      %v4434 = vpop.f32.mrf.mxu0
      %4435 = vdwg.mxu0
      %v4437 = vsel %vm603, %v475, 0
      %4439 = vmatprep.subr.mxu0 0.0
      %4440 = vmatpush1.msra.mxu0 0.0
      %4441 = vmatprep.subr.mxu0 0.0
      %4442 = vmatpush1.msra.mxu0 0.0
      %4443 = vmatprep.subr.mxu0 0.0
      %4444 = vmatpush1.msra.mxu0 0.0
      %4445 = vmatprep.subr.mxu0 0.0
      %4446 = vmatpush1.msra.mxu0 0.0
      %4447 = vmatprep.subr.mxu0 0.0
      %4448 = vmatpush1.msra.mxu0 0.0
      %4449 = vmatprep.subr.mxu0 0.0
      %4450 = vmatpush1.msra.mxu0 0.0
      %4451 = vmatprep.subr.mxu0 0.0
      %4452 = vmatpush1.msra.mxu0 0.0
      %4453 = vmatprep.subr.mxu0 0.0
      %4454 = vmatpush1.msra.mxu0 0.0
      %4455 = vmatprep.subr.mxu0 0.0
      %4456 = vmatpush1.msra.mxu0 0.0
      %4457 = vmatprep.subr.mxu0 0.0
      %4458 = vmatpush1.msra.mxu0 0.0
      %4459 = vmatprep.subr.mxu0 0.0
      %4460 = vmatpush1.msra.mxu0 0.0
      %4461 = vmatprep.subr.mxu0 0.0
      %4462 = vmatpush1.msra.mxu0 0.0
      %4463 = vmatprep.subr.mxu0 0.0
      %4464 = vmatpush1.msra.mxu0 0.0
      %4465 = vmatprep.subr.mxu0 0.0
      %4466 = vmatpush1.msra.mxu0 0.0
      %4467 = vmatprep.subr.mxu0 0.0
      %4468 = vmatpush1.msra.mxu0 0.0
      %4469 = vmatprep.subr.mxu0 0.0
      %4470 = vmatpush1.msra.mxu0 %v3248
      %4471 = vmatprep.subr.mxu0 0.0
      %4472 = vmatpush2.msra.mxu0 0.0
      %4473 = vmatprep.subr.mxu0 0.0
      %4474 = vmatpush2.msra.mxu0 0.0
      %4475 = vmatprep.subr.mxu0 0.0
      %4476 = vmatpush2.msra.mxu0 0.0
      %4477 = vmatprep.subr.mxu0 0.0
      %4478 = vmatpush2.msra.mxu0 0.0
      %4479 = vmatprep.subr.mxu0 0.0
      %4480 = vmatpush2.msra.mxu0 0.0
      %4481 = vmatprep.subr.mxu0 0.0
      %4482 = vmatpush2.msra.mxu0 0.0
      %4483 = vmatprep.subr.mxu0 0.0
      %4484 = vmatpush2.msra.mxu0 0.0
      %4485 = vmatprep.subr.mxu0 0.0
      %4486 = vmatpush2.msra.mxu0 0.0
      %4487 = vmatprep.subr.mxu0 0.0
      %4488 = vmatpush2.msra.mxu0 0.0
      %4489 = vmatprep.subr.mxu0 0.0
      %4490 = vmatpush2.msra.mxu0 0.0
      %4491 = vmatprep.subr.mxu0 0.0
      %4492 = vmatpush2.msra.mxu0 0.0
      %4493 = vmatprep.subr.mxu0 0.0
      %4494 = vmatpush2.msra.mxu0 0.0
      %4495 = vmatprep.subr.mxu0 0.0
      %4496 = vmatpush2.msra.mxu0 0.0
      %4497 = vmatprep.subr.mxu0 0.0
      %4498 = vmatpush2.msra.mxu0 0.0
      %4499 = vmatprep.subr.mxu0 0.0
      %4500 = vmatpush2.msra.mxu0 0.0
      %4501 = vmatprep.subr.mxu0 0.0
      %4502 = vmatpush2.msra.mxu0 0.0
      %4503 = vmatprep.mubr.f32.mxu0 0.0
      %4504 = vmatmul.mubr.f32.gmra.mxu0 %v4437
      %v4505 = vpop.f32.mrf.mxu0
      %v4506 = vadd.f32 0.0, %v4505
      %v4507 = vpop.f32.mrf.mxu0
      %4508 = vdwg.mxu0
      %v4510 = vsel %vm603, %v476, 0
      %4512 = vmatprep.subr.mxu0 0.0
      %4513 = vmatpush1.msra.mxu0 0.0
      %4514 = vmatprep.subr.mxu0 0.0
      %4515 = vmatpush1.msra.mxu0 0.0
      %4516 = vmatprep.subr.mxu0 0.0
      %4517 = vmatpush1.msra.mxu0 0.0
      %4518 = vmatprep.subr.mxu0 0.0
      %4519 = vmatpush1.msra.mxu0 0.0
      %4520 = vmatprep.subr.mxu0 0.0
      %4521 = vmatpush1.msra.mxu0 0.0
      %4522 = vmatprep.subr.mxu0 0.0
      %4523 = vmatpush1.msra.mxu0 0.0
      %4524 = vmatprep.subr.mxu0 0.0
      %4525 = vmatpush1.msra.mxu0 0.0
      %4526 = vmatprep.subr.mxu0 0.0
      %4527 = vmatpush1.msra.mxu0 0.0
      %4528 = vmatprep.subr.mxu0 0.0
      %4529 = vmatpush1.msra.mxu0 0.0
      %4530 = vmatprep.subr.mxu0 0.0
      %4531 = vmatpush1.msra.mxu0 0.0
      %4532 = vmatprep.subr.mxu0 0.0
      %4533 = vmatpush1.msra.mxu0 0.0
      %4534 = vmatprep.subr.mxu0 0.0
      %4535 = vmatpush1.msra.mxu0 0.0
      %4536 = vmatprep.subr.mxu0 0.0
      %4537 = vmatpush1.msra.mxu0 0.0
      %4538 = vmatprep.subr.mxu0 0.0
      %4539 = vmatpush1.msra.mxu0 0.0
      %4540 = vmatprep.subr.mxu0 0.0
      %4541 = vmatpush1.msra.mxu0 0.0
      %4542 = vmatprep.subr.mxu0 0.0
      %4543 = vmatpush1.msra.mxu0 %v3249
      %4544 = vmatprep.subr.mxu0 0.0
      %4545 = vmatpush2.msra.mxu0 0.0
      %4546 = vmatprep.subr.mxu0 0.0
      %4547 = vmatpush2.msra.mxu0 0.0
      %4548 = vmatprep.subr.mxu0 0.0
      %4549 = vmatpush2.msra.mxu0 0.0
      %4550 = vmatprep.subr.mxu0 0.0
      %4551 = vmatpush2.msra.mxu0 0.0
      %4552 = vmatprep.subr.mxu0 0.0
      %4553 = vmatpush2.msra.mxu0 0.0
      %4554 = vmatprep.subr.mxu0 0.0
      %4555 = vmatpush2.msra.mxu0 0.0
      %4556 = vmatprep.subr.mxu0 0.0
      %4557 = vmatpush2.msra.mxu0 0.0
      %4558 = vmatprep.subr.mxu0 0.0
      %4559 = vmatpush2.msra.mxu0 0.0
      %4560 = vmatprep.subr.mxu0 0.0
      %4561 = vmatpush2.msra.mxu0 0.0
      %4562 = vmatprep.subr.mxu0 0.0
      %4563 = vmatpush2.msra.mxu0 0.0
      %4564 = vmatprep.subr.mxu0 0.0
      %4565 = vmatpush2.msra.mxu0 0.0
      %4566 = vmatprep.subr.mxu0 0.0
      %4567 = vmatpush2.msra.mxu0 0.0
      %4568 = vmatprep.subr.mxu0 0.0
      %4569 = vmatpush2.msra.mxu0 0.0
      %4570 = vmatprep.subr.mxu0 0.0
      %4571 = vmatpush2.msra.mxu0 0.0
      %4572 = vmatprep.subr.mxu0 0.0
      %4573 = vmatpush2.msra.mxu0 0.0
      %4574 = vmatprep.subr.mxu0 0.0
      %4575 = vmatpush2.msra.mxu0 0.0
      %4576 = vmatprep.mubr.f32.mxu0 0.0
      %4577 = vmatmul.mubr.f32.gmra.mxu0 %v4510
      %v4578 = vpop.f32.mrf.mxu0
      %v4579 = vadd.f32 0.0, %v4578
      %v4580 = vpop.f32.mrf.mxu0
      %4581 = vdwg.mxu0
      %v4583 = vsel %vm603, %v477, 0
      %4585 = vmatprep.subr.mxu0 0.0
      %4586 = vmatpush1.msra.mxu0 0.0
      %4587 = vmatprep.subr.mxu0 0.0
      %4588 = vmatpush1.msra.mxu0 0.0
      %4589 = vmatprep.subr.mxu0 0.0
      %4590 = vmatpush1.msra.mxu0 0.0
      %4591 = vmatprep.subr.mxu0 0.0
      %4592 = vmatpush1.msra.mxu0 0.0
      %4593 = vmatprep.subr.mxu0 0.0
      %4594 = vmatpush1.msra.mxu0 0.0
      %4595 = vmatprep.subr.mxu0 0.0
      %4596 = vmatpush1.msra.mxu0 0.0
      %4597 = vmatprep.subr.mxu0 0.0
      %4598 = vmatpush1.msra.mxu0 0.0
      %4599 = vmatprep.subr.mxu0 0.0
      %4600 = vmatpush1.msra.mxu0 0.0
      %4601 = vmatprep.subr.mxu0 0.0
      %4602 = vmatpush1.msra.mxu0 0.0
      %4603 = vmatprep.subr.mxu0 0.0
      %4604 = vmatpush1.msra.mxu0 0.0
      %4605 = vmatprep.subr.mxu0 0.0
      %4606 = vmatpush1.msra.mxu0 0.0
      %4607 = vmatprep.subr.mxu0 0.0
      %4608 = vmatpush1.msra.mxu0 0.0
      %4609 = vmatprep.subr.mxu0 0.0
      %4610 = vmatpush1.msra.mxu0 0.0
      %4611 = vmatprep.subr.mxu0 0.0
      %4612 = vmatpush1.msra.mxu0 0.0
      %4613 = vmatprep.subr.mxu0 0.0
      %4614 = vmatpush1.msra.mxu0 0.0
      %4615 = vmatprep.subr.mxu0 0.0
      %4616 = vmatpush1.msra.mxu0 %v3250
      %4617 = vmatprep.subr.mxu0 0.0
      %4618 = vmatpush2.msra.mxu0 0.0
      %4619 = vmatprep.subr.mxu0 0.0
      %4620 = vmatpush2.msra.mxu0 0.0
      %4621 = vmatprep.subr.mxu0 0.0
      %4622 = vmatpush2.msra.mxu0 0.0
      %4623 = vmatprep.subr.mxu0 0.0
      %4624 = vmatpush2.msra.mxu0 0.0
      %4625 = vmatprep.subr.mxu0 0.0
      %4626 = vmatpush2.msra.mxu0 0.0
      %4627 = vmatprep.subr.mxu0 0.0
      %4628 = vmatpush2.msra.mxu0 0.0
      %4629 = vmatprep.subr.mxu0 0.0
      %4630 = vmatpush2.msra.mxu0 0.0
      %4631 = vmatprep.subr.mxu0 0.0
      %4632 = vmatpush2.msra.mxu0 0.0
      %4633 = vmatprep.subr.mxu0 0.0
      %4634 = vmatpush2.msra.mxu0 0.0
      %4635 = vmatprep.subr.mxu0 0.0
      %4636 = vmatpush2.msra.mxu0 0.0
      %4637 = vmatprep.subr.mxu0 0.0
      %4638 = vmatpush2.msra.mxu0 0.0
      %4639 = vmatprep.subr.mxu0 0.0
      %4640 = vmatpush2.msra.mxu0 0.0
      %4641 = vmatprep.subr.mxu0 0.0
      %4642 = vmatpush2.msra.mxu0 0.0
      %4643 = vmatprep.subr.mxu0 0.0
      %4644 = vmatpush2.msra.mxu0 0.0
      %4645 = vmatprep.subr.mxu0 0.0
      %4646 = vmatpush2.msra.mxu0 0.0
      %4647 = vmatprep.subr.mxu0 0.0
      %4648 = vmatpush2.msra.mxu0 0.0
      %4649 = vmatprep.mubr.f32.mxu0 0.0
      %4650 = vmatmul.mubr.f32.gmra.mxu0 %v4583
      %v4651 = vpop.f32.mrf.mxu0
      %v4652 = vadd.f32 0.0, %v4651
      %v4653 = vpop.f32.mrf.mxu0
      %4654 = vdwg.mxu0
      %v4656 = vsel %vm603, %v478, 0
      %4658 = vmatprep.subr.mxu0 0.0
      %4659 = vmatpush1.msra.mxu0 0.0
      %4660 = vmatprep.subr.mxu0 0.0
      %4661 = vmatpush1.msra.mxu0 0.0
      %4662 = vmatprep.subr.mxu0 0.0
      %4663 = vmatpush1.msra.mxu0 0.0
      %4664 = vmatprep.subr.mxu0 0.0
      %4665 = vmatpush1.msra.mxu0 0.0
      %4666 = vmatprep.subr.mxu0 0.0
      %4667 = vmatpush1.msra.mxu0 0.0
      %4668 = vmatprep.subr.mxu0 0.0
      %4669 = vmatpush1.msra.mxu0 0.0
      %4670 = vmatprep.subr.mxu0 0.0
      %4671 = vmatpush1.msra.mxu0 0.0
      %4672 = vmatprep.subr.mxu0 0.0
      %4673 = vmatpush1.msra.mxu0 0.0
      %4674 = vmatprep.subr.mxu0 0.0
      %4675 = vmatpush1.msra.mxu0 0.0
      %4676 = vmatprep.subr.mxu0 0.0
      %4677 = vmatpush1.msra.mxu0 0.0
      %4678 = vmatprep.subr.mxu0 0.0
      %4679 = vmatpush1.msra.mxu0 0.0
      %4680 = vmatprep.subr.mxu0 0.0
      %4681 = vmatpush1.msra.mxu0 0.0
      %4682 = vmatprep.subr.mxu0 0.0
      %4683 = vmatpush1.msra.mxu0 0.0
      %4684 = vmatprep.subr.mxu0 0.0
      %4685 = vmatpush1.msra.mxu0 0.0
      %4686 = vmatprep.subr.mxu0 0.0
      %4687 = vmatpush1.msra.mxu0 0.0
      %4688 = vmatprep.subr.mxu0 0.0
      %4689 = vmatpush1.msra.mxu0 %v3251
      %4690 = vmatprep.subr.mxu0 0.0
      %4691 = vmatpush2.msra.mxu0 0.0
      %4692 = vmatprep.subr.mxu0 0.0
      %4693 = vmatpush2.msra.mxu0 0.0
      %4694 = vmatprep.subr.mxu0 0.0
      %4695 = vmatpush2.msra.mxu0 0.0
      %4696 = vmatprep.subr.mxu0 0.0
      %4697 = vmatpush2.msra.mxu0 0.0
      %4698 = vmatprep.subr.mxu0 0.0
      %4699 = vmatpush2.msra.mxu0 0.0
      %4700 = vmatprep.subr.mxu0 0.0
      %4701 = vmatpush2.msra.mxu0 0.0
      %4702 = vmatprep.subr.mxu0 0.0
      %4703 = vmatpush2.msra.mxu0 0.0
      %4704 = vmatprep.subr.mxu0 0.0
      %4705 = vmatpush2.msra.mxu0 0.0
      %4706 = vmatprep.subr.mxu0 0.0
      %4707 = vmatpush2.msra.mxu0 0.0
      %4708 = vmatprep.subr.mxu0 0.0
      %4709 = vmatpush2.msra.mxu0 0.0
      %4710 = vmatprep.subr.mxu0 0.0
      %4711 = vmatpush2.msra.mxu0 0.0
      %4712 = vmatprep.subr.mxu0 0.0
      %4713 = vmatpush2.msra.mxu0 0.0
      %4714 = vmatprep.subr.mxu0 0.0
      %4715 = vmatpush2.msra.mxu0 0.0
      %4716 = vmatprep.subr.mxu0 0.0
      %4717 = vmatpush2.msra.mxu0 0.0
      %4718 = vmatprep.subr.mxu0 0.0
      %4719 = vmatpush2.msra.mxu0 0.0
      %4720 = vmatprep.subr.mxu0 0.0
      %4721 = vmatpush2.msra.mxu0 0.0
      %4722 = vmatprep.mubr.f32.mxu0 0.0
      %4723 = vmatmul.mubr.f32.gmra.mxu0 %v4656
      %v4724 = vpop.f32.mrf.mxu0
      %v4725 = vadd.f32 0.0, %v4724
      %v4726 = vpop.f32.mrf.mxu0
      %4727 = vdwg.mxu0
      %v4729 = vsel %vm603, %v479, 0
      %4731 = vmatprep.subr.mxu0 0.0
      %4732 = vmatpush1.msra.mxu0 0.0
      %4733 = vmatprep.subr.mxu0 0.0
      %4734 = vmatpush1.msra.mxu0 0.0
      %4735 = vmatprep.subr.mxu0 0.0
      %4736 = vmatpush1.msra.mxu0 0.0
      %4737 = vmatprep.subr.mxu0 0.0
      %4738 = vmatpush1.msra.mxu0 0.0
      %4739 = vmatprep.subr.mxu0 0.0
      %4740 = vmatpush1.msra.mxu0 0.0
      %4741 = vmatprep.subr.mxu0 0.0
      %4742 = vmatpush1.msra.mxu0 0.0
      %4743 = vmatprep.subr.mxu0 0.0
      %4744 = vmatpush1.msra.mxu0 0.0
      %4745 = vmatprep.subr.mxu0 0.0
      %4746 = vmatpush1.msra.mxu0 0.0
      %4747 = vmatprep.subr.mxu0 0.0
      %4748 = vmatpush1.msra.mxu0 0.0
      %4749 = vmatprep.subr.mxu0 0.0
      %4750 = vmatpush1.msra.mxu0 0.0
      %4751 = vmatprep.subr.mxu0 0.0
      %4752 = vmatpush1.msra.mxu0 0.0
      %4753 = vmatprep.subr.mxu0 0.0
      %4754 = vmatpush1.msra.mxu0 0.0
      %4755 = vmatprep.subr.mxu0 0.0
      %4756 = vmatpush1.msra.mxu0 0.0
      %4757 = vmatprep.subr.mxu0 0.0
      %4758 = vmatpush1.msra.mxu0 0.0
      %4759 = vmatprep.subr.mxu0 0.0
      %4760 = vmatpush1.msra.mxu0 0.0
      %4761 = vmatprep.subr.mxu0 0.0
      %4762 = vmatpush1.msra.mxu0 %v3252
      %4763 = vmatprep.subr.mxu0 0.0
      %4764 = vmatpush2.msra.mxu0 0.0
      %4765 = vmatprep.subr.mxu0 0.0
      %4766 = vmatpush2.msra.mxu0 0.0
      %4767 = vmatprep.subr.mxu0 0.0
      %4768 = vmatpush2.msra.mxu0 0.0
      %4769 = vmatprep.subr.mxu0 0.0
      %4770 = vmatpush2.msra.mxu0 0.0
      %4771 = vmatprep.subr.mxu0 0.0
      %4772 = vmatpush2.msra.mxu0 0.0
      %4773 = vmatprep.subr.mxu0 0.0
      %4774 = vmatpush2.msra.mxu0 0.0
      %4775 = vmatprep.subr.mxu0 0.0
      %4776 = vmatpush2.msra.mxu0 0.0
      %4777 = vmatprep.subr.mxu0 0.0
      %4778 = vmatpush2.msra.mxu0 0.0
      %4779 = vmatprep.subr.mxu0 0.0
      %4780 = vmatpush2.msra.mxu0 0.0
      %4781 = vmatprep.subr.mxu0 0.0
      %4782 = vmatpush2.msra.mxu0 0.0
      %4783 = vmatprep.subr.mxu0 0.0
      %4784 = vmatpush2.msra.mxu0 0.0
      %4785 = vmatprep.subr.mxu0 0.0
      %4786 = vmatpush2.msra.mxu0 0.0
      %4787 = vmatprep.subr.mxu0 0.0
      %4788 = vmatpush2.msra.mxu0 0.0
      %4789 = vmatprep.subr.mxu0 0.0
      %4790 = vmatpush2.msra.mxu0 0.0
      %4791 = vmatprep.subr.mxu0 0.0
      %4792 = vmatpush2.msra.mxu0 0.0
      %4793 = vmatprep.subr.mxu0 0.0
      %4794 = vmatpush2.msra.mxu0 0.0
      %4795 = vmatprep.mubr.f32.mxu0 0.0
      %4796 = vmatmul.mubr.f32.gmra.mxu0 %v4729
      %v4797 = vpop.f32.mrf.mxu0
      %v4798 = vadd.f32 0.0, %v4797
      %v4799 = vpop.f32.mrf.mxu0
      %4800 = vdwg.mxu0
      %v4802 = vsel %vm603, %v480, 0
      %4804 = vmatprep.subr.mxu0 0.0
      %4805 = vmatpush1.msra.mxu0 0.0
      %4806 = vmatprep.subr.mxu0 0.0
      %4807 = vmatpush1.msra.mxu0 0.0
      %4808 = vmatprep.subr.mxu0 0.0
      %4809 = vmatpush1.msra.mxu0 0.0
      %4810 = vmatprep.subr.mxu0 0.0
      %4811 = vmatpush1.msra.mxu0 0.0
      %4812 = vmatprep.subr.mxu0 0.0
      %4813 = vmatpush1.msra.mxu0 0.0
      %4814 = vmatprep.subr.mxu0 0.0
      %4815 = vmatpush1.msra.mxu0 0.0
      %4816 = vmatprep.subr.mxu0 0.0
      %4817 = vmatpush1.msra.mxu0 0.0
      %4818 = vmatprep.subr.mxu0 0.0
      %4819 = vmatpush1.msra.mxu0 0.0
      %4820 = vmatprep.subr.mxu0 0.0
      %4821 = vmatpush1.msra.mxu0 0.0
      %4822 = vmatprep.subr.mxu0 0.0
      %4823 = vmatpush1.msra.mxu0 0.0
      %4824 = vmatprep.subr.mxu0 0.0
      %4825 = vmatpush1.msra.mxu0 0.0
      %4826 = vmatprep.subr.mxu0 0.0
      %4827 = vmatpush1.msra.mxu0 0.0
      %4828 = vmatprep.subr.mxu0 0.0
      %4829 = vmatpush1.msra.mxu0 0.0
      %4830 = vmatprep.subr.mxu0 0.0
      %4831 = vmatpush1.msra.mxu0 0.0
      %4832 = vmatprep.subr.mxu0 0.0
      %4833 = vmatpush1.msra.mxu0 0.0
      %4834 = vmatprep.subr.mxu0 0.0
      %4835 = vmatpush1.msra.mxu0 %v3253
      %4836 = vmatprep.subr.mxu0 0.0
      %4837 = vmatpush2.msra.mxu0 0.0
      %4838 = vmatprep.subr.mxu0 0.0
      %4839 = vmatpush2.msra.mxu0 0.0
      %4840 = vmatprep.subr.mxu0 0.0
      %4841 = vmatpush2.msra.mxu0 0.0
      %4842 = vmatprep.subr.mxu0 0.0
      %4843 = vmatpush2.msra.mxu0 0.0
      %4844 = vmatprep.subr.mxu0 0.0
      %4845 = vmatpush2.msra.mxu0 0.0
      %4846 = vmatprep.subr.mxu0 0.0
      %4847 = vmatpush2.msra.mxu0 0.0
      %4848 = vmatprep.subr.mxu0 0.0
      %4849 = vmatpush2.msra.mxu0 0.0
      %4850 = vmatprep.subr.mxu0 0.0
      %4851 = vmatpush2.msra.mxu0 0.0
      %4852 = vmatprep.subr.mxu0 0.0
      %4853 = vmatpush2.msra.mxu0 0.0
      %4854 = vmatprep.subr.mxu0 0.0
      %4855 = vmatpush2.msra.mxu0 0.0
      %4856 = vmatprep.subr.mxu0 0.0
      %4857 = vmatpush2.msra.mxu0 0.0
      %4858 = vmatprep.subr.mxu0 0.0
      %4859 = vmatpush2.msra.mxu0 0.0
      %4860 = vmatprep.subr.mxu0 0.0
      %4861 = vmatpush2.msra.mxu0 0.0
      %4862 = vmatprep.subr.mxu0 0.0
      %4863 = vmatpush2.msra.mxu0 0.0
      %4864 = vmatprep.subr.mxu0 0.0
      %4865 = vmatpush2.msra.mxu0 0.0
      %4866 = vmatprep.subr.mxu0 0.0
      %4867 = vmatpush2.msra.mxu0 0.0
      %4868 = vmatprep.mubr.f32.mxu0 0.0
      %4869 = vmatmul.mubr.f32.gmra.mxu0 %v4802
      %v4870 = vpop.f32.mrf.mxu0
      %v4871 = vadd.f32 0.0, %v4870
      %v4872 = vpop.f32.mrf.mxu0
      %4873 = vdwg.mxu0
      %v4875 = vsel %vm603, %v481, 0
      %4877 = vmatprep.subr.mxu0 0.0
      %4878 = vmatpush1.msra.mxu0 0.0
      %4879 = vmatprep.subr.mxu0 0.0
      %4880 = vmatpush1.msra.mxu0 0.0
      %4881 = vmatprep.subr.mxu0 0.0
      %4882 = vmatpush1.msra.mxu0 0.0
      %4883 = vmatprep.subr.mxu0 0.0
      %4884 = vmatpush1.msra.mxu0 0.0
      %4885 = vmatprep.subr.mxu0 0.0
      %4886 = vmatpush1.msra.mxu0 0.0
      %4887 = vmatprep.subr.mxu0 0.0
      %4888 = vmatpush1.msra.mxu0 0.0
      %4889 = vmatprep.subr.mxu0 0.0
      %4890 = vmatpush1.msra.mxu0 0.0
      %4891 = vmatprep.subr.mxu0 0.0
      %4892 = vmatpush1.msra.mxu0 0.0
      %4893 = vmatprep.subr.mxu0 0.0
      %4894 = vmatpush1.msra.mxu0 0.0
      %4895 = vmatprep.subr.mxu0 0.0
      %4896 = vmatpush1.msra.mxu0 0.0
      %4897 = vmatprep.subr.mxu0 0.0
      %4898 = vmatpush1.msra.mxu0 0.0
      %4899 = vmatprep.subr.mxu0 0.0
      %4900 = vmatpush1.msra.mxu0 0.0
      %4901 = vmatprep.subr.mxu0 0.0
      %4902 = vmatpush1.msra.mxu0 0.0
      %4903 = vmatprep.subr.mxu0 0.0
      %4904 = vmatpush1.msra.mxu0 0.0
      %4905 = vmatprep.subr.mxu0 0.0
      %4906 = vmatpush1.msra.mxu0 0.0
      %4907 = vmatprep.subr.mxu0 0.0
      %4908 = vmatpush1.msra.mxu0 %v3254
      %4909 = vmatprep.subr.mxu0 0.0
      %4910 = vmatpush2.msra.mxu0 0.0
      %4911 = vmatprep.subr.mxu0 0.0
      %4912 = vmatpush2.msra.mxu0 0.0
      %4913 = vmatprep.subr.mxu0 0.0
      %4914 = vmatpush2.msra.mxu0 0.0
      %4915 = vmatprep.subr.mxu0 0.0
      %4916 = vmatpush2.msra.mxu0 0.0
      %4917 = vmatprep.subr.mxu0 0.0
      %4918 = vmatpush2.msra.mxu0 0.0
      %4919 = vmatprep.subr.mxu0 0.0
      %4920 = vmatpush2.msra.mxu0 0.0
      %4921 = vmatprep.subr.mxu0 0.0
      %4922 = vmatpush2.msra.mxu0 0.0
      %4923 = vmatprep.subr.mxu0 0.0
      %4924 = vmatpush2.msra.mxu0 0.0
      %4925 = vmatprep.subr.mxu0 0.0
      %4926 = vmatpush2.msra.mxu0 0.0
      %4927 = vmatprep.subr.mxu0 0.0
      %4928 = vmatpush2.msra.mxu0 0.0
      %4929 = vmatprep.subr.mxu0 0.0
      %4930 = vmatpush2.msra.mxu0 0.0
      %4931 = vmatprep.subr.mxu0 0.0
      %4932 = vmatpush2.msra.mxu0 0.0
      %4933 = vmatprep.subr.mxu0 0.0
      %4934 = vmatpush2.msra.mxu0 0.0
      %4935 = vmatprep.subr.mxu0 0.0
      %4936 = vmatpush2.msra.mxu0 0.0
      %4937 = vmatprep.subr.mxu0 0.0
      %4938 = vmatpush2.msra.mxu0 0.0
      %4939 = vmatprep.subr.mxu0 0.0
      %4940 = vmatpush2.msra.mxu0 0.0
      %4941 = vmatprep.mubr.f32.mxu0 0.0
      %4942 = vmatmul.mubr.f32.gmra.mxu0 %v4875
      %v4943 = vpop.f32.mrf.mxu0
      %v4944 = vadd.f32 0.0, %v4943
      %v4945 = vpop.f32.mrf.mxu0
      %4946 = vdwg.mxu0
      %v4948 = vsel %vm603, %v482, 0
      %4950 = vmatprep.subr.mxu0 0.0
      %4951 = vmatpush1.msra.mxu0 0.0
      %4952 = vmatprep.subr.mxu0 0.0
      %4953 = vmatpush1.msra.mxu0 0.0
      %4954 = vmatprep.subr.mxu0 0.0
      %4955 = vmatpush1.msra.mxu0 0.0
      %4956 = vmatprep.subr.mxu0 0.0
      %4957 = vmatpush1.msra.mxu0 0.0
      %4958 = vmatprep.subr.mxu0 0.0
      %4959 = vmatpush1.msra.mxu0 0.0
      %4960 = vmatprep.subr.mxu0 0.0
      %4961 = vmatpush1.msra.mxu0 0.0
      %4962 = vmatprep.subr.mxu0 0.0
      %4963 = vmatpush1.msra.mxu0 0.0
      %4964 = vmatprep.subr.mxu0 0.0
      %4965 = vmatpush1.msra.mxu0 0.0
      %4966 = vmatprep.subr.mxu0 0.0
      %4967 = vmatpush1.msra.mxu0 0.0
      %4968 = vmatprep.subr.mxu0 0.0
      %4969 = vmatpush1.msra.mxu0 0.0
      %4970 = vmatprep.subr.mxu0 0.0
      %4971 = vmatpush1.msra.mxu0 0.0
      %4972 = vmatprep.subr.mxu0 0.0
      %4973 = vmatpush1.msra.mxu0 0.0
      %4974 = vmatprep.subr.mxu0 0.0
      %4975 = vmatpush1.msra.mxu0 0.0
      %4976 = vmatprep.subr.mxu0 0.0
      %4977 = vmatpush1.msra.mxu0 0.0
      %4978 = vmatprep.subr.mxu0 0.0
      %4979 = vmatpush1.msra.mxu0 0.0
      %4980 = vmatprep.subr.mxu0 0.0
      %4981 = vmatpush1.msra.mxu0 %v3255
      %4982 = vmatprep.subr.mxu0 0.0
      %4983 = vmatpush2.msra.mxu0 0.0
      %4984 = vmatprep.subr.mxu0 0.0
      %4985 = vmatpush2.msra.mxu0 0.0
      %4986 = vmatprep.subr.mxu0 0.0
      %4987 = vmatpush2.msra.mxu0 0.0
      %4988 = vmatprep.subr.mxu0 0.0
      %4989 = vmatpush2.msra.mxu0 0.0
      %4990 = vmatprep.subr.mxu0 0.0
      %4991 = vmatpush2.msra.mxu0 0.0
      %4992 = vmatprep.subr.mxu0 0.0
      %4993 = vmatpush2.msra.mxu0 0.0
      %4994 = vmatprep.subr.mxu0 0.0
      %4995 = vmatpush2.msra.mxu0 0.0
      %4996 = vmatprep.subr.mxu0 0.0
      %4997 = vmatpush2.msra.mxu0 0.0
      %4998 = vmatprep.subr.mxu0 0.0
      %4999 = vmatpush2.msra.mxu0 0.0
      %5000 = vmatprep.subr.mxu0 0.0
      %5001 = vmatpush2.msra.mxu0 0.0
      %5002 = vmatprep.subr.mxu0 0.0
      %5003 = vmatpush2.msra.mxu0 0.0
      %5004 = vmatprep.subr.mxu0 0.0
      %5005 = vmatpush2.msra.mxu0 0.0
      %5006 = vmatprep.subr.mxu0 0.0
      %5007 = vmatpush2.msra.mxu0 0.0
      %5008 = vmatprep.subr.mxu0 0.0
      %5009 = vmatpush2.msra.mxu0 0.0
      %5010 = vmatprep.subr.mxu0 0.0
      %5011 = vmatpush2.msra.mxu0 0.0
      %5012 = vmatprep.subr.mxu0 0.0
      %5013 = vmatpush2.msra.mxu0 0.0
      %5014 = vmatprep.mubr.f32.mxu0 0.0
      %5015 = vmatmul.mubr.f32.gmra.mxu0 %v4948
      %v5016 = vpop.f32.mrf.mxu0
      %v5017 = vadd.f32 0.0, %v5016
      %v5018 = vpop.f32.mrf.mxu0
      %5019 = vdwg.mxu0
      %v5021 = vsel %vm603, %v483, 0
      %5023 = vmatprep.subr.mxu0 0.0
      %5024 = vmatpush1.msra.mxu0 0.0
      %5025 = vmatprep.subr.mxu0 0.0
      %5026 = vmatpush1.msra.mxu0 0.0
      %5027 = vmatprep.subr.mxu0 0.0
      %5028 = vmatpush1.msra.mxu0 0.0
      %5029 = vmatprep.subr.mxu0 0.0
      %5030 = vmatpush1.msra.mxu0 0.0
      %5031 = vmatprep.subr.mxu0 0.0
      %5032 = vmatpush1.msra.mxu0 0.0
      %5033 = vmatprep.subr.mxu0 0.0
      %5034 = vmatpush1.msra.mxu0 0.0
      %5035 = vmatprep.subr.mxu0 0.0
      %5036 = vmatpush1.msra.mxu0 0.0
      %5037 = vmatprep.subr.mxu0 0.0
      %5038 = vmatpush1.msra.mxu0 0.0
      %5039 = vmatprep.subr.mxu0 0.0
      %5040 = vmatpush1.msra.mxu0 0.0
      %5041 = vmatprep.subr.mxu0 0.0
      %5042 = vmatpush1.msra.mxu0 0.0
      %5043 = vmatprep.subr.mxu0 0.0
      %5044 = vmatpush1.msra.mxu0 0.0
      %5045 = vmatprep.subr.mxu0 0.0
      %5046 = vmatpush1.msra.mxu0 0.0
      %5047 = vmatprep.subr.mxu0 0.0
      %5048 = vmatpush1.msra.mxu0 0.0
      %5049 = vmatprep.subr.mxu0 0.0
      %5050 = vmatpush1.msra.mxu0 0.0
      %5051 = vmatprep.subr.mxu0 0.0
      %5052 = vmatpush1.msra.mxu0 0.0
      %5053 = vmatprep.subr.mxu0 0.0
      %5054 = vmatpush1.msra.mxu0 %v3256
      %5055 = vmatprep.subr.mxu0 0.0
      %5056 = vmatpush2.msra.mxu0 0.0
      %5057 = vmatprep.subr.mxu0 0.0
      %5058 = vmatpush2.msra.mxu0 0.0
      %5059 = vmatprep.subr.mxu0 0.0
      %5060 = vmatpush2.msra.mxu0 0.0
      %5061 = vmatprep.subr.mxu0 0.0
      %5062 = vmatpush2.msra.mxu0 0.0
      %5063 = vmatprep.subr.mxu0 0.0
      %5064 = vmatpush2.msra.mxu0 0.0
      %5065 = vmatprep.subr.mxu0 0.0
      %5066 = vmatpush2.msra.mxu0 0.0
      %5067 = vmatprep.subr.mxu0 0.0
      %5068 = vmatpush2.msra.mxu0 0.0
      %5069 = vmatprep.subr.mxu0 0.0
      %5070 = vmatpush2.msra.mxu0 0.0
      %5071 = vmatprep.subr.mxu0 0.0
      %5072 = vmatpush2.msra.mxu0 0.0
      %5073 = vmatprep.subr.mxu0 0.0
      %5074 = vmatpush2.msra.mxu0 0.0
      %5075 = vmatprep.subr.mxu0 0.0
      %5076 = vmatpush2.msra.mxu0 0.0
      %5077 = vmatprep.subr.mxu0 0.0
      %5078 = vmatpush2.msra.mxu0 0.0
      %5079 = vmatprep.subr.mxu0 0.0
      %5080 = vmatpush2.msra.mxu0 0.0
      %5081 = vmatprep.subr.mxu0 0.0
      %5082 = vmatpush2.msra.mxu0 0.0
      %5083 = vmatprep.subr.mxu0 0.0
      %5084 = vmatpush2.msra.mxu0 0.0
      %5085 = vmatprep.subr.mxu0 0.0
      %5086 = vmatpush2.msra.mxu0 0.0
      %5087 = vmatprep.mubr.f32.mxu0 0.0
      %5088 = vmatmul.mubr.f32.gmra.mxu0 %v5021
      %v5089 = vpop.f32.mrf.mxu0
      %v5090 = vadd.f32 0.0, %v5089
      %v5091 = vpop.f32.mrf.mxu0
      %5092 = vdwg.mxu0
      %v5094 = vsel %vm603, %v484, 0
      %5096 = vmatprep.subr.mxu0 0.0
      %5097 = vmatpush1.msra.mxu0 0.0
      %5098 = vmatprep.subr.mxu0 0.0
      %5099 = vmatpush1.msra.mxu0 0.0
      %5100 = vmatprep.subr.mxu0 0.0
      %5101 = vmatpush1.msra.mxu0 0.0
      %5102 = vmatprep.subr.mxu0 0.0
      %5103 = vmatpush1.msra.mxu0 0.0
      %5104 = vmatprep.subr.mxu0 0.0
      %5105 = vmatpush1.msra.mxu0 0.0
      %5106 = vmatprep.subr.mxu0 0.0
      %5107 = vmatpush1.msra.mxu0 0.0
      %5108 = vmatprep.subr.mxu0 0.0
      %5109 = vmatpush1.msra.mxu0 0.0
      %5110 = vmatprep.subr.mxu0 0.0
      %5111 = vmatpush1.msra.mxu0 0.0
      %5112 = vmatprep.subr.mxu0 0.0
      %5113 = vmatpush1.msra.mxu0 0.0
      %5114 = vmatprep.subr.mxu0 0.0
      %5115 = vmatpush1.msra.mxu0 0.0
      %5116 = vmatprep.subr.mxu0 0.0
      %5117 = vmatpush1.msra.mxu0 0.0
      %5118 = vmatprep.subr.mxu0 0.0
      %5119 = vmatpush1.msra.mxu0 0.0
      %5120 = vmatprep.subr.mxu0 0.0
      %5121 = vmatpush1.msra.mxu0 0.0
      %5122 = vmatprep.subr.mxu0 0.0
      %5123 = vmatpush1.msra.mxu0 0.0
      %5124 = vmatprep.subr.mxu0 0.0
      %5125 = vmatpush1.msra.mxu0 0.0
      %5126 = vmatprep.subr.mxu0 0.0
      %5127 = vmatpush1.msra.mxu0 %v3257
      %5128 = vmatprep.subr.mxu0 0.0
      %5129 = vmatpush2.msra.mxu0 0.0
      %5130 = vmatprep.subr.mxu0 0.0
      %5131 = vmatpush2.msra.mxu0 0.0
      %5132 = vmatprep.subr.mxu0 0.0
      %5133 = vmatpush2.msra.mxu0 0.0
      %5134 = vmatprep.subr.mxu0 0.0
      %5135 = vmatpush2.msra.mxu0 0.0
      %5136 = vmatprep.subr.mxu0 0.0
      %5137 = vmatpush2.msra.mxu0 0.0
      %5138 = vmatprep.subr.mxu0 0.0
      %5139 = vmatpush2.msra.mxu0 0.0
      %5140 = vmatprep.subr.mxu0 0.0
      %5141 = vmatpush2.msra.mxu0 0.0
      %5142 = vmatprep.subr.mxu0 0.0
      %5143 = vmatpush2.msra.mxu0 0.0
      %5144 = vmatprep.subr.mxu0 0.0
      %5145 = vmatpush2.msra.mxu0 0.0
      %5146 = vmatprep.subr.mxu0 0.0
      %5147 = vmatpush2.msra.mxu0 0.0
      %5148 = vmatprep.subr.mxu0 0.0
      %5149 = vmatpush2.msra.mxu0 0.0
      %5150 = vmatprep.subr.mxu0 0.0
      %5151 = vmatpush2.msra.mxu0 0.0
      %5152 = vmatprep.subr.mxu0 0.0
      %5153 = vmatpush2.msra.mxu0 0.0
      %5154 = vmatprep.subr.mxu0 0.0
      %5155 = vmatpush2.msra.mxu0 0.0
      %5156 = vmatprep.subr.mxu0 0.0
      %5157 = vmatpush2.msra.mxu0 0.0
      %5158 = vmatprep.subr.mxu0 0.0
      %5159 = vmatpush2.msra.mxu0 0.0
      %5160 = vmatprep.mubr.f32.mxu0 0.0
      %5161 = vmatmul.mubr.f32.gmra.mxu0 %v5094
      %v5162 = vpop.f32.mrf.mxu0
      %v5163 = vadd.f32 0.0, %v5162
      %v5164 = vpop.f32.mrf.mxu0
      %5165 = vdwg.mxu0
      %v5167 = vsel %vm603, %v485, 0
      %5169 = vmatprep.subr.mxu0 0.0
      %5170 = vmatpush1.msra.mxu0 0.0
      %5171 = vmatprep.subr.mxu0 0.0
      %5172 = vmatpush1.msra.mxu0 0.0
      %5173 = vmatprep.subr.mxu0 0.0
      %5174 = vmatpush1.msra.mxu0 0.0
      %5175 = vmatprep.subr.mxu0 0.0
      %5176 = vmatpush1.msra.mxu0 0.0
      %5177 = vmatprep.subr.mxu0 0.0
      %5178 = vmatpush1.msra.mxu0 0.0
      %5179 = vmatprep.subr.mxu0 0.0
      %5180 = vmatpush1.msra.mxu0 0.0
      %5181 = vmatprep.subr.mxu0 0.0
      %5182 = vmatpush1.msra.mxu0 0.0
      %5183 = vmatprep.subr.mxu0 0.0
      %5184 = vmatpush1.msra.mxu0 0.0
      %5185 = vmatprep.subr.mxu0 0.0
      %5186 = vmatpush1.msra.mxu0 0.0
      %5187 = vmatprep.subr.mxu0 0.0
      %5188 = vmatpush1.msra.mxu0 0.0
      %5189 = vmatprep.subr.mxu0 0.0
      %5190 = vmatpush1.msra.mxu0 0.0
      %5191 = vmatprep.subr.mxu0 0.0
      %5192 = vmatpush1.msra.mxu0 0.0
      %5193 = vmatprep.subr.mxu0 0.0
      %5194 = vmatpush1.msra.mxu0 0.0
      %5195 = vmatprep.subr.mxu0 0.0
      %5196 = vmatpush1.msra.mxu0 0.0
      %5197 = vmatprep.subr.mxu0 0.0
      %5198 = vmatpush1.msra.mxu0 0.0
      %5199 = vmatprep.subr.mxu0 0.0
      %5200 = vmatpush1.msra.mxu0 %v3258
      %5201 = vmatprep.subr.mxu0 0.0
      %5202 = vmatpush2.msra.mxu0 0.0
      %5203 = vmatprep.subr.mxu0 0.0
      %5204 = vmatpush2.msra.mxu0 0.0
      %5205 = vmatprep.subr.mxu0 0.0
      %5206 = vmatpush2.msra.mxu0 0.0
      %5207 = vmatprep.subr.mxu0 0.0
      %5208 = vmatpush2.msra.mxu0 0.0
      %5209 = vmatprep.subr.mxu0 0.0
      %5210 = vmatpush2.msra.mxu0 0.0
      %5211 = vmatprep.subr.mxu0 0.0
      %5212 = vmatpush2.msra.mxu0 0.0
      %5213 = vmatprep.subr.mxu0 0.0
      %5214 = vmatpush2.msra.mxu0 0.0
      %5215 = vmatprep.subr.mxu0 0.0
      %5216 = vmatpush2.msra.mxu0 0.0
      %5217 = vmatprep.subr.mxu0 0.0
      %5218 = vmatpush2.msra.mxu0 0.0
      %5219 = vmatprep.subr.mxu0 0.0
      %5220 = vmatpush2.msra.mxu0 0.0
      %5221 = vmatprep.subr.mxu0 0.0
      %5222 = vmatpush2.msra.mxu0 0.0
      %5223 = vmatprep.subr.mxu0 0.0
      %5224 = vmatpush2.msra.mxu0 0.0
      %5225 = vmatprep.subr.mxu0 0.0
      %5226 = vmatpush2.msra.mxu0 0.0
      %5227 = vmatprep.subr.mxu0 0.0
      %5228 = vmatpush2.msra.mxu0 0.0
      %5229 = vmatprep.subr.mxu0 0.0
      %5230 = vmatpush2.msra.mxu0 0.0
      %5231 = vmatprep.subr.mxu0 0.0
      %5232 = vmatpush2.msra.mxu0 0.0
      %5233 = vmatprep.mubr.f32.mxu0 0.0
      %5234 = vmatmul.mubr.f32.gmra.mxu0 %v5167
      %v5235 = vpop.f32.mrf.mxu0
      %v5236 = vadd.f32 0.0, %v5235
      %v5237 = vpop.f32.mrf.mxu0
      %5238 = vdwg.mxu0
      %v5240 = vsel %vm603, %v486, 0
      %5242 = vmatprep.subr.mxu0 0.0
      %5243 = vmatpush1.msra.mxu0 0.0
      %5244 = vmatprep.subr.mxu0 0.0
      %5245 = vmatpush1.msra.mxu0 0.0
      %5246 = vmatprep.subr.mxu0 0.0
      %5247 = vmatpush1.msra.mxu0 0.0
      %5248 = vmatprep.subr.mxu0 0.0
      %5249 = vmatpush1.msra.mxu0 0.0
      %5250 = vmatprep.subr.mxu0 0.0
      %5251 = vmatpush1.msra.mxu0 0.0
      %5252 = vmatprep.subr.mxu0 0.0
      %5253 = vmatpush1.msra.mxu0 0.0
      %5254 = vmatprep.subr.mxu0 0.0
      %5255 = vmatpush1.msra.mxu0 0.0
      %5256 = vmatprep.subr.mxu0 0.0
      %5257 = vmatpush1.msra.mxu0 0.0
      %5258 = vmatprep.subr.mxu0 0.0
      %5259 = vmatpush1.msra.mxu0 0.0
      %5260 = vmatprep.subr.mxu0 0.0
      %5261 = vmatpush1.msra.mxu0 0.0
      %5262 = vmatprep.subr.mxu0 0.0
      %5263 = vmatpush1.msra.mxu0 0.0
      %5264 = vmatprep.subr.mxu0 0.0
      %5265 = vmatpush1.msra.mxu0 0.0
      %5266 = vmatprep.subr.mxu0 0.0
      %5267 = vmatpush1.msra.mxu0 0.0
      %5268 = vmatprep.subr.mxu0 0.0
      %5269 = vmatpush1.msra.mxu0 0.0
      %5270 = vmatprep.subr.mxu0 0.0
      %5271 = vmatpush1.msra.mxu0 0.0
      %5272 = vmatprep.subr.mxu0 0.0
      %5273 = vmatpush1.msra.mxu0 %v3259
      %5274 = vmatprep.subr.mxu0 0.0
      %5275 = vmatpush2.msra.mxu0 0.0
      %5276 = vmatprep.subr.mxu0 0.0
      %5277 = vmatpush2.msra.mxu0 0.0
      %5278 = vmatprep.subr.mxu0 0.0
      %5279 = vmatpush2.msra.mxu0 0.0
      %5280 = vmatprep.subr.mxu0 0.0
      %5281 = vmatpush2.msra.mxu0 0.0
      %5282 = vmatprep.subr.mxu0 0.0
      %5283 = vmatpush2.msra.mxu0 0.0
      %5284 = vmatprep.subr.mxu0 0.0
      %5285 = vmatpush2.msra.mxu0 0.0
      %5286 = vmatprep.subr.mxu0 0.0
      %5287 = vmatpush2.msra.mxu0 0.0
      %5288 = vmatprep.subr.mxu0 0.0
      %5289 = vmatpush2.msra.mxu0 0.0
      %5290 = vmatprep.subr.mxu0 0.0
      %5291 = vmatpush2.msra.mxu0 0.0
      %5292 = vmatprep.subr.mxu0 0.0
      %5293 = vmatpush2.msra.mxu0 0.0
      %5294 = vmatprep.subr.mxu0 0.0
      %5295 = vmatpush2.msra.mxu0 0.0
      %5296 = vmatprep.subr.mxu0 0.0
      %5297 = vmatpush2.msra.mxu0 0.0
      %5298 = vmatprep.subr.mxu0 0.0
      %5299 = vmatpush2.msra.mxu0 0.0
      %5300 = vmatprep.subr.mxu0 0.0
      %5301 = vmatpush2.msra.mxu0 0.0
      %5302 = vmatprep.subr.mxu0 0.0
      %5303 = vmatpush2.msra.mxu0 0.0
      %5304 = vmatprep.subr.mxu0 0.0
      %5305 = vmatpush2.msra.mxu0 0.0
      %5306 = vmatprep.mubr.f32.mxu0 0.0
      %5307 = vmatmul.mubr.f32.gmra.mxu0 %v5240
      %v5308 = vpop.f32.mrf.mxu0
      %v5309 = vadd.f32 0.0, %v5308
      %v5310 = vpop.f32.mrf.mxu0
      %5311 = vdwg.mxu0
      %v5313 = vsel %vm603, %v487, 0
      %5315 = vmatprep.subr.mxu0 0.0
      %5316 = vmatpush1.msra.mxu0 0.0
      %5317 = vmatprep.subr.mxu0 0.0
      %5318 = vmatpush1.msra.mxu0 0.0
      %5319 = vmatprep.subr.mxu0 0.0
      %5320 = vmatpush1.msra.mxu0 0.0
      %5321 = vmatprep.subr.mxu0 0.0
      %5322 = vmatpush1.msra.mxu0 0.0
      %5323 = vmatprep.subr.mxu0 0.0
      %5324 = vmatpush1.msra.mxu0 0.0
      %5325 = vmatprep.subr.mxu0 0.0
      %5326 = vmatpush1.msra.mxu0 0.0
      %5327 = vmatprep.subr.mxu0 0.0
      %5328 = vmatpush1.msra.mxu0 0.0
      %5329 = vmatprep.subr.mxu0 0.0
      %5330 = vmatpush1.msra.mxu0 0.0
      %5331 = vmatprep.subr.mxu0 0.0
      %5332 = vmatpush1.msra.mxu0 0.0
      %5333 = vmatprep.subr.mxu0 0.0
      %5334 = vmatpush1.msra.mxu0 0.0
      %5335 = vmatprep.subr.mxu0 0.0
      %5336 = vmatpush1.msra.mxu0 0.0
      %5337 = vmatprep.subr.mxu0 0.0
      %5338 = vmatpush1.msra.mxu0 0.0
      %5339 = vmatprep.subr.mxu0 0.0
      %5340 = vmatpush1.msra.mxu0 0.0
      %5341 = vmatprep.subr.mxu0 0.0
      %5342 = vmatpush1.msra.mxu0 0.0
      %5343 = vmatprep.subr.mxu0 0.0
      %5344 = vmatpush1.msra.mxu0 0.0
      %5345 = vmatprep.subr.mxu0 0.0
      %5346 = vmatpush1.msra.mxu0 %v3260
      %5347 = vmatprep.subr.mxu0 0.0
      %5348 = vmatpush2.msra.mxu0 0.0
      %5349 = vmatprep.subr.mxu0 0.0
      %5350 = vmatpush2.msra.mxu0 0.0
      %5351 = vmatprep.subr.mxu0 0.0
      %5352 = vmatpush2.msra.mxu0 0.0
      %5353 = vmatprep.subr.mxu0 0.0
      %5354 = vmatpush2.msra.mxu0 0.0
      %5355 = vmatprep.subr.mxu0 0.0
      %5356 = vmatpush2.msra.mxu0 0.0
      %5357 = vmatprep.subr.mxu0 0.0
      %5358 = vmatpush2.msra.mxu0 0.0
      %5359 = vmatprep.subr.mxu0 0.0
      %5360 = vmatpush2.msra.mxu0 0.0
      %5361 = vmatprep.subr.mxu0 0.0
      %5362 = vmatpush2.msra.mxu0 0.0
      %5363 = vmatprep.subr.mxu0 0.0
      %5364 = vmatpush2.msra.mxu0 0.0
      %5365 = vmatprep.subr.mxu0 0.0
      %5366 = vmatpush2.msra.mxu0 0.0
      %5367 = vmatprep.subr.mxu0 0.0
      %5368 = vmatpush2.msra.mxu0 0.0
      %5369 = vmatprep.subr.mxu0 0.0
      %5370 = vmatpush2.msra.mxu0 0.0
      %5371 = vmatprep.subr.mxu0 0.0
      %5372 = vmatpush2.msra.mxu0 0.0
      %5373 = vmatprep.subr.mxu0 0.0
      %5374 = vmatpush2.msra.mxu0 0.0
      %5375 = vmatprep.subr.mxu0 0.0
      %5376 = vmatpush2.msra.mxu0 0.0
      %5377 = vmatprep.subr.mxu0 0.0
      %5378 = vmatpush2.msra.mxu0 0.0
      %5379 = vmatprep.mubr.f32.mxu0 0.0
      %5380 = vmatmul.mubr.f32.gmra.mxu0 %v5313
      %v5381 = vpop.f32.mrf.mxu0
      %v5382 = vadd.f32 0.0, %v5381
      %v5383 = vpop.f32.mrf.mxu0
      %5384 = vdwg.mxu0
      %v5386 = vsel %vm603, %v488, 0
      %5388 = vmatprep.subr.mxu0 0.0
      %5389 = vmatpush1.msra.mxu0 0.0
      %5390 = vmatprep.subr.mxu0 0.0
      %5391 = vmatpush1.msra.mxu0 0.0
      %5392 = vmatprep.subr.mxu0 0.0
      %5393 = vmatpush1.msra.mxu0 0.0
      %5394 = vmatprep.subr.mxu0 0.0
      %5395 = vmatpush1.msra.mxu0 0.0
      %5396 = vmatprep.subr.mxu0 0.0
      %5397 = vmatpush1.msra.mxu0 0.0
      %5398 = vmatprep.subr.mxu0 0.0
      %5399 = vmatpush1.msra.mxu0 0.0
      %5400 = vmatprep.subr.mxu0 0.0
      %5401 = vmatpush1.msra.mxu0 0.0
      %5402 = vmatprep.subr.mxu0 0.0
      %5403 = vmatpush1.msra.mxu0 0.0
      %5404 = vmatprep.subr.mxu0 0.0
      %5405 = vmatpush1.msra.mxu0 0.0
      %5406 = vmatprep.subr.mxu0 0.0
      %5407 = vmatpush1.msra.mxu0 0.0
      %5408 = vmatprep.subr.mxu0 0.0
      %5409 = vmatpush1.msra.mxu0 0.0
      %5410 = vmatprep.subr.mxu0 0.0
      %5411 = vmatpush1.msra.mxu0 0.0
      %5412 = vmatprep.subr.mxu0 0.0
      %5413 = vmatpush1.msra.mxu0 0.0
      %5414 = vmatprep.subr.mxu0 0.0
      %5415 = vmatpush1.msra.mxu0 0.0
      %5416 = vmatprep.subr.mxu0 0.0
      %5417 = vmatpush1.msra.mxu0 0.0
      %5418 = vmatprep.subr.mxu0 0.0
      %5419 = vmatpush1.msra.mxu0 %v3261
      %5420 = vmatprep.subr.mxu0 0.0
      %5421 = vmatpush2.msra.mxu0 0.0
      %5422 = vmatprep.subr.mxu0 0.0
      %5423 = vmatpush2.msra.mxu0 0.0
      %5424 = vmatprep.subr.mxu0 0.0
      %5425 = vmatpush2.msra.mxu0 0.0
      %5426 = vmatprep.subr.mxu0 0.0
      %5427 = vmatpush2.msra.mxu0 0.0
      %5428 = vmatprep.subr.mxu0 0.0
      %5429 = vmatpush2.msra.mxu0 0.0
      %5430 = vmatprep.subr.mxu0 0.0
      %5431 = vmatpush2.msra.mxu0 0.0
      %5432 = vmatprep.subr.mxu0 0.0
      %5433 = vmatpush2.msra.mxu0 0.0
      %5434 = vmatprep.subr.mxu0 0.0
      %5435 = vmatpush2.msra.mxu0 0.0
      %5436 = vmatprep.subr.mxu0 0.0
      %5437 = vmatpush2.msra.mxu0 0.0
      %5438 = vmatprep.subr.mxu0 0.0
      %5439 = vmatpush2.msra.mxu0 0.0
      %5440 = vmatprep.subr.mxu0 0.0
      %5441 = vmatpush2.msra.mxu0 0.0
      %5442 = vmatprep.subr.mxu0 0.0
      %5443 = vmatpush2.msra.mxu0 0.0
      %5444 = vmatprep.subr.mxu0 0.0
      %5445 = vmatpush2.msra.mxu0 0.0
      %5446 = vmatprep.subr.mxu0 0.0
      %5447 = vmatpush2.msra.mxu0 0.0
      %5448 = vmatprep.subr.mxu0 0.0
      %5449 = vmatpush2.msra.mxu0 0.0
      %5450 = vmatprep.subr.mxu0 0.0
      %5451 = vmatpush2.msra.mxu0 0.0
      %5452 = vmatprep.mubr.f32.mxu0 0.0
      %5453 = vmatmul.mubr.f32.gmra.mxu0 %v5386
      %v5454 = vpop.f32.mrf.mxu0
      %v5455 = vadd.f32 0.0, %v5454
      %v5456 = vpop.f32.mrf.mxu0
      %5457 = vdwg.mxu0
      %v5459 = vsel %vm603, %v489, 0
      %5461 = vmatprep.subr.mxu0 0.0
      %5462 = vmatpush1.msra.mxu0 0.0
      %5463 = vmatprep.subr.mxu0 0.0
      %5464 = vmatpush1.msra.mxu0 0.0
      %5465 = vmatprep.subr.mxu0 0.0
      %5466 = vmatpush1.msra.mxu0 0.0
      %5467 = vmatprep.subr.mxu0 0.0
      %5468 = vmatpush1.msra.mxu0 0.0
      %5469 = vmatprep.subr.mxu0 0.0
      %5470 = vmatpush1.msra.mxu0 0.0
      %5471 = vmatprep.subr.mxu0 0.0
      %5472 = vmatpush1.msra.mxu0 0.0
      %5473 = vmatprep.subr.mxu0 0.0
      %5474 = vmatpush1.msra.mxu0 0.0
      %5475 = vmatprep.subr.mxu0 0.0
      %5476 = vmatpush1.msra.mxu0 0.0
      %5477 = vmatprep.subr.mxu0 0.0
      %5478 = vmatpush1.msra.mxu0 0.0
      %5479 = vmatprep.subr.mxu0 0.0
      %5480 = vmatpush1.msra.mxu0 0.0
      %5481 = vmatprep.subr.mxu0 0.0
      %5482 = vmatpush1.msra.mxu0 0.0
      %5483 = vmatprep.subr.mxu0 0.0
      %5484 = vmatpush1.msra.mxu0 0.0
      %5485 = vmatprep.subr.mxu0 0.0
      %5486 = vmatpush1.msra.mxu0 0.0
      %5487 = vmatprep.subr.mxu0 0.0
      %5488 = vmatpush1.msra.mxu0 0.0
      %5489 = vmatprep.subr.mxu0 0.0
      %5490 = vmatpush1.msra.mxu0 0.0
      %5491 = vmatprep.subr.mxu0 0.0
      %5492 = vmatpush1.msra.mxu0 %v3262
      %5493 = vmatprep.subr.mxu0 0.0
      %5494 = vmatpush2.msra.mxu0 0.0
      %5495 = vmatprep.subr.mxu0 0.0
      %5496 = vmatpush2.msra.mxu0 0.0
      %5497 = vmatprep.subr.mxu0 0.0
      %5498 = vmatpush2.msra.mxu0 0.0
      %5499 = vmatprep.subr.mxu0 0.0
      %5500 = vmatpush2.msra.mxu0 0.0
      %5501 = vmatprep.subr.mxu0 0.0
      %5502 = vmatpush2.msra.mxu0 0.0
      %5503 = vmatprep.subr.mxu0 0.0
      %5504 = vmatpush2.msra.mxu0 0.0
      %5505 = vmatprep.subr.mxu0 0.0
      %5506 = vmatpush2.msra.mxu0 0.0
      %5507 = vmatprep.subr.mxu0 0.0
      %5508 = vmatpush2.msra.mxu0 0.0
      %5509 = vmatprep.subr.mxu0 0.0
      %5510 = vmatpush2.msra.mxu0 0.0
      %5511 = vmatprep.subr.mxu0 0.0
      %5512 = vmatpush2.msra.mxu0 0.0
      %5513 = vmatprep.subr.mxu0 0.0
      %5514 = vmatpush2.msra.mxu0 0.0
      %5515 = vmatprep.subr.mxu0 0.0
      %5516 = vmatpush2.msra.mxu0 0.0
      %5517 = vmatprep.subr.mxu0 0.0
      %5518 = vmatpush2.msra.mxu0 0.0
      %5519 = vmatprep.subr.mxu0 0.0
      %5520 = vmatpush2.msra.mxu0 0.0
      %5521 = vmatprep.subr.mxu0 0.0
      %5522 = vmatpush2.msra.mxu0 0.0
      %5523 = vmatprep.subr.mxu0 0.0
      %5524 = vmatpush2.msra.mxu0 0.0
      %5525 = vmatprep.mubr.f32.mxu0 0.0
      %5526 = vmatmul.mubr.f32.gmra.mxu0 %v5459
      %v5527 = vpop.f32.mrf.mxu0
      %v5528 = vadd.f32 0.0, %v5527
      %v5529 = vpop.f32.mrf.mxu0
      %5530 = vdwg.mxu0
      %v5532 = vsel %vm603, %v490, 0
      %5534 = vmatprep.subr.mxu0 0.0
      %5535 = vmatpush1.msra.mxu0 0.0
      %5536 = vmatprep.subr.mxu0 0.0
      %5537 = vmatpush1.msra.mxu0 0.0
      %5538 = vmatprep.subr.mxu0 0.0
      %5539 = vmatpush1.msra.mxu0 0.0
      %5540 = vmatprep.subr.mxu0 0.0
      %5541 = vmatpush1.msra.mxu0 0.0
      %5542 = vmatprep.subr.mxu0 0.0
      %5543 = vmatpush1.msra.mxu0 0.0
      %5544 = vmatprep.subr.mxu0 0.0
      %5545 = vmatpush1.msra.mxu0 0.0
      %5546 = vmatprep.subr.mxu0 0.0
      %5547 = vmatpush1.msra.mxu0 0.0
      %5548 = vmatprep.subr.mxu0 0.0
      %5549 = vmatpush1.msra.mxu0 0.0
      %5550 = vmatprep.subr.mxu0 0.0
      %5551 = vmatpush1.msra.mxu0 0.0
      %5552 = vmatprep.subr.mxu0 0.0
      %5553 = vmatpush1.msra.mxu0 0.0
      %5554 = vmatprep.subr.mxu0 0.0
      %5555 = vmatpush1.msra.mxu0 0.0
      %5556 = vmatprep.subr.mxu0 0.0
      %5557 = vmatpush1.msra.mxu0 0.0
      %5558 = vmatprep.subr.mxu0 0.0
      %5559 = vmatpush1.msra.mxu0 0.0
      %5560 = vmatprep.subr.mxu0 0.0
      %5561 = vmatpush1.msra.mxu0 0.0
      %5562 = vmatprep.subr.mxu0 0.0
      %5563 = vmatpush1.msra.mxu0 0.0
      %5564 = vmatprep.subr.mxu0 0.0
      %5565 = vmatpush1.msra.mxu0 %v3263
      %5566 = vmatprep.subr.mxu0 0.0
      %5567 = vmatpush2.msra.mxu0 0.0
      %5568 = vmatprep.subr.mxu0 0.0
      %5569 = vmatpush2.msra.mxu0 0.0
      %5570 = vmatprep.subr.mxu0 0.0
      %5571 = vmatpush2.msra.mxu0 0.0
      %5572 = vmatprep.subr.mxu0 0.0
      %5573 = vmatpush2.msra.mxu0 0.0
      %5574 = vmatprep.subr.mxu0 0.0
      %5575 = vmatpush2.msra.mxu0 0.0
      %5576 = vmatprep.subr.mxu0 0.0
      %5577 = vmatpush2.msra.mxu0 0.0
      %5578 = vmatprep.subr.mxu0 0.0
      %5579 = vmatpush2.msra.mxu0 0.0
      %5580 = vmatprep.subr.mxu0 0.0
      %5581 = vmatpush2.msra.mxu0 0.0
      %5582 = vmatprep.subr.mxu0 0.0
      %5583 = vmatpush2.msra.mxu0 0.0
      %5584 = vmatprep.subr.mxu0 0.0
      %5585 = vmatpush2.msra.mxu0 0.0
      %5586 = vmatprep.subr.mxu0 0.0
      %5587 = vmatpush2.msra.mxu0 0.0
      %5588 = vmatprep.subr.mxu0 0.0
      %5589 = vmatpush2.msra.mxu0 0.0
      %5590 = vmatprep.subr.mxu0 0.0
      %5591 = vmatpush2.msra.mxu0 0.0
      %5592 = vmatprep.subr.mxu0 0.0
      %5593 = vmatpush2.msra.mxu0 0.0
      %5594 = vmatprep.subr.mxu0 0.0
      %5595 = vmatpush2.msra.mxu0 0.0
      %5596 = vmatprep.subr.mxu0 0.0
      %5597 = vmatpush2.msra.mxu0 0.0
      %5598 = vmatprep.mubr.f32.mxu0 0.0
      %5599 = vmatmul.mubr.f32.gmra.mxu0 %v5532
      %v5600 = vpop.f32.mrf.mxu0
      %v5601 = vadd.f32 0.0, %v5600
      %v5602 = vpop.f32.mrf.mxu0
      %5603 = vdwg.mxu0
      %v5605 = vsel %vm603, %v491, 0
      %5607 = vmatprep.subr.mxu0 0.0
      %5608 = vmatpush1.msra.mxu0 0.0
      %5609 = vmatprep.subr.mxu0 0.0
      %5610 = vmatpush1.msra.mxu0 0.0
      %5611 = vmatprep.subr.mxu0 0.0
      %5612 = vmatpush1.msra.mxu0 0.0
      %5613 = vmatprep.subr.mxu0 0.0
      %5614 = vmatpush1.msra.mxu0 0.0
      %5615 = vmatprep.subr.mxu0 0.0
      %5616 = vmatpush1.msra.mxu0 0.0
      %5617 = vmatprep.subr.mxu0 0.0
      %5618 = vmatpush1.msra.mxu0 0.0
      %5619 = vmatprep.subr.mxu0 0.0
      %5620 = vmatpush1.msra.mxu0 0.0
      %5621 = vmatprep.subr.mxu0 0.0
      %5622 = vmatpush1.msra.mxu0 0.0
      %5623 = vmatprep.subr.mxu0 0.0
      %5624 = vmatpush1.msra.mxu0 0.0
      %5625 = vmatprep.subr.mxu0 0.0
      %5626 = vmatpush1.msra.mxu0 0.0
      %5627 = vmatprep.subr.mxu0 0.0
      %5628 = vmatpush1.msra.mxu0 0.0
      %5629 = vmatprep.subr.mxu0 0.0
      %5630 = vmatpush1.msra.mxu0 0.0
      %5631 = vmatprep.subr.mxu0 0.0
      %5632 = vmatpush1.msra.mxu0 0.0
      %5633 = vmatprep.subr.mxu0 0.0
      %5634 = vmatpush1.msra.mxu0 0.0
      %5635 = vmatprep.subr.mxu0 0.0
      %5636 = vmatpush1.msra.mxu0 0.0
      %5637 = vmatprep.subr.mxu0 0.0
      %5638 = vmatpush1.msra.mxu0 %v3264
      %5639 = vmatprep.subr.mxu0 0.0
      %5640 = vmatpush2.msra.mxu0 0.0
      %5641 = vmatprep.subr.mxu0 0.0
      %5642 = vmatpush2.msra.mxu0 0.0
      %5643 = vmatprep.subr.mxu0 0.0
      %5644 = vmatpush2.msra.mxu0 0.0
      %5645 = vmatprep.subr.mxu0 0.0
      %5646 = vmatpush2.msra.mxu0 0.0
      %5647 = vmatprep.subr.mxu0 0.0
      %5648 = vmatpush2.msra.mxu0 0.0
      %5649 = vmatprep.subr.mxu0 0.0
      %5650 = vmatpush2.msra.mxu0 0.0
      %5651 = vmatprep.subr.mxu0 0.0
      %5652 = vmatpush2.msra.mxu0 0.0
      %5653 = vmatprep.subr.mxu0 0.0
      %5654 = vmatpush2.msra.mxu0 0.0
      %5655 = vmatprep.subr.mxu0 0.0
      %5656 = vmatpush2.msra.mxu0 0.0
      %5657 = vmatprep.subr.mxu0 0.0
      %5658 = vmatpush2.msra.mxu0 0.0
      %5659 = vmatprep.subr.mxu0 0.0
      %5660 = vmatpush2.msra.mxu0 0.0
      %5661 = vmatprep.subr.mxu0 0.0
      %5662 = vmatpush2.msra.mxu0 0.0
      %5663 = vmatprep.subr.mxu0 0.0
      %5664 = vmatpush2.msra.mxu0 0.0
      %5665 = vmatprep.subr.mxu0 0.0
      %5666 = vmatpush2.msra.mxu0 0.0
      %5667 = vmatprep.subr.mxu0 0.0
      %5668 = vmatpush2.msra.mxu0 0.0
      %5669 = vmatprep.subr.mxu0 0.0
      %5670 = vmatpush2.msra.mxu0 0.0
      %5671 = vmatprep.mubr.f32.mxu0 0.0
      %5672 = vmatmul.mubr.f32.gmra.mxu0 %v5605
      %v5673 = vpop.f32.mrf.mxu0
      %v5674 = vadd.f32 0.0, %v5673
      %v5675 = vpop.f32.mrf.mxu0
      %5676 = vdwg.mxu0
      %v5678 = vsel %vm603, %v492, 0
      %5680 = vmatprep.subr.mxu0 0.0
      %5681 = vmatpush1.msra.mxu0 0.0
      %5682 = vmatprep.subr.mxu0 0.0
      %5683 = vmatpush1.msra.mxu0 0.0
      %5684 = vmatprep.subr.mxu0 0.0
      %5685 = vmatpush1.msra.mxu0 0.0
      %5686 = vmatprep.subr.mxu0 0.0
      %5687 = vmatpush1.msra.mxu0 0.0
      %5688 = vmatprep.subr.mxu0 0.0
      %5689 = vmatpush1.msra.mxu0 0.0
      %5690 = vmatprep.subr.mxu0 0.0
      %5691 = vmatpush1.msra.mxu0 0.0
      %5692 = vmatprep.subr.mxu0 0.0
      %5693 = vmatpush1.msra.mxu0 0.0
      %5694 = vmatprep.subr.mxu0 0.0
      %5695 = vmatpush1.msra.mxu0 0.0
      %5696 = vmatprep.subr.mxu0 0.0
      %5697 = vmatpush1.msra.mxu0 0.0
      %5698 = vmatprep.subr.mxu0 0.0
      %5699 = vmatpush1.msra.mxu0 0.0
      %5700 = vmatprep.subr.mxu0 0.0
      %5701 = vmatpush1.msra.mxu0 0.0
      %5702 = vmatprep.subr.mxu0 0.0
      %5703 = vmatpush1.msra.mxu0 0.0
      %5704 = vmatprep.subr.mxu0 0.0
      %5705 = vmatpush1.msra.mxu0 0.0
      %5706 = vmatprep.subr.mxu0 0.0
      %5707 = vmatpush1.msra.mxu0 0.0
      %5708 = vmatprep.subr.mxu0 0.0
      %5709 = vmatpush1.msra.mxu0 0.0
      %5710 = vmatprep.subr.mxu0 0.0
      %5711 = vmatpush1.msra.mxu0 %v3265
      %5712 = vmatprep.subr.mxu0 0.0
      %5713 = vmatpush2.msra.mxu0 0.0
      %5714 = vmatprep.subr.mxu0 0.0
      %5715 = vmatpush2.msra.mxu0 0.0
      %5716 = vmatprep.subr.mxu0 0.0
      %5717 = vmatpush2.msra.mxu0 0.0
      %5718 = vmatprep.subr.mxu0 0.0
      %5719 = vmatpush2.msra.mxu0 0.0
      %5720 = vmatprep.subr.mxu0 0.0
      %5721 = vmatpush2.msra.mxu0 0.0
      %5722 = vmatprep.subr.mxu0 0.0
      %5723 = vmatpush2.msra.mxu0 0.0
      %5724 = vmatprep.subr.mxu0 0.0
      %5725 = vmatpush2.msra.mxu0 0.0
      %5726 = vmatprep.subr.mxu0 0.0
      %5727 = vmatpush2.msra.mxu0 0.0
      %5728 = vmatprep.subr.mxu0 0.0
      %5729 = vmatpush2.msra.mxu0 0.0
      %5730 = vmatprep.subr.mxu0 0.0
      %5731 = vmatpush2.msra.mxu0 0.0
      %5732 = vmatprep.subr.mxu0 0.0
      %5733 = vmatpush2.msra.mxu0 0.0
      %5734 = vmatprep.subr.mxu0 0.0
      %5735 = vmatpush2.msra.mxu0 0.0
      %5736 = vmatprep.subr.mxu0 0.0
      %5737 = vmatpush2.msra.mxu0 0.0
      %5738 = vmatprep.subr.mxu0 0.0
      %5739 = vmatpush2.msra.mxu0 0.0
      %5740 = vmatprep.subr.mxu0 0.0
      %5741 = vmatpush2.msra.mxu0 0.0
      %5742 = vmatprep.subr.mxu0 0.0
      %5743 = vmatpush2.msra.mxu0 0.0
      %5744 = vmatprep.mubr.f32.mxu0 0.0
      %5745 = vmatmul.mubr.f32.gmra.mxu0 %v5678
      %v5746 = vpop.f32.mrf.mxu0
      %v5747 = vadd.f32 0.0, %v5746
      %v5748 = vpop.f32.mrf.mxu0
      %5749 = vdwg.mxu0
      %v5751 = vsel %vm603, %v493, 0
      %5753 = vmatprep.subr.mxu0 0.0
      %5754 = vmatpush1.msra.mxu0 0.0
      %5755 = vmatprep.subr.mxu0 0.0
      %5756 = vmatpush1.msra.mxu0 0.0
      %5757 = vmatprep.subr.mxu0 0.0
      %5758 = vmatpush1.msra.mxu0 0.0
      %5759 = vmatprep.subr.mxu0 0.0
      %5760 = vmatpush1.msra.mxu0 0.0
      %5761 = vmatprep.subr.mxu0 0.0
      %5762 = vmatpush1.msra.mxu0 0.0
      %5763 = vmatprep.subr.mxu0 0.0
      %5764 = vmatpush1.msra.mxu0 0.0
      %5765 = vmatprep.subr.mxu0 0.0
      %5766 = vmatpush1.msra.mxu0 0.0
      %5767 = vmatprep.subr.mxu0 0.0
      %5768 = vmatpush1.msra.mxu0 0.0
      %5769 = vmatprep.subr.mxu0 0.0
      %5770 = vmatpush1.msra.mxu0 0.0
      %5771 = vmatprep.subr.mxu0 0.0
      %5772 = vmatpush1.msra.mxu0 0.0
      %5773 = vmatprep.subr.mxu0 0.0
      %5774 = vmatpush1.msra.mxu0 0.0
      %5775 = vmatprep.subr.mxu0 0.0
      %5776 = vmatpush1.msra.mxu0 0.0
      %5777 = vmatprep.subr.mxu0 0.0
      %5778 = vmatpush1.msra.mxu0 0.0
      %5779 = vmatprep.subr.mxu0 0.0
      %5780 = vmatpush1.msra.mxu0 0.0
      %5781 = vmatprep.subr.mxu0 0.0
      %5782 = vmatpush1.msra.mxu0 0.0
      %5783 = vmatprep.subr.mxu0 0.0
      %5784 = vmatpush1.msra.mxu0 %v3266
      %5785 = vmatprep.subr.mxu0 0.0
      %5786 = vmatpush2.msra.mxu0 0.0
      %5787 = vmatprep.subr.mxu0 0.0
      %5788 = vmatpush2.msra.mxu0 0.0
      %5789 = vmatprep.subr.mxu0 0.0
      %5790 = vmatpush2.msra.mxu0 0.0
      %5791 = vmatprep.subr.mxu0 0.0
      %5792 = vmatpush2.msra.mxu0 0.0
      %5793 = vmatprep.subr.mxu0 0.0
      %5794 = vmatpush2.msra.mxu0 0.0
      %5795 = vmatprep.subr.mxu0 0.0
      %5796 = vmatpush2.msra.mxu0 0.0
      %5797 = vmatprep.subr.mxu0 0.0
      %5798 = vmatpush2.msra.mxu0 0.0
      %5799 = vmatprep.subr.mxu0 0.0
      %5800 = vmatpush2.msra.mxu0 0.0
      %5801 = vmatprep.subr.mxu0 0.0
      %5802 = vmatpush2.msra.mxu0 0.0
      %5803 = vmatprep.subr.mxu0 0.0
      %5804 = vmatpush2.msra.mxu0 0.0
      %5805 = vmatprep.subr.mxu0 0.0
      %5806 = vmatpush2.msra.mxu0 0.0
      %5807 = vmatprep.subr.mxu0 0.0
      %5808 = vmatpush2.msra.mxu0 0.0
      %5809 = vmatprep.subr.mxu0 0.0
      %5810 = vmatpush2.msra.mxu0 0.0
      %5811 = vmatprep.subr.mxu0 0.0
      %5812 = vmatpush2.msra.mxu0 0.0
      %5813 = vmatprep.subr.mxu0 0.0
      %5814 = vmatpush2.msra.mxu0 0.0
      %5815 = vmatprep.subr.mxu0 0.0
      %5816 = vmatpush2.msra.mxu0 0.0
      %5817 = vmatprep.mubr.f32.mxu0 0.0
      %5818 = vmatmul.mubr.f32.gmra.mxu0 %v5751
      %v5819 = vpop.f32.mrf.mxu0
      %v5820 = vadd.f32 0.0, %v5819
      %v5821 = vpop.f32.mrf.mxu0
      %5822 = vdwg.mxu0
      %v5824 = vsel %vm603, %v494, 0
      %5826 = vmatprep.subr.mxu0 0.0
      %5827 = vmatpush1.msra.mxu0 0.0
      %5828 = vmatprep.subr.mxu0 0.0
      %5829 = vmatpush1.msra.mxu0 0.0
      %5830 = vmatprep.subr.mxu0 0.0
      %5831 = vmatpush1.msra.mxu0 0.0
      %5832 = vmatprep.subr.mxu0 0.0
      %5833 = vmatpush1.msra.mxu0 0.0
      %5834 = vmatprep.subr.mxu0 0.0
      %5835 = vmatpush1.msra.mxu0 0.0
      %5836 = vmatprep.subr.mxu0 0.0
      %5837 = vmatpush1.msra.mxu0 0.0
      %5838 = vmatprep.subr.mxu0 0.0
      %5839 = vmatpush1.msra.mxu0 0.0
      %5840 = vmatprep.subr.mxu0 0.0
      %5841 = vmatpush1.msra.mxu0 0.0
      %5842 = vmatprep.subr.mxu0 0.0
      %5843 = vmatpush1.msra.mxu0 0.0
      %5844 = vmatprep.subr.mxu0 0.0
      %5845 = vmatpush1.msra.mxu0 0.0
      %5846 = vmatprep.subr.mxu0 0.0
      %5847 = vmatpush1.msra.mxu0 0.0
      %5848 = vmatprep.subr.mxu0 0.0
      %5849 = vmatpush1.msra.mxu0 0.0
      %5850 = vmatprep.subr.mxu0 0.0
      %5851 = vmatpush1.msra.mxu0 0.0
      %5852 = vmatprep.subr.mxu0 0.0
      %5853 = vmatpush1.msra.mxu0 0.0
      %5854 = vmatprep.subr.mxu0 0.0
      %5855 = vmatpush1.msra.mxu0 0.0
      %5856 = vmatprep.subr.mxu0 0.0
      %5857 = vmatpush1.msra.mxu0 %v3267
      %5858 = vmatprep.subr.mxu0 0.0
      %5859 = vmatpush2.msra.mxu0 0.0
      %5860 = vmatprep.subr.mxu0 0.0
      %5861 = vmatpush2.msra.mxu0 0.0
      %5862 = vmatprep.subr.mxu0 0.0
      %5863 = vmatpush2.msra.mxu0 0.0
      %5864 = vmatprep.subr.mxu0 0.0
      %5865 = vmatpush2.msra.mxu0 0.0
      %5866 = vmatprep.subr.mxu0 0.0
      %5867 = vmatpush2.msra.mxu0 0.0
      %5868 = vmatprep.subr.mxu0 0.0
      %5869 = vmatpush2.msra.mxu0 0.0
      %5870 = vmatprep.subr.mxu0 0.0
      %5871 = vmatpush2.msra.mxu0 0.0
      %5872 = vmatprep.subr.mxu0 0.0
      %5873 = vmatpush2.msra.mxu0 0.0
      %5874 = vmatprep.subr.mxu0 0.0
      %5875 = vmatpush2.msra.mxu0 0.0
      %5876 = vmatprep.subr.mxu0 0.0
      %5877 = vmatpush2.msra.mxu0 0.0
      %5878 = vmatprep.subr.mxu0 0.0
      %5879 = vmatpush2.msra.mxu0 0.0
      %5880 = vmatprep.subr.mxu0 0.0
      %5881 = vmatpush2.msra.mxu0 0.0
      %5882 = vmatprep.subr.mxu0 0.0
      %5883 = vmatpush2.msra.mxu0 0.0
      %5884 = vmatprep.subr.mxu0 0.0
      %5885 = vmatpush2.msra.mxu0 0.0
      %5886 = vmatprep.subr.mxu0 0.0
      %5887 = vmatpush2.msra.mxu0 0.0
      %5888 = vmatprep.subr.mxu0 0.0
      %5889 = vmatpush2.msra.mxu0 0.0
      %5890 = vmatprep.mubr.f32.mxu0 0.0
      %5891 = vmatmul.mubr.f32.gmra.mxu0 %v5824
      %v5892 = vpop.f32.mrf.mxu0
      %v5893 = vadd.f32 0.0, %v5892
      %v5894 = vpop.f32.mrf.mxu0
      %5895 = vdwg.mxu0
      %v5896 = vld [vmem:[%s437] sm:$0xff]
      %v5897 = vld [vmem:[%s437 + $0x8] sm:$0xff]
      %v5898 = vld [vmem:[%s437 + $0x10] sm:$0xff]
      %v5899 = vld [vmem:[%s437 + $0x18] sm:$0xff]
      %v5900 = vld [vmem:[%s437 + $0x20] sm:$0xff]
      %v5901 = vld [vmem:[%s437 + $0x28] sm:$0xff]
      %v5902 = vld [vmem:[%s437 + $0x30] sm:$0xff]
      %v5903 = vld [vmem:[%s437 + $0x38] sm:$0xff]
      %v5904 = vld [vmem:[%s437 + $0x40] sm:$0xff]
      %v5905 = vld [vmem:[%s437 + $0x48] sm:$0xff]
      %v5906 = vld [vmem:[%s437 + $0x50] sm:$0xff]
      %v5907 = vld [vmem:[%s437 + $0x58] sm:$0xff]
      %v5908 = vld [vmem:[%s437 + $0x60] sm:$0xff]
      %v5909 = vld [vmem:[%s437 + $0x68] sm:$0xff]
      %v5910 = vld [vmem:[%s437 + $0x70] sm:$0xff]
      %v5911 = vld [vmem:[%s437 + $0x78] sm:$0xff]
      %v5912 = vld [vmem:[%s437 + $0x80] sm:$0xff]
      %v5913 = vld [vmem:[%s437 + $0x88] sm:$0xff]
      %v5914 = vld [vmem:[%s437 + $0x90] sm:$0xff]
      %v5915 = vld [vmem:[%s437 + $0x98] sm:$0xff]
      %v5916 = vld [vmem:[%s437 + $0xa0] sm:$0xff]
      %v5917 = vld [vmem:[%s437 + $0xa8] sm:$0xff]
      %v5918 = vld [vmem:[%s437 + $0xb0] sm:$0xff]
      %v5919 = vld [vmem:[%s437 + $0xb8] sm:$0xff]
      %v5920 = vld [vmem:[%s437 + $0xc0] sm:$0xff]
      %v5921 = vld [vmem:[%s437 + $0xc8] sm:$0xff]
      %v5922 = vld [vmem:[%s437 + $0xd0] sm:$0xff]
      %v5923 = vld [vmem:[%s437 + $0xd8] sm:$0xff]
      %v5924 = vld [vmem:[%s437 + $0xe0] sm:$0xff]
      %v5925 = vld [vmem:[%s437 + $0xe8] sm:$0xff]
      %v5926 = vld [vmem:[%s437 + $0xf0] sm:$0xff]
      %v5927 = vld [vmem:[%s437 + $0xf8] sm:$0xff]
      %v5928 = vld [vmem:[%s437 + $0x100] sm:$0xff]
      %v5929 = vld [vmem:[%s437 + $0x108] sm:$0xff]
      %v5930 = vld [vmem:[%s437 + $0x110] sm:$0xff]
      %v5931 = vld [vmem:[%s437 + $0x118] sm:$0xff]
      %v5933 = vsel %vm603, %v495, 0
      %5935 = vmatprep.subr.mxu0 0.0
      %5936 = vmatpush1.msra.mxu0 0.0
      %5937 = vmatprep.subr.mxu0 0.0
      %5938 = vmatpush1.msra.mxu0 0.0
      %5939 = vmatprep.subr.mxu0 0.0
      %5940 = vmatpush1.msra.mxu0 0.0
      %5941 = vmatprep.subr.mxu0 0.0
      %5942 = vmatpush1.msra.mxu0 0.0
      %5943 = vmatprep.subr.mxu0 0.0
      %5944 = vmatpush1.msra.mxu0 0.0
      %5945 = vmatprep.subr.mxu0 0.0
      %5946 = vmatpush1.msra.mxu0 0.0
      %5947 = vmatprep.subr.mxu0 0.0
      %5948 = vmatpush1.msra.mxu0 0.0
      %5949 = vmatprep.subr.mxu0 0.0
      %5950 = vmatpush1.msra.mxu0 0.0
      %5951 = vmatprep.subr.mxu0 0.0
      %5952 = vmatpush1.msra.mxu0 0.0
      %5953 = vmatprep.subr.mxu0 0.0
      %5954 = vmatpush1.msra.mxu0 0.0
      %5955 = vmatprep.subr.mxu0 0.0
      %5956 = vmatpush1.msra.mxu0 0.0
      %5957 = vmatprep.subr.mxu0 0.0
      %5958 = vmatpush1.msra.mxu0 0.0
      %5959 = vmatprep.subr.mxu0 0.0
      %5960 = vmatpush1.msra.mxu0 0.0
      %5961 = vmatprep.subr.mxu0 0.0
      %5962 = vmatpush1.msra.mxu0 0.0
      %5963 = vmatprep.subr.mxu0 0.0
      %5964 = vmatpush1.msra.mxu0 0.0
      %5965 = vmatprep.subr.mxu0 0.0
      %5966 = vmatpush1.msra.mxu0 %v5896
      %5967 = vmatprep.subr.mxu0 0.0
      %5968 = vmatpush2.msra.mxu0 0.0
      %5969 = vmatprep.subr.mxu0 0.0
      %5970 = vmatpush2.msra.mxu0 0.0
      %5971 = vmatprep.subr.mxu0 0.0
      %5972 = vmatpush2.msra.mxu0 0.0
      %5973 = vmatprep.subr.mxu0 0.0
      %5974 = vmatpush2.msra.mxu0 0.0
      %5975 = vmatprep.subr.mxu0 0.0
      %5976 = vmatpush2.msra.mxu0 0.0
      %5977 = vmatprep.subr.mxu0 0.0
      %5978 = vmatpush2.msra.mxu0 0.0
      %5979 = vmatprep.subr.mxu0 0.0
      %5980 = vmatpush2.msra.mxu0 0.0
      %5981 = vmatprep.subr.mxu0 0.0
      %5982 = vmatpush2.msra.mxu0 0.0
      %5983 = vmatprep.subr.mxu0 0.0
      %5984 = vmatpush2.msra.mxu0 0.0
      %5985 = vmatprep.subr.mxu0 0.0
      %5986 = vmatpush2.msra.mxu0 0.0
      %5987 = vmatprep.subr.mxu0 0.0
      %5988 = vmatpush2.msra.mxu0 0.0
      %5989 = vmatprep.subr.mxu0 0.0
      %5990 = vmatpush2.msra.mxu0 0.0
      %5991 = vmatprep.subr.mxu0 0.0
      %5992 = vmatpush2.msra.mxu0 0.0
      %5993 = vmatprep.subr.mxu0 0.0
      %5994 = vmatpush2.msra.mxu0 0.0
      %5995 = vmatprep.subr.mxu0 0.0
      %5996 = vmatpush2.msra.mxu0 0.0
      %5997 = vmatprep.subr.mxu0 0.0
      %5998 = vmatpush2.msra.mxu0 0.0
      %5999 = vmatprep.mubr.f32.mxu0 0.0
      %6000 = vmatmul.mubr.f32.gmra.mxu0 %v5933
      %v6001 = vpop.f32.mrf.mxu0
      %v6002 = vadd.f32 0.0, %v6001
      %v6003 = vpop.f32.mrf.mxu0
      %6004 = vdwg.mxu0
      %v6006 = vsel %vm603, %v496, 0
      %6008 = vmatprep.subr.mxu0 0.0
      %6009 = vmatpush1.msra.mxu0 0.0
      %6010 = vmatprep.subr.mxu0 0.0
      %6011 = vmatpush1.msra.mxu0 0.0
      %6012 = vmatprep.subr.mxu0 0.0
      %6013 = vmatpush1.msra.mxu0 0.0
      %6014 = vmatprep.subr.mxu0 0.0
      %6015 = vmatpush1.msra.mxu0 0.0
      %6016 = vmatprep.subr.mxu0 0.0
      %6017 = vmatpush1.msra.mxu0 0.0
      %6018 = vmatprep.subr.mxu0 0.0
      %6019 = vmatpush1.msra.mxu0 0.0
      %6020 = vmatprep.subr.mxu0 0.0
      %6021 = vmatpush1.msra.mxu0 0.0
      %6022 = vmatprep.subr.mxu0 0.0
      %6023 = vmatpush1.msra.mxu0 0.0
      %6024 = vmatprep.subr.mxu0 0.0
      %6025 = vmatpush1.msra.mxu0 0.0
      %6026 = vmatprep.subr.mxu0 0.0
      %6027 = vmatpush1.msra.mxu0 0.0
      %6028 = vmatprep.subr.mxu0 0.0
      %6029 = vmatpush1.msra.mxu0 0.0
      %6030 = vmatprep.subr.mxu0 0.0
      %6031 = vmatpush1.msra.mxu0 0.0
      %6032 = vmatprep.subr.mxu0 0.0
      %6033 = vmatpush1.msra.mxu0 0.0
      %6034 = vmatprep.subr.mxu0 0.0
      %6035 = vmatpush1.msra.mxu0 0.0
      %6036 = vmatprep.subr.mxu0 0.0
      %6037 = vmatpush1.msra.mxu0 0.0
      %6038 = vmatprep.subr.mxu0 0.0
      %6039 = vmatpush1.msra.mxu0 %v5897
      %6040 = vmatprep.subr.mxu0 0.0
      %6041 = vmatpush2.msra.mxu0 0.0
      %6042 = vmatprep.subr.mxu0 0.0
      %6043 = vmatpush2.msra.mxu0 0.0
      %6044 = vmatprep.subr.mxu0 0.0
      %6045 = vmatpush2.msra.mxu0 0.0
      %6046 = vmatprep.subr.mxu0 0.0
      %6047 = vmatpush2.msra.mxu0 0.0
      %6048 = vmatprep.subr.mxu0 0.0
      %6049 = vmatpush2.msra.mxu0 0.0
      %6050 = vmatprep.subr.mxu0 0.0
      %6051 = vmatpush2.msra.mxu0 0.0
      %6052 = vmatprep.subr.mxu0 0.0
      %6053 = vmatpush2.msra.mxu0 0.0
      %6054 = vmatprep.subr.mxu0 0.0
      %6055 = vmatpush2.msra.mxu0 0.0
      %6056 = vmatprep.subr.mxu0 0.0
      %6057 = vmatpush2.msra.mxu0 0.0
      %6058 = vmatprep.subr.mxu0 0.0
      %6059 = vmatpush2.msra.mxu0 0.0
      %6060 = vmatprep.subr.mxu0 0.0
      %6061 = vmatpush2.msra.mxu0 0.0
      %6062 = vmatprep.subr.mxu0 0.0
      %6063 = vmatpush2.msra.mxu0 0.0
      %6064 = vmatprep.subr.mxu0 0.0
      %6065 = vmatpush2.msra.mxu0 0.0
      %6066 = vmatprep.subr.mxu0 0.0
      %6067 = vmatpush2.msra.mxu0 0.0
      %6068 = vmatprep.subr.mxu0 0.0
      %6069 = vmatpush2.msra.mxu0 0.0
      %6070 = vmatprep.subr.mxu0 0.0
      %6071 = vmatpush2.msra.mxu0 0.0
      %6072 = vmatprep.mubr.f32.mxu0 0.0
      %6073 = vmatmul.mubr.f32.gmra.mxu0 %v6006
      %v6074 = vpop.f32.mrf.mxu0
      %v6075 = vadd.f32 0.0, %v6074
      %v6076 = vpop.f32.mrf.mxu0
      %6077 = vdwg.mxu0
      %v6079 = vsel %vm603, %v497, 0
      %6081 = vmatprep.subr.mxu0 0.0
      %6082 = vmatpush1.msra.mxu0 0.0
      %6083 = vmatprep.subr.mxu0 0.0
      %6084 = vmatpush1.msra.mxu0 0.0
      %6085 = vmatprep.subr.mxu0 0.0
      %6086 = vmatpush1.msra.mxu0 0.0
      %6087 = vmatprep.subr.mxu0 0.0
      %6088 = vmatpush1.msra.mxu0 0.0
      %6089 = vmatprep.subr.mxu0 0.0
      %6090 = vmatpush1.msra.mxu0 0.0
      %6091 = vmatprep.subr.mxu0 0.0
      %6092 = vmatpush1.msra.mxu0 0.0
      %6093 = vmatprep.subr.mxu0 0.0
      %6094 = vmatpush1.msra.mxu0 0.0
      %6095 = vmatprep.subr.mxu0 0.0
      %6096 = vmatpush1.msra.mxu0 0.0
      %6097 = vmatprep.subr.mxu0 0.0
      %6098 = vmatpush1.msra.mxu0 0.0
      %6099 = vmatprep.subr.mxu0 0.0
      %6100 = vmatpush1.msra.mxu0 0.0
      %6101 = vmatprep.subr.mxu0 0.0
      %6102 = vmatpush1.msra.mxu0 0.0
      %6103 = vmatprep.subr.mxu0 0.0
      %6104 = vmatpush1.msra.mxu0 0.0
      %6105 = vmatprep.subr.mxu0 0.0
      %6106 = vmatpush1.msra.mxu0 0.0
      %6107 = vmatprep.subr.mxu0 0.0
      %6108 = vmatpush1.msra.mxu0 0.0
      %6109 = vmatprep.subr.mxu0 0.0
      %6110 = vmatpush1.msra.mxu0 0.0
      %6111 = vmatprep.subr.mxu0 0.0
      %6112 = vmatpush1.msra.mxu0 %v5898
      %6113 = vmatprep.subr.mxu0 0.0
      %6114 = vmatpush2.msra.mxu0 0.0
      %6115 = vmatprep.subr.mxu0 0.0
      %6116 = vmatpush2.msra.mxu0 0.0
      %6117 = vmatprep.subr.mxu0 0.0
      %6118 = vmatpush2.msra.mxu0 0.0
      %6119 = vmatprep.subr.mxu0 0.0
      %6120 = vmatpush2.msra.mxu0 0.0
      %6121 = vmatprep.subr.mxu0 0.0
      %6122 = vmatpush2.msra.mxu0 0.0
      %6123 = vmatprep.subr.mxu0 0.0
      %6124 = vmatpush2.msra.mxu0 0.0
      %6125 = vmatprep.subr.mxu0 0.0
      %6126 = vmatpush2.msra.mxu0 0.0
      %6127 = vmatprep.subr.mxu0 0.0
      %6128 = vmatpush2.msra.mxu0 0.0
      %6129 = vmatprep.subr.mxu0 0.0
      %6130 = vmatpush2.msra.mxu0 0.0
      %6131 = vmatprep.subr.mxu0 0.0
      %6132 = vmatpush2.msra.mxu0 0.0
      %6133 = vmatprep.subr.mxu0 0.0
      %6134 = vmatpush2.msra.mxu0 0.0
      %6135 = vmatprep.subr.mxu0 0.0
      %6136 = vmatpush2.msra.mxu0 0.0
      %6137 = vmatprep.subr.mxu0 0.0
      %6138 = vmatpush2.msra.mxu0 0.0
      %6139 = vmatprep.subr.mxu0 0.0
      %6140 = vmatpush2.msra.mxu0 0.0
      %6141 = vmatprep.subr.mxu0 0.0
      %6142 = vmatpush2.msra.mxu0 0.0
      %6143 = vmatprep.subr.mxu0 0.0
      %6144 = vmatpush2.msra.mxu0 0.0
      %6145 = vmatprep.mubr.f32.mxu0 0.0
      %6146 = vmatmul.mubr.f32.gmra.mxu0 %v6079
      %v6147 = vpop.f32.mrf.mxu0
      %v6148 = vadd.f32 0.0, %v6147
      %v6149 = vpop.f32.mrf.mxu0
      %6150 = vdwg.mxu0
      %v6152 = vsel %vm603, %v498, 0
      %6154 = vmatprep.subr.mxu0 0.0
      %6155 = vmatpush1.msra.mxu0 0.0
      %6156 = vmatprep.subr.mxu0 0.0
      %6157 = vmatpush1.msra.mxu0 0.0
      %6158 = vmatprep.subr.mxu0 0.0
      %6159 = vmatpush1.msra.mxu0 0.0
      %6160 = vmatprep.subr.mxu0 0.0
      %6161 = vmatpush1.msra.mxu0 0.0
      %6162 = vmatprep.subr.mxu0 0.0
      %6163 = vmatpush1.msra.mxu0 0.0
      %6164 = vmatprep.subr.mxu0 0.0
      %6165 = vmatpush1.msra.mxu0 0.0
      %6166 = vmatprep.subr.mxu0 0.0
      %6167 = vmatpush1.msra.mxu0 0.0
      %6168 = vmatprep.subr.mxu0 0.0
      %6169 = vmatpush1.msra.mxu0 0.0
      %6170 = vmatprep.subr.mxu0 0.0
      %6171 = vmatpush1.msra.mxu0 0.0
      %6172 = vmatprep.subr.mxu0 0.0
      %6173 = vmatpush1.msra.mxu0 0.0
      %6174 = vmatprep.subr.mxu0 0.0
      %6175 = vmatpush1.msra.mxu0 0.0
      %6176 = vmatprep.subr.mxu0 0.0
      %6177 = vmatpush1.msra.mxu0 0.0
      %6178 = vmatprep.subr.mxu0 0.0
      %6179 = vmatpush1.msra.mxu0 0.0
      %6180 = vmatprep.subr.mxu0 0.0
      %6181 = vmatpush1.msra.mxu0 0.0
      %6182 = vmatprep.subr.mxu0 0.0
      %6183 = vmatpush1.msra.mxu0 0.0
      %6184 = vmatprep.subr.mxu0 0.0
      %6185 = vmatpush1.msra.mxu0 %v5899
      %6186 = vmatprep.subr.mxu0 0.0
      %6187 = vmatpush2.msra.mxu0 0.0
      %6188 = vmatprep.subr.mxu0 0.0
      %6189 = vmatpush2.msra.mxu0 0.0
      %6190 = vmatprep.subr.mxu0 0.0
      %6191 = vmatpush2.msra.mxu0 0.0
      %6192 = vmatprep.subr.mxu0 0.0
      %6193 = vmatpush2.msra.mxu0 0.0
      %6194 = vmatprep.subr.mxu0 0.0
      %6195 = vmatpush2.msra.mxu0 0.0
      %6196 = vmatprep.subr.mxu0 0.0
      %6197 = vmatpush2.msra.mxu0 0.0
      %6198 = vmatprep.subr.mxu0 0.0
      %6199 = vmatpush2.msra.mxu0 0.0
      %6200 = vmatprep.subr.mxu0 0.0
      %6201 = vmatpush2.msra.mxu0 0.0
      %6202 = vmatprep.subr.mxu0 0.0
      %6203 = vmatpush2.msra.mxu0 0.0
      %6204 = vmatprep.subr.mxu0 0.0
      %6205 = vmatpush2.msra.mxu0 0.0
      %6206 = vmatprep.subr.mxu0 0.0
      %6207 = vmatpush2.msra.mxu0 0.0
      %6208 = vmatprep.subr.mxu0 0.0
      %6209 = vmatpush2.msra.mxu0 0.0
      %6210 = vmatprep.subr.mxu0 0.0
      %6211 = vmatpush2.msra.mxu0 0.0
      %6212 = vmatprep.subr.mxu0 0.0
      %6213 = vmatpush2.msra.mxu0 0.0
      %6214 = vmatprep.subr.mxu0 0.0
      %6215 = vmatpush2.msra.mxu0 0.0
      %6216 = vmatprep.subr.mxu0 0.0
      %6217 = vmatpush2.msra.mxu0 0.0
      %6218 = vmatprep.mubr.f32.mxu0 0.0
      %6219 = vmatmul.mubr.f32.gmra.mxu0 %v6152
      %v6220 = vpop.f32.mrf.mxu0
      %v6221 = vadd.f32 0.0, %v6220
      %v6222 = vpop.f32.mrf.mxu0
      %6223 = vdwg.mxu0
      %v6225 = vsel %vm603, %v499, 0
      %6227 = vmatprep.subr.mxu0 0.0
      %6228 = vmatpush1.msra.mxu0 0.0
      %6229 = vmatprep.subr.mxu0 0.0
      %6230 = vmatpush1.msra.mxu0 0.0
      %6231 = vmatprep.subr.mxu0 0.0
      %6232 = vmatpush1.msra.mxu0 0.0
      %6233 = vmatprep.subr.mxu0 0.0
      %6234 = vmatpush1.msra.mxu0 0.0
      %6235 = vmatprep.subr.mxu0 0.0
      %6236 = vmatpush1.msra.mxu0 0.0
      %6237 = vmatprep.subr.mxu0 0.0
      %6238 = vmatpush1.msra.mxu0 0.0
      %6239 = vmatprep.subr.mxu0 0.0
      %6240 = vmatpush1.msra.mxu0 0.0
      %6241 = vmatprep.subr.mxu0 0.0
      %6242 = vmatpush1.msra.mxu0 0.0
      %6243 = vmatprep.subr.mxu0 0.0
      %6244 = vmatpush1.msra.mxu0 0.0
      %6245 = vmatprep.subr.mxu0 0.0
      %6246 = vmatpush1.msra.mxu0 0.0
      %6247 = vmatprep.subr.mxu0 0.0
      %6248 = vmatpush1.msra.mxu0 0.0
      %6249 = vmatprep.subr.mxu0 0.0
      %6250 = vmatpush1.msra.mxu0 0.0
      %6251 = vmatprep.subr.mxu0 0.0
      %6252 = vmatpush1.msra.mxu0 0.0
      %6253 = vmatprep.subr.mxu0 0.0
      %6254 = vmatpush1.msra.mxu0 0.0
      %6255 = vmatprep.subr.mxu0 0.0
      %6256 = vmatpush1.msra.mxu0 0.0
      %6257 = vmatprep.subr.mxu0 0.0
      %6258 = vmatpush1.msra.mxu0 %v5900
      %6259 = vmatprep.subr.mxu0 0.0
      %6260 = vmatpush2.msra.mxu0 0.0
      %6261 = vmatprep.subr.mxu0 0.0
      %6262 = vmatpush2.msra.mxu0 0.0
      %6263 = vmatprep.subr.mxu0 0.0
      %6264 = vmatpush2.msra.mxu0 0.0
      %6265 = vmatprep.subr.mxu0 0.0
      %6266 = vmatpush2.msra.mxu0 0.0
      %6267 = vmatprep.subr.mxu0 0.0
      %6268 = vmatpush2.msra.mxu0 0.0
      %6269 = vmatprep.subr.mxu0 0.0
      %6270 = vmatpush2.msra.mxu0 0.0
      %6271 = vmatprep.subr.mxu0 0.0
      %6272 = vmatpush2.msra.mxu0 0.0
      %6273 = vmatprep.subr.mxu0 0.0
      %6274 = vmatpush2.msra.mxu0 0.0
      %6275 = vmatprep.subr.mxu0 0.0
      %6276 = vmatpush2.msra.mxu0 0.0
      %6277 = vmatprep.subr.mxu0 0.0
      %6278 = vmatpush2.msra.mxu0 0.0
      %6279 = vmatprep.subr.mxu0 0.0
      %6280 = vmatpush2.msra.mxu0 0.0
      %6281 = vmatprep.subr.mxu0 0.0
      %6282 = vmatpush2.msra.mxu0 0.0
      %6283 = vmatprep.subr.mxu0 0.0
      %6284 = vmatpush2.msra.mxu0 0.0
      %6285 = vmatprep.subr.mxu0 0.0
      %6286 = vmatpush2.msra.mxu0 0.0
      %6287 = vmatprep.subr.mxu0 0.0
      %6288 = vmatpush2.msra.mxu0 0.0
      %6289 = vmatprep.subr.mxu0 0.0
      %6290 = vmatpush2.msra.mxu0 0.0
      %6291 = vmatprep.mubr.f32.mxu0 0.0
      %6292 = vmatmul.mubr.f32.gmra.mxu0 %v6225
      %v6293 = vpop.f32.mrf.mxu0
      %v6294 = vadd.f32 0.0, %v6293
      %v6295 = vpop.f32.mrf.mxu0
      %6296 = vdwg.mxu0
      %v6298 = vsel %vm603, %v500, 0
      %6300 = vmatprep.subr.mxu0 0.0
      %6301 = vmatpush1.msra.mxu0 0.0
      %6302 = vmatprep.subr.mxu0 0.0
      %6303 = vmatpush1.msra.mxu0 0.0
      %6304 = vmatprep.subr.mxu0 0.0
      %6305 = vmatpush1.msra.mxu0 0.0
      %6306 = vmatprep.subr.mxu0 0.0
      %6307 = vmatpush1.msra.mxu0 0.0
      %6308 = vmatprep.subr.mxu0 0.0
      %6309 = vmatpush1.msra.mxu0 0.0
      %6310 = vmatprep.subr.mxu0 0.0
      %6311 = vmatpush1.msra.mxu0 0.0
      %6312 = vmatprep.subr.mxu0 0.0
      %6313 = vmatpush1.msra.mxu0 0.0
      %6314 = vmatprep.subr.mxu0 0.0
      %6315 = vmatpush1.msra.mxu0 0.0
      %6316 = vmatprep.subr.mxu0 0.0
      %6317 = vmatpush1.msra.mxu0 0.0
      %6318 = vmatprep.subr.mxu0 0.0
      %6319 = vmatpush1.msra.mxu0 0.0
      %6320 = vmatprep.subr.mxu0 0.0
      %6321 = vmatpush1.msra.mxu0 0.0
      %6322 = vmatprep.subr.mxu0 0.0
      %6323 = vmatpush1.msra.mxu0 0.0
      %6324 = vmatprep.subr.mxu0 0.0
      %6325 = vmatpush1.msra.mxu0 0.0
      %6326 = vmatprep.subr.mxu0 0.0
      %6327 = vmatpush1.msra.mxu0 0.0
      %6328 = vmatprep.subr.mxu0 0.0
      %6329 = vmatpush1.msra.mxu0 0.0
      %6330 = vmatprep.subr.mxu0 0.0
      %6331 = vmatpush1.msra.mxu0 %v5901
      %6332 = vmatprep.subr.mxu0 0.0
      %6333 = vmatpush2.msra.mxu0 0.0
      %6334 = vmatprep.subr.mxu0 0.0
      %6335 = vmatpush2.msra.mxu0 0.0
      %6336 = vmatprep.subr.mxu0 0.0
      %6337 = vmatpush2.msra.mxu0 0.0
      %6338 = vmatprep.subr.mxu0 0.0
      %6339 = vmatpush2.msra.mxu0 0.0
      %6340 = vmatprep.subr.mxu0 0.0
      %6341 = vmatpush2.msra.mxu0 0.0
      %6342 = vmatprep.subr.mxu0 0.0
      %6343 = vmatpush2.msra.mxu0 0.0
      %6344 = vmatprep.subr.mxu0 0.0
      %6345 = vmatpush2.msra.mxu0 0.0
      %6346 = vmatprep.subr.mxu0 0.0
      %6347 = vmatpush2.msra.mxu0 0.0
      %6348 = vmatprep.subr.mxu0 0.0
      %6349 = vmatpush2.msra.mxu0 0.0
      %6350 = vmatprep.subr.mxu0 0.0
      %6351 = vmatpush2.msra.mxu0 0.0
      %6352 = vmatprep.subr.mxu0 0.0
      %6353 = vmatpush2.msra.mxu0 0.0
      %6354 = vmatprep.subr.mxu0 0.0
      %6355 = vmatpush2.msra.mxu0 0.0
      %6356 = vmatprep.subr.mxu0 0.0
      %6357 = vmatpush2.msra.mxu0 0.0
      %6358 = vmatprep.subr.mxu0 0.0
      %6359 = vmatpush2.msra.mxu0 0.0
      %6360 = vmatprep.subr.mxu0 0.0
      %6361 = vmatpush2.msra.mxu0 0.0
      %6362 = vmatprep.subr.mxu0 0.0
      %6363 = vmatpush2.msra.mxu0 0.0
      %6364 = vmatprep.mubr.f32.mxu0 0.0
      %6365 = vmatmul.mubr.f32.gmra.mxu0 %v6298
      %v6366 = vpop.f32.mrf.mxu0
      %v6367 = vadd.f32 0.0, %v6366
      %v6368 = vpop.f32.mrf.mxu0
      %6369 = vdwg.mxu0
      %v6371 = vsel %vm603, %v501, 0
      %6373 = vmatprep.subr.mxu0 0.0
      %6374 = vmatpush1.msra.mxu0 0.0
      %6375 = vmatprep.subr.mxu0 0.0
      %6376 = vmatpush1.msra.mxu0 0.0
      %6377 = vmatprep.subr.mxu0 0.0
      %6378 = vmatpush1.msra.mxu0 0.0
      %6379 = vmatprep.subr.mxu0 0.0
      %6380 = vmatpush1.msra.mxu0 0.0
      %6381 = vmatprep.subr.mxu0 0.0
      %6382 = vmatpush1.msra.mxu0 0.0
      %6383 = vmatprep.subr.mxu0 0.0
      %6384 = vmatpush1.msra.mxu0 0.0
      %6385 = vmatprep.subr.mxu0 0.0
      %6386 = vmatpush1.msra.mxu0 0.0
      %6387 = vmatprep.subr.mxu0 0.0
      %6388 = vmatpush1.msra.mxu0 0.0
      %6389 = vmatprep.subr.mxu0 0.0
      %6390 = vmatpush1.msra.mxu0 0.0
      %6391 = vmatprep.subr.mxu0 0.0
      %6392 = vmatpush1.msra.mxu0 0.0
      %6393 = vmatprep.subr.mxu0 0.0
      %6394 = vmatpush1.msra.mxu0 0.0
      %6395 = vmatprep.subr.mxu0 0.0
      %6396 = vmatpush1.msra.mxu0 0.0
      %6397 = vmatprep.subr.mxu0 0.0
      %6398 = vmatpush1.msra.mxu0 0.0
      %6399 = vmatprep.subr.mxu0 0.0
      %6400 = vmatpush1.msra.mxu0 0.0
      %6401 = vmatprep.subr.mxu0 0.0
      %6402 = vmatpush1.msra.mxu0 0.0
      %6403 = vmatprep.subr.mxu0 0.0
      %6404 = vmatpush1.msra.mxu0 %v5902
      %6405 = vmatprep.subr.mxu0 0.0
      %6406 = vmatpush2.msra.mxu0 0.0
      %6407 = vmatprep.subr.mxu0 0.0
      %6408 = vmatpush2.msra.mxu0 0.0
      %6409 = vmatprep.subr.mxu0 0.0
      %6410 = vmatpush2.msra.mxu0 0.0
      %6411 = vmatprep.subr.mxu0 0.0
      %6412 = vmatpush2.msra.mxu0 0.0
      %6413 = vmatprep.subr.mxu0 0.0
      %6414 = vmatpush2.msra.mxu0 0.0
      %6415 = vmatprep.subr.mxu0 0.0
      %6416 = vmatpush2.msra.mxu0 0.0
      %6417 = vmatprep.subr.mxu0 0.0
      %6418 = vmatpush2.msra.mxu0 0.0
      %6419 = vmatprep.subr.mxu0 0.0
      %6420 = vmatpush2.msra.mxu0 0.0
      %6421 = vmatprep.subr.mxu0 0.0
      %6422 = vmatpush2.msra.mxu0 0.0
      %6423 = vmatprep.subr.mxu0 0.0
      %6424 = vmatpush2.msra.mxu0 0.0
      %6425 = vmatprep.subr.mxu0 0.0
      %6426 = vmatpush2.msra.mxu0 0.0
      %6427 = vmatprep.subr.mxu0 0.0
      %6428 = vmatpush2.msra.mxu0 0.0
      %6429 = vmatprep.subr.mxu0 0.0
      %6430 = vmatpush2.msra.mxu0 0.0
      %6431 = vmatprep.subr.mxu0 0.0
      %6432 = vmatpush2.msra.mxu0 0.0
      %6433 = vmatprep.subr.mxu0 0.0
      %6434 = vmatpush2.msra.mxu0 0.0
      %6435 = vmatprep.subr.mxu0 0.0
      %6436 = vmatpush2.msra.mxu0 0.0
      %6437 = vmatprep.mubr.f32.mxu0 0.0
      %6438 = vmatmul.mubr.f32.gmra.mxu0 %v6371
      %v6439 = vpop.f32.mrf.mxu0
      %v6440 = vadd.f32 0.0, %v6439
      %v6441 = vpop.f32.mrf.mxu0
      %6442 = vdwg.mxu0
      %v6444 = vsel %vm603, %v502, 0
      %6446 = vmatprep.subr.mxu0 0.0
      %6447 = vmatpush1.msra.mxu0 0.0
      %6448 = vmatprep.subr.mxu0 0.0
      %6449 = vmatpush1.msra.mxu0 0.0
      %6450 = vmatprep.subr.mxu0 0.0
      %6451 = vmatpush1.msra.mxu0 0.0
      %6452 = vmatprep.subr.mxu0 0.0
      %6453 = vmatpush1.msra.mxu0 0.0
      %6454 = vmatprep.subr.mxu0 0.0
      %6455 = vmatpush1.msra.mxu0 0.0
      %6456 = vmatprep.subr.mxu0 0.0
      %6457 = vmatpush1.msra.mxu0 0.0
      %6458 = vmatprep.subr.mxu0 0.0
      %6459 = vmatpush1.msra.mxu0 0.0
      %6460 = vmatprep.subr.mxu0 0.0
      %6461 = vmatpush1.msra.mxu0 0.0
      %6462 = vmatprep.subr.mxu0 0.0
      %6463 = vmatpush1.msra.mxu0 0.0
      %6464 = vmatprep.subr.mxu0 0.0
      %6465 = vmatpush1.msra.mxu0 0.0
      %6466 = vmatprep.subr.mxu0 0.0
      %6467 = vmatpush1.msra.mxu0 0.0
      %6468 = vmatprep.subr.mxu0 0.0
      %6469 = vmatpush1.msra.mxu0 0.0
      %6470 = vmatprep.subr.mxu0 0.0
      %6471 = vmatpush1.msra.mxu0 0.0
      %6472 = vmatprep.subr.mxu0 0.0
      %6473 = vmatpush1.msra.mxu0 0.0
      %6474 = vmatprep.subr.mxu0 0.0
      %6475 = vmatpush1.msra.mxu0 0.0
      %6476 = vmatprep.subr.mxu0 0.0
      %6477 = vmatpush1.msra.mxu0 %v5903
      %6478 = vmatprep.subr.mxu0 0.0
      %6479 = vmatpush2.msra.mxu0 0.0
      %6480 = vmatprep.subr.mxu0 0.0
      %6481 = vmatpush2.msra.mxu0 0.0
      %6482 = vmatprep.subr.mxu0 0.0
      %6483 = vmatpush2.msra.mxu0 0.0
      %6484 = vmatprep.subr.mxu0 0.0
      %6485 = vmatpush2.msra.mxu0 0.0
      %6486 = vmatprep.subr.mxu0 0.0
      %6487 = vmatpush2.msra.mxu0 0.0
      %6488 = vmatprep.subr.mxu0 0.0
      %6489 = vmatpush2.msra.mxu0 0.0
      %6490 = vmatprep.subr.mxu0 0.0
      %6491 = vmatpush2.msra.mxu0 0.0
      %6492 = vmatprep.subr.mxu0 0.0
      %6493 = vmatpush2.msra.mxu0 0.0
      %6494 = vmatprep.subr.mxu0 0.0
      %6495 = vmatpush2.msra.mxu0 0.0
      %6496 = vmatprep.subr.mxu0 0.0
      %6497 = vmatpush2.msra.mxu0 0.0
      %6498 = vmatprep.subr.mxu0 0.0
      %6499 = vmatpush2.msra.mxu0 0.0
      %6500 = vmatprep.subr.mxu0 0.0
      %6501 = vmatpush2.msra.mxu0 0.0
      %6502 = vmatprep.subr.mxu0 0.0
      %6503 = vmatpush2.msra.mxu0 0.0
      %6504 = vmatprep.subr.mxu0 0.0
      %6505 = vmatpush2.msra.mxu0 0.0
      %6506 = vmatprep.subr.mxu0 0.0
      %6507 = vmatpush2.msra.mxu0 0.0
      %6508 = vmatprep.subr.mxu0 0.0
      %6509 = vmatpush2.msra.mxu0 0.0
      %6510 = vmatprep.mubr.f32.mxu0 0.0
      %6511 = vmatmul.mubr.f32.gmra.mxu0 %v6444
      %v6512 = vpop.f32.mrf.mxu0
      %v6513 = vadd.f32 0.0, %v6512
      %v6514 = vpop.f32.mrf.mxu0
      %6515 = vdwg.mxu0
      %v6517 = vsel %vm603, %v503, 0
      %6519 = vmatprep.subr.mxu0 0.0
      %6520 = vmatpush1.msra.mxu0 0.0
      %6521 = vmatprep.subr.mxu0 0.0
      %6522 = vmatpush1.msra.mxu0 0.0
      %6523 = vmatprep.subr.mxu0 0.0
      %6524 = vmatpush1.msra.mxu0 0.0
      %6525 = vmatprep.subr.mxu0 0.0
      %6526 = vmatpush1.msra.mxu0 0.0
      %6527 = vmatprep.subr.mxu0 0.0
      %6528 = vmatpush1.msra.mxu0 0.0
      %6529 = vmatprep.subr.mxu0 0.0
      %6530 = vmatpush1.msra.mxu0 0.0
      %6531 = vmatprep.subr.mxu0 0.0
      %6532 = vmatpush1.msra.mxu0 0.0
      %6533 = vmatprep.subr.mxu0 0.0
      %6534 = vmatpush1.msra.mxu0 0.0
      %6535 = vmatprep.subr.mxu0 0.0
      %6536 = vmatpush1.msra.mxu0 0.0
      %6537 = vmatprep.subr.mxu0 0.0
      %6538 = vmatpush1.msra.mxu0 0.0
      %6539 = vmatprep.subr.mxu0 0.0
      %6540 = vmatpush1.msra.mxu0 0.0
      %6541 = vmatprep.subr.mxu0 0.0
      %6542 = vmatpush1.msra.mxu0 0.0
      %6543 = vmatprep.subr.mxu0 0.0
      %6544 = vmatpush1.msra.mxu0 0.0
      %6545 = vmatprep.subr.mxu0 0.0
      %6546 = vmatpush1.msra.mxu0 0.0
      %6547 = vmatprep.subr.mxu0 0.0
      %6548 = vmatpush1.msra.mxu0 0.0
      %6549 = vmatprep.subr.mxu0 0.0
      %6550 = vmatpush1.msra.mxu0 %v5904
      %6551 = vmatprep.subr.mxu0 0.0
      %6552 = vmatpush2.msra.mxu0 0.0
      %6553 = vmatprep.subr.mxu0 0.0
      %6554 = vmatpush2.msra.mxu0 0.0
      %6555 = vmatprep.subr.mxu0 0.0
      %6556 = vmatpush2.msra.mxu0 0.0
      %6557 = vmatprep.subr.mxu0 0.0
      %6558 = vmatpush2.msra.mxu0 0.0
      %6559 = vmatprep.subr.mxu0 0.0
      %6560 = vmatpush2.msra.mxu0 0.0
      %6561 = vmatprep.subr.mxu0 0.0
      %6562 = vmatpush2.msra.mxu0 0.0
      %6563 = vmatprep.subr.mxu0 0.0
      %6564 = vmatpush2.msra.mxu0 0.0
      %6565 = vmatprep.subr.mxu0 0.0
      %6566 = vmatpush2.msra.mxu0 0.0
      %6567 = vmatprep.subr.mxu0 0.0
      %6568 = vmatpush2.msra.mxu0 0.0
      %6569 = vmatprep.subr.mxu0 0.0
      %6570 = vmatpush2.msra.mxu0 0.0
      %6571 = vmatprep.subr.mxu0 0.0
      %6572 = vmatpush2.msra.mxu0 0.0
      %6573 = vmatprep.subr.mxu0 0.0
      %6574 = vmatpush2.msra.mxu0 0.0
      %6575 = vmatprep.subr.mxu0 0.0
      %6576 = vmatpush2.msra.mxu0 0.0
      %6577 = vmatprep.subr.mxu0 0.0
      %6578 = vmatpush2.msra.mxu0 0.0
      %6579 = vmatprep.subr.mxu0 0.0
      %6580 = vmatpush2.msra.mxu0 0.0
      %6581 = vmatprep.subr.mxu0 0.0
      %6582 = vmatpush2.msra.mxu0 0.0
      %6583 = vmatprep.mubr.f32.mxu0 0.0
      %6584 = vmatmul.mubr.f32.gmra.mxu0 %v6517
      %v6585 = vpop.f32.mrf.mxu0
      %v6586 = vadd.f32 0.0, %v6585
      %v6587 = vpop.f32.mrf.mxu0
      %6588 = vdwg.mxu0
      %v6590 = vsel %vm603, %v504, 0
      %6592 = vmatprep.subr.mxu0 0.0
      %6593 = vmatpush1.msra.mxu0 0.0
      %6594 = vmatprep.subr.mxu0 0.0
      %6595 = vmatpush1.msra.mxu0 0.0
      %6596 = vmatprep.subr.mxu0 0.0
      %6597 = vmatpush1.msra.mxu0 0.0
      %6598 = vmatprep.subr.mxu0 0.0
      %6599 = vmatpush1.msra.mxu0 0.0
      %6600 = vmatprep.subr.mxu0 0.0
      %6601 = vmatpush1.msra.mxu0 0.0
      %6602 = vmatprep.subr.mxu0 0.0
      %6603 = vmatpush1.msra.mxu0 0.0
      %6604 = vmatprep.subr.mxu0 0.0
      %6605 = vmatpush1.msra.mxu0 0.0
      %6606 = vmatprep.subr.mxu0 0.0
      %6607 = vmatpush1.msra.mxu0 0.0
      %6608 = vmatprep.subr.mxu0 0.0
      %6609 = vmatpush1.msra.mxu0 0.0
      %6610 = vmatprep.subr.mxu0 0.0
      %6611 = vmatpush1.msra.mxu0 0.0
      %6612 = vmatprep.subr.mxu0 0.0
      %6613 = vmatpush1.msra.mxu0 0.0
      %6614 = vmatprep.subr.mxu0 0.0
      %6615 = vmatpush1.msra.mxu0 0.0
      %6616 = vmatprep.subr.mxu0 0.0
      %6617 = vmatpush1.msra.mxu0 0.0
      %6618 = vmatprep.subr.mxu0 0.0
      %6619 = vmatpush1.msra.mxu0 0.0
      %6620 = vmatprep.subr.mxu0 0.0
      %6621 = vmatpush1.msra.mxu0 0.0
      %6622 = vmatprep.subr.mxu0 0.0
      %6623 = vmatpush1.msra.mxu0 %v5905
      %6624 = vmatprep.subr.mxu0 0.0
      %6625 = vmatpush2.msra.mxu0 0.0
      %6626 = vmatprep.subr.mxu0 0.0
      %6627 = vmatpush2.msra.mxu0 0.0
      %6628 = vmatprep.subr.mxu0 0.0
      %6629 = vmatpush2.msra.mxu0 0.0
      %6630 = vmatprep.subr.mxu0 0.0
      %6631 = vmatpush2.msra.mxu0 0.0
      %6632 = vmatprep.subr.mxu0 0.0
      %6633 = vmatpush2.msra.mxu0 0.0
      %6634 = vmatprep.subr.mxu0 0.0
      %6635 = vmatpush2.msra.mxu0 0.0
      %6636 = vmatprep.subr.mxu0 0.0
      %6637 = vmatpush2.msra.mxu0 0.0
      %6638 = vmatprep.subr.mxu0 0.0
      %6639 = vmatpush2.msra.mxu0 0.0
      %6640 = vmatprep.subr.mxu0 0.0
      %6641 = vmatpush2.msra.mxu0 0.0
      %6642 = vmatprep.subr.mxu0 0.0
      %6643 = vmatpush2.msra.mxu0 0.0
      %6644 = vmatprep.subr.mxu0 0.0
      %6645 = vmatpush2.msra.mxu0 0.0
      %6646 = vmatprep.subr.mxu0 0.0
      %6647 = vmatpush2.msra.mxu0 0.0
      %6648 = vmatprep.subr.mxu0 0.0
      %6649 = vmatpush2.msra.mxu0 0.0
      %6650 = vmatprep.subr.mxu0 0.0
      %6651 = vmatpush2.msra.mxu0 0.0
      %6652 = vmatprep.subr.mxu0 0.0
      %6653 = vmatpush2.msra.mxu0 0.0
      %6654 = vmatprep.subr.mxu0 0.0
      %6655 = vmatpush2.msra.mxu0 0.0
      %6656 = vmatprep.mubr.f32.mxu0 0.0
      %6657 = vmatmul.mubr.f32.gmra.mxu0 %v6590
      %v6658 = vpop.f32.mrf.mxu0
      %v6659 = vadd.f32 0.0, %v6658
      %v6660 = vpop.f32.mrf.mxu0
      %6661 = vdwg.mxu0
      %v6663 = vsel %vm603, %v505, 0
      %6665 = vmatprep.subr.mxu0 0.0
      %6666 = vmatpush1.msra.mxu0 0.0
      %6667 = vmatprep.subr.mxu0 0.0
      %6668 = vmatpush1.msra.mxu0 0.0
      %6669 = vmatprep.subr.mxu0 0.0
      %6670 = vmatpush1.msra.mxu0 0.0
      %6671 = vmatprep.subr.mxu0 0.0
      %6672 = vmatpush1.msra.mxu0 0.0
      %6673 = vmatprep.subr.mxu0 0.0
      %6674 = vmatpush1.msra.mxu0 0.0
      %6675 = vmatprep.subr.mxu0 0.0
      %6676 = vmatpush1.msra.mxu0 0.0
      %6677 = vmatprep.subr.mxu0 0.0
      %6678 = vmatpush1.msra.mxu0 0.0
      %6679 = vmatprep.subr.mxu0 0.0
      %6680 = vmatpush1.msra.mxu0 0.0
      %6681 = vmatprep.subr.mxu0 0.0
      %6682 = vmatpush1.msra.mxu0 0.0
      %6683 = vmatprep.subr.mxu0 0.0
      %6684 = vmatpush1.msra.mxu0 0.0
      %6685 = vmatprep.subr.mxu0 0.0
      %6686 = vmatpush1.msra.mxu0 0.0
      %6687 = vmatprep.subr.mxu0 0.0
      %6688 = vmatpush1.msra.mxu0 0.0
      %6689 = vmatprep.subr.mxu0 0.0
      %6690 = vmatpush1.msra.mxu0 0.0
      %6691 = vmatprep.subr.mxu0 0.0
      %6692 = vmatpush1.msra.mxu0 0.0
      %6693 = vmatprep.subr.mxu0 0.0
      %6694 = vmatpush1.msra.mxu0 0.0
      %6695 = vmatprep.subr.mxu0 0.0
      %6696 = vmatpush1.msra.mxu0 %v5906
      %6697 = vmatprep.subr.mxu0 0.0
      %6698 = vmatpush2.msra.mxu0 0.0
      %6699 = vmatprep.subr.mxu0 0.0
      %6700 = vmatpush2.msra.mxu0 0.0
      %6701 = vmatprep.subr.mxu0 0.0
      %6702 = vmatpush2.msra.mxu0 0.0
      %6703 = vmatprep.subr.mxu0 0.0
      %6704 = vmatpush2.msra.mxu0 0.0
      %6705 = vmatprep.subr.mxu0 0.0
      %6706 = vmatpush2.msra.mxu0 0.0
      %6707 = vmatprep.subr.mxu0 0.0
      %6708 = vmatpush2.msra.mxu0 0.0
      %6709 = vmatprep.subr.mxu0 0.0
      %6710 = vmatpush2.msra.mxu0 0.0
      %6711 = vmatprep.subr.mxu0 0.0
      %6712 = vmatpush2.msra.mxu0 0.0
      %6713 = vmatprep.subr.mxu0 0.0
      %6714 = vmatpush2.msra.mxu0 0.0
      %6715 = vmatprep.subr.mxu0 0.0
      %6716 = vmatpush2.msra.mxu0 0.0
      %6717 = vmatprep.subr.mxu0 0.0
      %6718 = vmatpush2.msra.mxu0 0.0
      %6719 = vmatprep.subr.mxu0 0.0
      %6720 = vmatpush2.msra.mxu0 0.0
      %6721 = vmatprep.subr.mxu0 0.0
      %6722 = vmatpush2.msra.mxu0 0.0
      %6723 = vmatprep.subr.mxu0 0.0
      %6724 = vmatpush2.msra.mxu0 0.0
      %6725 = vmatprep.subr.mxu0 0.0
      %6726 = vmatpush2.msra.mxu0 0.0
      %6727 = vmatprep.subr.mxu0 0.0
      %6728 = vmatpush2.msra.mxu0 0.0
      %6729 = vmatprep.mubr.f32.mxu0 0.0
      %6730 = vmatmul.mubr.f32.gmra.mxu0 %v6663
      %v6731 = vpop.f32.mrf.mxu0
      %v6732 = vadd.f32 0.0, %v6731
      %v6733 = vpop.f32.mrf.mxu0
      %6734 = vdwg.mxu0
      %v6736 = vsel %vm603, %v506, 0
      %6738 = vmatprep.subr.mxu0 0.0
      %6739 = vmatpush1.msra.mxu0 0.0
      %6740 = vmatprep.subr.mxu0 0.0
      %6741 = vmatpush1.msra.mxu0 0.0
      %6742 = vmatprep.subr.mxu0 0.0
      %6743 = vmatpush1.msra.mxu0 0.0
      %6744 = vmatprep.subr.mxu0 0.0
      %6745 = vmatpush1.msra.mxu0 0.0
      %6746 = vmatprep.subr.mxu0 0.0
      %6747 = vmatpush1.msra.mxu0 0.0
      %6748 = vmatprep.subr.mxu0 0.0
      %6749 = vmatpush1.msra.mxu0 0.0
      %6750 = vmatprep.subr.mxu0 0.0
      %6751 = vmatpush1.msra.mxu0 0.0
      %6752 = vmatprep.subr.mxu0 0.0
      %6753 = vmatpush1.msra.mxu0 0.0
      %6754 = vmatprep.subr.mxu0 0.0
      %6755 = vmatpush1.msra.mxu0 0.0
      %6756 = vmatprep.subr.mxu0 0.0
      %6757 = vmatpush1.msra.mxu0 0.0
      %6758 = vmatprep.subr.mxu0 0.0
      %6759 = vmatpush1.msra.mxu0 0.0
      %6760 = vmatprep.subr.mxu0 0.0
      %6761 = vmatpush1.msra.mxu0 0.0
      %6762 = vmatprep.subr.mxu0 0.0
      %6763 = vmatpush1.msra.mxu0 0.0
      %6764 = vmatprep.subr.mxu0 0.0
      %6765 = vmatpush1.msra.mxu0 0.0
      %6766 = vmatprep.subr.mxu0 0.0
      %6767 = vmatpush1.msra.mxu0 0.0
      %6768 = vmatprep.subr.mxu0 0.0
      %6769 = vmatpush1.msra.mxu0 %v5907
      %6770 = vmatprep.subr.mxu0 0.0
      %6771 = vmatpush2.msra.mxu0 0.0
      %6772 = vmatprep.subr.mxu0 0.0
      %6773 = vmatpush2.msra.mxu0 0.0
      %6774 = vmatprep.subr.mxu0 0.0
      %6775 = vmatpush2.msra.mxu0 0.0
      %6776 = vmatprep.subr.mxu0 0.0
      %6777 = vmatpush2.msra.mxu0 0.0
      %6778 = vmatprep.subr.mxu0 0.0
      %6779 = vmatpush2.msra.mxu0 0.0
      %6780 = vmatprep.subr.mxu0 0.0
      %6781 = vmatpush2.msra.mxu0 0.0
      %6782 = vmatprep.subr.mxu0 0.0
      %6783 = vmatpush2.msra.mxu0 0.0
      %6784 = vmatprep.subr.mxu0 0.0
      %6785 = vmatpush2.msra.mxu0 0.0
      %6786 = vmatprep.subr.mxu0 0.0
      %6787 = vmatpush2.msra.mxu0 0.0
      %6788 = vmatprep.subr.mxu0 0.0
      %6789 = vmatpush2.msra.mxu0 0.0
      %6790 = vmatprep.subr.mxu0 0.0
      %6791 = vmatpush2.msra.mxu0 0.0
      %6792 = vmatprep.subr.mxu0 0.0
      %6793 = vmatpush2.msra.mxu0 0.0
      %6794 = vmatprep.subr.mxu0 0.0
      %6795 = vmatpush2.msra.mxu0 0.0
      %6796 = vmatprep.subr.mxu0 0.0
      %6797 = vmatpush2.msra.mxu0 0.0
      %6798 = vmatprep.subr.mxu0 0.0
      %6799 = vmatpush2.msra.mxu0 0.0
      %6800 = vmatprep.subr.mxu0 0.0
      %6801 = vmatpush2.msra.mxu0 0.0
      %6802 = vmatprep.mubr.f32.mxu0 0.0
      %6803 = vmatmul.mubr.f32.gmra.mxu0 %v6736
      %v6804 = vpop.f32.mrf.mxu0
      %v6805 = vadd.f32 0.0, %v6804
      %v6806 = vpop.f32.mrf.mxu0
      %6807 = vdwg.mxu0
      %v6809 = vsel %vm603, %v507, 0
      %6811 = vmatprep.subr.mxu0 0.0
      %6812 = vmatpush1.msra.mxu0 0.0
      %6813 = vmatprep.subr.mxu0 0.0
      %6814 = vmatpush1.msra.mxu0 0.0
      %6815 = vmatprep.subr.mxu0 0.0
      %6816 = vmatpush1.msra.mxu0 0.0
      %6817 = vmatprep.subr.mxu0 0.0
      %6818 = vmatpush1.msra.mxu0 0.0
      %6819 = vmatprep.subr.mxu0 0.0
      %6820 = vmatpush1.msra.mxu0 0.0
      %6821 = vmatprep.subr.mxu0 0.0
      %6822 = vmatpush1.msra.mxu0 0.0
      %6823 = vmatprep.subr.mxu0 0.0
      %6824 = vmatpush1.msra.mxu0 0.0
      %6825 = vmatprep.subr.mxu0 0.0
      %6826 = vmatpush1.msra.mxu0 0.0
      %6827 = vmatprep.subr.mxu0 0.0
      %6828 = vmatpush1.msra.mxu0 0.0
      %6829 = vmatprep.subr.mxu0 0.0
      %6830 = vmatpush1.msra.mxu0 0.0
      %6831 = vmatprep.subr.mxu0 0.0
      %6832 = vmatpush1.msra.mxu0 0.0
      %6833 = vmatprep.subr.mxu0 0.0
      %6834 = vmatpush1.msra.mxu0 0.0
      %6835 = vmatprep.subr.mxu0 0.0
      %6836 = vmatpush1.msra.mxu0 0.0
      %6837 = vmatprep.subr.mxu0 0.0
      %6838 = vmatpush1.msra.mxu0 0.0
      %6839 = vmatprep.subr.mxu0 0.0
      %6840 = vmatpush1.msra.mxu0 0.0
      %6841 = vmatprep.subr.mxu0 0.0
      %6842 = vmatpush1.msra.mxu0 %v5908
      %6843 = vmatprep.subr.mxu0 0.0
      %6844 = vmatpush2.msra.mxu0 0.0
      %6845 = vmatprep.subr.mxu0 0.0
      %6846 = vmatpush2.msra.mxu0 0.0
      %6847 = vmatprep.subr.mxu0 0.0
      %6848 = vmatpush2.msra.mxu0 0.0
      %6849 = vmatprep.subr.mxu0 0.0
      %6850 = vmatpush2.msra.mxu0 0.0
      %6851 = vmatprep.subr.mxu0 0.0
      %6852 = vmatpush2.msra.mxu0 0.0
      %6853 = vmatprep.subr.mxu0 0.0
      %6854 = vmatpush2.msra.mxu0 0.0
      %6855 = vmatprep.subr.mxu0 0.0
      %6856 = vmatpush2.msra.mxu0 0.0
      %6857 = vmatprep.subr.mxu0 0.0
      %6858 = vmatpush2.msra.mxu0 0.0
      %6859 = vmatprep.subr.mxu0 0.0
      %6860 = vmatpush2.msra.mxu0 0.0
      %6861 = vmatprep.subr.mxu0 0.0
      %6862 = vmatpush2.msra.mxu0 0.0
      %6863 = vmatprep.subr.mxu0 0.0
      %6864 = vmatpush2.msra.mxu0 0.0
      %6865 = vmatprep.subr.mxu0 0.0
      %6866 = vmatpush2.msra.mxu0 0.0
      %6867 = vmatprep.subr.mxu0 0.0
      %6868 = vmatpush2.msra.mxu0 0.0
      %6869 = vmatprep.subr.mxu0 0.0
      %6870 = vmatpush2.msra.mxu0 0.0
      %6871 = vmatprep.subr.mxu0 0.0
      %6872 = vmatpush2.msra.mxu0 0.0
      %6873 = vmatprep.subr.mxu0 0.0
      %6874 = vmatpush2.msra.mxu0 0.0
      %6875 = vmatprep.mubr.f32.mxu0 0.0
      %6876 = vmatmul.mubr.f32.gmra.mxu0 %v6809
      %v6877 = vpop.f32.mrf.mxu0
      %v6878 = vadd.f32 0.0, %v6877
      %v6879 = vpop.f32.mrf.mxu0
      %6880 = vdwg.mxu0
      %v6882 = vsel %vm603, %v508, 0
      %6884 = vmatprep.subr.mxu0 0.0
      %6885 = vmatpush1.msra.mxu0 0.0
      %6886 = vmatprep.subr.mxu0 0.0
      %6887 = vmatpush1.msra.mxu0 0.0
      %6888 = vmatprep.subr.mxu0 0.0
      %6889 = vmatpush1.msra.mxu0 0.0
      %6890 = vmatprep.subr.mxu0 0.0
      %6891 = vmatpush1.msra.mxu0 0.0
      %6892 = vmatprep.subr.mxu0 0.0
      %6893 = vmatpush1.msra.mxu0 0.0
      %6894 = vmatprep.subr.mxu0 0.0
      %6895 = vmatpush1.msra.mxu0 0.0
      %6896 = vmatprep.subr.mxu0 0.0
      %6897 = vmatpush1.msra.mxu0 0.0
      %6898 = vmatprep.subr.mxu0 0.0
      %6899 = vmatpush1.msra.mxu0 0.0
      %6900 = vmatprep.subr.mxu0 0.0
      %6901 = vmatpush1.msra.mxu0 0.0
      %6902 = vmatprep.subr.mxu0 0.0
      %6903 = vmatpush1.msra.mxu0 0.0
      %6904 = vmatprep.subr.mxu0 0.0
      %6905 = vmatpush1.msra.mxu0 0.0
      %6906 = vmatprep.subr.mxu0 0.0
      %6907 = vmatpush1.msra.mxu0 0.0
      %6908 = vmatprep.subr.mxu0 0.0
      %6909 = vmatpush1.msra.mxu0 0.0
      %6910 = vmatprep.subr.mxu0 0.0
      %6911 = vmatpush1.msra.mxu0 0.0
      %6912 = vmatprep.subr.mxu0 0.0
      %6913 = vmatpush1.msra.mxu0 0.0
      %6914 = vmatprep.subr.mxu0 0.0
      %6915 = vmatpush1.msra.mxu0 %v5909
      %6916 = vmatprep.subr.mxu0 0.0
      %6917 = vmatpush2.msra.mxu0 0.0
      %6918 = vmatprep.subr.mxu0 0.0
      %6919 = vmatpush2.msra.mxu0 0.0
      %6920 = vmatprep.subr.mxu0 0.0
      %6921 = vmatpush2.msra.mxu0 0.0
      %6922 = vmatprep.subr.mxu0 0.0
      %6923 = vmatpush2.msra.mxu0 0.0
      %6924 = vmatprep.subr.mxu0 0.0
      %6925 = vmatpush2.msra.mxu0 0.0
      %6926 = vmatprep.subr.mxu0 0.0
      %6927 = vmatpush2.msra.mxu0 0.0
      %6928 = vmatprep.subr.mxu0 0.0
      %6929 = vmatpush2.msra.mxu0 0.0
      %6930 = vmatprep.subr.mxu0 0.0
      %6931 = vmatpush2.msra.mxu0 0.0
      %6932 = vmatprep.subr.mxu0 0.0
      %6933 = vmatpush2.msra.mxu0 0.0
      %6934 = vmatprep.subr.mxu0 0.0
      %6935 = vmatpush2.msra.mxu0 0.0
      %6936 = vmatprep.subr.mxu0 0.0
      %6937 = vmatpush2.msra.mxu0 0.0
      %6938 = vmatprep.subr.mxu0 0.0
      %6939 = vmatpush2.msra.mxu0 0.0
      %6940 = vmatprep.subr.mxu0 0.0
      %6941 = vmatpush2.msra.mxu0 0.0
      %6942 = vmatprep.subr.mxu0 0.0
      %6943 = vmatpush2.msra.mxu0 0.0
      %6944 = vmatprep.subr.mxu0 0.0
      %6945 = vmatpush2.msra.mxu0 0.0
      %6946 = vmatprep.subr.mxu0 0.0
      %6947 = vmatpush2.msra.mxu0 0.0
      %6948 = vmatprep.mubr.f32.mxu0 0.0
      %6949 = vmatmul.mubr.f32.gmra.mxu0 %v6882
      %v6950 = vpop.f32.mrf.mxu0
      %v6951 = vadd.f32 0.0, %v6950
      %v6952 = vpop.f32.mrf.mxu0
      %6953 = vdwg.mxu0
      %v6955 = vsel %vm603, %v509, 0
      %6957 = vmatprep.subr.mxu0 0.0
      %6958 = vmatpush1.msra.mxu0 0.0
      %6959 = vmatprep.subr.mxu0 0.0
      %6960 = vmatpush1.msra.mxu0 0.0
      %6961 = vmatprep.subr.mxu0 0.0
      %6962 = vmatpush1.msra.mxu0 0.0
      %6963 = vmatprep.subr.mxu0 0.0
      %6964 = vmatpush1.msra.mxu0 0.0
      %6965 = vmatprep.subr.mxu0 0.0
      %6966 = vmatpush1.msra.mxu0 0.0
      %6967 = vmatprep.subr.mxu0 0.0
      %6968 = vmatpush1.msra.mxu0 0.0
      %6969 = vmatprep.subr.mxu0 0.0
      %6970 = vmatpush1.msra.mxu0 0.0
      %6971 = vmatprep.subr.mxu0 0.0
      %6972 = vmatpush1.msra.mxu0 0.0
      %6973 = vmatprep.subr.mxu0 0.0
      %6974 = vmatpush1.msra.mxu0 0.0
      %6975 = vmatprep.subr.mxu0 0.0
      %6976 = vmatpush1.msra.mxu0 0.0
      %6977 = vmatprep.subr.mxu0 0.0
      %6978 = vmatpush1.msra.mxu0 0.0
      %6979 = vmatprep.subr.mxu0 0.0
      %6980 = vmatpush1.msra.mxu0 0.0
      %6981 = vmatprep.subr.mxu0 0.0
      %6982 = vmatpush1.msra.mxu0 0.0
      %6983 = vmatprep.subr.mxu0 0.0
      %6984 = vmatpush1.msra.mxu0 0.0
      %6985 = vmatprep.subr.mxu0 0.0
      %6986 = vmatpush1.msra.mxu0 0.0
      %6987 = vmatprep.subr.mxu0 0.0
      %6988 = vmatpush1.msra.mxu0 %v5910
      %6989 = vmatprep.subr.mxu0 0.0
      %6990 = vmatpush2.msra.mxu0 0.0
      %6991 = vmatprep.subr.mxu0 0.0
      %6992 = vmatpush2.msra.mxu0 0.0
      %6993 = vmatprep.subr.mxu0 0.0
      %6994 = vmatpush2.msra.mxu0 0.0
      %6995 = vmatprep.subr.mxu0 0.0
      %6996 = vmatpush2.msra.mxu0 0.0
      %6997 = vmatprep.subr.mxu0 0.0
      %6998 = vmatpush2.msra.mxu0 0.0
      %6999 = vmatprep.subr.mxu0 0.0
      %7000 = vmatpush2.msra.mxu0 0.0
      %7001 = vmatprep.subr.mxu0 0.0
      %7002 = vmatpush2.msra.mxu0 0.0
      %7003 = vmatprep.subr.mxu0 0.0
      %7004 = vmatpush2.msra.mxu0 0.0
      %7005 = vmatprep.subr.mxu0 0.0
      %7006 = vmatpush2.msra.mxu0 0.0
      %7007 = vmatprep.subr.mxu0 0.0
      %7008 = vmatpush2.msra.mxu0 0.0
      %7009 = vmatprep.subr.mxu0 0.0
      %7010 = vmatpush2.msra.mxu0 0.0
      %7011 = vmatprep.subr.mxu0 0.0
      %7012 = vmatpush2.msra.mxu0 0.0
      %7013 = vmatprep.subr.mxu0 0.0
      %7014 = vmatpush2.msra.mxu0 0.0
      %7015 = vmatprep.subr.mxu0 0.0
      %7016 = vmatpush2.msra.mxu0 0.0
      %7017 = vmatprep.subr.mxu0 0.0
      %7018 = vmatpush2.msra.mxu0 0.0
      %7019 = vmatprep.subr.mxu0 0.0
      %7020 = vmatpush2.msra.mxu0 0.0
      %7021 = vmatprep.mubr.f32.mxu0 0.0
      %7022 = vmatmul.mubr.f32.gmra.mxu0 %v6955
      %v7023 = vpop.f32.mrf.mxu0
      %v7024 = vadd.f32 0.0, %v7023
      %v7025 = vpop.f32.mrf.mxu0
      %7026 = vdwg.mxu0
      %v7028 = vsel %vm603, %v510, 0
      %7030 = vmatprep.subr.mxu0 0.0
      %7031 = vmatpush1.msra.mxu0 0.0
      %7032 = vmatprep.subr.mxu0 0.0
      %7033 = vmatpush1.msra.mxu0 0.0
      %7034 = vmatprep.subr.mxu0 0.0
      %7035 = vmatpush1.msra.mxu0 0.0
      %7036 = vmatprep.subr.mxu0 0.0
      %7037 = vmatpush1.msra.mxu0 0.0
      %7038 = vmatprep.subr.mxu0 0.0
      %7039 = vmatpush1.msra.mxu0 0.0
      %7040 = vmatprep.subr.mxu0 0.0
      %7041 = vmatpush1.msra.mxu0 0.0
      %7042 = vmatprep.subr.mxu0 0.0
      %7043 = vmatpush1.msra.mxu0 0.0
      %7044 = vmatprep.subr.mxu0 0.0
      %7045 = vmatpush1.msra.mxu0 0.0
      %7046 = vmatprep.subr.mxu0 0.0
      %7047 = vmatpush1.msra.mxu0 0.0
      %7048 = vmatprep.subr.mxu0 0.0
      %7049 = vmatpush1.msra.mxu0 0.0
      %7050 = vmatprep.subr.mxu0 0.0
      %7051 = vmatpush1.msra.mxu0 0.0
      %7052 = vmatprep.subr.mxu0 0.0
      %7053 = vmatpush1.msra.mxu0 0.0
      %7054 = vmatprep.subr.mxu0 0.0
      %7055 = vmatpush1.msra.mxu0 0.0
      %7056 = vmatprep.subr.mxu0 0.0
      %7057 = vmatpush1.msra.mxu0 0.0
      %7058 = vmatprep.subr.mxu0 0.0
      %7059 = vmatpush1.msra.mxu0 0.0
      %7060 = vmatprep.subr.mxu0 0.0
      %7061 = vmatpush1.msra.mxu0 %v5911
      %7062 = vmatprep.subr.mxu0 0.0
      %7063 = vmatpush2.msra.mxu0 0.0
      %7064 = vmatprep.subr.mxu0 0.0
      %7065 = vmatpush2.msra.mxu0 0.0
      %7066 = vmatprep.subr.mxu0 0.0
      %7067 = vmatpush2.msra.mxu0 0.0
      %7068 = vmatprep.subr.mxu0 0.0
      %7069 = vmatpush2.msra.mxu0 0.0
      %7070 = vmatprep.subr.mxu0 0.0
      %7071 = vmatpush2.msra.mxu0 0.0
      %7072 = vmatprep.subr.mxu0 0.0
      %7073 = vmatpush2.msra.mxu0 0.0
      %7074 = vmatprep.subr.mxu0 0.0
      %7075 = vmatpush2.msra.mxu0 0.0
      %7076 = vmatprep.subr.mxu0 0.0
      %7077 = vmatpush2.msra.mxu0 0.0
      %7078 = vmatprep.subr.mxu0 0.0
      %7079 = vmatpush2.msra.mxu0 0.0
      %7080 = vmatprep.subr.mxu0 0.0
      %7081 = vmatpush2.msra.mxu0 0.0
      %7082 = vmatprep.subr.mxu0 0.0
      %7083 = vmatpush2.msra.mxu0 0.0
      %7084 = vmatprep.subr.mxu0 0.0
      %7085 = vmatpush2.msra.mxu0 0.0
      %7086 = vmatprep.subr.mxu0 0.0
      %7087 = vmatpush2.msra.mxu0 0.0
      %7088 = vmatprep.subr.mxu0 0.0
      %7089 = vmatpush2.msra.mxu0 0.0
      %7090 = vmatprep.subr.mxu0 0.0
      %7091 = vmatpush2.msra.mxu0 0.0
      %7092 = vmatprep.subr.mxu0 0.0
      %7093 = vmatpush2.msra.mxu0 0.0
      %7094 = vmatprep.mubr.f32.mxu0 0.0
      %7095 = vmatmul.mubr.f32.gmra.mxu0 %v7028
      %v7096 = vpop.f32.mrf.mxu0
      %v7097 = vadd.f32 0.0, %v7096
      %v7098 = vpop.f32.mrf.mxu0
      %7099 = vdwg.mxu0
      %v7101 = vsel %vm603, %v511, 0
      %7103 = vmatprep.subr.mxu0 0.0
      %7104 = vmatpush1.msra.mxu0 0.0
      %7105 = vmatprep.subr.mxu0 0.0
      %7106 = vmatpush1.msra.mxu0 0.0
      %7107 = vmatprep.subr.mxu0 0.0
      %7108 = vmatpush1.msra.mxu0 0.0
      %7109 = vmatprep.subr.mxu0 0.0
      %7110 = vmatpush1.msra.mxu0 0.0
      %7111 = vmatprep.subr.mxu0 0.0
      %7112 = vmatpush1.msra.mxu0 0.0
      %7113 = vmatprep.subr.mxu0 0.0
      %7114 = vmatpush1.msra.mxu0 0.0
      %7115 = vmatprep.subr.mxu0 0.0
      %7116 = vmatpush1.msra.mxu0 0.0
      %7117 = vmatprep.subr.mxu0 0.0
      %7118 = vmatpush1.msra.mxu0 0.0
      %7119 = vmatprep.subr.mxu0 0.0
      %7120 = vmatpush1.msra.mxu0 0.0
      %7121 = vmatprep.subr.mxu0 0.0
      %7122 = vmatpush1.msra.mxu0 0.0
      %7123 = vmatprep.subr.mxu0 0.0
      %7124 = vmatpush1.msra.mxu0 0.0
      %7125 = vmatprep.subr.mxu0 0.0
      %7126 = vmatpush1.msra.mxu0 0.0
      %7127 = vmatprep.subr.mxu0 0.0
      %7128 = vmatpush1.msra.mxu0 0.0
      %7129 = vmatprep.subr.mxu0 0.0
      %7130 = vmatpush1.msra.mxu0 0.0
      %7131 = vmatprep.subr.mxu0 0.0
      %7132 = vmatpush1.msra.mxu0 0.0
      %7133 = vmatprep.subr.mxu0 0.0
      %7134 = vmatpush1.msra.mxu0 %v5912
      %7135 = vmatprep.subr.mxu0 0.0
      %7136 = vmatpush2.msra.mxu0 0.0
      %7137 = vmatprep.subr.mxu0 0.0
      %7138 = vmatpush2.msra.mxu0 0.0
      %7139 = vmatprep.subr.mxu0 0.0
      %7140 = vmatpush2.msra.mxu0 0.0
      %7141 = vmatprep.subr.mxu0 0.0
      %7142 = vmatpush2.msra.mxu0 0.0
      %7143 = vmatprep.subr.mxu0 0.0
      %7144 = vmatpush2.msra.mxu0 0.0
      %7145 = vmatprep.subr.mxu0 0.0
      %7146 = vmatpush2.msra.mxu0 0.0
      %7147 = vmatprep.subr.mxu0 0.0
      %7148 = vmatpush2.msra.mxu0 0.0
      %7149 = vmatprep.subr.mxu0 0.0
      %7150 = vmatpush2.msra.mxu0 0.0
      %7151 = vmatprep.subr.mxu0 0.0
      %7152 = vmatpush2.msra.mxu0 0.0
      %7153 = vmatprep.subr.mxu0 0.0
      %7154 = vmatpush2.msra.mxu0 0.0
      %7155 = vmatprep.subr.mxu0 0.0
      %7156 = vmatpush2.msra.mxu0 0.0
      %7157 = vmatprep.subr.mxu0 0.0
      %7158 = vmatpush2.msra.mxu0 0.0
      %7159 = vmatprep.subr.mxu0 0.0
      %7160 = vmatpush2.msra.mxu0 0.0
      %7161 = vmatprep.subr.mxu0 0.0
      %7162 = vmatpush2.msra.mxu0 0.0
      %7163 = vmatprep.subr.mxu0 0.0
      %7164 = vmatpush2.msra.mxu0 0.0
      %7165 = vmatprep.subr.mxu0 0.0
      %7166 = vmatpush2.msra.mxu0 0.0
      %7167 = vmatprep.mubr.f32.mxu0 0.0
      %7168 = vmatmul.mubr.f32.gmra.mxu0 %v7101
      %v7169 = vpop.f32.mrf.mxu0
      %v7170 = vadd.f32 0.0, %v7169
      %v7171 = vpop.f32.mrf.mxu0
      %7172 = vdwg.mxu0
      %v7174 = vsel %vm603, %v512, 0
      %7176 = vmatprep.subr.mxu0 0.0
      %7177 = vmatpush1.msra.mxu0 0.0
      %7178 = vmatprep.subr.mxu0 0.0
      %7179 = vmatpush1.msra.mxu0 0.0
      %7180 = vmatprep.subr.mxu0 0.0
      %7181 = vmatpush1.msra.mxu0 0.0
      %7182 = vmatprep.subr.mxu0 0.0
      %7183 = vmatpush1.msra.mxu0 0.0
      %7184 = vmatprep.subr.mxu0 0.0
      %7185 = vmatpush1.msra.mxu0 0.0
      %7186 = vmatprep.subr.mxu0 0.0
      %7187 = vmatpush1.msra.mxu0 0.0
      %7188 = vmatprep.subr.mxu0 0.0
      %7189 = vmatpush1.msra.mxu0 0.0
      %7190 = vmatprep.subr.mxu0 0.0
      %7191 = vmatpush1.msra.mxu0 0.0
      %7192 = vmatprep.subr.mxu0 0.0
      %7193 = vmatpush1.msra.mxu0 0.0
      %7194 = vmatprep.subr.mxu0 0.0
      %7195 = vmatpush1.msra.mxu0 0.0
      %7196 = vmatprep.subr.mxu0 0.0
      %7197 = vmatpush1.msra.mxu0 0.0
      %7198 = vmatprep.subr.mxu0 0.0
      %7199 = vmatpush1.msra.mxu0 0.0
      %7200 = vmatprep.subr.mxu0 0.0
      %7201 = vmatpush1.msra.mxu0 0.0
      %7202 = vmatprep.subr.mxu0 0.0
      %7203 = vmatpush1.msra.mxu0 0.0
      %7204 = vmatprep.subr.mxu0 0.0
      %7205 = vmatpush1.msra.mxu0 0.0
      %7206 = vmatprep.subr.mxu0 0.0
      %7207 = vmatpush1.msra.mxu0 %v5913
      %7208 = vmatprep.subr.mxu0 0.0
      %7209 = vmatpush2.msra.mxu0 0.0
      %7210 = vmatprep.subr.mxu0 0.0
      %7211 = vmatpush2.msra.mxu0 0.0
      %7212 = vmatprep.subr.mxu0 0.0
      %7213 = vmatpush2.msra.mxu0 0.0
      %7214 = vmatprep.subr.mxu0 0.0
      %7215 = vmatpush2.msra.mxu0 0.0
      %7216 = vmatprep.subr.mxu0 0.0
      %7217 = vmatpush2.msra.mxu0 0.0
      %7218 = vmatprep.subr.mxu0 0.0
      %7219 = vmatpush2.msra.mxu0 0.0
      %7220 = vmatprep.subr.mxu0 0.0
      %7221 = vmatpush2.msra.mxu0 0.0
      %7222 = vmatprep.subr.mxu0 0.0
      %7223 = vmatpush2.msra.mxu0 0.0
      %7224 = vmatprep.subr.mxu0 0.0
      %7225 = vmatpush2.msra.mxu0 0.0
      %7226 = vmatprep.subr.mxu0 0.0
      %7227 = vmatpush2.msra.mxu0 0.0
      %7228 = vmatprep.subr.mxu0 0.0
      %7229 = vmatpush2.msra.mxu0 0.0
      %7230 = vmatprep.subr.mxu0 0.0
      %7231 = vmatpush2.msra.mxu0 0.0
      %7232 = vmatprep.subr.mxu0 0.0
      %7233 = vmatpush2.msra.mxu0 0.0
      %7234 = vmatprep.subr.mxu0 0.0
      %7235 = vmatpush2.msra.mxu0 0.0
      %7236 = vmatprep.subr.mxu0 0.0
      %7237 = vmatpush2.msra.mxu0 0.0
      %7238 = vmatprep.subr.mxu0 0.0
      %7239 = vmatpush2.msra.mxu0 0.0
      %7240 = vmatprep.mubr.f32.mxu0 0.0
      %7241 = vmatmul.mubr.f32.gmra.mxu0 %v7174
      %v7242 = vpop.f32.mrf.mxu0
      %v7243 = vadd.f32 0.0, %v7242
      %v7244 = vpop.f32.mrf.mxu0
      %7245 = vdwg.mxu0
      %v7247 = vsel %vm603, %v513, 0
      %7249 = vmatprep.subr.mxu0 0.0
      %7250 = vmatpush1.msra.mxu0 0.0
      %7251 = vmatprep.subr.mxu0 0.0
      %7252 = vmatpush1.msra.mxu0 0.0
      %7253 = vmatprep.subr.mxu0 0.0
      %7254 = vmatpush1.msra.mxu0 0.0
      %7255 = vmatprep.subr.mxu0 0.0
      %7256 = vmatpush1.msra.mxu0 0.0
      %7257 = vmatprep.subr.mxu0 0.0
      %7258 = vmatpush1.msra.mxu0 0.0
      %7259 = vmatprep.subr.mxu0 0.0
      %7260 = vmatpush1.msra.mxu0 0.0
      %7261 = vmatprep.subr.mxu0 0.0
      %7262 = vmatpush1.msra.mxu0 0.0
      %7263 = vmatprep.subr.mxu0 0.0
      %7264 = vmatpush1.msra.mxu0 0.0
      %7265 = vmatprep.subr.mxu0 0.0
      %7266 = vmatpush1.msra.mxu0 0.0
      %7267 = vmatprep.subr.mxu0 0.0
      %7268 = vmatpush1.msra.mxu0 0.0
      %7269 = vmatprep.subr.mxu0 0.0
      %7270 = vmatpush1.msra.mxu0 0.0
      %7271 = vmatprep.subr.mxu0 0.0
      %7272 = vmatpush1.msra.mxu0 0.0
      %7273 = vmatprep.subr.mxu0 0.0
      %7274 = vmatpush1.msra.mxu0 0.0
      %7275 = vmatprep.subr.mxu0 0.0
      %7276 = vmatpush1.msra.mxu0 0.0
      %7277 = vmatprep.subr.mxu0 0.0
      %7278 = vmatpush1.msra.mxu0 0.0
      %7279 = vmatprep.subr.mxu0 0.0
      %7280 = vmatpush1.msra.mxu0 %v5914
      %7281 = vmatprep.subr.mxu0 0.0
      %7282 = vmatpush2.msra.mxu0 0.0
      %7283 = vmatprep.subr.mxu0 0.0
      %7284 = vmatpush2.msra.mxu0 0.0
      %7285 = vmatprep.subr.mxu0 0.0
      %7286 = vmatpush2.msra.mxu0 0.0
      %7287 = vmatprep.subr.mxu0 0.0
      %7288 = vmatpush2.msra.mxu0 0.0
      %7289 = vmatprep.subr.mxu0 0.0
      %7290 = vmatpush2.msra.mxu0 0.0
      %7291 = vmatprep.subr.mxu0 0.0
      %7292 = vmatpush2.msra.mxu0 0.0
      %7293 = vmatprep.subr.mxu0 0.0
      %7294 = vmatpush2.msra.mxu0 0.0
      %7295 = vmatprep.subr.mxu0 0.0
      %7296 = vmatpush2.msra.mxu0 0.0
      %7297 = vmatprep.subr.mxu0 0.0
      %7298 = vmatpush2.msra.mxu0 0.0
      %7299 = vmatprep.subr.mxu0 0.0
      %7300 = vmatpush2.msra.mxu0 0.0
      %7301 = vmatprep.subr.mxu0 0.0
      %7302 = vmatpush2.msra.mxu0 0.0
      %7303 = vmatprep.subr.mxu0 0.0
      %7304 = vmatpush2.msra.mxu0 0.0
      %7305 = vmatprep.subr.mxu0 0.0
      %7306 = vmatpush2.msra.mxu0 0.0
      %7307 = vmatprep.subr.mxu0 0.0
      %7308 = vmatpush2.msra.mxu0 0.0
      %7309 = vmatprep.subr.mxu0 0.0
      %7310 = vmatpush2.msra.mxu0 0.0
      %7311 = vmatprep.subr.mxu0 0.0
      %7312 = vmatpush2.msra.mxu0 0.0
      %7313 = vmatprep.mubr.f32.mxu0 0.0
      %7314 = vmatmul.mubr.f32.gmra.mxu0 %v7247
      %v7315 = vpop.f32.mrf.mxu0
      %v7316 = vadd.f32 0.0, %v7315
      %v7317 = vpop.f32.mrf.mxu0
      %7318 = vdwg.mxu0
      %v7320 = vsel %vm603, %v514, 0
      %7322 = vmatprep.subr.mxu0 0.0
      %7323 = vmatpush1.msra.mxu0 0.0
      %7324 = vmatprep.subr.mxu0 0.0
      %7325 = vmatpush1.msra.mxu0 0.0
      %7326 = vmatprep.subr.mxu0 0.0
      %7327 = vmatpush1.msra.mxu0 0.0
      %7328 = vmatprep.subr.mxu0 0.0
      %7329 = vmatpush1.msra.mxu0 0.0
      %7330 = vmatprep.subr.mxu0 0.0
      %7331 = vmatpush1.msra.mxu0 0.0
      %7332 = vmatprep.subr.mxu0 0.0
      %7333 = vmatpush1.msra.mxu0 0.0
      %7334 = vmatprep.subr.mxu0 0.0
      %7335 = vmatpush1.msra.mxu0 0.0
      %7336 = vmatprep.subr.mxu0 0.0
      %7337 = vmatpush1.msra.mxu0 0.0
      %7338 = vmatprep.subr.mxu0 0.0
      %7339 = vmatpush1.msra.mxu0 0.0
      %7340 = vmatprep.subr.mxu0 0.0
      %7341 = vmatpush1.msra.mxu0 0.0
      %7342 = vmatprep.subr.mxu0 0.0
      %7343 = vmatpush1.msra.mxu0 0.0
      %7344 = vmatprep.subr.mxu0 0.0
      %7345 = vmatpush1.msra.mxu0 0.0
      %7346 = vmatprep.subr.mxu0 0.0
      %7347 = vmatpush1.msra.mxu0 0.0
      %7348 = vmatprep.subr.mxu0 0.0
      %7349 = vmatpush1.msra.mxu0 0.0
      %7350 = vmatprep.subr.mxu0 0.0
      %7351 = vmatpush1.msra.mxu0 0.0
      %7352 = vmatprep.subr.mxu0 0.0
      %7353 = vmatpush1.msra.mxu0 %v5915
      %7354 = vmatprep.subr.mxu0 0.0
      %7355 = vmatpush2.msra.mxu0 0.0
      %7356 = vmatprep.subr.mxu0 0.0
      %7357 = vmatpush2.msra.mxu0 0.0
      %7358 = vmatprep.subr.mxu0 0.0
      %7359 = vmatpush2.msra.mxu0 0.0
      %7360 = vmatprep.subr.mxu0 0.0
      %7361 = vmatpush2.msra.mxu0 0.0
      %7362 = vmatprep.subr.mxu0 0.0
      %7363 = vmatpush2.msra.mxu0 0.0
      %7364 = vmatprep.subr.mxu0 0.0
      %7365 = vmatpush2.msra.mxu0 0.0
      %7366 = vmatprep.subr.mxu0 0.0
      %7367 = vmatpush2.msra.mxu0 0.0
      %7368 = vmatprep.subr.mxu0 0.0
      %7369 = vmatpush2.msra.mxu0 0.0
      %7370 = vmatprep.subr.mxu0 0.0
      %7371 = vmatpush2.msra.mxu0 0.0
      %7372 = vmatprep.subr.mxu0 0.0
      %7373 = vmatpush2.msra.mxu0 0.0
      %7374 = vmatprep.subr.mxu0 0.0
      %7375 = vmatpush2.msra.mxu0 0.0
      %7376 = vmatprep.subr.mxu0 0.0
      %7377 = vmatpush2.msra.mxu0 0.0
      %7378 = vmatprep.subr.mxu0 0.0
      %7379 = vmatpush2.msra.mxu0 0.0
      %7380 = vmatprep.subr.mxu0 0.0
      %7381 = vmatpush2.msra.mxu0 0.0
      %7382 = vmatprep.subr.mxu0 0.0
      %7383 = vmatpush2.msra.mxu0 0.0
      %7384 = vmatprep.subr.mxu0 0.0
      %7385 = vmatpush2.msra.mxu0 0.0
      %7386 = vmatprep.mubr.f32.mxu0 0.0
      %7387 = vmatmul.mubr.f32.gmra.mxu0 %v7320
      %v7388 = vpop.f32.mrf.mxu0
      %v7389 = vadd.f32 0.0, %v7388
      %v7390 = vpop.f32.mrf.mxu0
      %7391 = vdwg.mxu0
      %v7393 = vsel %vm603, %v515, 0
      %7395 = vmatprep.subr.mxu0 0.0
      %7396 = vmatpush1.msra.mxu0 0.0
      %7397 = vmatprep.subr.mxu0 0.0
      %7398 = vmatpush1.msra.mxu0 0.0
      %7399 = vmatprep.subr.mxu0 0.0
      %7400 = vmatpush1.msra.mxu0 0.0
      %7401 = vmatprep.subr.mxu0 0.0
      %7402 = vmatpush1.msra.mxu0 0.0
      %7403 = vmatprep.subr.mxu0 0.0
      %7404 = vmatpush1.msra.mxu0 0.0
      %7405 = vmatprep.subr.mxu0 0.0
      %7406 = vmatpush1.msra.mxu0 0.0
      %7407 = vmatprep.subr.mxu0 0.0
      %7408 = vmatpush1.msra.mxu0 0.0
      %7409 = vmatprep.subr.mxu0 0.0
      %7410 = vmatpush1.msra.mxu0 0.0
      %7411 = vmatprep.subr.mxu0 0.0
      %7412 = vmatpush1.msra.mxu0 0.0
      %7413 = vmatprep.subr.mxu0 0.0
      %7414 = vmatpush1.msra.mxu0 0.0
      %7415 = vmatprep.subr.mxu0 0.0
      %7416 = vmatpush1.msra.mxu0 0.0
      %7417 = vmatprep.subr.mxu0 0.0
      %7418 = vmatpush1.msra.mxu0 0.0
      %7419 = vmatprep.subr.mxu0 0.0
      %7420 = vmatpush1.msra.mxu0 0.0
      %7421 = vmatprep.subr.mxu0 0.0
      %7422 = vmatpush1.msra.mxu0 0.0
      %7423 = vmatprep.subr.mxu0 0.0
      %7424 = vmatpush1.msra.mxu0 0.0
      %7425 = vmatprep.subr.mxu0 0.0
      %7426 = vmatpush1.msra.mxu0 %v5916
      %7427 = vmatprep.subr.mxu0 0.0
      %7428 = vmatpush2.msra.mxu0 0.0
      %7429 = vmatprep.subr.mxu0 0.0
      %7430 = vmatpush2.msra.mxu0 0.0
      %7431 = vmatprep.subr.mxu0 0.0
      %7432 = vmatpush2.msra.mxu0 0.0
      %7433 = vmatprep.subr.mxu0 0.0
      %7434 = vmatpush2.msra.mxu0 0.0
      %7435 = vmatprep.subr.mxu0 0.0
      %7436 = vmatpush2.msra.mxu0 0.0
      %7437 = vmatprep.subr.mxu0 0.0
      %7438 = vmatpush2.msra.mxu0 0.0
      %7439 = vmatprep.subr.mxu0 0.0
      %7440 = vmatpush2.msra.mxu0 0.0
      %7441 = vmatprep.subr.mxu0 0.0
      %7442 = vmatpush2.msra.mxu0 0.0
      %7443 = vmatprep.subr.mxu0 0.0
      %7444 = vmatpush2.msra.mxu0 0.0
      %7445 = vmatprep.subr.mxu0 0.0
      %7446 = vmatpush2.msra.mxu0 0.0
      %7447 = vmatprep.subr.mxu0 0.0
      %7448 = vmatpush2.msra.mxu0 0.0
      %7449 = vmatprep.subr.mxu0 0.0
      %7450 = vmatpush2.msra.mxu0 0.0
      %7451 = vmatprep.subr.mxu0 0.0
      %7452 = vmatpush2.msra.mxu0 0.0
      %7453 = vmatprep.subr.mxu0 0.0
      %7454 = vmatpush2.msra.mxu0 0.0
      %7455 = vmatprep.subr.mxu0 0.0
      %7456 = vmatpush2.msra.mxu0 0.0
      %7457 = vmatprep.subr.mxu0 0.0
      %7458 = vmatpush2.msra.mxu0 0.0
      %7459 = vmatprep.mubr.f32.mxu0 0.0
      %7460 = vmatmul.mubr.f32.gmra.mxu0 %v7393
      %v7461 = vpop.f32.mrf.mxu0
      %v7462 = vadd.f32 0.0, %v7461
      %v7463 = vpop.f32.mrf.mxu0
      %7464 = vdwg.mxu0
      %v7466 = vsel %vm603, %v516, 0
      %7468 = vmatprep.subr.mxu0 0.0
      %7469 = vmatpush1.msra.mxu0 0.0
      %7470 = vmatprep.subr.mxu0 0.0
      %7471 = vmatpush1.msra.mxu0 0.0
      %7472 = vmatprep.subr.mxu0 0.0
      %7473 = vmatpush1.msra.mxu0 0.0
      %7474 = vmatprep.subr.mxu0 0.0
      %7475 = vmatpush1.msra.mxu0 0.0
      %7476 = vmatprep.subr.mxu0 0.0
      %7477 = vmatpush1.msra.mxu0 0.0
      %7478 = vmatprep.subr.mxu0 0.0
      %7479 = vmatpush1.msra.mxu0 0.0
      %7480 = vmatprep.subr.mxu0 0.0
      %7481 = vmatpush1.msra.mxu0 0.0
      %7482 = vmatprep.subr.mxu0 0.0
      %7483 = vmatpush1.msra.mxu0 0.0
      %7484 = vmatprep.subr.mxu0 0.0
      %7485 = vmatpush1.msra.mxu0 0.0
      %7486 = vmatprep.subr.mxu0 0.0
      %7487 = vmatpush1.msra.mxu0 0.0
      %7488 = vmatprep.subr.mxu0 0.0
      %7489 = vmatpush1.msra.mxu0 0.0
      %7490 = vmatprep.subr.mxu0 0.0
      %7491 = vmatpush1.msra.mxu0 0.0
      %7492 = vmatprep.subr.mxu0 0.0
      %7493 = vmatpush1.msra.mxu0 0.0
      %7494 = vmatprep.subr.mxu0 0.0
      %7495 = vmatpush1.msra.mxu0 0.0
      %7496 = vmatprep.subr.mxu0 0.0
      %7497 = vmatpush1.msra.mxu0 0.0
      %7498 = vmatprep.subr.mxu0 0.0
      %7499 = vmatpush1.msra.mxu0 %v5917
      %7500 = vmatprep.subr.mxu0 0.0
      %7501 = vmatpush2.msra.mxu0 0.0
      %7502 = vmatprep.subr.mxu0 0.0
      %7503 = vmatpush2.msra.mxu0 0.0
      %7504 = vmatprep.subr.mxu0 0.0
      %7505 = vmatpush2.msra.mxu0 0.0
      %7506 = vmatprep.subr.mxu0 0.0
      %7507 = vmatpush2.msra.mxu0 0.0
      %7508 = vmatprep.subr.mxu0 0.0
      %7509 = vmatpush2.msra.mxu0 0.0
      %7510 = vmatprep.subr.mxu0 0.0
      %7511 = vmatpush2.msra.mxu0 0.0
      %7512 = vmatprep.subr.mxu0 0.0
      %7513 = vmatpush2.msra.mxu0 0.0
      %7514 = vmatprep.subr.mxu0 0.0
      %7515 = vmatpush2.msra.mxu0 0.0
      %7516 = vmatprep.subr.mxu0 0.0
      %7517 = vmatpush2.msra.mxu0 0.0
      %7518 = vmatprep.subr.mxu0 0.0
      %7519 = vmatpush2.msra.mxu0 0.0
      %7520 = vmatprep.subr.mxu0 0.0
      %7521 = vmatpush2.msra.mxu0 0.0
      %7522 = vmatprep.subr.mxu0 0.0
      %7523 = vmatpush2.msra.mxu0 0.0
      %7524 = vmatprep.subr.mxu0 0.0
      %7525 = vmatpush2.msra.mxu0 0.0
      %7526 = vmatprep.subr.mxu0 0.0
      %7527 = vmatpush2.msra.mxu0 0.0
      %7528 = vmatprep.subr.mxu0 0.0
      %7529 = vmatpush2.msra.mxu0 0.0
      %7530 = vmatprep.subr.mxu0 0.0
      %7531 = vmatpush2.msra.mxu0 0.0
      %7532 = vmatprep.mubr.f32.mxu0 0.0
      %7533 = vmatmul.mubr.f32.gmra.mxu0 %v7466
      %v7534 = vpop.f32.mrf.mxu0
      %v7535 = vadd.f32 0.0, %v7534
      %v7536 = vpop.f32.mrf.mxu0
      %7537 = vdwg.mxu0
      %v7539 = vsel %vm603, %v517, 0
      %7541 = vmatprep.subr.mxu0 0.0
      %7542 = vmatpush1.msra.mxu0 0.0
      %7543 = vmatprep.subr.mxu0 0.0
      %7544 = vmatpush1.msra.mxu0 0.0
      %7545 = vmatprep.subr.mxu0 0.0
      %7546 = vmatpush1.msra.mxu0 0.0
      %7547 = vmatprep.subr.mxu0 0.0
      %7548 = vmatpush1.msra.mxu0 0.0
      %7549 = vmatprep.subr.mxu0 0.0
      %7550 = vmatpush1.msra.mxu0 0.0
      %7551 = vmatprep.subr.mxu0 0.0
      %7552 = vmatpush1.msra.mxu0 0.0
      %7553 = vmatprep.subr.mxu0 0.0
      %7554 = vmatpush1.msra.mxu0 0.0
      %7555 = vmatprep.subr.mxu0 0.0
      %7556 = vmatpush1.msra.mxu0 0.0
      %7557 = vmatprep.subr.mxu0 0.0
      %7558 = vmatpush1.msra.mxu0 0.0
      %7559 = vmatprep.subr.mxu0 0.0
      %7560 = vmatpush1.msra.mxu0 0.0
      %7561 = vmatprep.subr.mxu0 0.0
      %7562 = vmatpush1.msra.mxu0 0.0
      %7563 = vmatprep.subr.mxu0 0.0
      %7564 = vmatpush1.msra.mxu0 0.0
      %7565 = vmatprep.subr.mxu0 0.0
      %7566 = vmatpush1.msra.mxu0 0.0
      %7567 = vmatprep.subr.mxu0 0.0
      %7568 = vmatpush1.msra.mxu0 0.0
      %7569 = vmatprep.subr.mxu0 0.0
      %7570 = vmatpush1.msra.mxu0 0.0
      %7571 = vmatprep.subr.mxu0 0.0
      %7572 = vmatpush1.msra.mxu0 %v5918
      %7573 = vmatprep.subr.mxu0 0.0
      %7574 = vmatpush2.msra.mxu0 0.0
      %7575 = vmatprep.subr.mxu0 0.0
      %7576 = vmatpush2.msra.mxu0 0.0
      %7577 = vmatprep.subr.mxu0 0.0
      %7578 = vmatpush2.msra.mxu0 0.0
      %7579 = vmatprep.subr.mxu0 0.0
      %7580 = vmatpush2.msra.mxu0 0.0
      %7581 = vmatprep.subr.mxu0 0.0
      %7582 = vmatpush2.msra.mxu0 0.0
      %7583 = vmatprep.subr.mxu0 0.0
      %7584 = vmatpush2.msra.mxu0 0.0
      %7585 = vmatprep.subr.mxu0 0.0
      %7586 = vmatpush2.msra.mxu0 0.0
      %7587 = vmatprep.subr.mxu0 0.0
      %7588 = vmatpush2.msra.mxu0 0.0
      %7589 = vmatprep.subr.mxu0 0.0
      %7590 = vmatpush2.msra.mxu0 0.0
      %7591 = vmatprep.subr.mxu0 0.0
      %7592 = vmatpush2.msra.mxu0 0.0
      %7593 = vmatprep.subr.mxu0 0.0
      %7594 = vmatpush2.msra.mxu0 0.0
      %7595 = vmatprep.subr.mxu0 0.0
      %7596 = vmatpush2.msra.mxu0 0.0
      %7597 = vmatprep.subr.mxu0 0.0
      %7598 = vmatpush2.msra.mxu0 0.0
      %7599 = vmatprep.subr.mxu0 0.0
      %7600 = vmatpush2.msra.mxu0 0.0
      %7601 = vmatprep.subr.mxu0 0.0
      %7602 = vmatpush2.msra.mxu0 0.0
      %7603 = vmatprep.subr.mxu0 0.0
      %7604 = vmatpush2.msra.mxu0 0.0
      %7605 = vmatprep.mubr.f32.mxu0 0.0
      %7606 = vmatmul.mubr.f32.gmra.mxu0 %v7539
      %v7607 = vpop.f32.mrf.mxu0
      %v7608 = vadd.f32 0.0, %v7607
      %v7609 = vpop.f32.mrf.mxu0
      %7610 = vdwg.mxu0
      %v7612 = vsel %vm603, %v518, 0
      %7614 = vmatprep.subr.mxu0 0.0
      %7615 = vmatpush1.msra.mxu0 0.0
      %7616 = vmatprep.subr.mxu0 0.0
      %7617 = vmatpush1.msra.mxu0 0.0
      %7618 = vmatprep.subr.mxu0 0.0
      %7619 = vmatpush1.msra.mxu0 0.0
      %7620 = vmatprep.subr.mxu0 0.0
      %7621 = vmatpush1.msra.mxu0 0.0
      %7622 = vmatprep.subr.mxu0 0.0
      %7623 = vmatpush1.msra.mxu0 0.0
      %7624 = vmatprep.subr.mxu0 0.0
      %7625 = vmatpush1.msra.mxu0 0.0
      %7626 = vmatprep.subr.mxu0 0.0
      %7627 = vmatpush1.msra.mxu0 0.0
      %7628 = vmatprep.subr.mxu0 0.0
      %7629 = vmatpush1.msra.mxu0 0.0
      %7630 = vmatprep.subr.mxu0 0.0
      %7631 = vmatpush1.msra.mxu0 0.0
      %7632 = vmatprep.subr.mxu0 0.0
      %7633 = vmatpush1.msra.mxu0 0.0
      %7634 = vmatprep.subr.mxu0 0.0
      %7635 = vmatpush1.msra.mxu0 0.0
      %7636 = vmatprep.subr.mxu0 0.0
      %7637 = vmatpush1.msra.mxu0 0.0
      %7638 = vmatprep.subr.mxu0 0.0
      %7639 = vmatpush1.msra.mxu0 0.0
      %7640 = vmatprep.subr.mxu0 0.0
      %7641 = vmatpush1.msra.mxu0 0.0
      %7642 = vmatprep.subr.mxu0 0.0
      %7643 = vmatpush1.msra.mxu0 0.0
      %7644 = vmatprep.subr.mxu0 0.0
      %7645 = vmatpush1.msra.mxu0 %v5919
      %7646 = vmatprep.subr.mxu0 0.0
      %7647 = vmatpush2.msra.mxu0 0.0
      %7648 = vmatprep.subr.mxu0 0.0
      %7649 = vmatpush2.msra.mxu0 0.0
      %7650 = vmatprep.subr.mxu0 0.0
      %7651 = vmatpush2.msra.mxu0 0.0
      %7652 = vmatprep.subr.mxu0 0.0
      %7653 = vmatpush2.msra.mxu0 0.0
      %7654 = vmatprep.subr.mxu0 0.0
      %7655 = vmatpush2.msra.mxu0 0.0
      %7656 = vmatprep.subr.mxu0 0.0
      %7657 = vmatpush2.msra.mxu0 0.0
      %7658 = vmatprep.subr.mxu0 0.0
      %7659 = vmatpush2.msra.mxu0 0.0
      %7660 = vmatprep.subr.mxu0 0.0
      %7661 = vmatpush2.msra.mxu0 0.0
      %7662 = vmatprep.subr.mxu0 0.0
      %7663 = vmatpush2.msra.mxu0 0.0
      %7664 = vmatprep.subr.mxu0 0.0
      %7665 = vmatpush2.msra.mxu0 0.0
      %7666 = vmatprep.subr.mxu0 0.0
      %7667 = vmatpush2.msra.mxu0 0.0
      %7668 = vmatprep.subr.mxu0 0.0
      %7669 = vmatpush2.msra.mxu0 0.0
      %7670 = vmatprep.subr.mxu0 0.0
      %7671 = vmatpush2.msra.mxu0 0.0
      %7672 = vmatprep.subr.mxu0 0.0
      %7673 = vmatpush2.msra.mxu0 0.0
      %7674 = vmatprep.subr.mxu0 0.0
      %7675 = vmatpush2.msra.mxu0 0.0
      %7676 = vmatprep.subr.mxu0 0.0
      %7677 = vmatpush2.msra.mxu0 0.0
      %7678 = vmatprep.mubr.f32.mxu0 0.0
      %7679 = vmatmul.mubr.f32.gmra.mxu0 %v7612
      %v7680 = vpop.f32.mrf.mxu0
      %v7681 = vadd.f32 0.0, %v7680
      %v7682 = vpop.f32.mrf.mxu0
      %7683 = vdwg.mxu0
      %v7685 = vsel %vm603, %v519, 0
      %7687 = vmatprep.subr.mxu0 0.0
      %7688 = vmatpush1.msra.mxu0 0.0
      %7689 = vmatprep.subr.mxu0 0.0
      %7690 = vmatpush1.msra.mxu0 0.0
      %7691 = vmatprep.subr.mxu0 0.0
      %7692 = vmatpush1.msra.mxu0 0.0
      %7693 = vmatprep.subr.mxu0 0.0
      %7694 = vmatpush1.msra.mxu0 0.0
      %7695 = vmatprep.subr.mxu0 0.0
      %7696 = vmatpush1.msra.mxu0 0.0
      %7697 = vmatprep.subr.mxu0 0.0
      %7698 = vmatpush1.msra.mxu0 0.0
      %7699 = vmatprep.subr.mxu0 0.0
      %7700 = vmatpush1.msra.mxu0 0.0
      %7701 = vmatprep.subr.mxu0 0.0
      %7702 = vmatpush1.msra.mxu0 0.0
      %7703 = vmatprep.subr.mxu0 0.0
      %7704 = vmatpush1.msra.mxu0 0.0
      %7705 = vmatprep.subr.mxu0 0.0
      %7706 = vmatpush1.msra.mxu0 0.0
      %7707 = vmatprep.subr.mxu0 0.0
      %7708 = vmatpush1.msra.mxu0 0.0
      %7709 = vmatprep.subr.mxu0 0.0
      %7710 = vmatpush1.msra.mxu0 0.0
      %7711 = vmatprep.subr.mxu0 0.0
      %7712 = vmatpush1.msra.mxu0 0.0
      %7713 = vmatprep.subr.mxu0 0.0
      %7714 = vmatpush1.msra.mxu0 0.0
      %7715 = vmatprep.subr.mxu0 0.0
      %7716 = vmatpush1.msra.mxu0 0.0
      %7717 = vmatprep.subr.mxu0 0.0
      %7718 = vmatpush1.msra.mxu0 %v5920
      %7719 = vmatprep.subr.mxu0 0.0
      %7720 = vmatpush2.msra.mxu0 0.0
      %7721 = vmatprep.subr.mxu0 0.0
      %7722 = vmatpush2.msra.mxu0 0.0
      %7723 = vmatprep.subr.mxu0 0.0
      %7724 = vmatpush2.msra.mxu0 0.0
      %7725 = vmatprep.subr.mxu0 0.0
      %7726 = vmatpush2.msra.mxu0 0.0
      %7727 = vmatprep.subr.mxu0 0.0
      %7728 = vmatpush2.msra.mxu0 0.0
      %7729 = vmatprep.subr.mxu0 0.0
      %7730 = vmatpush2.msra.mxu0 0.0
      %7731 = vmatprep.subr.mxu0 0.0
      %7732 = vmatpush2.msra.mxu0 0.0
      %7733 = vmatprep.subr.mxu0 0.0
      %7734 = vmatpush2.msra.mxu0 0.0
      %7735 = vmatprep.subr.mxu0 0.0
      %7736 = vmatpush2.msra.mxu0 0.0
      %7737 = vmatprep.subr.mxu0 0.0
      %7738 = vmatpush2.msra.mxu0 0.0
      %7739 = vmatprep.subr.mxu0 0.0
      %7740 = vmatpush2.msra.mxu0 0.0
      %7741 = vmatprep.subr.mxu0 0.0
      %7742 = vmatpush2.msra.mxu0 0.0
      %7743 = vmatprep.subr.mxu0 0.0
      %7744 = vmatpush2.msra.mxu0 0.0
      %7745 = vmatprep.subr.mxu0 0.0
      %7746 = vmatpush2.msra.mxu0 0.0
      %7747 = vmatprep.subr.mxu0 0.0
      %7748 = vmatpush2.msra.mxu0 0.0
      %7749 = vmatprep.subr.mxu0 0.0
      %7750 = vmatpush2.msra.mxu0 0.0
      %7751 = vmatprep.mubr.f32.mxu0 0.0
      %7752 = vmatmul.mubr.f32.gmra.mxu0 %v7685
      %v7753 = vpop.f32.mrf.mxu0
      %v7754 = vadd.f32 0.0, %v7753
      %v7755 = vpop.f32.mrf.mxu0
      %7756 = vdwg.mxu0
      %v7758 = vsel %vm603, %v520, 0
      %7760 = vmatprep.subr.mxu0 0.0
      %7761 = vmatpush1.msra.mxu0 0.0
      %7762 = vmatprep.subr.mxu0 0.0
      %7763 = vmatpush1.msra.mxu0 0.0
      %7764 = vmatprep.subr.mxu0 0.0
      %7765 = vmatpush1.msra.mxu0 0.0
      %7766 = vmatprep.subr.mxu0 0.0
      %7767 = vmatpush1.msra.mxu0 0.0
      %7768 = vmatprep.subr.mxu0 0.0
      %7769 = vmatpush1.msra.mxu0 0.0
      %7770 = vmatprep.subr.mxu0 0.0
      %7771 = vmatpush1.msra.mxu0 0.0
      %7772 = vmatprep.subr.mxu0 0.0
      %7773 = vmatpush1.msra.mxu0 0.0
      %7774 = vmatprep.subr.mxu0 0.0
      %7775 = vmatpush1.msra.mxu0 0.0
      %7776 = vmatprep.subr.mxu0 0.0
      %7777 = vmatpush1.msra.mxu0 0.0
      %7778 = vmatprep.subr.mxu0 0.0
      %7779 = vmatpush1.msra.mxu0 0.0
      %7780 = vmatprep.subr.mxu0 0.0
      %7781 = vmatpush1.msra.mxu0 0.0
      %7782 = vmatprep.subr.mxu0 0.0
      %7783 = vmatpush1.msra.mxu0 0.0
      %7784 = vmatprep.subr.mxu0 0.0
      %7785 = vmatpush1.msra.mxu0 0.0
      %7786 = vmatprep.subr.mxu0 0.0
      %7787 = vmatpush1.msra.mxu0 0.0
      %7788 = vmatprep.subr.mxu0 0.0
      %7789 = vmatpush1.msra.mxu0 0.0
      %7790 = vmatprep.subr.mxu0 0.0
      %7791 = vmatpush1.msra.mxu0 %v5921
      %7792 = vmatprep.subr.mxu0 0.0
      %7793 = vmatpush2.msra.mxu0 0.0
      %7794 = vmatprep.subr.mxu0 0.0
      %7795 = vmatpush2.msra.mxu0 0.0
      %7796 = vmatprep.subr.mxu0 0.0
      %7797 = vmatpush2.msra.mxu0 0.0
      %7798 = vmatprep.subr.mxu0 0.0
      %7799 = vmatpush2.msra.mxu0 0.0
      %7800 = vmatprep.subr.mxu0 0.0
      %7801 = vmatpush2.msra.mxu0 0.0
      %7802 = vmatprep.subr.mxu0 0.0
      %7803 = vmatpush2.msra.mxu0 0.0
      %7804 = vmatprep.subr.mxu0 0.0
      %7805 = vmatpush2.msra.mxu0 0.0
      %7806 = vmatprep.subr.mxu0 0.0
      %7807 = vmatpush2.msra.mxu0 0.0
      %7808 = vmatprep.subr.mxu0 0.0
      %7809 = vmatpush2.msra.mxu0 0.0
      %7810 = vmatprep.subr.mxu0 0.0
      %7811 = vmatpush2.msra.mxu0 0.0
      %7812 = vmatprep.subr.mxu0 0.0
      %7813 = vmatpush2.msra.mxu0 0.0
      %7814 = vmatprep.subr.mxu0 0.0
      %7815 = vmatpush2.msra.mxu0 0.0
      %7816 = vmatprep.subr.mxu0 0.0
      %7817 = vmatpush2.msra.mxu0 0.0
      %7818 = vmatprep.subr.mxu0 0.0
      %7819 = vmatpush2.msra.mxu0 0.0
      %7820 = vmatprep.subr.mxu0 0.0
      %7821 = vmatpush2.msra.mxu0 0.0
      %7822 = vmatprep.subr.mxu0 0.0
      %7823 = vmatpush2.msra.mxu0 0.0
      %7824 = vmatprep.mubr.f32.mxu0 0.0
      %7825 = vmatmul.mubr.f32.gmra.mxu0 %v7758
      %v7826 = vpop.f32.mrf.mxu0
      %v7827 = vadd.f32 0.0, %v7826
      %v7828 = vpop.f32.mrf.mxu0
      %7829 = vdwg.mxu0
      %v7831 = vsel %vm603, %v521, 0
      %7833 = vmatprep.subr.mxu0 0.0
      %7834 = vmatpush1.msra.mxu0 0.0
      %7835 = vmatprep.subr.mxu0 0.0
      %7836 = vmatpush1.msra.mxu0 0.0
      %7837 = vmatprep.subr.mxu0 0.0
      %7838 = vmatpush1.msra.mxu0 0.0
      %7839 = vmatprep.subr.mxu0 0.0
      %7840 = vmatpush1.msra.mxu0 0.0
      %7841 = vmatprep.subr.mxu0 0.0
      %7842 = vmatpush1.msra.mxu0 0.0
      %7843 = vmatprep.subr.mxu0 0.0
      %7844 = vmatpush1.msra.mxu0 0.0
      %7845 = vmatprep.subr.mxu0 0.0
      %7846 = vmatpush1.msra.mxu0 0.0
      %7847 = vmatprep.subr.mxu0 0.0
      %7848 = vmatpush1.msra.mxu0 0.0
      %7849 = vmatprep.subr.mxu0 0.0
      %7850 = vmatpush1.msra.mxu0 0.0
      %7851 = vmatprep.subr.mxu0 0.0
      %7852 = vmatpush1.msra.mxu0 0.0
      %7853 = vmatprep.subr.mxu0 0.0
      %7854 = vmatpush1.msra.mxu0 0.0
      %7855 = vmatprep.subr.mxu0 0.0
      %7856 = vmatpush1.msra.mxu0 0.0
      %7857 = vmatprep.subr.mxu0 0.0
      %7858 = vmatpush1.msra.mxu0 0.0
      %7859 = vmatprep.subr.mxu0 0.0
      %7860 = vmatpush1.msra.mxu0 0.0
      %7861 = vmatprep.subr.mxu0 0.0
      %7862 = vmatpush1.msra.mxu0 0.0
      %7863 = vmatprep.subr.mxu0 0.0
      %7864 = vmatpush1.msra.mxu0 %v5922
      %7865 = vmatprep.subr.mxu0 0.0
      %7866 = vmatpush2.msra.mxu0 0.0
      %7867 = vmatprep.subr.mxu0 0.0
      %7868 = vmatpush2.msra.mxu0 0.0
      %7869 = vmatprep.subr.mxu0 0.0
      %7870 = vmatpush2.msra.mxu0 0.0
      %7871 = vmatprep.subr.mxu0 0.0
      %7872 = vmatpush2.msra.mxu0 0.0
      %7873 = vmatprep.subr.mxu0 0.0
      %7874 = vmatpush2.msra.mxu0 0.0
      %7875 = vmatprep.subr.mxu0 0.0
      %7876 = vmatpush2.msra.mxu0 0.0
      %7877 = vmatprep.subr.mxu0 0.0
      %7878 = vmatpush2.msra.mxu0 0.0
      %7879 = vmatprep.subr.mxu0 0.0
      %7880 = vmatpush2.msra.mxu0 0.0
      %7881 = vmatprep.subr.mxu0 0.0
      %7882 = vmatpush2.msra.mxu0 0.0
      %7883 = vmatprep.subr.mxu0 0.0
      %7884 = vmatpush2.msra.mxu0 0.0
      %7885 = vmatprep.subr.mxu0 0.0
      %7886 = vmatpush2.msra.mxu0 0.0
      %7887 = vmatprep.subr.mxu0 0.0
      %7888 = vmatpush2.msra.mxu0 0.0
      %7889 = vmatprep.subr.mxu0 0.0
      %7890 = vmatpush2.msra.mxu0 0.0
      %7891 = vmatprep.subr.mxu0 0.0
      %7892 = vmatpush2.msra.mxu0 0.0
      %7893 = vmatprep.subr.mxu0 0.0
      %7894 = vmatpush2.msra.mxu0 0.0
      %7895 = vmatprep.subr.mxu0 0.0
      %7896 = vmatpush2.msra.mxu0 0.0
      %7897 = vmatprep.mubr.f32.mxu0 0.0
      %7898 = vmatmul.mubr.f32.gmra.mxu0 %v7831
      %v7899 = vpop.f32.mrf.mxu0
      %v7900 = vadd.f32 0.0, %v7899
      %v7901 = vpop.f32.mrf.mxu0
      %7902 = vdwg.mxu0
      %v7904 = vsel %vm603, %v522, 0
      %7906 = vmatprep.subr.mxu0 0.0
      %7907 = vmatpush1.msra.mxu0 0.0
      %7908 = vmatprep.subr.mxu0 0.0
      %7909 = vmatpush1.msra.mxu0 0.0
      %7910 = vmatprep.subr.mxu0 0.0
      %7911 = vmatpush1.msra.mxu0 0.0
      %7912 = vmatprep.subr.mxu0 0.0
      %7913 = vmatpush1.msra.mxu0 0.0
      %7914 = vmatprep.subr.mxu0 0.0
      %7915 = vmatpush1.msra.mxu0 0.0
      %7916 = vmatprep.subr.mxu0 0.0
      %7917 = vmatpush1.msra.mxu0 0.0
      %7918 = vmatprep.subr.mxu0 0.0
      %7919 = vmatpush1.msra.mxu0 0.0
      %7920 = vmatprep.subr.mxu0 0.0
      %7921 = vmatpush1.msra.mxu0 0.0
      %7922 = vmatprep.subr.mxu0 0.0
      %7923 = vmatpush1.msra.mxu0 0.0
      %7924 = vmatprep.subr.mxu0 0.0
      %7925 = vmatpush1.msra.mxu0 0.0
      %7926 = vmatprep.subr.mxu0 0.0
      %7927 = vmatpush1.msra.mxu0 0.0
      %7928 = vmatprep.subr.mxu0 0.0
      %7929 = vmatpush1.msra.mxu0 0.0
      %7930 = vmatprep.subr.mxu0 0.0
      %7931 = vmatpush1.msra.mxu0 0.0
      %7932 = vmatprep.subr.mxu0 0.0
      %7933 = vmatpush1.msra.mxu0 0.0
      %7934 = vmatprep.subr.mxu0 0.0
      %7935 = vmatpush1.msra.mxu0 0.0
      %7936 = vmatprep.subr.mxu0 0.0
      %7937 = vmatpush1.msra.mxu0 %v5923
      %7938 = vmatprep.subr.mxu0 0.0
      %7939 = vmatpush2.msra.mxu0 0.0
      %7940 = vmatprep.subr.mxu0 0.0
      %7941 = vmatpush2.msra.mxu0 0.0
      %7942 = vmatprep.subr.mxu0 0.0
      %7943 = vmatpush2.msra.mxu0 0.0
      %7944 = vmatprep.subr.mxu0 0.0
      %7945 = vmatpush2.msra.mxu0 0.0
      %7946 = vmatprep.subr.mxu0 0.0
      %7947 = vmatpush2.msra.mxu0 0.0
      %7948 = vmatprep.subr.mxu0 0.0
      %7949 = vmatpush2.msra.mxu0 0.0
      %7950 = vmatprep.subr.mxu0 0.0
      %7951 = vmatpush2.msra.mxu0 0.0
      %7952 = vmatprep.subr.mxu0 0.0
      %7953 = vmatpush2.msra.mxu0 0.0
      %7954 = vmatprep.subr.mxu0 0.0
      %7955 = vmatpush2.msra.mxu0 0.0
      %7956 = vmatprep.subr.mxu0 0.0
      %7957 = vmatpush2.msra.mxu0 0.0
      %7958 = vmatprep.subr.mxu0 0.0
      %7959 = vmatpush2.msra.mxu0 0.0
      %7960 = vmatprep.subr.mxu0 0.0
      %7961 = vmatpush2.msra.mxu0 0.0
      %7962 = vmatprep.subr.mxu0 0.0
      %7963 = vmatpush2.msra.mxu0 0.0
      %7964 = vmatprep.subr.mxu0 0.0
      %7965 = vmatpush2.msra.mxu0 0.0
      %7966 = vmatprep.subr.mxu0 0.0
      %7967 = vmatpush2.msra.mxu0 0.0
      %7968 = vmatprep.subr.mxu0 0.0
      %7969 = vmatpush2.msra.mxu0 0.0
      %7970 = vmatprep.mubr.f32.mxu0 0.0
      %7971 = vmatmul.mubr.f32.gmra.mxu0 %v7904
      %v7972 = vpop.f32.mrf.mxu0
      %v7973 = vadd.f32 0.0, %v7972
      %v7974 = vpop.f32.mrf.mxu0
      %7975 = vdwg.mxu0
      %v7977 = vsel %vm603, %v523, 0
      %7979 = vmatprep.subr.mxu0 0.0
      %7980 = vmatpush1.msra.mxu0 0.0
      %7981 = vmatprep.subr.mxu0 0.0
      %7982 = vmatpush1.msra.mxu0 0.0
      %7983 = vmatprep.subr.mxu0 0.0
      %7984 = vmatpush1.msra.mxu0 0.0
      %7985 = vmatprep.subr.mxu0 0.0
      %7986 = vmatpush1.msra.mxu0 0.0
      %7987 = vmatprep.subr.mxu0 0.0
      %7988 = vmatpush1.msra.mxu0 0.0
      %7989 = vmatprep.subr.mxu0 0.0
      %7990 = vmatpush1.msra.mxu0 0.0
      %7991 = vmatprep.subr.mxu0 0.0
      %7992 = vmatpush1.msra.mxu0 0.0
      %7993 = vmatprep.subr.mxu0 0.0
      %7994 = vmatpush1.msra.mxu0 0.0
      %7995 = vmatprep.subr.mxu0 0.0
      %7996 = vmatpush1.msra.mxu0 0.0
      %7997 = vmatprep.subr.mxu0 0.0
      %7998 = vmatpush1.msra.mxu0 0.0
      %7999 = vmatprep.subr.mxu0 0.0
      %8000 = vmatpush1.msra.mxu0 0.0
      %8001 = vmatprep.subr.mxu0 0.0
      %8002 = vmatpush1.msra.mxu0 0.0
      %8003 = vmatprep.subr.mxu0 0.0
      %8004 = vmatpush1.msra.mxu0 0.0
      %8005 = vmatprep.subr.mxu0 0.0
      %8006 = vmatpush1.msra.mxu0 0.0
      %8007 = vmatprep.subr.mxu0 0.0
      %8008 = vmatpush1.msra.mxu0 0.0
      %8009 = vmatprep.subr.mxu0 0.0
      %8010 = vmatpush1.msra.mxu0 %v5924
      %8011 = vmatprep.subr.mxu0 0.0
      %8012 = vmatpush2.msra.mxu0 0.0
      %8013 = vmatprep.subr.mxu0 0.0
      %8014 = vmatpush2.msra.mxu0 0.0
      %8015 = vmatprep.subr.mxu0 0.0
      %8016 = vmatpush2.msra.mxu0 0.0
      %8017 = vmatprep.subr.mxu0 0.0
      %8018 = vmatpush2.msra.mxu0 0.0
      %8019 = vmatprep.subr.mxu0 0.0
      %8020 = vmatpush2.msra.mxu0 0.0
      %8021 = vmatprep.subr.mxu0 0.0
      %8022 = vmatpush2.msra.mxu0 0.0
      %8023 = vmatprep.subr.mxu0 0.0
      %8024 = vmatpush2.msra.mxu0 0.0
      %8025 = vmatprep.subr.mxu0 0.0
      %8026 = vmatpush2.msra.mxu0 0.0
      %8027 = vmatprep.subr.mxu0 0.0
      %8028 = vmatpush2.msra.mxu0 0.0
      %8029 = vmatprep.subr.mxu0 0.0
      %8030 = vmatpush2.msra.mxu0 0.0
      %8031 = vmatprep.subr.mxu0 0.0
      %8032 = vmatpush2.msra.mxu0 0.0
      %8033 = vmatprep.subr.mxu0 0.0
      %8034 = vmatpush2.msra.mxu0 0.0
      %8035 = vmatprep.subr.mxu0 0.0
      %8036 = vmatpush2.msra.mxu0 0.0
      %8037 = vmatprep.subr.mxu0 0.0
      %8038 = vmatpush2.msra.mxu0 0.0
      %8039 = vmatprep.subr.mxu0 0.0
      %8040 = vmatpush2.msra.mxu0 0.0
      %8041 = vmatprep.subr.mxu0 0.0
      %8042 = vmatpush2.msra.mxu0 0.0
      %8043 = vmatprep.mubr.f32.mxu0 0.0
      %8044 = vmatmul.mubr.f32.gmra.mxu0 %v7977
      %v8045 = vpop.f32.mrf.mxu0
      %v8046 = vadd.f32 0.0, %v8045
      %v8047 = vpop.f32.mrf.mxu0
      %8048 = vdwg.mxu0
      %v8050 = vsel %vm603, %v524, 0
      %8052 = vmatprep.subr.mxu0 0.0
      %8053 = vmatpush1.msra.mxu0 0.0
      %8054 = vmatprep.subr.mxu0 0.0
      %8055 = vmatpush1.msra.mxu0 0.0
      %8056 = vmatprep.subr.mxu0 0.0
      %8057 = vmatpush1.msra.mxu0 0.0
      %8058 = vmatprep.subr.mxu0 0.0
      %8059 = vmatpush1.msra.mxu0 0.0
      %8060 = vmatprep.subr.mxu0 0.0
      %8061 = vmatpush1.msra.mxu0 0.0
      %8062 = vmatprep.subr.mxu0 0.0
      %8063 = vmatpush1.msra.mxu0 0.0
      %8064 = vmatprep.subr.mxu0 0.0
      %8065 = vmatpush1.msra.mxu0 0.0
      %8066 = vmatprep.subr.mxu0 0.0
      %8067 = vmatpush1.msra.mxu0 0.0
      %8068 = vmatprep.subr.mxu0 0.0
      %8069 = vmatpush1.msra.mxu0 0.0
      %8070 = vmatprep.subr.mxu0 0.0
      %8071 = vmatpush1.msra.mxu0 0.0
      %8072 = vmatprep.subr.mxu0 0.0
      %8073 = vmatpush1.msra.mxu0 0.0
      %8074 = vmatprep.subr.mxu0 0.0
      %8075 = vmatpush1.msra.mxu0 0.0
      %8076 = vmatprep.subr.mxu0 0.0
      %8077 = vmatpush1.msra.mxu0 0.0
      %8078 = vmatprep.subr.mxu0 0.0
      %8079 = vmatpush1.msra.mxu0 0.0
      %8080 = vmatprep.subr.mxu0 0.0
      %8081 = vmatpush1.msra.mxu0 0.0
      %8082 = vmatprep.subr.mxu0 0.0
      %8083 = vmatpush1.msra.mxu0 %v5925
      %8084 = vmatprep.subr.mxu0 0.0
      %8085 = vmatpush2.msra.mxu0 0.0
      %8086 = vmatprep.subr.mxu0 0.0
      %8087 = vmatpush2.msra.mxu0 0.0
      %8088 = vmatprep.subr.mxu0 0.0
      %8089 = vmatpush2.msra.mxu0 0.0
      %8090 = vmatprep.subr.mxu0 0.0
      %8091 = vmatpush2.msra.mxu0 0.0
      %8092 = vmatprep.subr.mxu0 0.0
      %8093 = vmatpush2.msra.mxu0 0.0
      %8094 = vmatprep.subr.mxu0 0.0
      %8095 = vmatpush2.msra.mxu0 0.0
      %8096 = vmatprep.subr.mxu0 0.0
      %8097 = vmatpush2.msra.mxu0 0.0
      %8098 = vmatprep.subr.mxu0 0.0
      %8099 = vmatpush2.msra.mxu0 0.0
      %8100 = vmatprep.subr.mxu0 0.0
      %8101 = vmatpush2.msra.mxu0 0.0
      %8102 = vmatprep.subr.mxu0 0.0
      %8103 = vmatpush2.msra.mxu0 0.0
      %8104 = vmatprep.subr.mxu0 0.0
      %8105 = vmatpush2.msra.mxu0 0.0
      %8106 = vmatprep.subr.mxu0 0.0
      %8107 = vmatpush2.msra.mxu0 0.0
      %8108 = vmatprep.subr.mxu0 0.0
      %8109 = vmatpush2.msra.mxu0 0.0
      %8110 = vmatprep.subr.mxu0 0.0
      %8111 = vmatpush2.msra.mxu0 0.0
      %8112 = vmatprep.subr.mxu0 0.0
      %8113 = vmatpush2.msra.mxu0 0.0
      %8114 = vmatprep.subr.mxu0 0.0
      %8115 = vmatpush2.msra.mxu0 0.0
      %8116 = vmatprep.mubr.f32.mxu0 0.0
      %8117 = vmatmul.mubr.f32.gmra.mxu0 %v8050
      %v8118 = vpop.f32.mrf.mxu0
      %v8119 = vadd.f32 0.0, %v8118
      %v8120 = vpop.f32.mrf.mxu0
      %8121 = vdwg.mxu0
      %v8123 = vsel %vm603, %v525, 0
      %8125 = vmatprep.subr.mxu0 0.0
      %8126 = vmatpush1.msra.mxu0 0.0
      %8127 = vmatprep.subr.mxu0 0.0
      %8128 = vmatpush1.msra.mxu0 0.0
      %8129 = vmatprep.subr.mxu0 0.0
      %8130 = vmatpush1.msra.mxu0 0.0
      %8131 = vmatprep.subr.mxu0 0.0
      %8132 = vmatpush1.msra.mxu0 0.0
      %8133 = vmatprep.subr.mxu0 0.0
      %8134 = vmatpush1.msra.mxu0 0.0
      %8135 = vmatprep.subr.mxu0 0.0
      %8136 = vmatpush1.msra.mxu0 0.0
      %8137 = vmatprep.subr.mxu0 0.0
      %8138 = vmatpush1.msra.mxu0 0.0
      %8139 = vmatprep.subr.mxu0 0.0
      %8140 = vmatpush1.msra.mxu0 0.0
      %8141 = vmatprep.subr.mxu0 0.0
      %8142 = vmatpush1.msra.mxu0 0.0
      %8143 = vmatprep.subr.mxu0 0.0
      %8144 = vmatpush1.msra.mxu0 0.0
      %8145 = vmatprep.subr.mxu0 0.0
      %8146 = vmatpush1.msra.mxu0 0.0
      %8147 = vmatprep.subr.mxu0 0.0
      %8148 = vmatpush1.msra.mxu0 0.0
      %8149 = vmatprep.subr.mxu0 0.0
      %8150 = vmatpush1.msra.mxu0 0.0
      %8151 = vmatprep.subr.mxu0 0.0
      %8152 = vmatpush1.msra.mxu0 0.0
      %8153 = vmatprep.subr.mxu0 0.0
      %8154 = vmatpush1.msra.mxu0 0.0
      %8155 = vmatprep.subr.mxu0 0.0
      %8156 = vmatpush1.msra.mxu0 %v5926
      %8157 = vmatprep.subr.mxu0 0.0
      %8158 = vmatpush2.msra.mxu0 0.0
      %8159 = vmatprep.subr.mxu0 0.0
      %8160 = vmatpush2.msra.mxu0 0.0
      %8161 = vmatprep.subr.mxu0 0.0
      %8162 = vmatpush2.msra.mxu0 0.0
      %8163 = vmatprep.subr.mxu0 0.0
      %8164 = vmatpush2.msra.mxu0 0.0
      %8165 = vmatprep.subr.mxu0 0.0
      %8166 = vmatpush2.msra.mxu0 0.0
      %8167 = vmatprep.subr.mxu0 0.0
      %8168 = vmatpush2.msra.mxu0 0.0
      %8169 = vmatprep.subr.mxu0 0.0
      %8170 = vmatpush2.msra.mxu0 0.0
      %8171 = vmatprep.subr.mxu0 0.0
      %8172 = vmatpush2.msra.mxu0 0.0
      %8173 = vmatprep.subr.mxu0 0.0
      %8174 = vmatpush2.msra.mxu0 0.0
      %8175 = vmatprep.subr.mxu0 0.0
      %8176 = vmatpush2.msra.mxu0 0.0
      %8177 = vmatprep.subr.mxu0 0.0
      %8178 = vmatpush2.msra.mxu0 0.0
      %8179 = vmatprep.subr.mxu0 0.0
      %8180 = vmatpush2.msra.mxu0 0.0
      %8181 = vmatprep.subr.mxu0 0.0
      %8182 = vmatpush2.msra.mxu0 0.0
      %8183 = vmatprep.subr.mxu0 0.0
      %8184 = vmatpush2.msra.mxu0 0.0
      %8185 = vmatprep.subr.mxu0 0.0
      %8186 = vmatpush2.msra.mxu0 0.0
      %8187 = vmatprep.subr.mxu0 0.0
      %8188 = vmatpush2.msra.mxu0 0.0
      %8189 = vmatprep.mubr.f32.mxu0 0.0
      %8190 = vmatmul.mubr.f32.gmra.mxu0 %v8123
      %v8191 = vpop.f32.mrf.mxu0
      %v8192 = vadd.f32 0.0, %v8191
      %v8193 = vpop.f32.mrf.mxu0
      %8194 = vdwg.mxu0
      %v8196 = vsel %vm603, %v526, 0
      %8198 = vmatprep.subr.mxu0 0.0
      %8199 = vmatpush1.msra.mxu0 0.0
      %8200 = vmatprep.subr.mxu0 0.0
      %8201 = vmatpush1.msra.mxu0 0.0
      %8202 = vmatprep.subr.mxu0 0.0
      %8203 = vmatpush1.msra.mxu0 0.0
      %8204 = vmatprep.subr.mxu0 0.0
      %8205 = vmatpush1.msra.mxu0 0.0
      %8206 = vmatprep.subr.mxu0 0.0
      %8207 = vmatpush1.msra.mxu0 0.0
      %8208 = vmatprep.subr.mxu0 0.0
      %8209 = vmatpush1.msra.mxu0 0.0
      %8210 = vmatprep.subr.mxu0 0.0
      %8211 = vmatpush1.msra.mxu0 0.0
      %8212 = vmatprep.subr.mxu0 0.0
      %8213 = vmatpush1.msra.mxu0 0.0
      %8214 = vmatprep.subr.mxu0 0.0
      %8215 = vmatpush1.msra.mxu0 0.0
      %8216 = vmatprep.subr.mxu0 0.0
      %8217 = vmatpush1.msra.mxu0 0.0
      %8218 = vmatprep.subr.mxu0 0.0
      %8219 = vmatpush1.msra.mxu0 0.0
      %8220 = vmatprep.subr.mxu0 0.0
      %8221 = vmatpush1.msra.mxu0 0.0
      %8222 = vmatprep.subr.mxu0 0.0
      %8223 = vmatpush1.msra.mxu0 0.0
      %8224 = vmatprep.subr.mxu0 0.0
      %8225 = vmatpush1.msra.mxu0 0.0
      %8226 = vmatprep.subr.mxu0 0.0
      %8227 = vmatpush1.msra.mxu0 0.0
      %8228 = vmatprep.subr.mxu0 0.0
      %8229 = vmatpush1.msra.mxu0 %v5927
      %8230 = vmatprep.subr.mxu0 0.0
      %8231 = vmatpush2.msra.mxu0 0.0
      %8232 = vmatprep.subr.mxu0 0.0
      %8233 = vmatpush2.msra.mxu0 0.0
      %8234 = vmatprep.subr.mxu0 0.0
      %8235 = vmatpush2.msra.mxu0 0.0
      %8236 = vmatprep.subr.mxu0 0.0
      %8237 = vmatpush2.msra.mxu0 0.0
      %8238 = vmatprep.subr.mxu0 0.0
      %8239 = vmatpush2.msra.mxu0 0.0
      %8240 = vmatprep.subr.mxu0 0.0
      %8241 = vmatpush2.msra.mxu0 0.0
      %8242 = vmatprep.subr.mxu0 0.0
      %8243 = vmatpush2.msra.mxu0 0.0
      %8244 = vmatprep.subr.mxu0 0.0
      %8245 = vmatpush2.msra.mxu0 0.0
      %8246 = vmatprep.subr.mxu0 0.0
      %8247 = vmatpush2.msra.mxu0 0.0
      %8248 = vmatprep.subr.mxu0 0.0
      %8249 = vmatpush2.msra.mxu0 0.0
      %8250 = vmatprep.subr.mxu0 0.0
      %8251 = vmatpush2.msra.mxu0 0.0
      %8252 = vmatprep.subr.mxu0 0.0
      %8253 = vmatpush2.msra.mxu0 0.0
      %8254 = vmatprep.subr.mxu0 0.0
      %8255 = vmatpush2.msra.mxu0 0.0
      %8256 = vmatprep.subr.mxu0 0.0
      %8257 = vmatpush2.msra.mxu0 0.0
      %8258 = vmatprep.subr.mxu0 0.0
      %8259 = vmatpush2.msra.mxu0 0.0
      %8260 = vmatprep.subr.mxu0 0.0
      %8261 = vmatpush2.msra.mxu0 0.0
      %8262 = vmatprep.mubr.f32.mxu0 0.0
      %8263 = vmatmul.mubr.f32.gmra.mxu0 %v8196
      %v8264 = vpop.f32.mrf.mxu0
      %v8265 = vadd.f32 0.0, %v8264
      %v8266 = vpop.f32.mrf.mxu0
      %8267 = vdwg.mxu0
      %v8269 = vsel %vm603, %v527, 0
      %8271 = vmatprep.subr.mxu0 0.0
      %8272 = vmatpush1.msra.mxu0 0.0
      %8273 = vmatprep.subr.mxu0 0.0
      %8274 = vmatpush1.msra.mxu0 0.0
      %8275 = vmatprep.subr.mxu0 0.0
      %8276 = vmatpush1.msra.mxu0 0.0
      %8277 = vmatprep.subr.mxu0 0.0
      %8278 = vmatpush1.msra.mxu0 0.0
      %8279 = vmatprep.subr.mxu0 0.0
      %8280 = vmatpush1.msra.mxu0 0.0
      %8281 = vmatprep.subr.mxu0 0.0
      %8282 = vmatpush1.msra.mxu0 0.0
      %8283 = vmatprep.subr.mxu0 0.0
      %8284 = vmatpush1.msra.mxu0 0.0
      %8285 = vmatprep.subr.mxu0 0.0
      %8286 = vmatpush1.msra.mxu0 0.0
      %8287 = vmatprep.subr.mxu0 0.0
      %8288 = vmatpush1.msra.mxu0 0.0
      %8289 = vmatprep.subr.mxu0 0.0
      %8290 = vmatpush1.msra.mxu0 0.0
      %8291 = vmatprep.subr.mxu0 0.0
      %8292 = vmatpush1.msra.mxu0 0.0
      %8293 = vmatprep.subr.mxu0 0.0
      %8294 = vmatpush1.msra.mxu0 0.0
      %8295 = vmatprep.subr.mxu0 0.0
      %8296 = vmatpush1.msra.mxu0 0.0
      %8297 = vmatprep.subr.mxu0 0.0
      %8298 = vmatpush1.msra.mxu0 0.0
      %8299 = vmatprep.subr.mxu0 0.0
      %8300 = vmatpush1.msra.mxu0 0.0
      %8301 = vmatprep.subr.mxu0 0.0
      %8302 = vmatpush1.msra.mxu0 %v5928
      %8303 = vmatprep.subr.mxu0 0.0
      %8304 = vmatpush2.msra.mxu0 0.0
      %8305 = vmatprep.subr.mxu0 0.0
      %8306 = vmatpush2.msra.mxu0 0.0
      %8307 = vmatprep.subr.mxu0 0.0
      %8308 = vmatpush2.msra.mxu0 0.0
      %8309 = vmatprep.subr.mxu0 0.0
      %8310 = vmatpush2.msra.mxu0 0.0
      %8311 = vmatprep.subr.mxu0 0.0
      %8312 = vmatpush2.msra.mxu0 0.0
      %8313 = vmatprep.subr.mxu0 0.0
      %8314 = vmatpush2.msra.mxu0 0.0
      %8315 = vmatprep.subr.mxu0 0.0
      %8316 = vmatpush2.msra.mxu0 0.0
      %8317 = vmatprep.subr.mxu0 0.0
      %8318 = vmatpush2.msra.mxu0 0.0
      %8319 = vmatprep.subr.mxu0 0.0
      %8320 = vmatpush2.msra.mxu0 0.0
      %8321 = vmatprep.subr.mxu0 0.0
      %8322 = vmatpush2.msra.mxu0 0.0
      %8323 = vmatprep.subr.mxu0 0.0
      %8324 = vmatpush2.msra.mxu0 0.0
      %8325 = vmatprep.subr.mxu0 0.0
      %8326 = vmatpush2.msra.mxu0 0.0
      %8327 = vmatprep.subr.mxu0 0.0
      %8328 = vmatpush2.msra.mxu0 0.0
      %8329 = vmatprep.subr.mxu0 0.0
      %8330 = vmatpush2.msra.mxu0 0.0
      %8331 = vmatprep.subr.mxu0 0.0
      %8332 = vmatpush2.msra.mxu0 0.0
      %8333 = vmatprep.subr.mxu0 0.0
      %8334 = vmatpush2.msra.mxu0 0.0
      %8335 = vmatprep.mubr.f32.mxu0 0.0
      %8336 = vmatmul.mubr.f32.gmra.mxu0 %v8269
      %v8337 = vpop.f32.mrf.mxu0
      %v8338 = vadd.f32 0.0, %v8337
      %v8339 = vpop.f32.mrf.mxu0
      %8340 = vdwg.mxu0
      %v8342 = vsel %vm603, %v528, 0
      %8344 = vmatprep.subr.mxu0 0.0
      %8345 = vmatpush1.msra.mxu0 0.0
      %8346 = vmatprep.subr.mxu0 0.0
      %8347 = vmatpush1.msra.mxu0 0.0
      %8348 = vmatprep.subr.mxu0 0.0
      %8349 = vmatpush1.msra.mxu0 0.0
      %8350 = vmatprep.subr.mxu0 0.0
      %8351 = vmatpush1.msra.mxu0 0.0
      %8352 = vmatprep.subr.mxu0 0.0
      %8353 = vmatpush1.msra.mxu0 0.0
      %8354 = vmatprep.subr.mxu0 0.0
      %8355 = vmatpush1.msra.mxu0 0.0
      %8356 = vmatprep.subr.mxu0 0.0
      %8357 = vmatpush1.msra.mxu0 0.0
      %8358 = vmatprep.subr.mxu0 0.0
      %8359 = vmatpush1.msra.mxu0 0.0
      %8360 = vmatprep.subr.mxu0 0.0
      %8361 = vmatpush1.msra.mxu0 0.0
      %8362 = vmatprep.subr.mxu0 0.0
      %8363 = vmatpush1.msra.mxu0 0.0
      %8364 = vmatprep.subr.mxu0 0.0
      %8365 = vmatpush1.msra.mxu0 0.0
      %8366 = vmatprep.subr.mxu0 0.0
      %8367 = vmatpush1.msra.mxu0 0.0
      %8368 = vmatprep.subr.mxu0 0.0
      %8369 = vmatpush1.msra.mxu0 0.0
      %8370 = vmatprep.subr.mxu0 0.0
      %8371 = vmatpush1.msra.mxu0 0.0
      %8372 = vmatprep.subr.mxu0 0.0
      %8373 = vmatpush1.msra.mxu0 0.0
      %8374 = vmatprep.subr.mxu0 0.0
      %8375 = vmatpush1.msra.mxu0 %v5929
      %8376 = vmatprep.subr.mxu0 0.0
      %8377 = vmatpush2.msra.mxu0 0.0
      %8378 = vmatprep.subr.mxu0 0.0
      %8379 = vmatpush2.msra.mxu0 0.0
      %8380 = vmatprep.subr.mxu0 0.0
      %8381 = vmatpush2.msra.mxu0 0.0
      %8382 = vmatprep.subr.mxu0 0.0
      %8383 = vmatpush2.msra.mxu0 0.0
      %8384 = vmatprep.subr.mxu0 0.0
      %8385 = vmatpush2.msra.mxu0 0.0
      %8386 = vmatprep.subr.mxu0 0.0
      %8387 = vmatpush2.msra.mxu0 0.0
      %8388 = vmatprep.subr.mxu0 0.0
      %8389 = vmatpush2.msra.mxu0 0.0
      %8390 = vmatprep.subr.mxu0 0.0
      %8391 = vmatpush2.msra.mxu0 0.0
      %8392 = vmatprep.subr.mxu0 0.0
      %8393 = vmatpush2.msra.mxu0 0.0
      %8394 = vmatprep.subr.mxu0 0.0
      %8395 = vmatpush2.msra.mxu0 0.0
      %8396 = vmatprep.subr.mxu0 0.0
      %8397 = vmatpush2.msra.mxu0 0.0
      %8398 = vmatprep.subr.mxu0 0.0
      %8399 = vmatpush2.msra.mxu0 0.0
      %8400 = vmatprep.subr.mxu0 0.0
      %8401 = vmatpush2.msra.mxu0 0.0
      %8402 = vmatprep.subr.mxu0 0.0
      %8403 = vmatpush2.msra.mxu0 0.0
      %8404 = vmatprep.subr.mxu0 0.0
      %8405 = vmatpush2.msra.mxu0 0.0
      %8406 = vmatprep.subr.mxu0 0.0
      %8407 = vmatpush2.msra.mxu0 0.0
      %8408 = vmatprep.mubr.f32.mxu0 0.0
      %8409 = vmatmul.mubr.f32.gmra.mxu0 %v8342
      %v8410 = vpop.f32.mrf.mxu0
      %v8411 = vadd.f32 0.0, %v8410
      %v8412 = vpop.f32.mrf.mxu0
      %8413 = vdwg.mxu0
      %v8415 = vsel %vm603, %v529, 0
      %8417 = vmatprep.subr.mxu0 0.0
      %8418 = vmatpush1.msra.mxu0 0.0
      %8419 = vmatprep.subr.mxu0 0.0
      %8420 = vmatpush1.msra.mxu0 0.0
      %8421 = vmatprep.subr.mxu0 0.0
      %8422 = vmatpush1.msra.mxu0 0.0
      %8423 = vmatprep.subr.mxu0 0.0
      %8424 = vmatpush1.msra.mxu0 0.0
      %8425 = vmatprep.subr.mxu0 0.0
      %8426 = vmatpush1.msra.mxu0 0.0
      %8427 = vmatprep.subr.mxu0 0.0
      %8428 = vmatpush1.msra.mxu0 0.0
      %8429 = vmatprep.subr.mxu0 0.0
      %8430 = vmatpush1.msra.mxu0 0.0
      %8431 = vmatprep.subr.mxu0 0.0
      %8432 = vmatpush1.msra.mxu0 0.0
      %8433 = vmatprep.subr.mxu0 0.0
      %8434 = vmatpush1.msra.mxu0 0.0
      %8435 = vmatprep.subr.mxu0 0.0
      %8436 = vmatpush1.msra.mxu0 0.0
      %8437 = vmatprep.subr.mxu0 0.0
      %8438 = vmatpush1.msra.mxu0 0.0
      %8439 = vmatprep.subr.mxu0 0.0
      %8440 = vmatpush1.msra.mxu0 0.0
      %8441 = vmatprep.subr.mxu0 0.0
      %8442 = vmatpush1.msra.mxu0 0.0
      %8443 = vmatprep.subr.mxu0 0.0
      %8444 = vmatpush1.msra.mxu0 0.0
      %8445 = vmatprep.subr.mxu0 0.0
      %8446 = vmatpush1.msra.mxu0 0.0
      %8447 = vmatprep.subr.mxu0 0.0
      %8448 = vmatpush1.msra.mxu0 %v5930
      %8449 = vmatprep.subr.mxu0 0.0
      %8450 = vmatpush2.msra.mxu0 0.0
      %8451 = vmatprep.subr.mxu0 0.0
      %8452 = vmatpush2.msra.mxu0 0.0
      %8453 = vmatprep.subr.mxu0 0.0
      %8454 = vmatpush2.msra.mxu0 0.0
      %8455 = vmatprep.subr.mxu0 0.0
      %8456 = vmatpush2.msra.mxu0 0.0
      %8457 = vmatprep.subr.mxu0 0.0
      %8458 = vmatpush2.msra.mxu0 0.0
      %8459 = vmatprep.subr.mxu0 0.0
      %8460 = vmatpush2.msra.mxu0 0.0
      %8461 = vmatprep.subr.mxu0 0.0
      %8462 = vmatpush2.msra.mxu0 0.0
      %8463 = vmatprep.subr.mxu0 0.0
      %8464 = vmatpush2.msra.mxu0 0.0
      %8465 = vmatprep.subr.mxu0 0.0
      %8466 = vmatpush2.msra.mxu0 0.0
      %8467 = vmatprep.subr.mxu0 0.0
      %8468 = vmatpush2.msra.mxu0 0.0
      %8469 = vmatprep.subr.mxu0 0.0
      %8470 = vmatpush2.msra.mxu0 0.0
      %8471 = vmatprep.subr.mxu0 0.0
      %8472 = vmatpush2.msra.mxu0 0.0
      %8473 = vmatprep.subr.mxu0 0.0
      %8474 = vmatpush2.msra.mxu0 0.0
      %8475 = vmatprep.subr.mxu0 0.0
      %8476 = vmatpush2.msra.mxu0 0.0
      %8477 = vmatprep.subr.mxu0 0.0
      %8478 = vmatpush2.msra.mxu0 0.0
      %8479 = vmatprep.subr.mxu0 0.0
      %8480 = vmatpush2.msra.mxu0 0.0
      %8481 = vmatprep.mubr.f32.mxu0 0.0
      %8482 = vmatmul.mubr.f32.gmra.mxu0 %v8415
      %v8483 = vpop.f32.mrf.mxu0
      %v8484 = vadd.f32 0.0, %v8483
      %v8485 = vpop.f32.mrf.mxu0
      %8486 = vdwg.mxu0
      %v8488 = vsel %vm603, %v530, 0
      %8490 = vmatprep.subr.mxu0 0.0
      %8491 = vmatpush1.msra.mxu0 0.0
      %8492 = vmatprep.subr.mxu0 0.0
      %8493 = vmatpush1.msra.mxu0 0.0
      %8494 = vmatprep.subr.mxu0 0.0
      %8495 = vmatpush1.msra.mxu0 0.0
      %8496 = vmatprep.subr.mxu0 0.0
      %8497 = vmatpush1.msra.mxu0 0.0
      %8498 = vmatprep.subr.mxu0 0.0
      %8499 = vmatpush1.msra.mxu0 0.0
      %8500 = vmatprep.subr.mxu0 0.0
      %8501 = vmatpush1.msra.mxu0 0.0
      %8502 = vmatprep.subr.mxu0 0.0
      %8503 = vmatpush1.msra.mxu0 0.0
      %8504 = vmatprep.subr.mxu0 0.0
      %8505 = vmatpush1.msra.mxu0 0.0
      %8506 = vmatprep.subr.mxu0 0.0
      %8507 = vmatpush1.msra.mxu0 0.0
      %8508 = vmatprep.subr.mxu0 0.0
      %8509 = vmatpush1.msra.mxu0 0.0
      %8510 = vmatprep.subr.mxu0 0.0
      %8511 = vmatpush1.msra.mxu0 0.0
      %8512 = vmatprep.subr.mxu0 0.0
      %8513 = vmatpush1.msra.mxu0 0.0
      %8514 = vmatprep.subr.mxu0 0.0
      %8515 = vmatpush1.msra.mxu0 0.0
      %8516 = vmatprep.subr.mxu0 0.0
      %8517 = vmatpush1.msra.mxu0 0.0
      %8518 = vmatprep.subr.mxu0 0.0
      %8519 = vmatpush1.msra.mxu0 0.0
      %8520 = vmatprep.subr.mxu0 0.0
      %8521 = vmatpush1.msra.mxu0 %v5931
      %8522 = vmatprep.subr.mxu0 0.0
      %8523 = vmatpush2.msra.mxu0 0.0
      %8524 = vmatprep.subr.mxu0 0.0
      %8525 = vmatpush2.msra.mxu0 0.0
      %8526 = vmatprep.subr.mxu0 0.0
      %8527 = vmatpush2.msra.mxu0 0.0
      %8528 = vmatprep.subr.mxu0 0.0
      %8529 = vmatpush2.msra.mxu0 0.0
      %8530 = vmatprep.subr.mxu0 0.0
      %8531 = vmatpush2.msra.mxu0 0.0
      %8532 = vmatprep.subr.mxu0 0.0
      %8533 = vmatpush2.msra.mxu0 0.0
      %8534 = vmatprep.subr.mxu0 0.0
      %8535 = vmatpush2.msra.mxu0 0.0
      %8536 = vmatprep.subr.mxu0 0.0
      %8537 = vmatpush2.msra.mxu0 0.0
      %8538 = vmatprep.subr.mxu0 0.0
      %8539 = vmatpush2.msra.mxu0 0.0
      %8540 = vmatprep.subr.mxu0 0.0
      %8541 = vmatpush2.msra.mxu0 0.0
      %8542 = vmatprep.subr.mxu0 0.0
      %8543 = vmatpush2.msra.mxu0 0.0
      %8544 = vmatprep.subr.mxu0 0.0
      %8545 = vmatpush2.msra.mxu0 0.0
      %8546 = vmatprep.subr.mxu0 0.0
      %8547 = vmatpush2.msra.mxu0 0.0
      %8548 = vmatprep.subr.mxu0 0.0
      %8549 = vmatpush2.msra.mxu0 0.0
      %8550 = vmatprep.subr.mxu0 0.0
      %8551 = vmatpush2.msra.mxu0 0.0
      %8552 = vmatprep.subr.mxu0 0.0
      %8553 = vmatpush2.msra.mxu0 0.0
      %8554 = vmatprep.mubr.f32.mxu0 0.0
      %8555 = vmatmul.mubr.f32.gmra.mxu0 %v8488
      %v8556 = vpop.f32.mrf.mxu0
      %v8557 = vadd.f32 0.0, %v8556
      %v8558 = vpop.f32.mrf.mxu0
      %8559 = vdwg.mxu0
      %v8560 = vsub.f32 %v674, %v6002
      %v8561 = vsub.f32 %v747, %v6075
      %v8562 = vsub.f32 %v820, %v6148
      %v8563 = vsub.f32 %v893, %v6221
      %v8564 = vsub.f32 %v966, %v6294
      %v8565 = vsub.f32 %v1039, %v6367
      %v8566 = vsub.f32 %v1112, %v6440
      %v8567 = vsub.f32 %v1185, %v6513
      %v8568 = vsub.f32 %v1258, %v6586
      %v8569 = vsub.f32 %v1331, %v6659
      %v8570 = vsub.f32 %v1404, %v6732
      %v8571 = vsub.f32 %v1477, %v6805
      %v8572 = vsub.f32 %v1550, %v6878
      %v8573 = vsub.f32 %v1623, %v6951
      %v8574 = vsub.f32 %v1696, %v7024
      %v8575 = vsub.f32 %v1769, %v7097
      %v8576 = vsub.f32 %v1842, %v7170
      %v8577 = vsub.f32 %v1915, %v7243
      %v8578 = vsub.f32 %v1988, %v7316
      %v8579 = vsub.f32 %v2061, %v7389
      %v8580 = vsub.f32 %v2134, %v7462
      %v8581 = vsub.f32 %v2207, %v7535
      %v8582 = vsub.f32 %v2280, %v7608
      %v8583 = vsub.f32 %v2353, %v7681
      %v8584 = vsub.f32 %v2426, %v7754
      %v8585 = vsub.f32 %v2499, %v7827
      %v8586 = vsub.f32 %v2572, %v7900
      %v8587 = vsub.f32 %v2645, %v7973
      %v8588 = vsub.f32 %v2718, %v8046
      %v8589 = vsub.f32 %v2791, %v8119
      %v8590 = vsub.f32 %v2864, %v8192
      %v8591 = vsub.f32 %v2937, %v8265
      %v8592 = vsub.f32 %v3010, %v8338
      %v8593 = vsub.f32 %v3083, %v8411
      %v8594 = vsub.f32 %v3156, %v8484
      %v8595 = vsub.f32 %v3229, %v8557
      %vm8596 = vcmask 58368
      %8597 = vst.msk [vmem:[%s447] sm:$0x3] %vm8596, %v8560
      %8598 = vst.msk [vmem:[%s447 + $0x2] sm:$0x3] %vm8596, %v8561
      %8599 = vst.msk [vmem:[%s447 + $0x4] sm:$0x3] %vm8596, %v8562
      %8600 = vst.msk [vmem:[%s447 + $0x6] sm:$0x3] %vm8596, %v8563
      %8601 = vst.msk [vmem:[%s447 + $0x8] sm:$0x3] %vm8596, %v8564
      %8602 = vst.msk [vmem:[%s447 + $0xa] sm:$0x3] %vm8596, %v8565
      %8603 = vst.msk [vmem:[%s447 + $0xc] sm:$0x3] %vm8596, %v8566
      %8604 = vst.msk [vmem:[%s447 + $0xe] sm:$0x3] %vm8596, %v8567
      %8605 = vst.msk [vmem:[%s447 + $0x10] sm:$0x3] %vm8596, %v8568
      %8606 = vst.msk [vmem:[%s447 + $0x12] sm:$0x3] %vm8596, %v8569
      %8607 = vst.msk [vmem:[%s447 + $0x14] sm:$0x3] %vm8596, %v8570
      %8608 = vst.msk [vmem:[%s447 + $0x16] sm:$0x3] %vm8596, %v8571
      %8609 = vst.msk [vmem:[%s447 + $0x18] sm:$0x3] %vm8596, %v8572
      %8610 = vst.msk [vmem:[%s447 + $0x1a] sm:$0x3] %vm8596, %v8573
      %8611 = vst.msk [vmem:[%s447 + $0x1c] sm:$0x3] %vm8596, %v8574
      %8612 = vst.msk [vmem:[%s447 + $0x1e] sm:$0x3] %vm8596, %v8575
      %8613 = vst.msk [vmem:[%s447 + $0x20] sm:$0x3] %vm8596, %v8576
      %8614 = vst.msk [vmem:[%s447 + $0x22] sm:$0x3] %vm8596, %v8577
      %8615 = vst.msk [vmem:[%s447 + $0x24] sm:$0x3] %vm8596, %v8578
      %8616 = vst.msk [vmem:[%s447 + $0x26] sm:$0x3] %vm8596, %v8579
      %8617 = vst.msk [vmem:[%s447 + $0x28] sm:$0x3] %vm8596, %v8580
      %8618 = vst.msk [vmem:[%s447 + $0x2a] sm:$0x3] %vm8596, %v8581
      %8619 = vst.msk [vmem:[%s447 + $0x2c] sm:$0x3] %vm8596, %v8582
      %8620 = vst.msk [vmem:[%s447 + $0x2e] sm:$0x3] %vm8596, %v8583
      %8621 = vst.msk [vmem:[%s447 + $0x30] sm:$0x3] %vm8596, %v8584
      %8622 = vst.msk [vmem:[%s447 + $0x32] sm:$0x3] %vm8596, %v8585
      %8623 = vst.msk [vmem:[%s447 + $0x34] sm:$0x3] %vm8596, %v8586
      %8624 = vst.msk [vmem:[%s447 + $0x36] sm:$0x3] %vm8596, %v8587
      %8625 = vst.msk [vmem:[%s447 + $0x38] sm:$0x3] %vm8596, %v8588
      %8626 = vst.msk [vmem:[%s447 + $0x3a] sm:$0x3] %vm8596, %v8589
      %8627 = vst.msk [vmem:[%s447 + $0x3c] sm:$0x3] %vm8596, %v8590
      %8628 = vst.msk [vmem:[%s447 + $0x3e] sm:$0x3] %vm8596, %v8591
      %8629 = vst.msk [vmem:[%s447 + $0x40] sm:$0x3] %vm8596, %v8592
      %8630 = vst.msk [vmem:[%s447 + $0x42] sm:$0x3] %vm8596, %v8593
      %8631 = vst.msk [vmem:[%s447 + $0x44] sm:$0x3] %vm8596, %v8594
      %8632 = vst.msk [vmem:[%s447 + $0x46] sm:$0x3] %vm8596, %v8595
      %v8633 = vadd.f32 %v674, %v3338
      %v8634 = vadd.f32 %v747, %v3411
      %v8635 = vadd.f32 %v820, %v3484
      %v8636 = vadd.f32 %v893, %v3557
      %v8637 = vadd.f32 %v966, %v3630
      %v8638 = vadd.f32 %v1039, %v3703
      %v8639 = vadd.f32 %v1112, %v3776
      %v8640 = vadd.f32 %v1185, %v3849
      %v8641 = vadd.f32 %v1258, %v3922
      %v8642 = vadd.f32 %v1331, %v3995
      %v8643 = vadd.f32 %v1404, %v4068
      %v8644 = vadd.f32 %v1477, %v4141
      %v8645 = vadd.f32 %v1550, %v4214
      %v8646 = vadd.f32 %v1623, %v4287
      %v8647 = vadd.f32 %v1696, %v4360
      %v8648 = vadd.f32 %v1769, %v4433
      %v8649 = vadd.f32 %v1842, %v4506
      %v8650 = vadd.f32 %v1915, %v4579
      %v8651 = vadd.f32 %v1988, %v4652
      %v8652 = vadd.f32 %v2061, %v4725
      %v8653 = vadd.f32 %v2134, %v4798
      %v8654 = vadd.f32 %v2207, %v4871
      %v8655 = vadd.f32 %v2280, %v4944
      %v8656 = vadd.f32 %v2353, %v5017
      %v8657 = vadd.f32 %v2426, %v5090
      %v8658 = vadd.f32 %v2499, %v5163
      %v8659 = vadd.f32 %v2572, %v5236
      %v8660 = vadd.f32 %v2645, %v5309
      %v8661 = vadd.f32 %v2718, %v5382
      %v8662 = vadd.f32 %v2791, %v5455
      %v8663 = vadd.f32 %v2864, %v5528
      %v8664 = vadd.f32 %v2937, %v5601
      %v8665 = vadd.f32 %v3010, %v5674
      %v8666 = vadd.f32 %v3083, %v5747
      %v8667 = vadd.f32 %v3156, %v5820
      %v8668 = vadd.f32 %v3229, %v5893
      %8669 = vst.msk [vmem:[%s457] sm:$0x3] %vm8596, %v8633
      %8670 = vst.msk [vmem:[%s457 + $0x2] sm:$0x3] %vm8596, %v8634
      %8671 = vst.msk [vmem:[%s457 + $0x4] sm:$0x3] %vm8596, %v8635
      %8672 = vst.msk [vmem:[%s457 + $0x6] sm:$0x3] %vm8596, %v8636
      %8673 = vst.msk [vmem:[%s457 + $0x8] sm:$0x3] %vm8596, %v8637
      %8674 = vst.msk [vmem:[%s457 + $0xa] sm:$0x3] %vm8596, %v8638
      %8675 = vst.msk [vmem:[%s457 + $0xc] sm:$0x3] %vm8596, %v8639
      %8676 = vst.msk [vmem:[%s457 + $0xe] sm:$0x3] %vm8596, %v8640
      %8677 = vst.msk [vmem:[%s457 + $0x10] sm:$0x3] %vm8596, %v8641
      %8678 = vst.msk [vmem:[%s457 + $0x12] sm:$0x3] %vm8596, %v8642
      %8679 = vst.msk [vmem:[%s457 + $0x14] sm:$0x3] %vm8596, %v8643
      %8680 = vst.msk [vmem:[%s457 + $0x16] sm:$0x3] %vm8596, %v8644
      %8681 = vst.msk [vmem:[%s457 + $0x18] sm:$0x3] %vm8596, %v8645
      %8682 = vst.msk [vmem:[%s457 + $0x1a] sm:$0x3] %vm8596, %v8646
      %8683 = vst.msk [vmem:[%s457 + $0x1c] sm:$0x3] %vm8596, %v8647
      %8684 = vst.msk [vmem:[%s457 + $0x1e] sm:$0x3] %vm8596, %v8648
      %8685 = vst.msk [vmem:[%s457 + $0x20] sm:$0x3] %vm8596, %v8649
      %8686 = vst.msk [vmem:[%s457 + $0x22] sm:$0x3] %vm8596, %v8650
      %8687 = vst.msk [vmem:[%s457 + $0x24] sm:$0x3] %vm8596, %v8651
      %8688 = vst.msk [vmem:[%s457 + $0x26] sm:$0x3] %vm8596, %v8652
      %8689 = vst.msk [vmem:[%s457 + $0x28] sm:$0x3] %vm8596, %v8653
      %8690 = vst.msk [vmem:[%s457 + $0x2a] sm:$0x3] %vm8596, %v8654
      %8691 = vst.msk [vmem:[%s457 + $0x2c] sm:$0x3] %vm8596, %v8655
      %8692 = vst.msk [vmem:[%s457 + $0x2e] sm:$0x3] %vm8596, %v8656
      %8693 = vst.msk [vmem:[%s457 + $0x30] sm:$0x3] %vm8596, %v8657
      %8694 = vst.msk [vmem:[%s457 + $0x32] sm:$0x3] %vm8596, %v8658
      %8695 = vst.msk [vmem:[%s457 + $0x34] sm:$0x3] %vm8596, %v8659
      %8696 = vst.msk [vmem:[%s457 + $0x36] sm:$0x3] %vm8596, %v8660
      %8697 = vst.msk [vmem:[%s457 + $0x38] sm:$0x3] %vm8596, %v8661
      %8698 = vst.msk [vmem:[%s457 + $0x3a] sm:$0x3] %vm8596, %v8662
      %8699 = vst.msk [vmem:[%s457 + $0x3c] sm:$0x3] %vm8596, %v8663
      %8700 = vst.msk [vmem:[%s457 + $0x3e] sm:$0x3] %vm8596, %v8664
      %8701 = vst.msk [vmem:[%s457 + $0x40] sm:$0x3] %vm8596, %v8665
      %8702 = vst.msk [vmem:[%s457 + $0x42] sm:$0x3] %vm8596, %v8666
      %8703 = vst.msk [vmem:[%s457 + $0x44] sm:$0x3] %vm8596, %v8667
      %8704 = vst.msk [vmem:[%s457 + $0x46] sm:$0x3] %vm8596, %v8668
      %s8705 = smul.u32 36, %s23
      %p8706 = scmp.lt.s32.totalorder %s22, 1
      %s8707 = scalar_select %p8706, %s22, 1
      %p8708 = scmp.lt.s32.totalorder %s8705, 35
      %s8709 = scalar_select %p8708, %s8705, 35
      %s8710 = smul.addr %s8707, 36
      %s8711 = sadd.s32 %s8709, %s8710
      %s8712 = smul.addr %s8711, 2
      %s8713 = scalar_lea.vmem %s5, %s8712
      %s8714 = smul.u32 36, %s23
      %p8715 = scmp.lt.s32.totalorder %s22, 1
      %s8716 = scalar_select %p8715, %s22, 1
      %p8717 = scmp.lt.s32.totalorder %s8714, 35
      %s8718 = scalar_select %p8717, %s8714, 35
      %s8719 = smul.addr %s8716, 36
      %s8720 = sadd.s32 %s8718, %s8719
      %s8721 = smul.addr %s8720, 2
      %s8722 = scalar_lea.vmem %s6, %s8721
      // Predicated region
      $region41: #{_lambda_.4} parent=39 // pred_check
        %p8723 = pneg %p190
      $region42: #{_lambda_.4} parent=39 // pred_check_branch
        %8725 = sbr.rel (%p8723) target = $region44
      $region43: #{_lambda_.4} parent=39 // pred_region
        %s8726 = smul.u32 36, %s23
      $region44: #{_lambda_.4} parent=39 // pred_fallthru
        _
      // Predicated region
      $region45: #{_lambda_.4} parent=39 // pred_check
        %p8727 = pneg %p218
      $region46: #{_lambda_.4} parent=39 // pred_check_branch
        %8729 = sbr.rel (%p8727) target = $region48
      $region47: #{_lambda_.4} parent=39 // pred_region
        %s8730 = smul.u32 36, %s23
      $region48: #{_lambda_.4} parent=39 // pred_fallthru
        _
    $region40: #{_lambda_.4} parent=5 // pred_fallthru
      _
    %p8731 = scmp.le.s32.totalorder 2, %s13
    // Predicated region
    $region49: #{_lambda_.4} parent=5 // pred_check
      %p8732 = pneg %p8731
    $region50: #{_lambda_.4} parent=5 // pred_check_branch
      %8734 = sbr.rel (%p8732) target = $region52
    $region51: #{_lambda_.4} parent=5 // pred_region
      %s8735 = ssub.s32 %s13, 2
      // Predicated region
      $region53: #{_lambda_.4} parent=51 // pred_check
        %p8736 = pneg %p196
      $region54: #{_lambda_.4} parent=51 // pred_check_branch
        %8738 = sbr.rel (%p8736) target = $region56
      $region55: #{_lambda_.4} parent=51 // pred_region
        %s8739 = smul.u32 36, %s25
        %p8740 = scmp.lt.s32.totalorder %s24, 1
        %s8741 = scalar_select %p8740, %s24, 1
        %p8742 = scmp.lt.s32.totalorder %s8739, 35
        %s8743 = scalar_select %p8742, %s8739, 35
        %s8744 = smul.addr %s8741, 36
        %s8745 = sadd.s32 %s8743, %s8744
        %s8746 = smul.addr %s8745, 2
        %s8747 = scalar_lea.vmem %s5, %s8746
      $region56: #{_lambda_.4} parent=51 // pred_fallthru
        _
      // Predicated region
      $region57: #{_lambda_.4} parent=51 // pred_check
        %p8748 = pneg %p224
      $region58: #{_lambda_.4} parent=51 // pred_check_branch
        %8750 = sbr.rel (%p8748) target = $region60
      $region59: #{_lambda_.4} parent=51 // pred_region
        %s8751 = smul.u32 36, %s25
        %p8752 = scmp.lt.s32.totalorder %s24, 1
        %s8753 = scalar_select %p8752, %s24, 1
        %p8754 = scmp.lt.s32.totalorder %s8751, 35
        %s8755 = scalar_select %p8754, %s8751, 35
        %s8756 = smul.addr %s8753, 36
        %s8757 = sadd.s32 %s8755, %s8756
        %s8758 = smul.addr %s8757, 2
        %s8759 = scalar_lea.vmem %s6, %s8758
      $region60: #{_lambda_.4} parent=51 // pred_fallthru
        _
    $region52: #{_lambda_.4} parent=5 // pred_fallthru
      _
  $region6: #{_lambda_.4} parent=0 // loop_footer
    %s17 = sadd.s32 1, %s13
  $region7: #{_lambda_.4} parent=0 // loop_footer_branch
    %12 = sbr.rel target = $region3
  $region8: #{_lambda_.4} parent=0 // loop_exit
    _

</llo_original>
